<compile_context>
chip_gen: v6e
topology: v6e:2x2x1
jax: 0.10.0
libtpu: 0.0.40
codegen_flags: <defaults>
</compile_context>

<pallas_src>
import functools

import jax
import jax.numpy as jnp
import numpy as np
from jax.experimental import pallas as pl
from jax.experimental.pallas import tpu as pltpu

_LANE = 128


def _default_vmem_limit():
    # Generation-aware scoped-VMEM cap: ~3/4 of physical, capped at 96 MiB
    # (v5e/v6e: 128 MiB physical -> 96 MiB; v7x: 64 MiB physical -> 48 MiB).
    try:
        cap = pltpu.get_tpu_info().vmem_capacity_bytes
        return max(32 * 1024 * 1024, min(int(cap) * 3 // 4, 96 * 1024 * 1024))
    except Exception:
        return 48 * 1024 * 1024


_VMEM_LIMIT = _default_vmem_limit()


# ----------------------------------------------------------------------------
# small helpers
# ----------------------------------------------------------------------------
def _round_up(n, m):
    return ((n + m - 1) // m) * m


def _pad_to(a, target_shape):
    pads = [(0, t - s) for s, t in zip(a.shape, target_shape)]
    if all(p == (0, 0) for p in pads):
        return a
    return jnp.pad(a, pads)


def _pick_tm(M, row_bytes):
    """Largest row tile whose double-buffered row-tiled operands stay well under
    the VMEM cap and that still yields >= 2 grid steps (pipelining / megacore)."""
    budget = _VMEM_LIMIT // 3
    cands = (1024, 512, 256, 128, 64, 32, 16, 8)
    for tm in cands:
        if M % tm == 0 and M // tm >= 2 and 2 * tm * row_bytes <= budget:
            return tm
    for tm in cands:
        if M % tm == 0 and 2 * tm * row_bytes <= budget:
            return tm
    return _round_up(min(M, 512), 8)        # caller pads rows up to multiple of tm


# ----------------------------------------------------------------------------
# Kernel 1/3: fused 1x1-conv matmul + folded BN + optional residual/projection
# ----------------------------------------------------------------------------
def _make_mm_bn_kernel(relu: bool, mode: str):
    def _finish(acc, o_ref):
        if relu:
            acc = jnp.maximum(acc, 0.0)
        o_ref[...] = acc.astype(o_ref.dtype)

    if mode == "proj":      # conv3 + fused projection shortcut
        def kernel(x_ref, w_ref, s_ref, b_ref,
                   xs_ref, wsc_ref, ssc_ref, bsc_ref, o_ref):
            acc = jnp.dot(x_ref[...], w_ref[...],
                          preferred_element_type=jnp.float32)
            acc = acc * s_ref[...] + b_ref[...]
            sc = jnp.dot(xs_ref[...], wsc_ref[...],
                         preferred_element_type=jnp.float32)
            acc = acc + sc * ssc_ref[...] + bsc_ref[...]
            _finish(acc, o_ref)
    elif mode == "res":     # conv3 + identity shortcut
        def kernel(x_ref, w_ref, s_ref, b_ref, r_ref, o_ref):
            acc = jnp.dot(x_ref[...], w_ref[...],
                          preferred_element_type=jnp.float32)
            acc = acc * s_ref[...] + b_ref[...] + r_ref[...].astype(jnp.float32)
            _finish(acc, o_ref)
    else:                   # plain conv + BN (+ ReLU)
        def kernel(x_ref, w_ref, s_ref, b_ref, o_ref):
            acc = jnp.dot(x_ref[...], w_ref[...],
                          preferred_element_type=jnp.float32)
            acc = acc * s_ref[...] + b_ref[...]
            _finish(acc, o_ref)
    return kernel


def conv1x1_bn_act(x, w, scale, bias, *, relu, res=None, proj=None,
                   out_dtype=jnp.bfloat16):
    """out = act((x @ w) * scale + bias [+ res | + (xs @ wsc) * ssc + bsc])."""
    M, K = x.shape
    Cout = w.shape[1]

    row_bytes = (K + Cout) * 2 + Cout * jnp.dtype(out_dtype).itemsize
    if proj is not None:
        row_bytes += proj[0].shape[1] * 2
    if res is not None:
        row_bytes += Cout * 2
    tm = _pick_tm(M, row_bytes)
    Mp = _round_up(M, tm)

    def pad_rows(a):
        return _pad_to(a, (Mp,) + a.shape[1:])

    in_specs = [
        pl.BlockSpec((tm, K), lambda i: (i, 0)),        # activation row tile
        pl.BlockSpec((K, Cout), lambda i: (0, 0)),      # weights (resident)
        pl.BlockSpec((1, Cout), lambda i: (0, 0)),      # folded BN scale
        pl.BlockSpec((1, Cout), lambda i: (0, 0)),      # folded BN bias
    ]
    args = [pad_rows(x), w, scale.reshape(1, Cout), bias.reshape(1, Cout)]

    if proj is not None:
        mode = "proj"
        xs, wsc, ssc, bsc = proj
        Ks = xs.shape[1]
        in_specs += [
            pl.BlockSpec((tm, Ks), lambda i: (i, 0)),   # shortcut activations
            pl.BlockSpec((Ks, Cout), lambda i: (0, 0)),
            pl.BlockSpec((1, Cout), lambda i: (0, 0)),
            pl.BlockSpec((1, Cout), lambda i: (0, 0)),
        ]
        args += [pad_rows(xs), wsc, ssc.reshape(1, Cout), bsc.reshape(1, Cout)]
    elif res is not None:
        mode = "res"
        in_specs.append(pl.BlockSpec((tm, Cout), lambda i: (i, 0)))
        args.append(pad_rows(res))
    else:
        mode = "plain"

    out = pl.pallas_call(
        _make_mm_bn_kernel(relu, mode),
        out_shape=jax.ShapeDtypeStruct((Mp, Cout), out_dtype),
        grid=(Mp // tm,),
        in_specs=in_specs,
        out_specs=pl.BlockSpec((tm, Cout), lambda i: (i, 0)),
        compiler_params=pltpu.CompilerParams(
            dimension_semantics=("parallel",),
            vmem_limit_bytes=_VMEM_LIMIT),
    )(*args)
    # Row-padded tiles hold relu(bias) garbage; the [:M] slice drops them.
    return out[:M] if Mp != M else out


# ----------------------------------------------------------------------------
# Kernel 2: fused 3x3 conv (in-kernel halo + im2col) + folded BN + ReLU
# ----------------------------------------------------------------------------
def _make_conv3x3_kernel(stride: int, H: int, W: int, Hb: int, Wo: int):
    def kernel(x_ref, w_ref, s_ref, b_ref, o_ref, slab_ref):
        # x_ref   : (1, H, W, Cp)   resident conv1-output image (bf16)
        # w_ref   : (3, 3, Cp, Cop) weights (resident)
        # s_ref/b_ref : (1, Cop)    folded BN scale / bias (f32)
        # o_ref   : (1, Hb, Wo, Cop)
        # slab_ref: (H+2, W+2, Cp)  per-image zero-padded halo slab (scratch)
        hb = pl.program_id(1)
        Cp = x_ref.shape[-1]
        Cop = o_ref.shape[-1]

        # Build the padded slab once per image.  hb is the innermost,
        # sequential ("arbitrary") grid axis, so every core that owns image n
        # runs its hb == 0 step first; the scratch persists across steps.
        @pl.when(hb == 0)
        def _():
            slab_ref[...] = jnp.zeros_like(slab_ref)
            slab_ref[pl.ds(1, H), pl.ds(1, W), :] = x_ref[0]

        # Top row of this block's input window, in padded coordinates.
        r0 = pl.multiple_of(hb * (Hb * stride), Hb * stride)

        acc = None
        for dy in range(3):
            for dx in range(3):
                if stride == 1:
                    xs = slab_ref[pl.ds(r0 + dy, Hb), pl.ds(dx, Wo), :]
                else:
                    xs = slab_ref[pl.ds(r0 + dy, Hb, stride=stride),
                                  pl.ds(dx, Wo, stride=stride), :]
                part = jnp.dot(xs.reshape(Hb * Wo, Cp), w_ref[dy, dx],
                               preferred_element_type=jnp.float32)
                acc = part if acc is None else acc + part

        out = acc * s_ref[...] + b_ref[...]
        out = jnp.maximum(out, 0.0)
        o_ref[0] = out.reshape(Hb, Wo, Cop).astype(o_ref.dtype)

    return kernel


def _pick_hb(Ho, Wo, target_rows=256):
    """Smallest divisor of Ho giving >= target_rows matmul rows per grid step."""
    for hb in range(1, Ho + 1):
        if Ho % hb == 0 and hb * Wo >= target_rows:
            return hb
    return Ho


def conv3x3_bn_relu(x, w2, scale, bias, *, stride, Ho, Wo):
    """x : (N, H, W, Cp) bf16 (UNPADDED spatially; halo handled in-kernel).
       w2: (3, 3, Cp, Cop) bf16.   Returns (N, Ho, Wo, Cop) bf16."""
    N, H, W, Cp = x.shape
    Cop = w2.shape[-1]
    Hb = _pick_hb(Ho, Wo)

    return pl.pallas_call(
        _make_conv3x3_kernel(stride, H, W, Hb, Wo),
        out_shape=jax.ShapeDtypeStruct((N, Ho, Wo, Cop), jnp.bfloat16),
        grid=(N, Ho // Hb),
        in_specs=[
            # Whole image per batch element; block index constant in hb so the
            # image is DMA'd once per image (revisit skip), not once per step.
            pl.BlockSpec((1, H, W, Cp), lambda n, h: (n, 0, 0, 0)),
            pl.BlockSpec((3, 3, Cp, Cop), lambda n, h: (0, 0, 0, 0)),  # weights
            pl.BlockSpec((1, Cop), lambda n, h: (0, 0)),               # scale
            pl.BlockSpec((1, Cop), lambda n, h: (0, 0)),               # bias
        ],
        out_specs=pl.BlockSpec((1, Hb, Wo, Cop), lambda n, h: (n, h, 0, 0)),
        scratch_shapes=[pltpu.VMEM((H + 2, W + 2, Cp), jnp.bfloat16)],
        compiler_params=pltpu.CompilerParams(
            # hb must stay sequential per image (slab filled at hb == 0);
            # megacore parallelism comes from the batch axis.
            dimension_semantics=("parallel", "arbitrary"),
            vmem_limit_bytes=_VMEM_LIMIT),
    )(x, w2, scale.reshape(1, Cop), bias.reshape(1, Cop))


# ----------------------------------------------------------------------------
# Bottleneck forward (wrapper) — NCHW in, NCHW out, like the PyTorch module
# ----------------------------------------------------------------------------
def bottleneck_forward(x_nchw, params, stride=1):
    expansion = 4
    N, Cin, H, W = x_nchw.shape
    P = params["w1"].shape[1]
    Cout = expansion * P
    Ho = (H + 2 - 3) // stride + 1
    Wo = (W + 2 - 3) // stride + 1

    Cin_p = _round_up(Cin, _LANE)
    Pp = _round_up(P, _LANE)
    Cout_p = _round_up(Cout, _LANE)
    bf16 = jnp.bfloat16

    # Lane-padded bf16 weights / f32 folded-BN params.  Zero padding keeps the
    # padded channels exactly zero throughout the block.
    w1 = _pad_to(params["w1"], (Cin_p, Pp)).astype(bf16)
    w2 = _pad_to(params["w2"].reshape(3, 3, P, P), (3, 3, Pp, Pp)).astype(bf16)
    w3 = _pad_to(params["w3"], (Pp, Cout_p)).astype(bf16)
    s1 = _pad_to(params["s1"], (Pp,));     b1 = _pad_to(params["b1"], (Pp,))
    s2 = _pad_to(params["s2"], (Pp,));     b2 = _pad_to(params["b2"], (Pp,))
    s3 = _pad_to(params["s3"], (Cout_p,)); b3 = _pad_to(params["b3"], (Cout_p,))

    # NCHW -> NHWC directly in bf16 (no f32 intermediate), channels padded to a
    # lane multiple.
    xb = _pad_to(jnp.transpose(x_nchw.astype(bf16), (0, 2, 3, 1)),
                 (N, H, W, Cin_p))

    # conv1 (1x1) + bn1 + relu: one lane-dense row-tiled matmul over all pixels.
    out1 = conv1x1_bn_act(xb.reshape(N * H * W, Cin_p), w1, s1, b1, relu=True)
    out1 = out1.reshape(N, H, W, Pp)

    # conv2 (3x3, pad=1, stride) + bn2 + relu: halo padding + im2col fused in
    # the kernel; no padded HBM copy of out1, Hb output rows per grid step.
    out2 = conv3x3_bn_relu(out1, w2, s2, b2, stride=stride, Ho=Ho, Wo=Wo)
    out2 = out2.reshape(N * Ho * Wo, Pp)

    # conv3 (1x1) + bn3 + shortcut + relu, all fused into one kernel.
    if params.get("wsc") is not None:
        wsc = _pad_to(params["wsc"], (Cin_p, Cout_p)).astype(bf16)
        ssc = _pad_to(params["ssc"], (Cout_p,))
        bsc = _pad_to(params["bsc"], (Cout_p,))
        if stride == 1:
            xs = xb                                          # gather-free
        else:
            # TODO(synk): fold the stride-2 subsample into a Pallas index_map /
            # strided ds load instead of this XLA strided gather.
            xs = xb[:, ::stride, ::stride, :][:, :Ho, :Wo, :]
        out3 = conv1x1_bn_act(
            out2, w3, s3, b3, relu=True,
            proj=(xs.reshape(N * Ho * Wo, Cin_p), wsc, ssc, bsc))
    else:
        assert stride == 1 and Cin == Cout, "identity shortcut needs same shapes"
        out3 = conv1x1_bn_act(out2, w3, s3, b3, relu=True,
                              res=xb.reshape(N * H * W, Cin_p))

    out = out3.reshape(N, Ho, Wo, Cout_p)[..., :Cout]
    # Single f32 materialisation at the block boundary (NCHW like the module).
    return jnp.transpose(out, (0, 3, 1, 2)).astype(jnp.float32)


# ----------------------------------------------------------------------------
# Deterministic parameter init (matches module __init__ shapes; BN folded)
# ----------------------------------------------------------------------------
def init_params(key, in_planes, planes, stride, eps=1e-5):
    expansion = 4
    keys = jax.random.split(key, 24)

    def bn(k0, k1, k2, k3, c):
        gamma = 1.0 + 0.1 * jax.random.normal(k0, (c,), jnp.float32)
        beta = 0.1 * jax.random.normal(k1, (c,), jnp.float32)
        mean = 0.1 * jax.random.normal(k2, (c,), jnp.float32)
        var = 1.0 + 0.5 * jax.random.uniform(k3, (c,), jnp.float32)
        scale = gamma / jnp.sqrt(var + eps)
        bias = beta - mean * scale
        return scale, bias

    p = {}
    p["w1"] = 0.3 * jax.random.normal(keys[0], (in_planes, planes), jnp.float32)
    p["w2"] = 0.2 * jax.random.normal(keys[1], (9 * planes, planes), jnp.float32)
    p["w3"] = 0.3 * jax.random.normal(keys[2], (planes, expansion * planes),
                                      jnp.float32)
    p["s1"], p["b1"] = bn(keys[4], keys[5], keys[6], keys[7], planes)
    p["s2"], p["b2"] = bn(keys[8], keys[9], keys[10], keys[11], planes)
    p["s3"], p["b3"] = bn(keys[12], keys[13], keys[14], keys[15],
                          expansion * planes)
    if stride != 1 or in_planes != expansion * planes:
        p["wsc"] = 0.3 * jax.random.normal(
            keys[3], (in_planes, expansion * planes), jnp.float32)
        p["ssc"], p["bsc"] = bn(keys[16], keys[17], keys[18], keys[19],
                                expansion * planes)
    else:
        p["wsc"] = None
    return p


# ----------------------------------------------------------------------------
# Pure-JAX reference (f32 lax.conv) for validating the Pallas path
# ----------------------------------------------------------------------------
def ref_bottleneck(x_nchw, params, stride=1):
    x = jnp.transpose(x_nchw, (0, 2, 3, 1)).astype(jnp.float32)
    P = params["w1"].shape[1]

    def conv(x, w_hwio, s, padding):
        return jax.lax.conv_general_dilated(
            x, w_hwio, window_strides=(s, s), padding=padding,
            dimension_numbers=("NHWC", "HWIO", "NHWC"),
            precision=jax.lax.Precision.HIGHEST)

    w1 = params["w1"][None, None]
    w2 = params["w2"].reshape(3, 3, P, P)
    w3 = params["w3"][None, None]

    o = jax.nn.relu(conv(x, w1, 1, "VALID") * params["s1"] + params["b1"])
    o = jax.nn.relu(conv(o, w2, stride, [(1, 1), (1, 1)]) * params["s2"]
                    + params["b2"])
    o = conv(o, w3, 1, "VALID") * params["s3"] + params["b3"]
    if params.get("wsc") is not None:
        sc = (conv(x, params["wsc"][None, None], stride, "VALID")
              * params["ssc"] + params["bsc"])
    else:
        sc = x
    out = jax.nn.relu(o + sc)
    return jnp.transpose(out, (0, 3, 1, 2))


# ----------------------------------------------------------------------------
if __name__ == "__main__":
    N, in_planes, planes, H, W, stride = 2, 4, 4, 16, 16, 1

    key = jax.random.PRNGKey(0)
    kx, kp = jax.random.split(key)
    x = jax.random.normal(kx, (N, in_planes, H, W), dtype=jnp.float32)
    params = init_params(kp, in_planes, planes, stride)

    fwd = jax.jit(functools.partial(bottleneck_forward, stride=stride))
    out = jax.block_until_ready(fwd(x, params))

    ref = ref_bottleneck(x, params, stride=stride)
    assert out.shape == ref.shape == (N, 4 * planes, H // stride, W // stride)
    # bf16 matmul operands / bf16 intermediates (f32 accumulate) vs f32
    # reference -> relaxed tolerance.
    np.testing.assert_allclose(np.asarray(out), np.asarray(ref),
                               rtol=3e-2, atol=3e-2)
    print("KERNEL_OK")
</pallas_src>

<mosaic_0001>
module attributes {stable_mosaic.version = 11 : i64} {
  func.func @kernel(%arg0: i32, %arg1: i32, %arg2: memref<1x16x16x128xbf16, #tpu.memory_space<vmem>>, %arg3: memref<3x3x128x128xbf16, #tpu.memory_space<vmem>>, %arg4: memref<1x128xf32, #tpu.memory_space<vmem>>, %arg5: memref<1x128xf32, #tpu.memory_space<vmem>>, %arg6: memref<1x16x16x128xbf16, #tpu.memory_space<vmem>>, %arg7: memref<18x18x128xbf16, #tpu.memory_space<vmem>>) attributes {dimension_semantics = [#tpu.dimension_semantics<parallel>, #tpu.dimension_semantics<arbitrary>], iteration_bounds = array<i64: 2, 1>, scalar_prefetch = 0 : i64, scratch_operands = 1 : i64, tpu.core_type = #tpu.core_type<tc>, window_params = [{transform_indices = @transform_0, window_bounds = array<i64: 1, 16, 16, 128>}, {pipeline_mode = #tpu.pipeline_mode<synchronous>, transform_indices = @transform_1, window_bounds = array<i64: 3, 3, 128, 128>}, {pipeline_mode = #tpu.pipeline_mode<synchronous>, transform_indices = @transform_2, window_bounds = array<i64: 1, 128>}, {pipeline_mode = #tpu.pipeline_mode<synchronous>, transform_indices = @transform_3, window_bounds = array<i64: 1, 128>}, {transform_indices = @transform_4, window_bounds = array<i64: 1, 16, 16, 128>}]} {
    %c0_i32 = arith.constant 0 : i32
    %0 = arith.cmpi eq, %arg1, %c0_i32 : i32
    %1 = arith.extui %0 : i1 to i32
    %c0_i32_0 = arith.constant 0 : i32
    %2 = arith.cmpi ne, %1, %c0_i32_0 : i32
    scf.if %2 {
      %cst_76 = arith.constant 0.000000e+00 : bf16
      %89 = vector.broadcast %cst_76 : bf16 to vector<18x18x128xbf16>
      %c0_77 = arith.constant 0 : index
      %c0_78 = arith.constant 0 : index
      %c0_79 = arith.constant 0 : index
      %90 = vector.load %arg7[%c0_77, %c0_78, %c0_79] : memref<18x18x128xbf16, #tpu.memory_space<vmem>>, vector<18x18x128xbf16>
      tpu.vector_store %arg7[%c0_77, %c0_78, %c0_79], %89 {strides = array<i32>} : memref<18x18x128xbf16, #tpu.memory_space<vmem>>, vector<18x18x128xbf16>,
      %c0_80 = arith.constant 0 : index
      %c0_81 = arith.constant 0 : index
      %c0_82 = arith.constant 0 : index
      %c0_83 = arith.constant 0 : index
      %91 = vector.load %arg2[%c0_80, %c0_81, %c0_82, %c0_83] : memref<1x16x16x128xbf16, #tpu.memory_space<vmem>>, vector<1x16x16x128xbf16>
      %92 = vector.shape_cast %91 : vector<1x16x16x128xbf16> to vector<16x16x128xbf16>
      %c1_84 = arith.constant 1 : index
      %c1_85 = arith.constant 1 : index
      %c0_86 = arith.constant 0 : index
      %93 = vector.load %arg7[%c1_84, %c1_85, %c0_86] : memref<18x18x128xbf16, #tpu.memory_space<vmem>>, vector<16x16x128xbf16>
      tpu.vector_store %arg7[%c1_84, %c1_85, %c0_86], %92 {strides = array<i32>} : memref<18x18x128xbf16, #tpu.memory_space<vmem>>, vector<16x16x128xbf16>,
    } else {
    }
    %c16_i32 = arith.constant 16 : i32
    %3 = arith.muli %arg1, %c16_i32 : i32
    %4 = tpu.assume_multiple %3, 16 : i32
    %c0_i32_1 = arith.constant 0 : i32
    %5 = arith.addi %4, %c0_i32_1 : i32
    %6 = arith.index_cast %5 : i32 to index
    %c0 = arith.constant 0 : index
    %c0_2 = arith.constant 0 : index
    %7 = vector.load %arg7[%6, %c0, %c0_2] : memref<18x18x128xbf16, #tpu.memory_space<vmem>>, vector<16x16x128xbf16>
    %8 = vector.shape_cast %7 : vector<16x16x128xbf16> to vector<256x128xbf16>
    %c0_3 = arith.constant 0 : index
    %c0_4 = arith.constant 0 : index
    %c0_5 = arith.constant 0 : index
    %c0_6 = arith.constant 0 : index
    %9 = vector.load %arg3[%c0_3, %c0_4, %c0_5, %c0_6] : memref<3x3x128x128xbf16, #tpu.memory_space<vmem>>, vector<1x1x128x128xbf16>
    %10 = vector.shape_cast %9 : vector<1x1x128x128xbf16> to vector<128x128xbf16>
    %cst = arith.constant dense<0.000000e+00> : vector<256x128xf32>
    %11 = tpu.matmul %8, %10, %cst {dimension_numbers = #tpu.dot_dimension_numbers<[1], [0], [0], [1], [0, 0, 1, 1], [], []>} : vector<256x128xbf16>, vector<128x128xbf16>, vector<256x128xf32> -> vector<256x128xf32>
    %c0_i32_7 = arith.constant 0 : i32
    %12 = arith.addi %4, %c0_i32_7 : i32
    %13 = arith.index_cast %12 : i32 to index
    %c1 = arith.constant 1 : index
    %c0_8 = arith.constant 0 : index
    %14 = vector.load %arg7[%13, %c1, %c0_8] : memref<18x18x128xbf16, #tpu.memory_space<vmem>>, vector<16x16x128xbf16>
    %15 = vector.shape_cast %14 : vector<16x16x128xbf16> to vector<256x128xbf16>
    %c0_9 = arith.constant 0 : index
    %c1_10 = arith.constant 1 : index
    %c0_11 = arith.constant 0 : index
    %c0_12 = arith.constant 0 : index
    %16 = vector.load %arg3[%c0_9, %c1_10, %c0_11, %c0_12] : memref<3x3x128x128xbf16, #tpu.memory_space<vmem>>, vector<1x1x128x128xbf16>
    %17 = vector.shape_cast %16 : vector<1x1x128x128xbf16> to vector<128x128xbf16>
    %cst_13 = arith.constant dense<0.000000e+00> : vector<256x128xf32>
    %18 = tpu.matmul %15, %17, %cst_13 {dimension_numbers = #tpu.dot_dimension_numbers<[1], [0], [0], [1], [0, 0, 1, 1], [], []>} : vector<256x128xbf16>, vector<128x128xbf16>, vector<256x128xf32> -> vector<256x128xf32>
    %19 = arith.addf %11, %18 : vector<256x128xf32>
    %c0_i32_14 = arith.constant 0 : i32
    %20 = arith.addi %4, %c0_i32_14 : i32
    %21 = arith.index_cast %20 : i32 to index
    %c2 = arith.constant 2 : index
    %c0_15 = arith.constant 0 : index
    %22 = vector.load %arg7[%21, %c2, %c0_15] : memref<18x18x128xbf16, #tpu.memory_space<vmem>>, vector<16x16x128xbf16>
    %23 = vector.shape_cast %22 : vector<16x16x128xbf16> to vector<256x128xbf16>
    %c0_16 = arith.constant 0 : index
    %c2_17 = arith.constant 2 : index
    %c0_18 = arith.constant 0 : index
    %c0_19 = arith.constant 0 : index
    %24 = vector.load %arg3[%c0_16, %c2_17, %c0_18, %c0_19] : memref<3x3x128x128xbf16, #tpu.memory_space<vmem>>, vector<1x1x128x128xbf16>
    %25 = vector.shape_cast %24 : vector<1x1x128x128xbf16> to vector<128x128xbf16>
    %cst_20 = arith.constant dense<0.000000e+00> : vector<256x128xf32>
    %26 = tpu.matmul %23, %25, %cst_20 {dimension_numbers = #tpu.dot_dimension_numbers<[1], [0], [0], [1], [0, 0, 1, 1], [], []>} : vector<256x128xbf16>, vector<128x128xbf16>, vector<256x128xf32> -> vector<256x128xf32>
    %27 = arith.addf %19, %26 : vector<256x128xf32>
    %c1_i32 = arith.constant 1 : i32
    %28 = arith.addi %4, %c1_i32 : i32
    %29 = arith.index_cast %28 : i32 to index
    %c0_21 = arith.constant 0 : index
    %c0_22 = arith.constant 0 : index
    %30 = vector.load %arg7[%29, %c0_21, %c0_22] : memref<18x18x128xbf16, #tpu.memory_space<vmem>>, vector<16x16x128xbf16>
    %31 = vector.shape_cast %30 : vector<16x16x128xbf16> to vector<256x128xbf16>
    %c1_23 = arith.constant 1 : index
    %c0_24 = arith.constant 0 : index
    %c0_25 = arith.constant 0 : index
    %c0_26 = arith.constant 0 : index
    %32 = vector.load %arg3[%c1_23, %c0_24, %c0_25, %c0_26] : memref<3x3x128x128xbf16, #tpu.memory_space<vmem>>, vector<1x1x128x128xbf16>
    %33 = vector.shape_cast %32 : vector<1x1x128x128xbf16> to vector<128x128xbf16>
    %cst_27 = arith.constant dense<0.000000e+00> : vector<256x128xf32>
    %34 = tpu.matmul %31, %33, %cst_27 {dimension_numbers = #tpu.dot_dimension_numbers<[1], [0], [0], [1], [0, 0, 1, 1], [], []>} : vector<256x128xbf16>, vector<128x128xbf16>, vector<256x128xf32> -> vector<256x128xf32>
    %35 = arith.addf %27, %34 : vector<256x128xf32>
    %c1_i32_28 = arith.constant 1 : i32
    %36 = arith.addi %4, %c1_i32_28 : i32
    %37 = arith.index_cast %36 : i32 to index
    %c1_29 = arith.constant 1 : index
    %c0_30 = arith.constant 0 : index
    %38 = vector.load %arg7[%37, %c1_29, %c0_30] : memref<18x18x128xbf16, #tpu.memory_space<vmem>>, vector<16x16x128xbf16>
    %39 = vector.shape_cast %38 : vector<16x16x128xbf16> to vector<256x128xbf16>
    %c1_31 = arith.constant 1 : index
    %c1_32 = arith.constant 1 : index
    %c0_33 = arith.constant 0 : index
    %c0_34 = arith.constant 0 : index
    %40 = vector.load %arg3[%c1_31, %c1_32, %c0_33, %c0_34] : memref<3x3x128x128xbf16, #tpu.memory_space<vmem>>, vector<1x1x128x128xbf16>
    %41 = vector.shape_cast %40 : vector<1x1x128x128xbf16> to vector<128x128xbf16>
    %cst_35 = arith.constant dense<0.000000e+00> : vector<256x128xf32>
    %42 = tpu.matmul %39, %41, %cst_35 {dimension_numbers = #tpu.dot_dimension_numbers<[1], [0], [0], [1], [0, 0, 1, 1], [], []>} : vector<256x128xbf16>, vector<128x128xbf16>, vector<256x128xf32> -> vector<256x128xf32>
    %43 = arith.addf %35, %42 : vector<256x128xf32>
    %c1_i32_36 = arith.constant 1 : i32
    %44 = arith.addi %4, %c1_i32_36 : i32
    %45 = arith.index_cast %44 : i32 to index
    %c2_37 = arith.constant 2 : index
    %c0_38 = arith.constant 0 : index
    %46 = vector.load %arg7[%45, %c2_37, %c0_38] : memref<18x18x128xbf16, #tpu.memory_space<vmem>>, vector<16x16x128xbf16>
    %47 = vector.shape_cast %46 : vector<16x16x128xbf16> to vector<256x128xbf16>
    %c1_39 = arith.constant 1 : index
    %c2_40 = arith.constant 2 : index
    %c0_41 = arith.constant 0 : index
    %c0_42 = arith.constant 0 : index
    %48 = vector.load %arg3[%c1_39, %c2_40, %c0_41, %c0_42] : memref<3x3x128x128xbf16, #tpu.memory_space<vmem>>, vector<1x1x128x128xbf16>
    %49 = vector.shape_cast %48 : vector<1x1x128x128xbf16> to vector<128x128xbf16>
    %cst_43 = arith.constant dense<0.000000e+00> : vector<256x128xf32>
    %50 = tpu.matmul %47, %49, %cst_43 {dimension_numbers = #tpu.dot_dimension_numbers<[1], [0], [0], [1], [0, 0, 1, 1], [], []>} : vector<256x128xbf16>, vector<128x128xbf16>, vector<256x128xf32> -> vector<256x128xf32>
    %51 = arith.addf %43, %50 : vector<256x128xf32>
    %c2_i32 = arith.constant 2 : i32
    %52 = arith.addi %4, %c2_i32 : i32
    %53 = arith.index_cast %52 : i32 to index
    %c0_44 = arith.constant 0 : index
    %c0_45 = arith.constant 0 : index
    %54 = vector.load %arg7[%53, %c0_44, %c0_45] : memref<18x18x128xbf16, #tpu.memory_space<vmem>>, vector<16x16x128xbf16>
    %55 = vector.shape_cast %54 : vector<16x16x128xbf16> to vector<256x128xbf16>
    %c2_46 = arith.constant 2 : index
    %c0_47 = arith.constant 0 : index
    %c0_48 = arith.constant 0 : index
    %c0_49 = arith.constant 0 : index
    %56 = vector.load %arg3[%c2_46, %c0_47, %c0_48, %c0_49] : memref<3x3x128x128xbf16, #tpu.memory_space<vmem>>, vector<1x1x128x128xbf16>
    %57 = vector.shape_cast %56 : vector<1x1x128x128xbf16> to vector<128x128xbf16>
    %cst_50 = arith.constant dense<0.000000e+00> : vector<256x128xf32>
    %58 = tpu.matmul %55, %57, %cst_50 {dimension_numbers = #tpu.dot_dimension_numbers<[1], [0], [0], [1], [0, 0, 1, 1], [], []>} : vector<256x128xbf16>, vector<128x128xbf16>, vector<256x128xf32> -> vector<256x128xf32>
    %59 = arith.addf %51, %58 : vector<256x128xf32>
    %c2_i32_51 = arith.constant 2 : i32
    %60 = arith.addi %4, %c2_i32_51 : i32
    %61 = arith.index_cast %60 : i32 to index
    %c1_52 = arith.constant 1 : index
    %c0_53 = arith.constant 0 : index
    %62 = vector.load %arg7[%61, %c1_52, %c0_53] : memref<18x18x128xbf16, #tpu.memory_space<vmem>>, vector<16x16x128xbf16>
    %63 = vector.shape_cast %62 : vector<16x16x128xbf16> to vector<256x128xbf16>
    %c2_54 = arith.constant 2 : index
    %c1_55 = arith.constant 1 : index
    %c0_56 = arith.constant 0 : index
    %c0_57 = arith.constant 0 : index
    %64 = vector.load %arg3[%c2_54, %c1_55, %c0_56, %c0_57] : memref<3x3x128x128xbf16, #tpu.memory_space<vmem>>, vector<1x1x128x128xbf16>
    %65 = vector.shape_cast %64 : vector<1x1x128x128xbf16> to vector<128x128xbf16>
    %cst_58 = arith.constant dense<0.000000e+00> : vector<256x128xf32>
    %66 = tpu.matmul %63, %65, %cst_58 {dimension_numbers = #tpu.dot_dimension_numbers<[1], [0], [0], [1], [0, 0, 1, 1], [], []>} : vector<256x128xbf16>, vector<128x128xbf16>, vector<256x128xf32> -> vector<256x128xf32>
    %67 = arith.addf %59, %66 : vector<256x128xf32>
    %c2_i32_59 = arith.constant 2 : i32
    %68 = arith.addi %4, %c2_i32_59 : i32
    %69 = arith.index_cast %68 : i32 to index
    %c2_60 = arith.constant 2 : index
    %c0_61 = arith.constant 0 : index
    %70 = vector.load %arg7[%69, %c2_60, %c0_61] : memref<18x18x128xbf16, #tpu.memory_space<vmem>>, vector<16x16x128xbf16>
    %71 = vector.shape_cast %70 : vector<16x16x128xbf16> to vector<256x128xbf16>
    %c2_62 = arith.constant 2 : index
    %c2_63 = arith.constant 2 : index
    %c0_64 = arith.constant 0 : index
    %c0_65 = arith.constant 0 : index
    %72 = vector.load %arg3[%c2_62, %c2_63, %c0_64, %c0_65] : memref<3x3x128x128xbf16, #tpu.memory_space<vmem>>, vector<1x1x128x128xbf16>
    %73 = vector.shape_cast %72 : vector<1x1x128x128xbf16> to vector<128x128xbf16>
    %cst_66 = arith.constant dense<0.000000e+00> : vector<256x128xf32>
    %74 = tpu.matmul %71, %73, %cst_66 {dimension_numbers = #tpu.dot_dimension_numbers<[1], [0], [0], [1], [0, 0, 1, 1], [], []>} : vector<256x128xbf16>, vector<128x128xbf16>, vector<256x128xf32> -> vector<256x128xf32>
    %75 = arith.addf %67, %74 : vector<256x128xf32>
    %c0_67 = arith.constant 0 : index
    %c0_68 = arith.constant 0 : index
    %76 = vector.load %arg4[%c0_67, %c0_68] : memref<1x128xf32, #tpu.memory_space<vmem>>, vector<1x128xf32>
    %77 = vector.broadcast %76 : vector<1x128xf32> to vector<256x128xf32>
    %78 = arith.mulf %75, %77 : vector<256x128xf32>
    %c0_69 = arith.constant 0 : index
    %c0_70 = arith.constant 0 : index
    %79 = vector.load %arg5[%c0_69, %c0_70] : memref<1x128xf32, #tpu.memory_space<vmem>>, vector<1x128xf32>
    %80 = vector.broadcast %79 : vector<1x128xf32> to vector<256x128xf32>
    %81 = arith.addf %78, %80 : vector<256x128xf32>
    %cst_71 = arith.constant 0.000000e+00 : f32
    %82 = vector.broadcast %cst_71 : f32 to vector<256x128xf32>
    %83 = arith.maximumf %81, %82 : vector<256x128xf32>
    %84 = vector.shape_cast %83 : vector<256x128xf32> to vector<16x16x128xf32>
    %85 = arith.truncf %84 : vector<16x16x128xf32> to vector<16x16x128xbf16>
    %c0_72 = arith.constant 0 : index
    %c0_73 = arith.constant 0 : index
    %c0_74 = arith.constant 0 : index
    %c0_75 = arith.constant 0 : index
    %86 = vector.load %arg6[%c0_72, %c0_73, %c0_74, %c0_75] : memref<1x16x16x128xbf16, #tpu.memory_space<vmem>>, vector<1x16x16x128xbf16>
    %87 = vector.shape_cast %86 : vector<1x16x16x128xbf16> to vector<16x16x128xbf16>
    %88 = vector.shape_cast %85 : vector<16x16x128xbf16> to vector<1x16x16x128xbf16>
    tpu.vector_store %arg6[%c0_72, %c0_73, %c0_74, %c0_75], %88 {strides = array<i32>} : memref<1x16x16x128xbf16, #tpu.memory_space<vmem>>, vector<1x16x16x128xbf16>,
    return
  }
  func.func @transform_0(%arg0: i32, %arg1: i32) -> (i32, i32, i32, i32) {
    %c0_i32 = arith.constant 0 : i32
    %c0_i32_0 = arith.constant 0 : i32
    %c0_i32_1 = arith.constant 0 : i32
    %c0_i32_2 = arith.constant 0 : i32
    return %arg0, %c0_i32, %c0_i32_0, %c0_i32_1 : i32, i32, i32, i32
  }
  func.func @transform_1(%arg0: i32, %arg1: i32) -> (i32, i32, i32, i32) {
    %c0_i32 = arith.constant 0 : i32
    %c0_i32_0 = arith.constant 0 : i32
    %c0_i32_1 = arith.constant 0 : i32
    %c0_i32_2 = arith.constant 0 : i32
    %c0_i32_3 = arith.constant 0 : i32
    return %c0_i32, %c0_i32_0, %c0_i32_1, %c0_i32_2 : i32, i32, i32, i32
  }
  func.func @transform_2(%arg0: i32, %arg1: i32) -> (i32, i32) {
    %c0_i32 = arith.constant 0 : i32
    %c0_i32_0 = arith.constant 0 : i32
    %c0_i32_1 = arith.constant 0 : i32
    return %c0_i32, %c0_i32_0 : i32, i32
  }
  func.func @transform_3(%arg0: i32, %arg1: i32) -> (i32, i32) {
    %c0_i32 = arith.constant 0 : i32
    %c0_i32_0 = arith.constant 0 : i32
    %c0_i32_1 = arith.constant 0 : i32
    return %c0_i32, %c0_i32_0 : i32, i32
  }
  func.func @transform_4(%arg0: i32, %arg1: i32) -> (i32, i32, i32, i32) {
    %c0_i32 = arith.constant 0 : i32
    %c0_i32_0 = arith.constant 0 : i32
    %c0_i32_1 = arith.constant 0 : i32
    return %arg0, %arg1, %c0_i32, %c0_i32_0 : i32, i32, i32, i32
  }
}

module attributes {stable_mosaic.version = 11 : i64} {
  func.func @kernel(%arg0: i32, %arg1: memref<256x128xbf16, #tpu.memory_space<vmem>>, %arg2: memref<128x128xbf16, #tpu.memory_space<vmem>>, %arg3: memref<1x128xf32, #tpu.memory_space<vmem>>, %arg4: memref<1x128xf32, #tpu.memory_space<vmem>>, %arg5: memref<256x128xbf16, #tpu.memory_space<vmem>>) attributes {dimension_semantics = [#tpu.dimension_semantics<parallel>], iteration_bounds = array<i64: 2>, scalar_prefetch = 0 : i64, scratch_operands = 0 : i64, tpu.core_type = #tpu.core_type<tc>, window_params = [{transform_indices = @transform_0, window_bounds = array<i64: 256, 128>}, {pipeline_mode = #tpu.pipeline_mode<synchronous>, transform_indices = @transform_1, window_bounds = array<i64: 128, 128>}, {pipeline_mode = #tpu.pipeline_mode<synchronous>, transform_indices = @transform_2, window_bounds = array<i64: 1, 128>}, {pipeline_mode = #tpu.pipeline_mode<synchronous>, transform_indices = @transform_3, window_bounds = array<i64: 1, 128>}, {transform_indices = @transform_4, window_bounds = array<i64: 256, 128>}]} {
    %c0 = arith.constant 0 : index
    %c0_0 = arith.constant 0 : index
    %0 = vector.load %arg1[%c0, %c0_0] : memref<256x128xbf16, #tpu.memory_space<vmem>>, vector<256x128xbf16>
    %c0_1 = arith.constant 0 : index
    %c0_2 = arith.constant 0 : index
    %1 = vector.load %arg2[%c0_1, %c0_2] : memref<128x128xbf16, #tpu.memory_space<vmem>>, vector<128x128xbf16>
    %cst = arith.constant dense<0.000000e+00> : vector<256x128xf32>
    %2 = tpu.matmul %0, %1, %cst {dimension_numbers = #tpu.dot_dimension_numbers<[1], [0], [0], [1], [0, 0, 1, 1], [], []>} : vector<256x128xbf16>, vector<128x128xbf16>, vector<256x128xf32> -> vector<256x128xf32>
    %c0_3 = arith.constant 0 : index
    %c0_4 = arith.constant 0 : index
    %3 = vector.load %arg3[%c0_3, %c0_4] : memref<1x128xf32, #tpu.memory_space<vmem>>, vector<1x128xf32>
    %4 = vector.broadcast %3 : vector<1x128xf32> to vector<256x128xf32>
    %5 = arith.mulf %2, %4 : vector<256x128xf32>
    %c0_5 = arith.constant 0 : index
    %c0_6 = arith.constant 0 : index
    %6 = vector.load %arg4[%c0_5, %c0_6] : memref<1x128xf32, #tpu.memory_space<vmem>>, vector<1x128xf32>
    %7 = vector.broadcast %6 : vector<1x128xf32> to vector<256x128xf32>
    %8 = arith.addf %5, %7 : vector<256x128xf32>
    %cst_7 = arith.constant 0.000000e+00 : f32
    %9 = vector.broadcast %cst_7 : f32 to vector<256x128xf32>
    %10 = arith.maximumf %8, %9 : vector<256x128xf32>
    %11 = arith.truncf %10 : vector<256x128xf32> to vector<256x128xbf16>
    %c0_8 = arith.constant 0 : index
    %c0_9 = arith.constant 0 : index
    %12 = vector.load %arg5[%c0_8, %c0_9] : memref<256x128xbf16, #tpu.memory_space<vmem>>, vector<256x128xbf16>
    tpu.vector_store %arg5[%c0_8, %c0_9], %11 {strides = array<i32>} : memref<256x128xbf16, #tpu.memory_space<vmem>>, vector<256x128xbf16>,
    return
  }
  func.func @transform_0(%arg0: i32) -> (i32, i32) {
    %c0_i32 = arith.constant 0 : i32
    %c0_i32_0 = arith.constant 0 : i32
    return %arg0, %c0_i32 : i32, i32
  }
  func.func @transform_1(%arg0: i32) -> (i32, i32) {
    %c0_i32 = arith.constant 0 : i32
    %c0_i32_0 = arith.constant 0 : i32
    %c0_i32_1 = arith.constant 0 : i32
    return %c0_i32, %c0_i32_0 : i32, i32
  }
  func.func @transform_2(%arg0: i32) -> (i32, i32) {
    %c0_i32 = arith.constant 0 : i32
    %c0_i32_0 = arith.constant 0 : i32
    %c0_i32_1 = arith.constant 0 : i32
    return %c0_i32, %c0_i32_0 : i32, i32
  }
  func.func @transform_3(%arg0: i32) -> (i32, i32) {
    %c0_i32 = arith.constant 0 : i32
    %c0_i32_0 = arith.constant 0 : i32
    %c0_i32_1 = arith.constant 0 : i32
    return %c0_i32, %c0_i32_0 : i32, i32
  }
  func.func @transform_4(%arg0: i32) -> (i32, i32) {
    %c0_i32 = arith.constant 0 : i32
    %c0_i32_0 = arith.constant 0 : i32
    return %arg0, %c0_i32 : i32, i32
  }
}

module attributes {stable_mosaic.version = 11 : i64} {
  func.func @kernel(%arg0: i32, %arg1: memref<256x128xbf16, #tpu.memory_space<vmem>>, %arg2: memref<128x128xbf16, #tpu.memory_space<vmem>>, %arg3: memref<1x128xf32, #tpu.memory_space<vmem>>, %arg4: memref<1x128xf32, #tpu.memory_space<vmem>>, %arg5: memref<256x128xbf16, #tpu.memory_space<vmem>>, %arg6: memref<128x128xbf16, #tpu.memory_space<vmem>>, %arg7: memref<1x128xf32, #tpu.memory_space<vmem>>, %arg8: memref<1x128xf32, #tpu.memory_space<vmem>>, %arg9: memref<256x128xbf16, #tpu.memory_space<vmem>>) attributes {dimension_semantics = [#tpu.dimension_semantics<parallel>], iteration_bounds = array<i64: 2>, scalar_prefetch = 0 : i64, scratch_operands = 0 : i64, tpu.core_type = #tpu.core_type<tc>, window_params = [{transform_indices = @transform_0, window_bounds = array<i64: 256, 128>}, {pipeline_mode = #tpu.pipeline_mode<synchronous>, transform_indices = @transform_1, window_bounds = array<i64: 128, 128>}, {pipeline_mode = #tpu.pipeline_mode<synchronous>, transform_indices = @transform_2, window_bounds = array<i64: 1, 128>}, {pipeline_mode = #tpu.pipeline_mode<synchronous>, transform_indices = @transform_3, window_bounds = array<i64: 1, 128>}, {transform_indices = @transform_4, window_bounds = array<i64: 256, 128>}, {pipeline_mode = #tpu.pipeline_mode<synchronous>, transform_indices = @transform_5, window_bounds = array<i64: 128, 128>}, {pipeline_mode = #tpu.pipeline_mode<synchronous>, transform_indices = @transform_6, window_bounds = array<i64: 1, 128>}, {pipeline_mode = #tpu.pipeline_mode<synchronous>, transform_indices = @transform_7, window_bounds = array<i64: 1, 128>}, {transform_indices = @transform_8, window_bounds = array<i64: 256, 128>}]} {
    %c0 = arith.constant 0 : index
    %c0_0 = arith.constant 0 : index
    %0 = vector.load %arg1[%c0, %c0_0] : memref<256x128xbf16, #tpu.memory_space<vmem>>, vector<256x128xbf16>
    %c0_1 = arith.constant 0 : index
    %c0_2 = arith.constant 0 : index
    %1 = vector.load %arg2[%c0_1, %c0_2] : memref<128x128xbf16, #tpu.memory_space<vmem>>, vector<128x128xbf16>
    %cst = arith.constant dense<0.000000e+00> : vector<256x128xf32>
    %2 = tpu.matmul %0, %1, %cst {dimension_numbers = #tpu.dot_dimension_numbers<[1], [0], [0], [1], [0, 0, 1, 1], [], []>} : vector<256x128xbf16>, vector<128x128xbf16>, vector<256x128xf32> -> vector<256x128xf32>
    %c0_3 = arith.constant 0 : index
    %c0_4 = arith.constant 0 : index
    %3 = vector.load %arg3[%c0_3, %c0_4] : memref<1x128xf32, #tpu.memory_space<vmem>>, vector<1x128xf32>
    %4 = vector.broadcast %3 : vector<1x128xf32> to vector<256x128xf32>
    %5 = arith.mulf %2, %4 : vector<256x128xf32>
    %c0_5 = arith.constant 0 : index
    %c0_6 = arith.constant 0 : index
    %6 = vector.load %arg4[%c0_5, %c0_6] : memref<1x128xf32, #tpu.memory_space<vmem>>, vector<1x128xf32>
    %7 = vector.broadcast %6 : vector<1x128xf32> to vector<256x128xf32>
    %8 = arith.addf %5, %7 : vector<256x128xf32>
    %c0_7 = arith.constant 0 : index
    %c0_8 = arith.constant 0 : index
    %9 = vector.load %arg5[%c0_7, %c0_8] : memref<256x128xbf16, #tpu.memory_space<vmem>>, vector<256x128xbf16>
    %c0_9 = arith.constant 0 : index
    %c0_10 = arith.constant 0 : index
    %10 = vector.load %arg6[%c0_9, %c0_10] : memref<128x128xbf16, #tpu.memory_space<vmem>>, vector<128x128xbf16>
    %cst_11 = arith.constant dense<0.000000e+00> : vector<256x128xf32>
    %11 = tpu.matmul %9, %10, %cst_11 {dimension_numbers = #tpu.dot_dimension_numbers<[1], [0], [0], [1], [0, 0, 1, 1], [], []>} : vector<256x128xbf16>, vector<128x128xbf16>, vector<256x128xf32> -> vector<256x128xf32>
    %c0_12 = arith.constant 0 : index
    %c0_13 = arith.constant 0 : index
    %12 = vector.load %arg7[%c0_12, %c0_13] : memref<1x128xf32, #tpu.memory_space<vmem>>, vector<1x128xf32>
    %13 = vector.broadcast %12 : vector<1x128xf32> to vector<256x128xf32>
    %14 = arith.mulf %11, %13 : vector<256x128xf32>
    %15 = arith.addf %8, %14 : vector<256x128xf32>
    %c0_14 = arith.constant 0 : index
    %c0_15 = arith.constant 0 : index
    %16 = vector.load %arg8[%c0_14, %c0_15] : memref<1x128xf32, #tpu.memory_space<vmem>>, vector<1x128xf32>
    %17 = vector.broadcast %16 : vector<1x128xf32> to vector<256x128xf32>
    %18 = arith.addf %15, %17 : vector<256x128xf32>
    %cst_16 = arith.constant 0.000000e+00 : f32
    %19 = vector.broadcast %cst_16 : f32 to vector<256x128xf32>
    %20 = arith.maximumf %18, %19 : vector<256x128xf32>
    %21 = arith.truncf %20 : vector<256x128xf32> to vector<256x128xbf16>
    %c0_17 = arith.constant 0 : index
    %c0_18 = arith.constant 0 : index
    %22 = vector.load %arg9[%c0_17, %c0_18] : memref<256x128xbf16, #tpu.memory_space<vmem>>, vector<256x128xbf16>
    tpu.vector_store %arg9[%c0_17, %c0_18], %21 {strides = array<i32>} : memref<256x128xbf16, #tpu.memory_space<vmem>>, vector<256x128xbf16>,
    return
  }
  func.func @transform_0(%arg0: i32) -> (i32, i32) {
    %c0_i32 = arith.constant 0 : i32
    %c0_i32_0 = arith.constant 0 : i32
    return %arg0, %c0_i32 : i32, i32
  }
  func.func @transform_1(%arg0: i32) -> (i32, i32) {
    %c0_i32 = arith.constant 0 : i32
    %c0_i32_0 = arith.constant 0 : i32
    %c0_i32_1 = arith.constant 0 : i32
    return %c0_i32, %c0_i32_0 : i32, i32
  }
  func.func @transform_2(%arg0: i32) -> (i32, i32) {
    %c0_i32 = arith.constant 0 : i32
    %c0_i32_0 = arith.constant 0 : i32
    %c0_i32_1 = arith.constant 0 : i32
    return %c0_i32, %c0_i32_0 : i32, i32
  }
  func.func @transform_3(%arg0: i32) -> (i32, i32) {
    %c0_i32 = arith.constant 0 : i32
    %c0_i32_0 = arith.constant 0 : i32
    %c0_i32_1 = arith.constant 0 : i32
    return %c0_i32, %c0_i32_0 : i32, i32
  }
  func.func @transform_4(%arg0: i32) -> (i32, i32) {
    %c0_i32 = arith.constant 0 : i32
    %c0_i32_0 = arith.constant 0 : i32
    return %arg0, %c0_i32 : i32, i32
  }
  func.func @transform_5(%arg0: i32) -> (i32, i32) {
    %c0_i32 = arith.constant 0 : i32
    %c0_i32_0 = arith.constant 0 : i32
    %c0_i32_1 = arith.constant 0 : i32
    return %c0_i32, %c0_i32_0 : i32, i32
  }
  func.func @transform_6(%arg0: i32) -> (i32, i32) {
    %c0_i32 = arith.constant 0 : i32
    %c0_i32_0 = arith.constant 0 : i32
    %c0_i32_1 = arith.constant 0 : i32
    return %c0_i32, %c0_i32_0 : i32, i32
  }
  func.func @transform_7(%arg0: i32) -> (i32, i32) {
    %c0_i32 = arith.constant 0 : i32
    %c0_i32_0 = arith.constant 0 : i32
    %c0_i32_1 = arith.constant 0 : i32
    return %c0_i32, %c0_i32_0 : i32, i32
  }
  func.func @transform_8(%arg0: i32) -> (i32, i32) {
    %c0_i32 = arith.constant 0 : i32
    %c0_i32_0 = arith.constant 0 : i32
    return %arg0, %c0_i32 : i32, i32
  }
}

</mosaic_0001>

<llo_original>
// kernel: bottleneck_forward.3
$region0: #{bottleneck_forward.3}
  #allocation0 [shape = 'u32[]', space=smem, size = 0x4, offset = 0x4, fixed_abs, tag = 'smem constant byte address 0x4 - core index']
  #allocation1 [shape = 'u32[144,128]{1,0:T(1,128)}', space=vmem, size = 0x12000, scoped, tag = 'internal scratch']
  %s0 = inlined_call_operand.vmem [shape: bf16[512,128], index: 0, kind: input, shape index: {}]
  %s1 = inlined_call_operand.vmem [shape: bf16[128,128], index: 1, kind: input, shape index: {}]
  %s2 = inlined_call_operand.vmem [shape: f32[1,128], index: 2, kind: input, shape index: {}]
  %s3 = inlined_call_operand.vmem [shape: f32[1,128], index: 3, kind: input, shape index: {}]
  %s4 = inlined_call_operand.vmem [shape: bf16[512,128], index: 4, kind: output, shape index: {}]
  %s5 = sld [smem:[#allocation0]]
  $region49: #{bottleneck_forward.3} parent=0
    _
  %s7 = ssub.s32 1, %s5
  %s8 = scalar_select 0, %s7, %s5
  loop: start=0, step=1, limit=4
  $region2: #{bottleneck_forward.3} parent=0 // loop_pre_header
    _
  $region3: #{bottleneck_forward.3} parent=0 // loop_header
    %s10 = sphi 0, %s14
    %p11 = scmp.ge.s32.totalorder %s10, 4
    %s20 = sphi 0, %s22
    %s23 = sphi 0, %s20
    %s24 = sphi 0, %s23
    %s40 = sphi 0, %s24
    %s44 = sphi 0, %s44
    %s46 = sphi 0, %s44
    %s47 = sphi 0, %s46
    %s61 = sphi 0, %s47
    %s65 = sphi 0, %s65
    %s67 = sphi 0, %s65
    %s68 = sphi 0, %s67
    %s82 = sphi 0, %s68
    %s86 = sphi 0, %s86
    %s88 = sphi 0, %s86
    %s89 = sphi 0, %s88
    %s103 = sphi 0, %s89
    %s109 = sphi 0, %s111
    %s112 = sphi 0, %s109
    %s113 = sphi 0, %s112
    %s129 = sphi 0, %s113
  $region4: #{bottleneck_forward.3} parent=0 // loop_header_branch
    %13 = sbr.rel (%p11) target = $region8
  $region5: #{bottleneck_forward.3} parent=0 // loop_body
    %s15 = ssub.s32 %s10, 1
    %s16 = ssub.s32 %s10, 2
    %s17 = sadd.s32 %s10, 1
    %s18 = ssub.s32 %s10, %s17
    %p19 = scmp.eq.s32.totalorder %s18, 0
    %s21 = sadd.s32 %s20, 1
    %s22 = scalar_select %p19, %s20, %s21
    %p25 = pneg %p19
    %p26 = scmp.eq.s32.totalorder %s10, 1
    %p27 = por %p25, %p26
    %p28 = scmp.ne.s32.totalorder %s20, %s23
    %p29 = scmp.eq.s32.totalorder %s10, 0
    %p30 = por %p28, %p29
    %p31 = scmp.ne.s32.totalorder %s20, %s23
    %p32 = scmp.eq.s32.totalorder %s15, 1
    %p33 = por %p31, %p32
    %p34 = scmp.ne.s32.totalorder %s23, %s24
    %p35 = scmp.eq.s32.totalorder %s15, 0
    %p36 = por %p34, %p35
    %p37 = scmp.ne.s32.totalorder %s23, %s24
    %p38 = scmp.eq.s32.totalorder %s16, 1
    %p39 = por %p37, %p38
    %p41 = scmp.ne.s32.totalorder %s24, %s40
    %p42 = scmp.eq.s32.totalorder %s16, 0
    %p43 = por %p41, %p42
    %s45 = sadd.s32 %s44, 1
    %p48 = scmp.eq.s32.totalorder %s10, 1
    %p49 = scmp.ne.s32.totalorder %s44, %s46
    %p50 = scmp.eq.s32.totalorder %s10, 0
    %p51 = por %p49, %p50
    %p52 = scmp.ne.s32.totalorder %s44, %s46
    %p53 = scmp.eq.s32.totalorder %s15, 1
    %p54 = por %p52, %p53
    %p55 = scmp.ne.s32.totalorder %s46, %s47
    %p56 = scmp.eq.s32.totalorder %s15, 0
    %p57 = por %p55, %p56
    %p58 = scmp.ne.s32.totalorder %s46, %s47
    %p59 = scmp.eq.s32.totalorder %s16, 1
    %p60 = por %p58, %p59
    %p62 = scmp.ne.s32.totalorder %s47, %s61
    %p63 = scmp.eq.s32.totalorder %s16, 0
    %p64 = por %p62, %p63
    %s66 = sadd.s32 %s65, 1
    %p69 = scmp.eq.s32.totalorder %s10, 1
    %p70 = scmp.ne.s32.totalorder %s65, %s67
    %p71 = scmp.eq.s32.totalorder %s10, 0
    %p72 = por %p70, %p71
    %p73 = scmp.ne.s32.totalorder %s65, %s67
    %p74 = scmp.eq.s32.totalorder %s15, 1
    %p75 = por %p73, %p74
    %p76 = scmp.ne.s32.totalorder %s67, %s68
    %p77 = scmp.eq.s32.totalorder %s15, 0
    %p78 = por %p76, %p77
    %p79 = scmp.ne.s32.totalorder %s67, %s68
    %p80 = scmp.eq.s32.totalorder %s16, 1
    %p81 = por %p79, %p80
    %p83 = scmp.ne.s32.totalorder %s68, %s82
    %p84 = scmp.eq.s32.totalorder %s16, 0
    %p85 = por %p83, %p84
    %s87 = sadd.s32 %s86, 1
    %p90 = scmp.eq.s32.totalorder %s10, 1
    %p91 = scmp.ne.s32.totalorder %s86, %s88
    %p92 = scmp.eq.s32.totalorder %s10, 0
    %p93 = por %p91, %p92
    %p94 = scmp.ne.s32.totalorder %s86, %s88
    %p95 = scmp.eq.s32.totalorder %s15, 1
    %p96 = por %p94, %p95
    %p97 = scmp.ne.s32.totalorder %s88, %s89
    %p98 = scmp.eq.s32.totalorder %s15, 0
    %p99 = por %p97, %p98
    %p100 = scmp.ne.s32.totalorder %s88, %s89
    %p101 = scmp.eq.s32.totalorder %s16, 1
    %p102 = por %p100, %p101
    %p104 = scmp.ne.s32.totalorder %s89, %s103
    %p105 = scmp.eq.s32.totalorder %s16, 0
    %p106 = por %p104, %p105
    %s107 = ssub.s32 %s10, %s17
    %p108 = scmp.eq.s32.totalorder %s107, 0
    %s110 = sadd.s32 %s109, 1
    %s111 = scalar_select %p108, %s109, %s110
    %p114 = pneg %p108
    %p115 = scmp.eq.s32.totalorder %s10, 1
    %p116 = por %p114, %p115
    %p117 = scmp.ne.s32.totalorder %s109, %s112
    %p118 = scmp.eq.s32.totalorder %s10, 0
    %p119 = por %p117, %p118
    %p120 = scmp.ne.s32.totalorder %s109, %s112
    %p121 = scmp.eq.s32.totalorder %s15, 1
    %p122 = por %p120, %p121
    %p123 = scmp.ne.s32.totalorder %s112, %s113
    %p124 = scmp.eq.s32.totalorder %s15, 0
    %p125 = por %p123, %p124
    %p126 = scmp.ne.s32.totalorder %s112, %s113
    %p127 = scmp.eq.s32.totalorder %s16, 1
    %p128 = por %p126, %p127
    %p130 = scmp.ne.s32.totalorder %s113, %s129
    %p131 = scmp.eq.s32.totalorder %s16, 0
    %p132 = por %p130, %p131
    %p133 = scmp.le.s32.totalorder 1, %s10
    %p134 = scmp.lt.s32.totalorder %s10, 3
    %p135 = pnand %p133, %p134
    %p136 = pneg %p135
    // Predicated region
    $region9: #{bottleneck_forward.3} parent=5 // pred_check
      _
    $region10: #{bottleneck_forward.3} parent=5 // pred_check_branch
      %138 = sbr.rel (%p135) target = $region12
    $region11: #{bottleneck_forward.3} parent=5 // pred_region
      %s139 = ssub.s32 %s10, 1
      // Predicated region
      $region13: #{bottleneck_forward.3} parent=11 // pred_check
        %p140 = pneg %p57
      $region14: #{bottleneck_forward.3} parent=11 // pred_check_branch
        %142 = sbr.rel (%p140) target = $region16
      $region15: #{bottleneck_forward.3} parent=11 // pred_region
        _
      $region16: #{bottleneck_forward.3} parent=11 // pred_fallthru
        _
      // Predicated region
      $region17: #{bottleneck_forward.3} parent=11 // pred_check
        %p143 = pneg %p78
      $region18: #{bottleneck_forward.3} parent=11 // pred_check_branch
        %145 = sbr.rel (%p143) target = $region20
      $region19: #{bottleneck_forward.3} parent=11 // pred_region
        _
      $region20: #{bottleneck_forward.3} parent=11 // pred_fallthru
        _
      // Predicated region
      $region21: #{bottleneck_forward.3} parent=11 // pred_check
        %p146 = pneg %p99
      $region22: #{bottleneck_forward.3} parent=11 // pred_check_branch
        %148 = sbr.rel (%p146) target = $region24
      $region23: #{bottleneck_forward.3} parent=11 // pred_region
        _
      $region24: #{bottleneck_forward.3} parent=11 // pred_fallthru
        _
    $region12: #{bottleneck_forward.3} parent=5 // pred_fallthru
      _
    %p149 = scmp.lt.s32.totalorder %s10, 2
    // Predicated region
    $region25: #{bottleneck_forward.3} parent=5 // pred_check
      %p150 = pneg %p149
    $region26: #{bottleneck_forward.3} parent=5 // pred_check_branch
      %152 = sbr.rel (%p150) target = $region28
    $region27: #{bottleneck_forward.3} parent=5 // pred_region
      // Predicated region
      $region29: #{bottleneck_forward.3} parent=27 // pred_check
        %p153 = pneg %p30
      $region30: #{bottleneck_forward.3} parent=27 // pred_check_branch
        %155 = sbr.rel (%p153) target = $region32
      $region31: #{bottleneck_forward.3} parent=27 // pred_region
        %s156 = smul.u32 32, %s10
        %p157 = scmp.lt.s32.totalorder %s156, 63
        %s158 = scalar_select %p157, %s156, 63
        %s159 = smul.addr %s158, 4
        %s160 = scalar_lea.vmem %s0, %s159
        %s161 = smul.u32 32, %s10
      $region32: #{bottleneck_forward.3} parent=27 // pred_fallthru
        _
    $region28: #{bottleneck_forward.3} parent=5 // pred_fallthru
      _
    %p162 = scmp.le.s32.totalorder 1, %s10
    %p163 = scmp.lt.s32.totalorder %s10, 3
    %p164 = pnand %p162, %p163
    %p165 = pneg %p164
    // Predicated region
    $region33: #{bottleneck_forward.3} parent=5 // pred_check
      _
    $region34: #{bottleneck_forward.3} parent=5 // pred_check_branch
      %167 = sbr.rel (%p164) target = $region36
    $region35: #{bottleneck_forward.3} parent=5 // pred_region
      %s168 = ssub.s32 %s10, 1
      %s169 = smul.u32 32, %s15
      %p170 = scmp.lt.s32.totalorder %s169, 63
      %s171 = scalar_select %p170, %s169, 63
      %s172 = smul.addr %s171, 4
      %s173 = scalar_lea.vmem %s0, %s172
      %p174 = pneg %p36
      %p175 = pneg %p33
      %p176 = pneg %p57
      %p177 = pneg %p54
      %p178 = pneg %p78
      %p179 = pneg %p75
      %p180 = pneg %p99
      %p181 = pneg %p96
      %p182 = pneg %p125
      %p183 = pneg %p122
      %s184 = smul.u32 32, %s15
      %p185 = scmp.lt.s32.totalorder %s184, 63
      %s186 = scalar_select %p185, %s184, 63
      %s187 = smul.addr %s186, 4
      %s188 = scalar_lea.vmem %s4, %s187
      %s189 = smul.u32 32, %s15
      %p190 = scmp.lt.s32.totalorder %s189, 63
      %s191 = scalar_select %p190, %s189, 63
      %s192 = smul.addr %s191, 4
      %s193 = scalar_lea.vmem %s0, %s192
      %s194 = smul.u32 32, %s15
      %s195 = smul.u32 32, %s15
      %p196 = scmp.lt.s32.totalorder %s195, 63
      %s197 = scalar_select %p196, %s195, 63
      %s198 = smul.addr %s197, 4
      %s199 = scalar_lea.vmem %s4, %s198
      %s200 = smul.u32 32, %s15
      %v202 = vld [vmem:[%s193] sm:$0xf]
      %v203 = vld [vmem:[%s193 + $0x4] sm:$0xf]
      %v204 = vld [vmem:[%s193 + $0x8] sm:$0xf]
      %v205 = vld [vmem:[%s193 + $0xc] sm:$0xf]
      %v206 = vld [vmem:[%s193 + $0x10] sm:$0xf]
      %v207 = vld [vmem:[%s193 + $0x14] sm:$0xf]
      %v208 = vld [vmem:[%s193 + $0x18] sm:$0xf]
      %v209 = vld [vmem:[%s193 + $0x1c] sm:$0xf]
      %v210 = vld [vmem:[%s193 + $0x20] sm:$0xf]
      %v211 = vld [vmem:[%s193 + $0x24] sm:$0xf]
      %v212 = vld [vmem:[%s193 + $0x28] sm:$0xf]
      %v213 = vld [vmem:[%s193 + $0x2c] sm:$0xf]
      %v214 = vld [vmem:[%s193 + $0x30] sm:$0xf]
      %v215 = vld [vmem:[%s193 + $0x34] sm:$0xf]
      %v216 = vld [vmem:[%s193 + $0x38] sm:$0xf]
      %v217 = vld [vmem:[%s193 + $0x3c] sm:$0xf]
      %v218 = vld [vmem:[%s193 + $0x40] sm:$0xf]
      %v219 = vld [vmem:[%s193 + $0x44] sm:$0xf]
      %v220 = vld [vmem:[%s193 + $0x48] sm:$0xf]
      %v221 = vld [vmem:[%s193 + $0x4c] sm:$0xf]
      %v222 = vld [vmem:[%s193 + $0x50] sm:$0xf]
      %v223 = vld [vmem:[%s193 + $0x54] sm:$0xf]
      %v224 = vld [vmem:[%s193 + $0x58] sm:$0xf]
      %v225 = vld [vmem:[%s193 + $0x5c] sm:$0xf]
      %v226 = vld [vmem:[%s193 + $0x60] sm:$0xf]
      %v227 = vld [vmem:[%s193 + $0x64] sm:$0xf]
      %v228 = vld [vmem:[%s193 + $0x68] sm:$0xf]
      %v229 = vld [vmem:[%s193 + $0x6c] sm:$0xf]
      %v230 = vld [vmem:[%s193 + $0x70] sm:$0xf]
      %v231 = vld [vmem:[%s193 + $0x74] sm:$0xf]
      %v232 = vld [vmem:[%s193 + $0x78] sm:$0xf]
      %v233 = vld [vmem:[%s193 + $0x7c] sm:$0xf]
      %v234 = vld [vmem:[%s1] sm:$0xf]
      %v235 = vld [vmem:[%s1 + $0x4] sm:$0xf]
      %v236 = vld [vmem:[%s1 + $0x8] sm:$0xf]
      %v237 = vld [vmem:[%s1 + $0xc] sm:$0xf]
      %v238 = vld [vmem:[%s1 + $0x10] sm:$0xf]
      %v239 = vld [vmem:[%s1 + $0x14] sm:$0xf]
      %v240 = vld [vmem:[%s1 + $0x18] sm:$0xf]
      %v241 = vld [vmem:[%s1 + $0x1c] sm:$0xf]
      %v242 = vld [vmem:[%s1 + $0x20] sm:$0xf]
      %v243 = vld [vmem:[%s1 + $0x24] sm:$0xf]
      %v244 = vld [vmem:[%s1 + $0x28] sm:$0xf]
      %v245 = vld [vmem:[%s1 + $0x2c] sm:$0xf]
      %v246 = vld [vmem:[%s1 + $0x30] sm:$0xf]
      %v247 = vld [vmem:[%s1 + $0x34] sm:$0xf]
      %v248 = vld [vmem:[%s1 + $0x38] sm:$0xf]
      %v249 = vld [vmem:[%s1 + $0x3c] sm:$0xf]
      %v282 = vunpack.c.l.b16 %v202
      %v283 = vunpack.c.l.b16 %v203
      %v284 = vunpack.c.l.b16 %v204
      %v285 = vunpack.c.l.b16 %v205
      %v286 = vunpack.c.l.b16 %v206
      %v287 = vunpack.c.l.b16 %v207
      %v288 = vunpack.c.l.b16 %v208
      %v289 = vunpack.c.l.b16 %v209
      %v290 = vunpack.c.l.b16 %v210
      %v291 = vunpack.c.l.b16 %v211
      %v292 = vunpack.c.l.b16 %v212
      %v293 = vunpack.c.l.b16 %v213
      %v294 = vunpack.c.l.b16 %v214
      %v295 = vunpack.c.l.b16 %v215
      %v296 = vunpack.c.l.b16 %v216
      %v297 = vunpack.c.l.b16 %v217
      %v298 = vunpack.c.l.b16 %v218
      %v299 = vunpack.c.l.b16 %v219
      %v300 = vunpack.c.l.b16 %v220
      %v301 = vunpack.c.l.b16 %v221
      %v302 = vunpack.c.l.b16 %v222
      %v303 = vunpack.c.l.b16 %v223
      %v304 = vunpack.c.l.b16 %v224
      %v305 = vunpack.c.l.b16 %v225
      %v306 = vunpack.c.l.b16 %v226
      %v307 = vunpack.c.l.b16 %v227
      %v308 = vunpack.c.l.b16 %v228
      %v309 = vunpack.c.l.b16 %v229
      %v310 = vunpack.c.l.b16 %v230
      %v311 = vunpack.c.l.b16 %v231
      %v312 = vunpack.c.l.b16 %v232
      %v313 = vunpack.c.l.b16 %v233
      %v314 = vpack.c.b16 %v283, %v282
      %v315 = vpack.c.b16 %v285, %v284
      %v316 = vpack.c.b16 %v287, %v286
      %v317 = vpack.c.b16 %v289, %v288
      %v318 = vpack.c.b16 %v291, %v290
      %v319 = vpack.c.b16 %v293, %v292
      %v320 = vpack.c.b16 %v295, %v294
      %v321 = vpack.c.b16 %v297, %v296
      %v322 = vpack.c.b16 %v299, %v298
      %v323 = vpack.c.b16 %v301, %v300
      %v324 = vpack.c.b16 %v303, %v302
      %v325 = vpack.c.b16 %v305, %v304
      %v326 = vpack.c.b16 %v307, %v306
      %v327 = vpack.c.b16 %v309, %v308
      %v328 = vpack.c.b16 %v311, %v310
      %v329 = vpack.c.b16 %v313, %v312
      %v362 = vunpack.c.l.b16 %v234
      %v363 = vunpack.c.l.b16 %v235
      %v364 = vunpack.c.l.b16 %v236
      %v365 = vunpack.c.l.b16 %v237
      %v366 = vunpack.c.l.b16 %v238
      %v367 = vunpack.c.l.b16 %v239
      %v368 = vunpack.c.l.b16 %v240
      %v369 = vunpack.c.l.b16 %v241
      %v370 = vunpack.c.l.b16 %v242
      %v371 = vunpack.c.l.b16 %v243
      %v372 = vunpack.c.l.b16 %v244
      %v373 = vunpack.c.l.b16 %v245
      %v374 = vunpack.c.l.b16 %v246
      %v375 = vunpack.c.l.b16 %v247
      %v376 = vunpack.c.l.b16 %v248
      %v377 = vunpack.c.l.b16 %v249
      %v378 = vpack.c.b16 %v363, %v362
      %v379 = vpack.c.b16 %v365, %v364
      %v380 = vpack.c.b16 %v367, %v366
      %v381 = vpack.c.b16 %v369, %v368
      %v382 = vpack.c.b16 %v371, %v370
      %v383 = vpack.c.b16 %v373, %v372
      %v384 = vpack.c.b16 %v375, %v374
      %v385 = vpack.c.b16 %v377, %v376
      %394 = vmatprep.subr.bf16.mxu0 0
      %395 = vmatpush1.bf16.msra.mxu0 %v385
      %396 = vmatprep.subr.bf16.mxu0 0
      %397 = vmatpush1.bf16.msra.mxu0 %v384
      %398 = vmatprep.subr.bf16.mxu0 0
      %399 = vmatpush1.bf16.msra.mxu0 %v383
      %400 = vmatprep.subr.bf16.mxu0 0
      %401 = vmatpush1.bf16.msra.mxu0 %v382
      %402 = vmatprep.subr.bf16.mxu0 0
      %403 = vmatpush1.bf16.msra.mxu0 %v381
      %404 = vmatprep.subr.bf16.mxu0 0
      %405 = vmatpush1.bf16.msra.mxu0 %v380
      %406 = vmatprep.subr.bf16.mxu0 0
      %407 = vmatpush1.bf16.msra.mxu0 %v379
      %408 = vmatprep.subr.bf16.mxu0 0
      %409 = vmatpush1.bf16.msra.mxu0 %v378
      %410 = vmatprep.subr.bf16.mxu0 0
      %411 = vmatpush2.bf16.msra.mxu0 0
      %412 = vmatprep.subr.bf16.mxu0 0
      %413 = vmatpush2.bf16.msra.mxu0 0
      %414 = vmatprep.subr.bf16.mxu0 0
      %415 = vmatpush2.bf16.msra.mxu0 0
      %416 = vmatprep.subr.bf16.mxu0 0
      %417 = vmatpush2.bf16.msra.mxu0 0
      %418 = vmatprep.subr.bf16.mxu0 0
      %419 = vmatpush2.bf16.msra.mxu0 0
      %420 = vmatprep.subr.bf16.mxu0 0
      %421 = vmatpush2.bf16.msra.mxu0 0
      %422 = vmatprep.subr.bf16.mxu0 0
      %423 = vmatpush2.bf16.msra.mxu0 0
      %424 = vmatprep.subr.bf16.mxu0 0
      %425 = vmatpush2.bf16.msra.mxu0 0
      %426 = vmatprep.mubr.bf16.mxu0 0
      %427 = vmatmul.mubr.bf16.gmra.mxu0 %v314
      %v428 = vpop.f32.mrf.mxu0
      %v429 = vadd.f32 0.0, %v428
      %v430 = vpop.f32.mrf.mxu0
      %v431 = vpop.f32.mrf.mxu0
      %v432 = vadd.f32 0.0, %v431
      %v433 = vpop.f32.mrf.mxu0
      %434 = vmatprep.mubr.bf16.mxu0 0
      %435 = vmatmul.mubr.bf16.gmra.mxu0 %v315
      %v436 = vpop.f32.mrf.mxu0
      %v437 = vadd.f32 0.0, %v436
      %v438 = vpop.f32.mrf.mxu0
      %v439 = vpop.f32.mrf.mxu0
      %v440 = vadd.f32 0.0, %v439
      %v441 = vpop.f32.mrf.mxu0
      %442 = vmatprep.mubr.bf16.mxu0 0
      %443 = vmatmul.mubr.bf16.gmra.mxu0 %v316
      %v444 = vpop.f32.mrf.mxu0
      %v445 = vadd.f32 0.0, %v444
      %v446 = vpop.f32.mrf.mxu0
      %v447 = vpop.f32.mrf.mxu0
      %v448 = vadd.f32 0.0, %v447
      %v449 = vpop.f32.mrf.mxu0
      %450 = vmatprep.mubr.bf16.mxu0 0
      %451 = vmatmul.mubr.bf16.gmra.mxu0 %v317
      %v452 = vpop.f32.mrf.mxu0
      %v453 = vadd.f32 0.0, %v452
      %v454 = vpop.f32.mrf.mxu0
      %v455 = vpop.f32.mrf.mxu0
      %v456 = vadd.f32 0.0, %v455
      %v457 = vpop.f32.mrf.mxu0
      %458 = vmatprep.mubr.bf16.mxu0 0
      %459 = vmatmul.mubr.bf16.gmra.mxu0 %v318
      %v460 = vpop.f32.mrf.mxu0
      %v461 = vadd.f32 0.0, %v460
      %v462 = vpop.f32.mrf.mxu0
      %v463 = vpop.f32.mrf.mxu0
      %v464 = vadd.f32 0.0, %v463
      %v465 = vpop.f32.mrf.mxu0
      %466 = vmatprep.mubr.bf16.mxu0 0
      %467 = vmatmul.mubr.bf16.gmra.mxu0 %v319
      %v468 = vpop.f32.mrf.mxu0
      %v469 = vadd.f32 0.0, %v468
      %v470 = vpop.f32.mrf.mxu0
      %v471 = vpop.f32.mrf.mxu0
      %v472 = vadd.f32 0.0, %v471
      %v473 = vpop.f32.mrf.mxu0
      %474 = vmatprep.mubr.bf16.mxu0 0
      %475 = vmatmul.mubr.bf16.gmra.mxu0 %v320
      %v476 = vpop.f32.mrf.mxu0
      %v477 = vadd.f32 0.0, %v476
      %v478 = vpop.f32.mrf.mxu0
      %v479 = vpop.f32.mrf.mxu0
      %v480 = vadd.f32 0.0, %v479
      %v481 = vpop.f32.mrf.mxu0
      %482 = vmatprep.mubr.bf16.mxu0 0
      %483 = vmatmul.mubr.bf16.gmra.mxu0 %v321
      %v484 = vpop.f32.mrf.mxu0
      %v485 = vadd.f32 0.0, %v484
      %v486 = vpop.f32.mrf.mxu0
      %v487 = vpop.f32.mrf.mxu0
      %v488 = vadd.f32 0.0, %v487
      %v489 = vpop.f32.mrf.mxu0
      %490 = vmatprep.mubr.bf16.mxu0 0
      %491 = vmatmul.mubr.bf16.gmra.mxu0 %v322
      %v492 = vpop.f32.mrf.mxu0
      %v493 = vadd.f32 0.0, %v492
      %v494 = vpop.f32.mrf.mxu0
      %v495 = vpop.f32.mrf.mxu0
      %v496 = vadd.f32 0.0, %v495
      %v497 = vpop.f32.mrf.mxu0
      %498 = vmatprep.mubr.bf16.mxu0 0
      %499 = vmatmul.mubr.bf16.gmra.mxu0 %v323
      %v500 = vpop.f32.mrf.mxu0
      %v501 = vadd.f32 0.0, %v500
      %v502 = vpop.f32.mrf.mxu0
      %v503 = vpop.f32.mrf.mxu0
      %v504 = vadd.f32 0.0, %v503
      %v505 = vpop.f32.mrf.mxu0
      %506 = vmatprep.mubr.bf16.mxu0 0
      %507 = vmatmul.mubr.bf16.gmra.mxu0 %v324
      %v508 = vpop.f32.mrf.mxu0
      %v509 = vadd.f32 0.0, %v508
      %v510 = vpop.f32.mrf.mxu0
      %v511 = vpop.f32.mrf.mxu0
      %v512 = vadd.f32 0.0, %v511
      %v513 = vpop.f32.mrf.mxu0
      %514 = vmatprep.mubr.bf16.mxu0 0
      %515 = vmatmul.mubr.bf16.gmra.mxu0 %v325
      %v516 = vpop.f32.mrf.mxu0
      %v517 = vadd.f32 0.0, %v516
      %v518 = vpop.f32.mrf.mxu0
      %v519 = vpop.f32.mrf.mxu0
      %v520 = vadd.f32 0.0, %v519
      %v521 = vpop.f32.mrf.mxu0
      %522 = vmatprep.mubr.bf16.mxu0 0
      %523 = vmatmul.mubr.bf16.gmra.mxu0 %v326
      %v524 = vpop.f32.mrf.mxu0
      %v525 = vadd.f32 0.0, %v524
      %v526 = vpop.f32.mrf.mxu0
      %v527 = vpop.f32.mrf.mxu0
      %v528 = vadd.f32 0.0, %v527
      %v529 = vpop.f32.mrf.mxu0
      %530 = vmatprep.mubr.bf16.mxu0 0
      %531 = vmatmul.mubr.bf16.gmra.mxu0 %v327
      %v532 = vpop.f32.mrf.mxu0
      %v533 = vadd.f32 0.0, %v532
      %v534 = vpop.f32.mrf.mxu0
      %v535 = vpop.f32.mrf.mxu0
      %v536 = vadd.f32 0.0, %v535
      %v537 = vpop.f32.mrf.mxu0
      %538 = vmatprep.mubr.bf16.mxu0 0
      %539 = vmatmul.mubr.bf16.gmra.mxu0 %v328
      %v540 = vpop.f32.mrf.mxu0
      %v541 = vadd.f32 0.0, %v540
      %v542 = vpop.f32.mrf.mxu0
      %v543 = vpop.f32.mrf.mxu0
      %v544 = vadd.f32 0.0, %v543
      %v545 = vpop.f32.mrf.mxu0
      %546 = vmatprep.mubr.bf16.mxu0 0
      %547 = vmatmul.mubr.bf16.gmra.mxu0 %v329
      %v548 = vpop.f32.mrf.mxu0
      %v549 = vadd.f32 0.0, %v548
      %v550 = vpop.f32.mrf.mxu0
      %v551 = vpop.f32.mrf.mxu0
      %v552 = vadd.f32 0.0, %v551
      %v553 = vpop.f32.mrf.mxu0
      %554 = vdwg.mxu0
      %v555 = vld [vmem:[%s2] sm:$0x1]
      %v557 = vlaneseq
      %v558 = vshrl.u32 %v557, 7
      %v559 = vsub.s32 0, %v558
      %v560 = vrot.slane %v555, %v559
      %v562 = vmul.f32 %v429, %v560
      %v563 = vmul.f32 %v432, %v560
      %v564 = vmul.f32 %v437, %v560
      %v565 = vmul.f32 %v440, %v560
      %v566 = vmul.f32 %v445, %v560
      %v567 = vmul.f32 %v448, %v560
      %v568 = vmul.f32 %v453, %v560
      %v569 = vmul.f32 %v456, %v560
      %v570 = vmul.f32 %v461, %v560
      %v571 = vmul.f32 %v464, %v560
      %v572 = vmul.f32 %v469, %v560
      %v573 = vmul.f32 %v472, %v560
      %v574 = vmul.f32 %v477, %v560
      %v575 = vmul.f32 %v480, %v560
      %v576 = vmul.f32 %v485, %v560
      %v577 = vmul.f32 %v488, %v560
      %v578 = vmul.f32 %v493, %v560
      %v579 = vmul.f32 %v496, %v560
      %v580 = vmul.f32 %v501, %v560
      %v581 = vmul.f32 %v504, %v560
      %v582 = vmul.f32 %v509, %v560
      %v583 = vmul.f32 %v512, %v560
      %v584 = vmul.f32 %v517, %v560
      %v585 = vmul.f32 %v520, %v560
      %v586 = vmul.f32 %v525, %v560
      %v587 = vmul.f32 %v528, %v560
      %v588 = vmul.f32 %v533, %v560
      %v589 = vmul.f32 %v536, %v560
      %v590 = vmul.f32 %v541, %v560
      %v591 = vmul.f32 %v544, %v560
      %v592 = vmul.f32 %v549, %v560
      %v593 = vmul.f32 %v552, %v560
      %v594 = vld [vmem:[%s3] sm:$0x1]
      %v596 = vlaneseq
      %v597 = vshrl.u32 %v596, 7
      %v598 = vsub.s32 0, %v597
      %v599 = vrot.slane %v594, %v598
      %v601 = vadd.f32 %v562, %v599
      %v602 = vadd.f32 %v563, %v599
      %v603 = vadd.f32 %v564, %v599
      %v604 = vadd.f32 %v565, %v599
      %v605 = vadd.f32 %v566, %v599
      %v606 = vadd.f32 %v567, %v599
      %v607 = vadd.f32 %v568, %v599
      %v608 = vadd.f32 %v569, %v599
      %v609 = vadd.f32 %v570, %v599
      %v610 = vadd.f32 %v571, %v599
      %v611 = vadd.f32 %v572, %v599
      %v612 = vadd.f32 %v573, %v599
      %v613 = vadd.f32 %v574, %v599
      %v614 = vadd.f32 %v575, %v599
      %v615 = vadd.f32 %v576, %v599
      %v616 = vadd.f32 %v577, %v599
      %v617 = vadd.f32 %v578, %v599
      %v618 = vadd.f32 %v579, %v599
      %v619 = vadd.f32 %v580, %v599
      %v620 = vadd.f32 %v581, %v599
      %v621 = vadd.f32 %v582, %v599
      %v622 = vadd.f32 %v583, %v599
      %v623 = vadd.f32 %v584, %v599
      %v624 = vadd.f32 %v585, %v599
      %v625 = vadd.f32 %v586, %v599
      %v626 = vadd.f32 %v587, %v599
      %v627 = vadd.f32 %v588, %v599
      %v628 = vadd.f32 %v589, %v599
      %v629 = vadd.f32 %v590, %v599
      %v630 = vadd.f32 %v591, %v599
      %v631 = vadd.f32 %v592, %v599
      %v632 = vadd.f32 %v593, %v599
      %v633 = vmax.f32 %v601, 0.0
      %v634 = vmax.f32 %v602, 0.0
      %v635 = vmax.f32 %v603, 0.0
      %v636 = vmax.f32 %v604, 0.0
      %v637 = vmax.f32 %v605, 0.0
      %v638 = vmax.f32 %v606, 0.0
      %v639 = vmax.f32 %v607, 0.0
      %v640 = vmax.f32 %v608, 0.0
      %v641 = vmax.f32 %v609, 0.0
      %v642 = vmax.f32 %v610, 0.0
      %v643 = vmax.f32 %v611, 0.0
      %v644 = vmax.f32 %v612, 0.0
      %v645 = vmax.f32 %v613, 0.0
      %v646 = vmax.f32 %v614, 0.0
      %v647 = vmax.f32 %v615, 0.0
      %v648 = vmax.f32 %v616, 0.0
      %v649 = vmax.f32 %v617, 0.0
      %v650 = vmax.f32 %v618, 0.0
      %v651 = vmax.f32 %v619, 0.0
      %v652 = vmax.f32 %v620, 0.0
      %v653 = vmax.f32 %v621, 0.0
      %v654 = vmax.f32 %v622, 0.0
      %v655 = vmax.f32 %v623, 0.0
      %v656 = vmax.f32 %v624, 0.0
      %v657 = vmax.f32 %v625, 0.0
      %v658 = vmax.f32 %v626, 0.0
      %v659 = vmax.f32 %v627, 0.0
      %v660 = vmax.f32 %v628, 0.0
      %v661 = vmax.f32 %v629, 0.0
      %v662 = vmax.f32 %v630, 0.0
      %v663 = vmax.f32 %v631, 0.0
      %v664 = vmax.f32 %v632, 0.0
      %v665 = vpack.c.bf16 %v634, %v633
      %v666 = vpack.c.bf16 %v636, %v635
      %v667 = vpack.c.bf16 %v638, %v637
      %v668 = vpack.c.bf16 %v640, %v639
      %v669 = vpack.c.bf16 %v642, %v641
      %v670 = vpack.c.bf16 %v644, %v643
      %v671 = vpack.c.bf16 %v646, %v645
      %v672 = vpack.c.bf16 %v648, %v647
      %v673 = vpack.c.bf16 %v650, %v649
      %v674 = vpack.c.bf16 %v652, %v651
      %v675 = vpack.c.bf16 %v654, %v653
      %v676 = vpack.c.bf16 %v656, %v655
      %v677 = vpack.c.bf16 %v658, %v657
      %v678 = vpack.c.bf16 %v660, %v659
      %v679 = vpack.c.bf16 %v662, %v661
      %v680 = vpack.c.bf16 %v664, %v663
      %v697 = vunpack.c.l.b16 %v665
      %v698 = vunpack.c.h.b16 %v665
      %v699 = vunpack.c.l.b16 %v666
      %v700 = vunpack.c.h.b16 %v666
      %v701 = vunpack.c.l.b16 %v667
      %v702 = vunpack.c.h.b16 %v667
      %v703 = vunpack.c.l.b16 %v668
      %v704 = vunpack.c.h.b16 %v668
      %v705 = vunpack.c.l.b16 %v669
      %v706 = vunpack.c.h.b16 %v669
      %v707 = vunpack.c.l.b16 %v670
      %v708 = vunpack.c.h.b16 %v670
      %v709 = vunpack.c.l.b16 %v671
      %v710 = vunpack.c.h.b16 %v671
      %v711 = vunpack.c.l.b16 %v672
      %v712 = vunpack.c.h.b16 %v672
      %v713 = vunpack.c.l.b16 %v673
      %v714 = vunpack.c.h.b16 %v673
      %v715 = vunpack.c.l.b16 %v674
      %v716 = vunpack.c.h.b16 %v674
      %v717 = vunpack.c.l.b16 %v675
      %v718 = vunpack.c.h.b16 %v675
      %v719 = vunpack.c.l.b16 %v676
      %v720 = vunpack.c.h.b16 %v676
      %v721 = vunpack.c.l.b16 %v677
      %v722 = vunpack.c.h.b16 %v677
      %v723 = vunpack.c.l.b16 %v678
      %v724 = vunpack.c.h.b16 %v678
      %v725 = vunpack.c.l.b16 %v679
      %v726 = vunpack.c.h.b16 %v679
      %v727 = vunpack.c.l.b16 %v680
      %v728 = vunpack.c.h.b16 %v680
      %v729 = vpack.c.b16 %v697, %v697
      %v730 = vpack.c.b16 %v698, %v698
      %v731 = vpack.c.b16 %v699, %v699
      %v732 = vpack.c.b16 %v700, %v700
      %v733 = vpack.c.b16 %v701, %v701
      %v734 = vpack.c.b16 %v702, %v702
      %v735 = vpack.c.b16 %v703, %v703
      %v736 = vpack.c.b16 %v704, %v704
      %v737 = vpack.c.b16 %v705, %v705
      %v738 = vpack.c.b16 %v706, %v706
      %v739 = vpack.c.b16 %v707, %v707
      %v740 = vpack.c.b16 %v708, %v708
      %v741 = vpack.c.b16 %v709, %v709
      %v742 = vpack.c.b16 %v710, %v710
      %v743 = vpack.c.b16 %v711, %v711
      %v744 = vpack.c.b16 %v712, %v712
      %v745 = vpack.c.b16 %v713, %v713
      %v746 = vpack.c.b16 %v714, %v714
      %v747 = vpack.c.b16 %v715, %v715
      %v748 = vpack.c.b16 %v716, %v716
      %v749 = vpack.c.b16 %v717, %v717
      %v750 = vpack.c.b16 %v718, %v718
      %v751 = vpack.c.b16 %v719, %v719
      %v752 = vpack.c.b16 %v720, %v720
      %v753 = vpack.c.b16 %v721, %v721
      %v754 = vpack.c.b16 %v722, %v722
      %v755 = vpack.c.b16 %v723, %v723
      %v756 = vpack.c.b16 %v724, %v724
      %v757 = vpack.c.b16 %v725, %v725
      %v758 = vpack.c.b16 %v726, %v726
      %v759 = vpack.c.b16 %v727, %v727
      %v760 = vpack.c.b16 %v728, %v728
      %793 = vst [vmem:[%s199] sm:$0xf] %v729
      %794 = vst [vmem:[%s199 + $0x4] sm:$0xf] %v730
      %795 = vst [vmem:[%s199 + $0x8] sm:$0xf] %v731
      %796 = vst [vmem:[%s199 + $0xc] sm:$0xf] %v732
      %797 = vst [vmem:[%s199 + $0x10] sm:$0xf] %v733
      %798 = vst [vmem:[%s199 + $0x14] sm:$0xf] %v734
      %799 = vst [vmem:[%s199 + $0x18] sm:$0xf] %v735
      %800 = vst [vmem:[%s199 + $0x1c] sm:$0xf] %v736
      %801 = vst [vmem:[%s199 + $0x20] sm:$0xf] %v737
      %802 = vst [vmem:[%s199 + $0x24] sm:$0xf] %v738
      %803 = vst [vmem:[%s199 + $0x28] sm:$0xf] %v739
      %804 = vst [vmem:[%s199 + $0x2c] sm:$0xf] %v740
      %805 = vst [vmem:[%s199 + $0x30] sm:$0xf] %v741
      %806 = vst [vmem:[%s199 + $0x34] sm:$0xf] %v742
      %807 = vst [vmem:[%s199 + $0x38] sm:$0xf] %v743
      %808 = vst [vmem:[%s199 + $0x3c] sm:$0xf] %v744
      %809 = vst [vmem:[%s199 + $0x40] sm:$0xf] %v745
      %810 = vst [vmem:[%s199 + $0x44] sm:$0xf] %v746
      %811 = vst [vmem:[%s199 + $0x48] sm:$0xf] %v747
      %812 = vst [vmem:[%s199 + $0x4c] sm:$0xf] %v748
      %813 = vst [vmem:[%s199 + $0x50] sm:$0xf] %v749
      %814 = vst [vmem:[%s199 + $0x54] sm:$0xf] %v750
      %815 = vst [vmem:[%s199 + $0x58] sm:$0xf] %v751
      %816 = vst [vmem:[%s199 + $0x5c] sm:$0xf] %v752
      %817 = vst [vmem:[%s199 + $0x60] sm:$0xf] %v753
      %818 = vst [vmem:[%s199 + $0x64] sm:$0xf] %v754
      %819 = vst [vmem:[%s199 + $0x68] sm:$0xf] %v755
      %820 = vst [vmem:[%s199 + $0x6c] sm:$0xf] %v756
      %821 = vst [vmem:[%s199 + $0x70] sm:$0xf] %v757
      %822 = vst [vmem:[%s199 + $0x74] sm:$0xf] %v758
      %823 = vst [vmem:[%s199 + $0x78] sm:$0xf] %v759
      %824 = vst [vmem:[%s199 + $0x7c] sm:$0xf] %v760
      %s825 = smul.u32 32, %s15
      %p826 = scmp.lt.s32.totalorder %s825, 63
      %s827 = scalar_select %p826, %s825, 63
      %s828 = smul.addr %s827, 4
      %s829 = scalar_lea.vmem %s4, %s828
      // Predicated region
      $region37: #{bottleneck_forward.3} parent=35 // pred_check
        %p830 = pneg %p122
      $region38: #{bottleneck_forward.3} parent=35 // pred_check_branch
        %832 = sbr.rel (%p830) target = $region40
      $region39: #{bottleneck_forward.3} parent=35 // pred_region
        %s833 = smul.u32 32, %s15
      $region40: #{bottleneck_forward.3} parent=35 // pred_fallthru
        _
    $region36: #{bottleneck_forward.3} parent=5 // pred_fallthru
      _
    %p834 = scmp.le.s32.totalorder 2, %s10
    // Predicated region
    $region41: #{bottleneck_forward.3} parent=5 // pred_check
      %p835 = pneg %p834
    $region42: #{bottleneck_forward.3} parent=5 // pred_check_branch
      %837 = sbr.rel (%p835) target = $region44
    $region43: #{bottleneck_forward.3} parent=5 // pred_region
      %s838 = ssub.s32 %s10, 2
      // Predicated region
      $region45: #{bottleneck_forward.3} parent=43 // pred_check
        %p839 = pneg %p128
      $region46: #{bottleneck_forward.3} parent=43 // pred_check_branch
        %841 = sbr.rel (%p839) target = $region48
      $region47: #{bottleneck_forward.3} parent=43 // pred_region
        %s842 = smul.u32 32, %s16
        %p843 = scmp.lt.s32.totalorder %s842, 63
        %s844 = scalar_select %p843, %s842, 63
        %s845 = smul.addr %s844, 4
        %s846 = scalar_lea.vmem %s4, %s845
      $region48: #{bottleneck_forward.3} parent=43 // pred_fallthru
        _
    $region44: #{bottleneck_forward.3} parent=5 // pred_fallthru
      _
  $region6: #{bottleneck_forward.3} parent=0 // loop_footer
    %s14 = sadd.s32 1, %s10
  $region7: #{bottleneck_forward.3} parent=0 // loop_footer_branch
    %9 = sbr.rel target = $region3
  $region8: #{bottleneck_forward.3} parent=0 // loop_exit
    _

// kernel: bottleneck_forward.5
$region0: #{bottleneck_forward.5}
  #allocation0 [shape = 'u32[]', space=smem, size = 0x4, offset = 0x4, fixed_abs, tag = 'smem constant byte address 0x4 - core index']
  #allocation1 [shape = 'u32[144,128]{1,0:T(1,128)}', space=vmem, size = 0x12000, scoped, tag = 'internal scratch']
  %s0 = inlined_call_operand.vmem [shape: bf16[512,128], index: 0, kind: input, shape index: {}]
  %s1 = inlined_call_operand.vmem [shape: bf16[128,128], index: 1, kind: input, shape index: {}]
  %s2 = inlined_call_operand.vmem [shape: f32[1,128], index: 2, kind: input, shape index: {}]
  %s3 = inlined_call_operand.vmem [shape: f32[1,128], index: 3, kind: input, shape index: {}]
  %s4 = inlined_call_operand.vmem [shape: bf16[512,128], index: 4, kind: input, shape index: {}]
  %s5 = inlined_call_operand.vmem [shape: bf16[128,128], index: 5, kind: input, shape index: {}]
  %s6 = inlined_call_operand.vmem [shape: f32[1,128], index: 6, kind: input, shape index: {}]
  %s7 = inlined_call_operand.vmem [shape: f32[1,128], index: 7, kind: input, shape index: {}]
  %s8 = inlined_call_operand.vmem [shape: bf16[512,128], index: 8, kind: output, shape index: {}]
  %s9 = sld [smem:[#allocation0]]
  $region65: #{bottleneck_forward.5} parent=0
    _
  %s11 = ssub.s32 1, %s9
  %s12 = scalar_select 0, %s11, %s9
  loop: start=0, step=1, limit=4
  $region2: #{bottleneck_forward.5} parent=0 // loop_pre_header
    _
  $region3: #{bottleneck_forward.5} parent=0 // loop_header
    %s14 = sphi 0, %s18
    %p15 = scmp.ge.s32.totalorder %s14, 4
    %s24 = sphi 0, %s26
    %s27 = sphi 0, %s24
    %s28 = sphi 0, %s27
    %s44 = sphi 0, %s28
    %s48 = sphi 0, %s48
    %s50 = sphi 0, %s48
    %s51 = sphi 0, %s50
    %s65 = sphi 0, %s51
    %s69 = sphi 0, %s69
    %s71 = sphi 0, %s69
    %s72 = sphi 0, %s71
    %s86 = sphi 0, %s72
    %s90 = sphi 0, %s90
    %s92 = sphi 0, %s90
    %s93 = sphi 0, %s92
    %s107 = sphi 0, %s93
    %s113 = sphi 0, %s115
    %s116 = sphi 0, %s113
    %s117 = sphi 0, %s116
    %s133 = sphi 0, %s117
    %s137 = sphi 0, %s137
    %s139 = sphi 0, %s137
    %s140 = sphi 0, %s139
    %s154 = sphi 0, %s140
    %s158 = sphi 0, %s158
    %s160 = sphi 0, %s158
    %s161 = sphi 0, %s160
    %s175 = sphi 0, %s161
    %s179 = sphi 0, %s179
    %s181 = sphi 0, %s179
    %s182 = sphi 0, %s181
    %s196 = sphi 0, %s182
    %s202 = sphi 0, %s204
    %s205 = sphi 0, %s202
    %s206 = sphi 0, %s205
    %s222 = sphi 0, %s206
  $region4: #{bottleneck_forward.5} parent=0 // loop_header_branch
    %17 = sbr.rel (%p15) target = $region8
  $region5: #{bottleneck_forward.5} parent=0 // loop_body
    %s19 = ssub.s32 %s14, 1
    %s20 = ssub.s32 %s14, 2
    %s21 = sadd.s32 %s14, 1
    %s22 = ssub.s32 %s14, %s21
    %p23 = scmp.eq.s32.totalorder %s22, 0
    %s25 = sadd.s32 %s24, 1
    %s26 = scalar_select %p23, %s24, %s25
    %p29 = pneg %p23
    %p30 = scmp.eq.s32.totalorder %s14, 1
    %p31 = por %p29, %p30
    %p32 = scmp.ne.s32.totalorder %s24, %s27
    %p33 = scmp.eq.s32.totalorder %s14, 0
    %p34 = por %p32, %p33
    %p35 = scmp.ne.s32.totalorder %s24, %s27
    %p36 = scmp.eq.s32.totalorder %s19, 1
    %p37 = por %p35, %p36
    %p38 = scmp.ne.s32.totalorder %s27, %s28
    %p39 = scmp.eq.s32.totalorder %s19, 0
    %p40 = por %p38, %p39
    %p41 = scmp.ne.s32.totalorder %s27, %s28
    %p42 = scmp.eq.s32.totalorder %s20, 1
    %p43 = por %p41, %p42
    %p45 = scmp.ne.s32.totalorder %s28, %s44
    %p46 = scmp.eq.s32.totalorder %s20, 0
    %p47 = por %p45, %p46
    %s49 = sadd.s32 %s48, 1
    %p52 = scmp.eq.s32.totalorder %s14, 1
    %p53 = scmp.ne.s32.totalorder %s48, %s50
    %p54 = scmp.eq.s32.totalorder %s14, 0
    %p55 = por %p53, %p54
    %p56 = scmp.ne.s32.totalorder %s48, %s50
    %p57 = scmp.eq.s32.totalorder %s19, 1
    %p58 = por %p56, %p57
    %p59 = scmp.ne.s32.totalorder %s50, %s51
    %p60 = scmp.eq.s32.totalorder %s19, 0
    %p61 = por %p59, %p60
    %p62 = scmp.ne.s32.totalorder %s50, %s51
    %p63 = scmp.eq.s32.totalorder %s20, 1
    %p64 = por %p62, %p63
    %p66 = scmp.ne.s32.totalorder %s51, %s65
    %p67 = scmp.eq.s32.totalorder %s20, 0
    %p68 = por %p66, %p67
    %s70 = sadd.s32 %s69, 1
    %p73 = scmp.eq.s32.totalorder %s14, 1
    %p74 = scmp.ne.s32.totalorder %s69, %s71
    %p75 = scmp.eq.s32.totalorder %s14, 0
    %p76 = por %p74, %p75
    %p77 = scmp.ne.s32.totalorder %s69, %s71
    %p78 = scmp.eq.s32.totalorder %s19, 1
    %p79 = por %p77, %p78
    %p80 = scmp.ne.s32.totalorder %s71, %s72
    %p81 = scmp.eq.s32.totalorder %s19, 0
    %p82 = por %p80, %p81
    %p83 = scmp.ne.s32.totalorder %s71, %s72
    %p84 = scmp.eq.s32.totalorder %s20, 1
    %p85 = por %p83, %p84
    %p87 = scmp.ne.s32.totalorder %s72, %s86
    %p88 = scmp.eq.s32.totalorder %s20, 0
    %p89 = por %p87, %p88
    %s91 = sadd.s32 %s90, 1
    %p94 = scmp.eq.s32.totalorder %s14, 1
    %p95 = scmp.ne.s32.totalorder %s90, %s92
    %p96 = scmp.eq.s32.totalorder %s14, 0
    %p97 = por %p95, %p96
    %p98 = scmp.ne.s32.totalorder %s90, %s92
    %p99 = scmp.eq.s32.totalorder %s19, 1
    %p100 = por %p98, %p99
    %p101 = scmp.ne.s32.totalorder %s92, %s93
    %p102 = scmp.eq.s32.totalorder %s19, 0
    %p103 = por %p101, %p102
    %p104 = scmp.ne.s32.totalorder %s92, %s93
    %p105 = scmp.eq.s32.totalorder %s20, 1
    %p106 = por %p104, %p105
    %p108 = scmp.ne.s32.totalorder %s93, %s107
    %p109 = scmp.eq.s32.totalorder %s20, 0
    %p110 = por %p108, %p109
    %s111 = ssub.s32 %s14, %s21
    %p112 = scmp.eq.s32.totalorder %s111, 0
    %s114 = sadd.s32 %s113, 1
    %s115 = scalar_select %p112, %s113, %s114
    %p118 = pneg %p112
    %p119 = scmp.eq.s32.totalorder %s14, 1
    %p120 = por %p118, %p119
    %p121 = scmp.ne.s32.totalorder %s113, %s116
    %p122 = scmp.eq.s32.totalorder %s14, 0
    %p123 = por %p121, %p122
    %p124 = scmp.ne.s32.totalorder %s113, %s116
    %p125 = scmp.eq.s32.totalorder %s19, 1
    %p126 = por %p124, %p125
    %p127 = scmp.ne.s32.totalorder %s116, %s117
    %p128 = scmp.eq.s32.totalorder %s19, 0
    %p129 = por %p127, %p128
    %p130 = scmp.ne.s32.totalorder %s116, %s117
    %p131 = scmp.eq.s32.totalorder %s20, 1
    %p132 = por %p130, %p131
    %p134 = scmp.ne.s32.totalorder %s117, %s133
    %p135 = scmp.eq.s32.totalorder %s20, 0
    %p136 = por %p134, %p135
    %s138 = sadd.s32 %s137, 1
    %p141 = scmp.eq.s32.totalorder %s14, 1
    %p142 = scmp.ne.s32.totalorder %s137, %s139
    %p143 = scmp.eq.s32.totalorder %s14, 0
    %p144 = por %p142, %p143
    %p145 = scmp.ne.s32.totalorder %s137, %s139
    %p146 = scmp.eq.s32.totalorder %s19, 1
    %p147 = por %p145, %p146
    %p148 = scmp.ne.s32.totalorder %s139, %s140
    %p149 = scmp.eq.s32.totalorder %s19, 0
    %p150 = por %p148, %p149
    %p151 = scmp.ne.s32.totalorder %s139, %s140
    %p152 = scmp.eq.s32.totalorder %s20, 1
    %p153 = por %p151, %p152
    %p155 = scmp.ne.s32.totalorder %s140, %s154
    %p156 = scmp.eq.s32.totalorder %s20, 0
    %p157 = por %p155, %p156
    %s159 = sadd.s32 %s158, 1
    %p162 = scmp.eq.s32.totalorder %s14, 1
    %p163 = scmp.ne.s32.totalorder %s158, %s160
    %p164 = scmp.eq.s32.totalorder %s14, 0
    %p165 = por %p163, %p164
    %p166 = scmp.ne.s32.totalorder %s158, %s160
    %p167 = scmp.eq.s32.totalorder %s19, 1
    %p168 = por %p166, %p167
    %p169 = scmp.ne.s32.totalorder %s160, %s161
    %p170 = scmp.eq.s32.totalorder %s19, 0
    %p171 = por %p169, %p170
    %p172 = scmp.ne.s32.totalorder %s160, %s161
    %p173 = scmp.eq.s32.totalorder %s20, 1
    %p174 = por %p172, %p173
    %p176 = scmp.ne.s32.totalorder %s161, %s175
    %p177 = scmp.eq.s32.totalorder %s20, 0
    %p178 = por %p176, %p177
    %s180 = sadd.s32 %s179, 1
    %p183 = scmp.eq.s32.totalorder %s14, 1
    %p184 = scmp.ne.s32.totalorder %s179, %s181
    %p185 = scmp.eq.s32.totalorder %s14, 0
    %p186 = por %p184, %p185
    %p187 = scmp.ne.s32.totalorder %s179, %s181
    %p188 = scmp.eq.s32.totalorder %s19, 1
    %p189 = por %p187, %p188
    %p190 = scmp.ne.s32.totalorder %s181, %s182
    %p191 = scmp.eq.s32.totalorder %s19, 0
    %p192 = por %p190, %p191
    %p193 = scmp.ne.s32.totalorder %s181, %s182
    %p194 = scmp.eq.s32.totalorder %s20, 1
    %p195 = por %p193, %p194
    %p197 = scmp.ne.s32.totalorder %s182, %s196
    %p198 = scmp.eq.s32.totalorder %s20, 0
    %p199 = por %p197, %p198
    %s200 = ssub.s32 %s14, %s21
    %p201 = scmp.eq.s32.totalorder %s200, 0
    %s203 = sadd.s32 %s202, 1
    %s204 = scalar_select %p201, %s202, %s203
    %p207 = pneg %p201
    %p208 = scmp.eq.s32.totalorder %s14, 1
    %p209 = por %p207, %p208
    %p210 = scmp.ne.s32.totalorder %s202, %s205
    %p211 = scmp.eq.s32.totalorder %s14, 0
    %p212 = por %p210, %p211
    %p213 = scmp.ne.s32.totalorder %s202, %s205
    %p214 = scmp.eq.s32.totalorder %s19, 1
    %p215 = por %p213, %p214
    %p216 = scmp.ne.s32.totalorder %s205, %s206
    %p217 = scmp.eq.s32.totalorder %s19, 0
    %p218 = por %p216, %p217
    %p219 = scmp.ne.s32.totalorder %s205, %s206
    %p220 = scmp.eq.s32.totalorder %s20, 1
    %p221 = por %p219, %p220
    %p223 = scmp.ne.s32.totalorder %s206, %s222
    %p224 = scmp.eq.s32.totalorder %s20, 0
    %p225 = por %p223, %p224
    %p226 = scmp.le.s32.totalorder 1, %s14
    %p227 = scmp.lt.s32.totalorder %s14, 3
    %p228 = pnand %p226, %p227
    %p229 = pneg %p228
    // Predicated region
    $region9: #{bottleneck_forward.5} parent=5 // pred_check
      _
    $region10: #{bottleneck_forward.5} parent=5 // pred_check_branch
      %231 = sbr.rel (%p228) target = $region12
    $region11: #{bottleneck_forward.5} parent=5 // pred_region
      %s232 = ssub.s32 %s14, 1
      // Predicated region
      $region13: #{bottleneck_forward.5} parent=11 // pred_check
        %p233 = pneg %p61
      $region14: #{bottleneck_forward.5} parent=11 // pred_check_branch
        %235 = sbr.rel (%p233) target = $region16
      $region15: #{bottleneck_forward.5} parent=11 // pred_region
        _
      $region16: #{bottleneck_forward.5} parent=11 // pred_fallthru
        _
      // Predicated region
      $region17: #{bottleneck_forward.5} parent=11 // pred_check
        %p236 = pneg %p82
      $region18: #{bottleneck_forward.5} parent=11 // pred_check_branch
        %238 = sbr.rel (%p236) target = $region20
      $region19: #{bottleneck_forward.5} parent=11 // pred_region
        _
      $region20: #{bottleneck_forward.5} parent=11 // pred_fallthru
        _
      // Predicated region
      $region21: #{bottleneck_forward.5} parent=11 // pred_check
        %p239 = pneg %p103
      $region22: #{bottleneck_forward.5} parent=11 // pred_check_branch
        %241 = sbr.rel (%p239) target = $region24
      $region23: #{bottleneck_forward.5} parent=11 // pred_region
        _
      $region24: #{bottleneck_forward.5} parent=11 // pred_fallthru
        _
      // Predicated region
      $region25: #{bottleneck_forward.5} parent=11 // pred_check
        %p242 = pneg %p150
      $region26: #{bottleneck_forward.5} parent=11 // pred_check_branch
        %244 = sbr.rel (%p242) target = $region28
      $region27: #{bottleneck_forward.5} parent=11 // pred_region
        _
      $region28: #{bottleneck_forward.5} parent=11 // pred_fallthru
        _
      // Predicated region
      $region29: #{bottleneck_forward.5} parent=11 // pred_check
        %p245 = pneg %p171
      $region30: #{bottleneck_forward.5} parent=11 // pred_check_branch
        %247 = sbr.rel (%p245) target = $region32
      $region31: #{bottleneck_forward.5} parent=11 // pred_region
        _
      $region32: #{bottleneck_forward.5} parent=11 // pred_fallthru
        _
      // Predicated region
      $region33: #{bottleneck_forward.5} parent=11 // pred_check
        %p248 = pneg %p192
      $region34: #{bottleneck_forward.5} parent=11 // pred_check_branch
        %250 = sbr.rel (%p248) target = $region36
      $region35: #{bottleneck_forward.5} parent=11 // pred_region
        _
      $region36: #{bottleneck_forward.5} parent=11 // pred_fallthru
        _
    $region12: #{bottleneck_forward.5} parent=5 // pred_fallthru
      _
    %p251 = scmp.lt.s32.totalorder %s14, 2
    // Predicated region
    $region37: #{bottleneck_forward.5} parent=5 // pred_check
      %p252 = pneg %p251
    $region38: #{bottleneck_forward.5} parent=5 // pred_check_branch
      %254 = sbr.rel (%p252) target = $region40
    $region39: #{bottleneck_forward.5} parent=5 // pred_region
      // Predicated region
      $region41: #{bottleneck_forward.5} parent=39 // pred_check
        %p255 = pneg %p34
      $region42: #{bottleneck_forward.5} parent=39 // pred_check_branch
        %257 = sbr.rel (%p255) target = $region44
      $region43: #{bottleneck_forward.5} parent=39 // pred_region
        %s258 = smul.u32 32, %s14
        %p259 = scmp.lt.s32.totalorder %s258, 63
        %s260 = scalar_select %p259, %s258, 63
        %s261 = smul.addr %s260, 4
        %s262 = scalar_lea.vmem %s0, %s261
        %s263 = smul.u32 32, %s14
      $region44: #{bottleneck_forward.5} parent=39 // pred_fallthru
        _
      // Predicated region
      $region45: #{bottleneck_forward.5} parent=39 // pred_check
        %p264 = pneg %p123
      $region46: #{bottleneck_forward.5} parent=39 // pred_check_branch
        %266 = sbr.rel (%p264) target = $region48
      $region47: #{bottleneck_forward.5} parent=39 // pred_region
        %s267 = smul.u32 32, %s14
        %p268 = scmp.lt.s32.totalorder %s267, 63
        %s269 = scalar_select %p268, %s267, 63
        %s270 = smul.addr %s269, 4
        %s271 = scalar_lea.vmem %s4, %s270
        %s272 = smul.u32 32, %s14
      $region48: #{bottleneck_forward.5} parent=39 // pred_fallthru
        _
    $region40: #{bottleneck_forward.5} parent=5 // pred_fallthru
      _
    %p273 = scmp.le.s32.totalorder 1, %s14
    %p274 = scmp.lt.s32.totalorder %s14, 3
    %p275 = pnand %p273, %p274
    %p276 = pneg %p275
    // Predicated region
    $region49: #{bottleneck_forward.5} parent=5 // pred_check
      _
    $region50: #{bottleneck_forward.5} parent=5 // pred_check_branch
      %278 = sbr.rel (%p275) target = $region52
    $region51: #{bottleneck_forward.5} parent=5 // pred_region
      %s279 = ssub.s32 %s14, 1
      %s280 = smul.u32 32, %s19
      %p281 = scmp.lt.s32.totalorder %s280, 63
      %s282 = scalar_select %p281, %s280, 63
      %s283 = smul.addr %s282, 4
      %s284 = scalar_lea.vmem %s0, %s283
      %p285 = pneg %p40
      %p286 = pneg %p37
      %p287 = pneg %p61
      %p288 = pneg %p58
      %p289 = pneg %p82
      %p290 = pneg %p79
      %p291 = pneg %p103
      %p292 = pneg %p100
      %s293 = smul.u32 32, %s19
      %p294 = scmp.lt.s32.totalorder %s293, 63
      %s295 = scalar_select %p294, %s293, 63
      %s296 = smul.addr %s295, 4
      %s297 = scalar_lea.vmem %s4, %s296
      %p298 = pneg %p129
      %p299 = pneg %p126
      %p300 = pneg %p150
      %p301 = pneg %p147
      %p302 = pneg %p171
      %p303 = pneg %p168
      %p304 = pneg %p192
      %p305 = pneg %p189
      %p306 = pneg %p218
      %p307 = pneg %p215
      %s308 = smul.u32 32, %s19
      %p309 = scmp.lt.s32.totalorder %s308, 63
      %s310 = scalar_select %p309, %s308, 63
      %s311 = smul.addr %s310, 4
      %s312 = scalar_lea.vmem %s8, %s311
      %s313 = smul.u32 32, %s19
      %p314 = scmp.lt.s32.totalorder %s313, 63
      %s315 = scalar_select %p314, %s313, 63
      %s316 = smul.addr %s315, 4
      %s317 = scalar_lea.vmem %s0, %s316
      %s318 = smul.u32 32, %s19
      %s319 = smul.u32 32, %s19
      %p320 = scmp.lt.s32.totalorder %s319, 63
      %s321 = scalar_select %p320, %s319, 63
      %s322 = smul.addr %s321, 4
      %s323 = scalar_lea.vmem %s4, %s322
      %s324 = smul.u32 32, %s19
      %s325 = smul.u32 32, %s19
      %p326 = scmp.lt.s32.totalorder %s325, 63
      %s327 = scalar_select %p326, %s325, 63
      %s328 = smul.addr %s327, 4
      %s329 = scalar_lea.vmem %s8, %s328
      %s330 = smul.u32 32, %s19
      %v332 = vld [vmem:[%s317] sm:$0xf]
      %v333 = vld [vmem:[%s317 + $0x4] sm:$0xf]
      %v334 = vld [vmem:[%s317 + $0x8] sm:$0xf]
      %v335 = vld [vmem:[%s317 + $0xc] sm:$0xf]
      %v336 = vld [vmem:[%s317 + $0x10] sm:$0xf]
      %v337 = vld [vmem:[%s317 + $0x14] sm:$0xf]
      %v338 = vld [vmem:[%s317 + $0x18] sm:$0xf]
      %v339 = vld [vmem:[%s317 + $0x1c] sm:$0xf]
      %v340 = vld [vmem:[%s317 + $0x20] sm:$0xf]
      %v341 = vld [vmem:[%s317 + $0x24] sm:$0xf]
      %v342 = vld [vmem:[%s317 + $0x28] sm:$0xf]
      %v343 = vld [vmem:[%s317 + $0x2c] sm:$0xf]
      %v344 = vld [vmem:[%s317 + $0x30] sm:$0xf]
      %v345 = vld [vmem:[%s317 + $0x34] sm:$0xf]
      %v346 = vld [vmem:[%s317 + $0x38] sm:$0xf]
      %v347 = vld [vmem:[%s317 + $0x3c] sm:$0xf]
      %v348 = vld [vmem:[%s317 + $0x40] sm:$0xf]
      %v349 = vld [vmem:[%s317 + $0x44] sm:$0xf]
      %v350 = vld [vmem:[%s317 + $0x48] sm:$0xf]
      %v351 = vld [vmem:[%s317 + $0x4c] sm:$0xf]
      %v352 = vld [vmem:[%s317 + $0x50] sm:$0xf]
      %v353 = vld [vmem:[%s317 + $0x54] sm:$0xf]
      %v354 = vld [vmem:[%s317 + $0x58] sm:$0xf]
      %v355 = vld [vmem:[%s317 + $0x5c] sm:$0xf]
      %v356 = vld [vmem:[%s317 + $0x60] sm:$0xf]
      %v357 = vld [vmem:[%s317 + $0x64] sm:$0xf]
      %v358 = vld [vmem:[%s317 + $0x68] sm:$0xf]
      %v359 = vld [vmem:[%s317 + $0x6c] sm:$0xf]
      %v360 = vld [vmem:[%s317 + $0x70] sm:$0xf]
      %v361 = vld [vmem:[%s317 + $0x74] sm:$0xf]
      %v362 = vld [vmem:[%s317 + $0x78] sm:$0xf]
      %v363 = vld [vmem:[%s317 + $0x7c] sm:$0xf]
      %v364 = vld [vmem:[%s1] sm:$0xf]
      %v365 = vld [vmem:[%s1 + $0x4] sm:$0xf]
      %v366 = vld [vmem:[%s1 + $0x8] sm:$0xf]
      %v367 = vld [vmem:[%s1 + $0xc] sm:$0xf]
      %v368 = vld [vmem:[%s1 + $0x10] sm:$0xf]
      %v369 = vld [vmem:[%s1 + $0x14] sm:$0xf]
      %v370 = vld [vmem:[%s1 + $0x18] sm:$0xf]
      %v371 = vld [vmem:[%s1 + $0x1c] sm:$0xf]
      %v372 = vld [vmem:[%s1 + $0x20] sm:$0xf]
      %v373 = vld [vmem:[%s1 + $0x24] sm:$0xf]
      %v374 = vld [vmem:[%s1 + $0x28] sm:$0xf]
      %v375 = vld [vmem:[%s1 + $0x2c] sm:$0xf]
      %v376 = vld [vmem:[%s1 + $0x30] sm:$0xf]
      %v377 = vld [vmem:[%s1 + $0x34] sm:$0xf]
      %v378 = vld [vmem:[%s1 + $0x38] sm:$0xf]
      %v379 = vld [vmem:[%s1 + $0x3c] sm:$0xf]
      %v412 = vunpack.c.l.b16 %v332
      %v413 = vunpack.c.l.b16 %v333
      %v414 = vunpack.c.l.b16 %v334
      %v415 = vunpack.c.l.b16 %v335
      %v416 = vunpack.c.l.b16 %v336
      %v417 = vunpack.c.l.b16 %v337
      %v418 = vunpack.c.l.b16 %v338
      %v419 = vunpack.c.l.b16 %v339
      %v420 = vunpack.c.l.b16 %v340
      %v421 = vunpack.c.l.b16 %v341
      %v422 = vunpack.c.l.b16 %v342
      %v423 = vunpack.c.l.b16 %v343
      %v424 = vunpack.c.l.b16 %v344
      %v425 = vunpack.c.l.b16 %v345
      %v426 = vunpack.c.l.b16 %v346
      %v427 = vunpack.c.l.b16 %v347
      %v428 = vunpack.c.l.b16 %v348
      %v429 = vunpack.c.l.b16 %v349
      %v430 = vunpack.c.l.b16 %v350
      %v431 = vunpack.c.l.b16 %v351
      %v432 = vunpack.c.l.b16 %v352
      %v433 = vunpack.c.l.b16 %v353
      %v434 = vunpack.c.l.b16 %v354
      %v435 = vunpack.c.l.b16 %v355
      %v436 = vunpack.c.l.b16 %v356
      %v437 = vunpack.c.l.b16 %v357
      %v438 = vunpack.c.l.b16 %v358
      %v439 = vunpack.c.l.b16 %v359
      %v440 = vunpack.c.l.b16 %v360
      %v441 = vunpack.c.l.b16 %v361
      %v442 = vunpack.c.l.b16 %v362
      %v443 = vunpack.c.l.b16 %v363
      %v444 = vpack.c.b16 %v413, %v412
      %v445 = vpack.c.b16 %v415, %v414
      %v446 = vpack.c.b16 %v417, %v416
      %v447 = vpack.c.b16 %v419, %v418
      %v448 = vpack.c.b16 %v421, %v420
      %v449 = vpack.c.b16 %v423, %v422
      %v450 = vpack.c.b16 %v425, %v424
      %v451 = vpack.c.b16 %v427, %v426
      %v452 = vpack.c.b16 %v429, %v428
      %v453 = vpack.c.b16 %v431, %v430
      %v454 = vpack.c.b16 %v433, %v432
      %v455 = vpack.c.b16 %v435, %v434
      %v456 = vpack.c.b16 %v437, %v436
      %v457 = vpack.c.b16 %v439, %v438
      %v458 = vpack.c.b16 %v441, %v440
      %v459 = vpack.c.b16 %v443, %v442
      %v492 = vunpack.c.l.b16 %v364
      %v493 = vunpack.c.l.b16 %v365
      %v494 = vunpack.c.l.b16 %v366
      %v495 = vunpack.c.l.b16 %v367
      %v496 = vunpack.c.l.b16 %v368
      %v497 = vunpack.c.l.b16 %v369
      %v498 = vunpack.c.l.b16 %v370
      %v499 = vunpack.c.l.b16 %v371
      %v500 = vunpack.c.l.b16 %v372
      %v501 = vunpack.c.l.b16 %v373
      %v502 = vunpack.c.l.b16 %v374
      %v503 = vunpack.c.l.b16 %v375
      %v504 = vunpack.c.l.b16 %v376
      %v505 = vunpack.c.l.b16 %v377
      %v506 = vunpack.c.l.b16 %v378
      %v507 = vunpack.c.l.b16 %v379
      %v508 = vpack.c.b16 %v493, %v492
      %v509 = vpack.c.b16 %v495, %v494
      %v510 = vpack.c.b16 %v497, %v496
      %v511 = vpack.c.b16 %v499, %v498
      %v512 = vpack.c.b16 %v501, %v500
      %v513 = vpack.c.b16 %v503, %v502
      %v514 = vpack.c.b16 %v505, %v504
      %v515 = vpack.c.b16 %v507, %v506
      %524 = vmatprep.subr.bf16.mxu0 0
      %525 = vmatpush1.bf16.msra.mxu0 %v515
      %526 = vmatprep.subr.bf16.mxu0 0
      %527 = vmatpush1.bf16.msra.mxu0 %v514
      %528 = vmatprep.subr.bf16.mxu0 0
      %529 = vmatpush1.bf16.msra.mxu0 %v513
      %530 = vmatprep.subr.bf16.mxu0 0
      %531 = vmatpush1.bf16.msra.mxu0 %v512
      %532 = vmatprep.subr.bf16.mxu0 0
      %533 = vmatpush1.bf16.msra.mxu0 %v511
      %534 = vmatprep.subr.bf16.mxu0 0
      %535 = vmatpush1.bf16.msra.mxu0 %v510
      %536 = vmatprep.subr.bf16.mxu0 0
      %537 = vmatpush1.bf16.msra.mxu0 %v509
      %538 = vmatprep.subr.bf16.mxu0 0
      %539 = vmatpush1.bf16.msra.mxu0 %v508
      %540 = vmatprep.subr.bf16.mxu0 0
      %541 = vmatpush2.bf16.msra.mxu0 0
      %542 = vmatprep.subr.bf16.mxu0 0
      %543 = vmatpush2.bf16.msra.mxu0 0
      %544 = vmatprep.subr.bf16.mxu0 0
      %545 = vmatpush2.bf16.msra.mxu0 0
      %546 = vmatprep.subr.bf16.mxu0 0
      %547 = vmatpush2.bf16.msra.mxu0 0
      %548 = vmatprep.subr.bf16.mxu0 0
      %549 = vmatpush2.bf16.msra.mxu0 0
      %550 = vmatprep.subr.bf16.mxu0 0
      %551 = vmatpush2.bf16.msra.mxu0 0
      %552 = vmatprep.subr.bf16.mxu0 0
      %553 = vmatpush2.bf16.msra.mxu0 0
      %554 = vmatprep.subr.bf16.mxu0 0
      %555 = vmatpush2.bf16.msra.mxu0 0
      %556 = vmatprep.mubr.bf16.mxu0 0
      %557 = vmatmul.mubr.bf16.gmra.mxu0 %v444
      %v558 = vpop.f32.mrf.mxu0
      %v559 = vadd.f32 0.0, %v558
      %v560 = vpop.f32.mrf.mxu0
      %v561 = vpop.f32.mrf.mxu0
      %v562 = vadd.f32 0.0, %v561
      %v563 = vpop.f32.mrf.mxu0
      %564 = vmatprep.mubr.bf16.mxu0 0
      %565 = vmatmul.mubr.bf16.gmra.mxu0 %v445
      %v566 = vpop.f32.mrf.mxu0
      %v567 = vadd.f32 0.0, %v566
      %v568 = vpop.f32.mrf.mxu0
      %v569 = vpop.f32.mrf.mxu0
      %v570 = vadd.f32 0.0, %v569
      %v571 = vpop.f32.mrf.mxu0
      %572 = vmatprep.mubr.bf16.mxu0 0
      %573 = vmatmul.mubr.bf16.gmra.mxu0 %v446
      %v574 = vpop.f32.mrf.mxu0
      %v575 = vadd.f32 0.0, %v574
      %v576 = vpop.f32.mrf.mxu0
      %v577 = vpop.f32.mrf.mxu0
      %v578 = vadd.f32 0.0, %v577
      %v579 = vpop.f32.mrf.mxu0
      %580 = vmatprep.mubr.bf16.mxu0 0
      %581 = vmatmul.mubr.bf16.gmra.mxu0 %v447
      %v582 = vpop.f32.mrf.mxu0
      %v583 = vadd.f32 0.0, %v582
      %v584 = vpop.f32.mrf.mxu0
      %v585 = vpop.f32.mrf.mxu0
      %v586 = vadd.f32 0.0, %v585
      %v587 = vpop.f32.mrf.mxu0
      %588 = vmatprep.mubr.bf16.mxu0 0
      %589 = vmatmul.mubr.bf16.gmra.mxu0 %v448
      %v590 = vpop.f32.mrf.mxu0
      %v591 = vadd.f32 0.0, %v590
      %v592 = vpop.f32.mrf.mxu0
      %v593 = vpop.f32.mrf.mxu0
      %v594 = vadd.f32 0.0, %v593
      %v595 = vpop.f32.mrf.mxu0
      %596 = vmatprep.mubr.bf16.mxu0 0
      %597 = vmatmul.mubr.bf16.gmra.mxu0 %v449
      %v598 = vpop.f32.mrf.mxu0
      %v599 = vadd.f32 0.0, %v598
      %v600 = vpop.f32.mrf.mxu0
      %v601 = vpop.f32.mrf.mxu0
      %v602 = vadd.f32 0.0, %v601
      %v603 = vpop.f32.mrf.mxu0
      %604 = vmatprep.mubr.bf16.mxu0 0
      %605 = vmatmul.mubr.bf16.gmra.mxu0 %v450
      %v606 = vpop.f32.mrf.mxu0
      %v607 = vadd.f32 0.0, %v606
      %v608 = vpop.f32.mrf.mxu0
      %v609 = vpop.f32.mrf.mxu0
      %v610 = vadd.f32 0.0, %v609
      %v611 = vpop.f32.mrf.mxu0
      %612 = vmatprep.mubr.bf16.mxu0 0
      %613 = vmatmul.mubr.bf16.gmra.mxu0 %v451
      %v614 = vpop.f32.mrf.mxu0
      %v615 = vadd.f32 0.0, %v614
      %v616 = vpop.f32.mrf.mxu0
      %v617 = vpop.f32.mrf.mxu0
      %v618 = vadd.f32 0.0, %v617
      %v619 = vpop.f32.mrf.mxu0
      %620 = vmatprep.mubr.bf16.mxu0 0
      %621 = vmatmul.mubr.bf16.gmra.mxu0 %v452
      %v622 = vpop.f32.mrf.mxu0
      %v623 = vadd.f32 0.0, %v622
      %v624 = vpop.f32.mrf.mxu0
      %v625 = vpop.f32.mrf.mxu0
      %v626 = vadd.f32 0.0, %v625
      %v627 = vpop.f32.mrf.mxu0
      %628 = vmatprep.mubr.bf16.mxu0 0
      %629 = vmatmul.mubr.bf16.gmra.mxu0 %v453
      %v630 = vpop.f32.mrf.mxu0
      %v631 = vadd.f32 0.0, %v630
      %v632 = vpop.f32.mrf.mxu0
      %v633 = vpop.f32.mrf.mxu0
      %v634 = vadd.f32 0.0, %v633
      %v635 = vpop.f32.mrf.mxu0
      %636 = vmatprep.mubr.bf16.mxu0 0
      %637 = vmatmul.mubr.bf16.gmra.mxu0 %v454
      %v638 = vpop.f32.mrf.mxu0
      %v639 = vadd.f32 0.0, %v638
      %v640 = vpop.f32.mrf.mxu0
      %v641 = vpop.f32.mrf.mxu0
      %v642 = vadd.f32 0.0, %v641
      %v643 = vpop.f32.mrf.mxu0
      %644 = vmatprep.mubr.bf16.mxu0 0
      %645 = vmatmul.mubr.bf16.gmra.mxu0 %v455
      %v646 = vpop.f32.mrf.mxu0
      %v647 = vadd.f32 0.0, %v646
      %v648 = vpop.f32.mrf.mxu0
      %v649 = vpop.f32.mrf.mxu0
      %v650 = vadd.f32 0.0, %v649
      %v651 = vpop.f32.mrf.mxu0
      %652 = vmatprep.mubr.bf16.mxu0 0
      %653 = vmatmul.mubr.bf16.gmra.mxu0 %v456
      %v654 = vpop.f32.mrf.mxu0
      %v655 = vadd.f32 0.0, %v654
      %v656 = vpop.f32.mrf.mxu0
      %v657 = vpop.f32.mrf.mxu0
      %v658 = vadd.f32 0.0, %v657
      %v659 = vpop.f32.mrf.mxu0
      %660 = vmatprep.mubr.bf16.mxu0 0
      %661 = vmatmul.mubr.bf16.gmra.mxu0 %v457
      %v662 = vpop.f32.mrf.mxu0
      %v663 = vadd.f32 0.0, %v662
      %v664 = vpop.f32.mrf.mxu0
      %v665 = vpop.f32.mrf.mxu0
      %v666 = vadd.f32 0.0, %v665
      %v667 = vpop.f32.mrf.mxu0
      %668 = vmatprep.mubr.bf16.mxu0 0
      %669 = vmatmul.mubr.bf16.gmra.mxu0 %v458
      %v670 = vpop.f32.mrf.mxu0
      %v671 = vadd.f32 0.0, %v670
      %v672 = vpop.f32.mrf.mxu0
      %v673 = vpop.f32.mrf.mxu0
      %v674 = vadd.f32 0.0, %v673
      %v675 = vpop.f32.mrf.mxu0
      %676 = vmatprep.mubr.bf16.mxu0 0
      %677 = vmatmul.mubr.bf16.gmra.mxu0 %v459
      %v678 = vpop.f32.mrf.mxu0
      %v679 = vadd.f32 0.0, %v678
      %v680 = vpop.f32.mrf.mxu0
      %v681 = vpop.f32.mrf.mxu0
      %v682 = vadd.f32 0.0, %v681
      %v683 = vpop.f32.mrf.mxu0
      %684 = vdwg.mxu0
      %v685 = vld [vmem:[%s2] sm:$0x1]
      %v687 = vlaneseq
      %v688 = vshrl.u32 %v687, 7
      %v689 = vsub.s32 0, %v688
      %v690 = vrot.slane %v685, %v689
      %v692 = vmul.f32 %v559, %v690
      %v693 = vmul.f32 %v562, %v690
      %v694 = vmul.f32 %v567, %v690
      %v695 = vmul.f32 %v570, %v690
      %v696 = vmul.f32 %v575, %v690
      %v697 = vmul.f32 %v578, %v690
      %v698 = vmul.f32 %v583, %v690
      %v699 = vmul.f32 %v586, %v690
      %v700 = vmul.f32 %v591, %v690
      %v701 = vmul.f32 %v594, %v690
      %v702 = vmul.f32 %v599, %v690
      %v703 = vmul.f32 %v602, %v690
      %v704 = vmul.f32 %v607, %v690
      %v705 = vmul.f32 %v610, %v690
      %v706 = vmul.f32 %v615, %v690
      %v707 = vmul.f32 %v618, %v690
      %v708 = vmul.f32 %v623, %v690
      %v709 = vmul.f32 %v626, %v690
      %v710 = vmul.f32 %v631, %v690
      %v711 = vmul.f32 %v634, %v690
      %v712 = vmul.f32 %v639, %v690
      %v713 = vmul.f32 %v642, %v690
      %v714 = vmul.f32 %v647, %v690
      %v715 = vmul.f32 %v650, %v690
      %v716 = vmul.f32 %v655, %v690
      %v717 = vmul.f32 %v658, %v690
      %v718 = vmul.f32 %v663, %v690
      %v719 = vmul.f32 %v666, %v690
      %v720 = vmul.f32 %v671, %v690
      %v721 = vmul.f32 %v674, %v690
      %v722 = vmul.f32 %v679, %v690
      %v723 = vmul.f32 %v682, %v690
      %v724 = vld [vmem:[%s3] sm:$0x1]
      %v726 = vlaneseq
      %v727 = vshrl.u32 %v726, 7
      %v728 = vsub.s32 0, %v727
      %v729 = vrot.slane %v724, %v728
      %v731 = vadd.f32 %v692, %v729
      %v732 = vadd.f32 %v693, %v729
      %v733 = vadd.f32 %v694, %v729
      %v734 = vadd.f32 %v695, %v729
      %v735 = vadd.f32 %v696, %v729
      %v736 = vadd.f32 %v697, %v729
      %v737 = vadd.f32 %v698, %v729
      %v738 = vadd.f32 %v699, %v729
      %v739 = vadd.f32 %v700, %v729
      %v740 = vadd.f32 %v701, %v729
      %v741 = vadd.f32 %v702, %v729
      %v742 = vadd.f32 %v703, %v729
      %v743 = vadd.f32 %v704, %v729
      %v744 = vadd.f32 %v705, %v729
      %v745 = vadd.f32 %v706, %v729
      %v746 = vadd.f32 %v707, %v729
      %v747 = vadd.f32 %v708, %v729
      %v748 = vadd.f32 %v709, %v729
      %v749 = vadd.f32 %v710, %v729
      %v750 = vadd.f32 %v711, %v729
      %v751 = vadd.f32 %v712, %v729
      %v752 = vadd.f32 %v713, %v729
      %v753 = vadd.f32 %v714, %v729
      %v754 = vadd.f32 %v715, %v729
      %v755 = vadd.f32 %v716, %v729
      %v756 = vadd.f32 %v717, %v729
      %v757 = vadd.f32 %v718, %v729
      %v758 = vadd.f32 %v719, %v729
      %v759 = vadd.f32 %v720, %v729
      %v760 = vadd.f32 %v721, %v729
      %v761 = vadd.f32 %v722, %v729
      %v762 = vadd.f32 %v723, %v729
      %v763 = vld [vmem:[%s323] sm:$0xf]
      %v764 = vld [vmem:[%s323 + $0x4] sm:$0xf]
      %v765 = vld [vmem:[%s323 + $0x8] sm:$0xf]
      %v766 = vld [vmem:[%s323 + $0xc] sm:$0xf]
      %v767 = vld [vmem:[%s323 + $0x10] sm:$0xf]
      %v768 = vld [vmem:[%s323 + $0x14] sm:$0xf]
      %v769 = vld [vmem:[%s323 + $0x18] sm:$0xf]
      %v770 = vld [vmem:[%s323 + $0x1c] sm:$0xf]
      %v771 = vld [vmem:[%s323 + $0x20] sm:$0xf]
      %v772 = vld [vmem:[%s323 + $0x24] sm:$0xf]
      %v773 = vld [vmem:[%s323 + $0x28] sm:$0xf]
      %v774 = vld [vmem:[%s323 + $0x2c] sm:$0xf]
      %v775 = vld [vmem:[%s323 + $0x30] sm:$0xf]
      %v776 = vld [vmem:[%s323 + $0x34] sm:$0xf]
      %v777 = vld [vmem:[%s323 + $0x38] sm:$0xf]
      %v778 = vld [vmem:[%s323 + $0x3c] sm:$0xf]
      %v779 = vld [vmem:[%s323 + $0x40] sm:$0xf]
      %v780 = vld [vmem:[%s323 + $0x44] sm:$0xf]
      %v781 = vld [vmem:[%s323 + $0x48] sm:$0xf]
      %v782 = vld [vmem:[%s323 + $0x4c] sm:$0xf]
      %v783 = vld [vmem:[%s323 + $0x50] sm:$0xf]
      %v784 = vld [vmem:[%s323 + $0x54] sm:$0xf]
      %v785 = vld [vmem:[%s323 + $0x58] sm:$0xf]
      %v786 = vld [vmem:[%s323 + $0x5c] sm:$0xf]
      %v787 = vld [vmem:[%s323 + $0x60] sm:$0xf]
      %v788 = vld [vmem:[%s323 + $0x64] sm:$0xf]
      %v789 = vld [vmem:[%s323 + $0x68] sm:$0xf]
      %v790 = vld [vmem:[%s323 + $0x6c] sm:$0xf]
      %v791 = vld [vmem:[%s323 + $0x70] sm:$0xf]
      %v792 = vld [vmem:[%s323 + $0x74] sm:$0xf]
      %v793 = vld [vmem:[%s323 + $0x78] sm:$0xf]
      %v794 = vld [vmem:[%s323 + $0x7c] sm:$0xf]
      %v795 = vld [vmem:[%s5] sm:$0xf]
      %v796 = vld [vmem:[%s5 + $0x4] sm:$0xf]
      %v797 = vld [vmem:[%s5 + $0x8] sm:$0xf]
      %v798 = vld [vmem:[%s5 + $0xc] sm:$0xf]
      %v799 = vld [vmem:[%s5 + $0x10] sm:$0xf]
      %v800 = vld [vmem:[%s5 + $0x14] sm:$0xf]
      %v801 = vld [vmem:[%s5 + $0x18] sm:$0xf]
      %v802 = vld [vmem:[%s5 + $0x1c] sm:$0xf]
      %v803 = vld [vmem:[%s5 + $0x20] sm:$0xf]
      %v804 = vld [vmem:[%s5 + $0x24] sm:$0xf]
      %v805 = vld [vmem:[%s5 + $0x28] sm:$0xf]
      %v806 = vld [vmem:[%s5 + $0x2c] sm:$0xf]
      %v807 = vld [vmem:[%s5 + $0x30] sm:$0xf]
      %v808 = vld [vmem:[%s5 + $0x34] sm:$0xf]
      %v809 = vld [vmem:[%s5 + $0x38] sm:$0xf]
      %v810 = vld [vmem:[%s5 + $0x3c] sm:$0xf]
      %v843 = vunpack.c.l.b16 %v763
      %v844 = vunpack.c.l.b16 %v764
      %v845 = vunpack.c.l.b16 %v765
      %v846 = vunpack.c.l.b16 %v766
      %v847 = vunpack.c.l.b16 %v767
      %v848 = vunpack.c.l.b16 %v768
      %v849 = vunpack.c.l.b16 %v769
      %v850 = vunpack.c.l.b16 %v770
      %v851 = vunpack.c.l.b16 %v771
      %v852 = vunpack.c.l.b16 %v772
      %v853 = vunpack.c.l.b16 %v773
      %v854 = vunpack.c.l.b16 %v774
      %v855 = vunpack.c.l.b16 %v775
      %v856 = vunpack.c.l.b16 %v776
      %v857 = vunpack.c.l.b16 %v777
      %v858 = vunpack.c.l.b16 %v778
      %v859 = vunpack.c.l.b16 %v779
      %v860 = vunpack.c.l.b16 %v780
      %v861 = vunpack.c.l.b16 %v781
      %v862 = vunpack.c.l.b16 %v782
      %v863 = vunpack.c.l.b16 %v783
      %v864 = vunpack.c.l.b16 %v784
      %v865 = vunpack.c.l.b16 %v785
      %v866 = vunpack.c.l.b16 %v786
      %v867 = vunpack.c.l.b16 %v787
      %v868 = vunpack.c.l.b16 %v788
      %v869 = vunpack.c.l.b16 %v789
      %v870 = vunpack.c.l.b16 %v790
      %v871 = vunpack.c.l.b16 %v791
      %v872 = vunpack.c.l.b16 %v792
      %v873 = vunpack.c.l.b16 %v793
      %v874 = vunpack.c.l.b16 %v794
      %v875 = vpack.c.b16 %v844, %v843
      %v876 = vpack.c.b16 %v846, %v845
      %v877 = vpack.c.b16 %v848, %v847
      %v878 = vpack.c.b16 %v850, %v849
      %v879 = vpack.c.b16 %v852, %v851
      %v880 = vpack.c.b16 %v854, %v853
      %v881 = vpack.c.b16 %v856, %v855
      %v882 = vpack.c.b16 %v858, %v857
      %v883 = vpack.c.b16 %v860, %v859
      %v884 = vpack.c.b16 %v862, %v861
      %v885 = vpack.c.b16 %v864, %v863
      %v886 = vpack.c.b16 %v866, %v865
      %v887 = vpack.c.b16 %v868, %v867
      %v888 = vpack.c.b16 %v870, %v869
      %v889 = vpack.c.b16 %v872, %v871
      %v890 = vpack.c.b16 %v874, %v873
      %v923 = vunpack.c.l.b16 %v795
      %v924 = vunpack.c.l.b16 %v796
      %v925 = vunpack.c.l.b16 %v797
      %v926 = vunpack.c.l.b16 %v798
      %v927 = vunpack.c.l.b16 %v799
      %v928 = vunpack.c.l.b16 %v800
      %v929 = vunpack.c.l.b16 %v801
      %v930 = vunpack.c.l.b16 %v802
      %v931 = vunpack.c.l.b16 %v803
      %v932 = vunpack.c.l.b16 %v804
      %v933 = vunpack.c.l.b16 %v805
      %v934 = vunpack.c.l.b16 %v806
      %v935 = vunpack.c.l.b16 %v807
      %v936 = vunpack.c.l.b16 %v808
      %v937 = vunpack.c.l.b16 %v809
      %v938 = vunpack.c.l.b16 %v810
      %v939 = vpack.c.b16 %v924, %v923
      %v940 = vpack.c.b16 %v926, %v925
      %v941 = vpack.c.b16 %v928, %v927
      %v942 = vpack.c.b16 %v930, %v929
      %v943 = vpack.c.b16 %v932, %v931
      %v944 = vpack.c.b16 %v934, %v933
      %v945 = vpack.c.b16 %v936, %v935
      %v946 = vpack.c.b16 %v938, %v937
      %955 = vmatprep.subr.bf16.mxu0 0
      %956 = vmatpush1.bf16.msra.mxu0 %v946
      %957 = vmatprep.subr.bf16.mxu0 0
      %958 = vmatpush1.bf16.msra.mxu0 %v945
      %959 = vmatprep.subr.bf16.mxu0 0
      %960 = vmatpush1.bf16.msra.mxu0 %v944
      %961 = vmatprep.subr.bf16.mxu0 0
      %962 = vmatpush1.bf16.msra.mxu0 %v943
      %963 = vmatprep.subr.bf16.mxu0 0
      %964 = vmatpush1.bf16.msra.mxu0 %v942
      %965 = vmatprep.subr.bf16.mxu0 0
      %966 = vmatpush1.bf16.msra.mxu0 %v941
      %967 = vmatprep.subr.bf16.mxu0 0
      %968 = vmatpush1.bf16.msra.mxu0 %v940
      %969 = vmatprep.subr.bf16.mxu0 0
      %970 = vmatpush1.bf16.msra.mxu0 %v939
      %971 = vmatprep.subr.bf16.mxu0 0
      %972 = vmatpush2.bf16.msra.mxu0 0
      %973 = vmatprep.subr.bf16.mxu0 0
      %974 = vmatpush2.bf16.msra.mxu0 0
      %975 = vmatprep.subr.bf16.mxu0 0
      %976 = vmatpush2.bf16.msra.mxu0 0
      %977 = vmatprep.subr.bf16.mxu0 0
      %978 = vmatpush2.bf16.msra.mxu0 0
      %979 = vmatprep.subr.bf16.mxu0 0
      %980 = vmatpush2.bf16.msra.mxu0 0
      %981 = vmatprep.subr.bf16.mxu0 0
      %982 = vmatpush2.bf16.msra.mxu0 0
      %983 = vmatprep.subr.bf16.mxu0 0
      %984 = vmatpush2.bf16.msra.mxu0 0
      %985 = vmatprep.subr.bf16.mxu0 0
      %986 = vmatpush2.bf16.msra.mxu0 0
      %987 = vmatprep.mubr.bf16.mxu0 0
      %988 = vmatmul.mubr.bf16.gmra.mxu0 %v875
      %v989 = vpop.f32.mrf.mxu0
      %v990 = vadd.f32 0.0, %v989
      %v991 = vpop.f32.mrf.mxu0
      %v992 = vpop.f32.mrf.mxu0
      %v993 = vadd.f32 0.0, %v992
      %v994 = vpop.f32.mrf.mxu0
      %995 = vmatprep.mubr.bf16.mxu0 0
      %996 = vmatmul.mubr.bf16.gmra.mxu0 %v876
      %v997 = vpop.f32.mrf.mxu0
      %v998 = vadd.f32 0.0, %v997
      %v999 = vpop.f32.mrf.mxu0
      %v1000 = vpop.f32.mrf.mxu0
      %v1001 = vadd.f32 0.0, %v1000
      %v1002 = vpop.f32.mrf.mxu0
      %1003 = vmatprep.mubr.bf16.mxu0 0
      %1004 = vmatmul.mubr.bf16.gmra.mxu0 %v877
      %v1005 = vpop.f32.mrf.mxu0
      %v1006 = vadd.f32 0.0, %v1005
      %v1007 = vpop.f32.mrf.mxu0
      %v1008 = vpop.f32.mrf.mxu0
      %v1009 = vadd.f32 0.0, %v1008
      %v1010 = vpop.f32.mrf.mxu0
      %1011 = vmatprep.mubr.bf16.mxu0 0
      %1012 = vmatmul.mubr.bf16.gmra.mxu0 %v878
      %v1013 = vpop.f32.mrf.mxu0
      %v1014 = vadd.f32 0.0, %v1013
      %v1015 = vpop.f32.mrf.mxu0
      %v1016 = vpop.f32.mrf.mxu0
      %v1017 = vadd.f32 0.0, %v1016
      %v1018 = vpop.f32.mrf.mxu0
      %1019 = vmatprep.mubr.bf16.mxu0 0
      %1020 = vmatmul.mubr.bf16.gmra.mxu0 %v879
      %v1021 = vpop.f32.mrf.mxu0
      %v1022 = vadd.f32 0.0, %v1021
      %v1023 = vpop.f32.mrf.mxu0
      %v1024 = vpop.f32.mrf.mxu0
      %v1025 = vadd.f32 0.0, %v1024
      %v1026 = vpop.f32.mrf.mxu0
      %1027 = vmatprep.mubr.bf16.mxu0 0
      %1028 = vmatmul.mubr.bf16.gmra.mxu0 %v880
      %v1029 = vpop.f32.mrf.mxu0
      %v1030 = vadd.f32 0.0, %v1029
      %v1031 = vpop.f32.mrf.mxu0
      %v1032 = vpop.f32.mrf.mxu0
      %v1033 = vadd.f32 0.0, %v1032
      %v1034 = vpop.f32.mrf.mxu0
      %1035 = vmatprep.mubr.bf16.mxu0 0
      %1036 = vmatmul.mubr.bf16.gmra.mxu0 %v881
      %v1037 = vpop.f32.mrf.mxu0
      %v1038 = vadd.f32 0.0, %v1037
      %v1039 = vpop.f32.mrf.mxu0
      %v1040 = vpop.f32.mrf.mxu0
      %v1041 = vadd.f32 0.0, %v1040
      %v1042 = vpop.f32.mrf.mxu0
      %1043 = vmatprep.mubr.bf16.mxu0 0
      %1044 = vmatmul.mubr.bf16.gmra.mxu0 %v882
      %v1045 = vpop.f32.mrf.mxu0
      %v1046 = vadd.f32 0.0, %v1045
      %v1047 = vpop.f32.mrf.mxu0
      %v1048 = vpop.f32.mrf.mxu0
      %v1049 = vadd.f32 0.0, %v1048
      %v1050 = vpop.f32.mrf.mxu0
      %1051 = vmatprep.mubr.bf16.mxu0 0
      %1052 = vmatmul.mubr.bf16.gmra.mxu0 %v883
      %v1053 = vpop.f32.mrf.mxu0
      %v1054 = vadd.f32 0.0, %v1053
      %v1055 = vpop.f32.mrf.mxu0
      %v1056 = vpop.f32.mrf.mxu0
      %v1057 = vadd.f32 0.0, %v1056
      %v1058 = vpop.f32.mrf.mxu0
      %1059 = vmatprep.mubr.bf16.mxu0 0
      %1060 = vmatmul.mubr.bf16.gmra.mxu0 %v884
      %v1061 = vpop.f32.mrf.mxu0
      %v1062 = vadd.f32 0.0, %v1061
      %v1063 = vpop.f32.mrf.mxu0
      %v1064 = vpop.f32.mrf.mxu0
      %v1065 = vadd.f32 0.0, %v1064
      %v1066 = vpop.f32.mrf.mxu0
      %1067 = vmatprep.mubr.bf16.mxu0 0
      %1068 = vmatmul.mubr.bf16.gmra.mxu0 %v885
      %v1069 = vpop.f32.mrf.mxu0
      %v1070 = vadd.f32 0.0, %v1069
      %v1071 = vpop.f32.mrf.mxu0
      %v1072 = vpop.f32.mrf.mxu0
      %v1073 = vadd.f32 0.0, %v1072
      %v1074 = vpop.f32.mrf.mxu0
      %1075 = vmatprep.mubr.bf16.mxu0 0
      %1076 = vmatmul.mubr.bf16.gmra.mxu0 %v886
      %v1077 = vpop.f32.mrf.mxu0
      %v1078 = vadd.f32 0.0, %v1077
      %v1079 = vpop.f32.mrf.mxu0
      %v1080 = vpop.f32.mrf.mxu0
      %v1081 = vadd.f32 0.0, %v1080
      %v1082 = vpop.f32.mrf.mxu0
      %1083 = vmatprep.mubr.bf16.mxu0 0
      %1084 = vmatmul.mubr.bf16.gmra.mxu0 %v887
      %v1085 = vpop.f32.mrf.mxu0
      %v1086 = vadd.f32 0.0, %v1085
      %v1087 = vpop.f32.mrf.mxu0
      %v1088 = vpop.f32.mrf.mxu0
      %v1089 = vadd.f32 0.0, %v1088
      %v1090 = vpop.f32.mrf.mxu0
      %1091 = vmatprep.mubr.bf16.mxu0 0
      %1092 = vmatmul.mubr.bf16.gmra.mxu0 %v888
      %v1093 = vpop.f32.mrf.mxu0
      %v1094 = vadd.f32 0.0, %v1093
      %v1095 = vpop.f32.mrf.mxu0
      %v1096 = vpop.f32.mrf.mxu0
      %v1097 = vadd.f32 0.0, %v1096
      %v1098 = vpop.f32.mrf.mxu0
      %1099 = vmatprep.mubr.bf16.mxu0 0
      %1100 = vmatmul.mubr.bf16.gmra.mxu0 %v889
      %v1101 = vpop.f32.mrf.mxu0
      %v1102 = vadd.f32 0.0, %v1101
      %v1103 = vpop.f32.mrf.mxu0
      %v1104 = vpop.f32.mrf.mxu0
      %v1105 = vadd.f32 0.0, %v1104
      %v1106 = vpop.f32.mrf.mxu0
      %1107 = vmatprep.mubr.bf16.mxu0 0
      %1108 = vmatmul.mubr.bf16.gmra.mxu0 %v890
      %v1109 = vpop.f32.mrf.mxu0
      %v1110 = vadd.f32 0.0, %v1109
      %v1111 = vpop.f32.mrf.mxu0
      %v1112 = vpop.f32.mrf.mxu0
      %v1113 = vadd.f32 0.0, %v1112
      %v1114 = vpop.f32.mrf.mxu0
      %1115 = vdwg.mxu0
      %v1116 = vld [vmem:[%s6] sm:$0x1]
      %v1118 = vlaneseq
      %v1119 = vshrl.u32 %v1118, 7
      %v1120 = vsub.s32 0, %v1119
      %v1121 = vrot.slane %v1116, %v1120
      %v1123 = vmul.f32 %v990, %v1121
      %v1124 = vmul.f32 %v993, %v1121
      %v1125 = vmul.f32 %v998, %v1121
      %v1126 = vmul.f32 %v1001, %v1121
      %v1127 = vmul.f32 %v1006, %v1121
      %v1128 = vmul.f32 %v1009, %v1121
      %v1129 = vmul.f32 %v1014, %v1121
      %v1130 = vmul.f32 %v1017, %v1121
      %v1131 = vmul.f32 %v1022, %v1121
      %v1132 = vmul.f32 %v1025, %v1121
      %v1133 = vmul.f32 %v1030, %v1121
      %v1134 = vmul.f32 %v1033, %v1121
      %v1135 = vmul.f32 %v1038, %v1121
      %v1136 = vmul.f32 %v1041, %v1121
      %v1137 = vmul.f32 %v1046, %v1121
      %v1138 = vmul.f32 %v1049, %v1121
      %v1139 = vmul.f32 %v1054, %v1121
      %v1140 = vmul.f32 %v1057, %v1121
      %v1141 = vmul.f32 %v1062, %v1121
      %v1142 = vmul.f32 %v1065, %v1121
      %v1143 = vmul.f32 %v1070, %v1121
      %v1144 = vmul.f32 %v1073, %v1121
      %v1145 = vmul.f32 %v1078, %v1121
      %v1146 = vmul.f32 %v1081, %v1121
      %v1147 = vmul.f32 %v1086, %v1121
      %v1148 = vmul.f32 %v1089, %v1121
      %v1149 = vmul.f32 %v1094, %v1121
      %v1150 = vmul.f32 %v1097, %v1121
      %v1151 = vmul.f32 %v1102, %v1121
      %v1152 = vmul.f32 %v1105, %v1121
      %v1153 = vmul.f32 %v1110, %v1121
      %v1154 = vmul.f32 %v1113, %v1121
      %v1155 = vadd.f32 %v731, %v1123
      %v1156 = vadd.f32 %v732, %v1124
      %v1157 = vadd.f32 %v733, %v1125
      %v1158 = vadd.f32 %v734, %v1126
      %v1159 = vadd.f32 %v735, %v1127
      %v1160 = vadd.f32 %v736, %v1128
      %v1161 = vadd.f32 %v737, %v1129
      %v1162 = vadd.f32 %v738, %v1130
      %v1163 = vadd.f32 %v739, %v1131
      %v1164 = vadd.f32 %v740, %v1132
      %v1165 = vadd.f32 %v741, %v1133
      %v1166 = vadd.f32 %v742, %v1134
      %v1167 = vadd.f32 %v743, %v1135
      %v1168 = vadd.f32 %v744, %v1136
      %v1169 = vadd.f32 %v745, %v1137
      %v1170 = vadd.f32 %v746, %v1138
      %v1171 = vadd.f32 %v747, %v1139
      %v1172 = vadd.f32 %v748, %v1140
      %v1173 = vadd.f32 %v749, %v1141
      %v1174 = vadd.f32 %v750, %v1142
      %v1175 = vadd.f32 %v751, %v1143
      %v1176 = vadd.f32 %v752, %v1144
      %v1177 = vadd.f32 %v753, %v1145
      %v1178 = vadd.f32 %v754, %v1146
      %v1179 = vadd.f32 %v755, %v1147
      %v1180 = vadd.f32 %v756, %v1148
      %v1181 = vadd.f32 %v757, %v1149
      %v1182 = vadd.f32 %v758, %v1150
      %v1183 = vadd.f32 %v759, %v1151
      %v1184 = vadd.f32 %v760, %v1152
      %v1185 = vadd.f32 %v761, %v1153
      %v1186 = vadd.f32 %v762, %v1154
      %v1187 = vld [vmem:[%s7] sm:$0x1]
      %v1189 = vlaneseq
      %v1190 = vshrl.u32 %v1189, 7
      %v1191 = vsub.s32 0, %v1190
      %v1192 = vrot.slane %v1187, %v1191
      %v1194 = vadd.f32 %v1155, %v1192
      %v1195 = vadd.f32 %v1156, %v1192
      %v1196 = vadd.f32 %v1157, %v1192
      %v1197 = vadd.f32 %v1158, %v1192
      %v1198 = vadd.f32 %v1159, %v1192
      %v1199 = vadd.f32 %v1160, %v1192
      %v1200 = vadd.f32 %v1161, %v1192
      %v1201 = vadd.f32 %v1162, %v1192
      %v1202 = vadd.f32 %v1163, %v1192
      %v1203 = vadd.f32 %v1164, %v1192
      %v1204 = vadd.f32 %v1165, %v1192
      %v1205 = vadd.f32 %v1166, %v1192
      %v1206 = vadd.f32 %v1167, %v1192
      %v1207 = vadd.f32 %v1168, %v1192
      %v1208 = vadd.f32 %v1169, %v1192
      %v1209 = vadd.f32 %v1170, %v1192
      %v1210 = vadd.f32 %v1171, %v1192
      %v1211 = vadd.f32 %v1172, %v1192
      %v1212 = vadd.f32 %v1173, %v1192
      %v1213 = vadd.f32 %v1174, %v1192
      %v1214 = vadd.f32 %v1175, %v1192
      %v1215 = vadd.f32 %v1176, %v1192
      %v1216 = vadd.f32 %v1177, %v1192
      %v1217 = vadd.f32 %v1178, %v1192
      %v1218 = vadd.f32 %v1179, %v1192
      %v1219 = vadd.f32 %v1180, %v1192
      %v1220 = vadd.f32 %v1181, %v1192
      %v1221 = vadd.f32 %v1182, %v1192
      %v1222 = vadd.f32 %v1183, %v1192
      %v1223 = vadd.f32 %v1184, %v1192
      %v1224 = vadd.f32 %v1185, %v1192
      %v1225 = vadd.f32 %v1186, %v1192
      %v1226 = vmax.f32 %v1194, 0.0
      %v1227 = vmax.f32 %v1195, 0.0
      %v1228 = vmax.f32 %v1196, 0.0
      %v1229 = vmax.f32 %v1197, 0.0
      %v1230 = vmax.f32 %v1198, 0.0
      %v1231 = vmax.f32 %v1199, 0.0
      %v1232 = vmax.f32 %v1200, 0.0
      %v1233 = vmax.f32 %v1201, 0.0
      %v1234 = vmax.f32 %v1202, 0.0
      %v1235 = vmax.f32 %v1203, 0.0
      %v1236 = vmax.f32 %v1204, 0.0
      %v1237 = vmax.f32 %v1205, 0.0
      %v1238 = vmax.f32 %v1206, 0.0
      %v1239 = vmax.f32 %v1207, 0.0
      %v1240 = vmax.f32 %v1208, 0.0
      %v1241 = vmax.f32 %v1209, 0.0
      %v1242 = vmax.f32 %v1210, 0.0
      %v1243 = vmax.f32 %v1211, 0.0
      %v1244 = vmax.f32 %v1212, 0.0
      %v1245 = vmax.f32 %v1213, 0.0
      %v1246 = vmax.f32 %v1214, 0.0
      %v1247 = vmax.f32 %v1215, 0.0
      %v1248 = vmax.f32 %v1216, 0.0
      %v1249 = vmax.f32 %v1217, 0.0
      %v1250 = vmax.f32 %v1218, 0.0
      %v1251 = vmax.f32 %v1219, 0.0
      %v1252 = vmax.f32 %v1220, 0.0
      %v1253 = vmax.f32 %v1221, 0.0
      %v1254 = vmax.f32 %v1222, 0.0
      %v1255 = vmax.f32 %v1223, 0.0
      %v1256 = vmax.f32 %v1224, 0.0
      %v1257 = vmax.f32 %v1225, 0.0
      %v1258 = vpack.c.bf16 %v1227, %v1226
      %v1259 = vpack.c.bf16 %v1229, %v1228
      %v1260 = vpack.c.bf16 %v1231, %v1230
      %v1261 = vpack.c.bf16 %v1233, %v1232
      %v1262 = vpack.c.bf16 %v1235, %v1234
      %v1263 = vpack.c.bf16 %v1237, %v1236
      %v1264 = vpack.c.bf16 %v1239, %v1238
      %v1265 = vpack.c.bf16 %v1241, %v1240
      %v1266 = vpack.c.bf16 %v1243, %v1242
      %v1267 = vpack.c.bf16 %v1245, %v1244
      %v1268 = vpack.c.bf16 %v1247, %v1246
      %v1269 = vpack.c.bf16 %v1249, %v1248
      %v1270 = vpack.c.bf16 %v1251, %v1250
      %v1271 = vpack.c.bf16 %v1253, %v1252
      %v1272 = vpack.c.bf16 %v1255, %v1254
      %v1273 = vpack.c.bf16 %v1257, %v1256
      %v1290 = vunpack.c.l.b16 %v1258
      %v1291 = vunpack.c.h.b16 %v1258
      %v1292 = vunpack.c.l.b16 %v1259
      %v1293 = vunpack.c.h.b16 %v1259
      %v1294 = vunpack.c.l.b16 %v1260
      %v1295 = vunpack.c.h.b16 %v1260
      %v1296 = vunpack.c.l.b16 %v1261
      %v1297 = vunpack.c.h.b16 %v1261
      %v1298 = vunpack.c.l.b16 %v1262
      %v1299 = vunpack.c.h.b16 %v1262
      %v1300 = vunpack.c.l.b16 %v1263
      %v1301 = vunpack.c.h.b16 %v1263
      %v1302 = vunpack.c.l.b16 %v1264
      %v1303 = vunpack.c.h.b16 %v1264
      %v1304 = vunpack.c.l.b16 %v1265
      %v1305 = vunpack.c.h.b16 %v1265
      %v1306 = vunpack.c.l.b16 %v1266
      %v1307 = vunpack.c.h.b16 %v1266
      %v1308 = vunpack.c.l.b16 %v1267
      %v1309 = vunpack.c.h.b16 %v1267
      %v1310 = vunpack.c.l.b16 %v1268
      %v1311 = vunpack.c.h.b16 %v1268
      %v1312 = vunpack.c.l.b16 %v1269
      %v1313 = vunpack.c.h.b16 %v1269
      %v1314 = vunpack.c.l.b16 %v1270
      %v1315 = vunpack.c.h.b16 %v1270
      %v1316 = vunpack.c.l.b16 %v1271
      %v1317 = vunpack.c.h.b16 %v1271
      %v1318 = vunpack.c.l.b16 %v1272
      %v1319 = vunpack.c.h.b16 %v1272
      %v1320 = vunpack.c.l.b16 %v1273
      %v1321 = vunpack.c.h.b16 %v1273
      %v1322 = vpack.c.b16 %v1290, %v1290
      %v1323 = vpack.c.b16 %v1291, %v1291
      %v1324 = vpack.c.b16 %v1292, %v1292
      %v1325 = vpack.c.b16 %v1293, %v1293
      %v1326 = vpack.c.b16 %v1294, %v1294
      %v1327 = vpack.c.b16 %v1295, %v1295
      %v1328 = vpack.c.b16 %v1296, %v1296
      %v1329 = vpack.c.b16 %v1297, %v1297
      %v1330 = vpack.c.b16 %v1298, %v1298
      %v1331 = vpack.c.b16 %v1299, %v1299
      %v1332 = vpack.c.b16 %v1300, %v1300
      %v1333 = vpack.c.b16 %v1301, %v1301
      %v1334 = vpack.c.b16 %v1302, %v1302
      %v1335 = vpack.c.b16 %v1303, %v1303
      %v1336 = vpack.c.b16 %v1304, %v1304
      %v1337 = vpack.c.b16 %v1305, %v1305
      %v1338 = vpack.c.b16 %v1306, %v1306
      %v1339 = vpack.c.b16 %v1307, %v1307
      %v1340 = vpack.c.b16 %v1308, %v1308
      %v1341 = vpack.c.b16 %v1309, %v1309
      %v1342 = vpack.c.b16 %v1310, %v1310
      %v1343 = vpack.c.b16 %v1311, %v1311
      %v1344 = vpack.c.b16 %v1312, %v1312
      %v1345 = vpack.c.b16 %v1313, %v1313
      %v1346 = vpack.c.b16 %v1314, %v1314
      %v1347 = vpack.c.b16 %v1315, %v1315
      %v1348 = vpack.c.b16 %v1316, %v1316
      %v1349 = vpack.c.b16 %v1317, %v1317
      %v1350 = vpack.c.b16 %v1318, %v1318
      %v1351 = vpack.c.b16 %v1319, %v1319
      %v1352 = vpack.c.b16 %v1320, %v1320
      %v1353 = vpack.c.b16 %v1321, %v1321
      %1386 = vst [vmem:[%s329] sm:$0xf] %v1322
      %1387 = vst [vmem:[%s329 + $0x4] sm:$0xf] %v1323
      %1388 = vst [vmem:[%s329 + $0x8] sm:$0xf] %v1324
      %1389 = vst [vmem:[%s329 + $0xc] sm:$0xf] %v1325
      %1390 = vst [vmem:[%s329 + $0x10] sm:$0xf] %v1326
      %1391 = vst [vmem:[%s329 + $0x14] sm:$0xf] %v1327
      %1392 = vst [vmem:[%s329 + $0x18] sm:$0xf] %v1328
      %1393 = vst [vmem:[%s329 + $0x1c] sm:$0xf] %v1329
      %1394 = vst [vmem:[%s329 + $0x20] sm:$0xf] %v1330
      %1395 = vst [vmem:[%s329 + $0x24] sm:$0xf] %v1331
      %1396 = vst [vmem:[%s329 + $0x28] sm:$0xf] %v1332
      %1397 = vst [vmem:[%s329 + $0x2c] sm:$0xf] %v1333
      %1398 = vst [vmem:[%s329 + $0x30] sm:$0xf] %v1334
      %1399 = vst [vmem:[%s329 + $0x34] sm:$0xf] %v1335
      %1400 = vst [vmem:[%s329 + $0x38] sm:$0xf] %v1336
      %1401 = vst [vmem:[%s329 + $0x3c] sm:$0xf] %v1337
      %1402 = vst [vmem:[%s329 + $0x40] sm:$0xf] %v1338
      %1403 = vst [vmem:[%s329 + $0x44] sm:$0xf] %v1339
      %1404 = vst [vmem:[%s329 + $0x48] sm:$0xf] %v1340
      %1405 = vst [vmem:[%s329 + $0x4c] sm:$0xf] %v1341
      %1406 = vst [vmem:[%s329 + $0x50] sm:$0xf] %v1342
      %1407 = vst [vmem:[%s329 + $0x54] sm:$0xf] %v1343
      %1408 = vst [vmem:[%s329 + $0x58] sm:$0xf] %v1344
      %1409 = vst [vmem:[%s329 + $0x5c] sm:$0xf] %v1345
      %1410 = vst [vmem:[%s329 + $0x60] sm:$0xf] %v1346
      %1411 = vst [vmem:[%s329 + $0x64] sm:$0xf] %v1347
      %1412 = vst [vmem:[%s329 + $0x68] sm:$0xf] %v1348
      %1413 = vst [vmem:[%s329 + $0x6c] sm:$0xf] %v1349
      %1414 = vst [vmem:[%s329 + $0x70] sm:$0xf] %v1350
      %1415 = vst [vmem:[%s329 + $0x74] sm:$0xf] %v1351
      %1416 = vst [vmem:[%s329 + $0x78] sm:$0xf] %v1352
      %1417 = vst [vmem:[%s329 + $0x7c] sm:$0xf] %v1353
      %s1418 = smul.u32 32, %s19
      %p1419 = scmp.lt.s32.totalorder %s1418, 63
      %s1420 = scalar_select %p1419, %s1418, 63
      %s1421 = smul.addr %s1420, 4
      %s1422 = scalar_lea.vmem %s8, %s1421
      // Predicated region
      $region53: #{bottleneck_forward.5} parent=51 // pred_check
        %p1423 = pneg %p215
      $region54: #{bottleneck_forward.5} parent=51 // pred_check_branch
        %1425 = sbr.rel (%p1423) target = $region56
      $region55: #{bottleneck_forward.5} parent=51 // pred_region
        %s1426 = smul.u32 32, %s19
      $region56: #{bottleneck_forward.5} parent=51 // pred_fallthru
        _
    $region52: #{bottleneck_forward.5} parent=5 // pred_fallthru
      _
    %p1427 = scmp.le.s32.totalorder 2, %s14
    // Predicated region
    $region57: #{bottleneck_forward.5} parent=5 // pred_check
      %p1428 = pneg %p1427
    $region58: #{bottleneck_forward.5} parent=5 // pred_check_branch
      %1430 = sbr.rel (%p1428) target = $region60
    $region59: #{bottleneck_forward.5} parent=5 // pred_region
      %s1431 = ssub.s32 %s14, 2
      // Predicated region
      $region61: #{bottleneck_forward.5} parent=59 // pred_check
        %p1432 = pneg %p221
      $region62: #{bottleneck_forward.5} parent=59 // pred_check_branch
        %1434 = sbr.rel (%p1432) target = $region64
      $region63: #{bottleneck_forward.5} parent=59 // pred_region
        %s1435 = smul.u32 32, %s20
        %p1436 = scmp.lt.s32.totalorder %s1435, 63
        %s1437 = scalar_select %p1436, %s1435, 63
        %s1438 = smul.addr %s1437, 4
        %s1439 = scalar_lea.vmem %s8, %s1438
      $region64: #{bottleneck_forward.5} parent=59 // pred_fallthru
        _
    $region60: #{bottleneck_forward.5} parent=5 // pred_fallthru
      _
  $region6: #{bottleneck_forward.5} parent=0 // loop_footer
    %s18 = sadd.s32 1, %s14
  $region7: #{bottleneck_forward.5} parent=0 // loop_footer_branch
    %13 = sbr.rel target = $region3
  $region8: #{bottleneck_forward.5} parent=0 // loop_exit
    _

// kernel: bottleneck_forward.4
$region0: #{bottleneck_forward.4}
  #allocation0 [shape = 'u32[]', space=smem, size = 0x4, offset = 0x4, fixed_abs, tag = 'smem constant byte address 0x4 - core index']
  #allocation1 [shape = 'u32[144,128]{1,0:T(1,128)}', space=vmem, size = 0x12000, scoped, tag = 'internal scratch']
  #allocation2 [shape = 'bf16[18,18,128]{2,1,0:T(8,128)(2,1)}', space=vmem, size = 0x1b000, scoped, tag = 'scratch operand']
  %s0 = inlined_call_operand.vmem [shape: bf16[2,16,16,128], index: 0, kind: input, shape index: {}]
  %s1 = inlined_call_operand.vmem [shape: bf16[3,3,128,128], index: 1, kind: input, shape index: {}]
  %s2 = inlined_call_operand.vmem [shape: f32[1,128], index: 2, kind: input, shape index: {}]
  %s3 = inlined_call_operand.vmem [shape: f32[1,128], index: 3, kind: input, shape index: {}]
  %s4 = inlined_call_operand.vmem [shape: bf16[2,16,16,128], index: 4, kind: output, shape index: {}]
  %s5 = sld [smem:[#allocation0]]
  $region53: #{bottleneck_forward.4} parent=0
    _
  %s7 = ssub.s32 1, %s5
  %s8 = scalar_select 0, %s7, %s5
  loop: start=0, step=1, limit=4
  $region2: #{bottleneck_forward.4} parent=0 // loop_pre_header
    _
  $region3: #{bottleneck_forward.4} parent=0 // loop_header
    %s10 = sphi 0, %s14
    %p11 = scmp.ge.s32.totalorder %s10, 4
    %s17 = sphi 0, %s29
    %s18 = sphi 0, %s25
    %s19 = sphi 0, %s17
    %s20 = sphi 0, %s18
    %s21 = sphi 0, %s19
    %s22 = sphi 0, %s20
    %s32 = sphi 0, %s34
    %s35 = sphi 0, %s32
    %s36 = sphi 0, %s35
    %s52 = sphi 0, %s36
    %s56 = sphi 0, %s56
    %s58 = sphi 0, %s56
    %s59 = sphi 0, %s58
    %s73 = sphi 0, %s59
    %s77 = sphi 0, %s77
    %s79 = sphi 0, %s77
    %s80 = sphi 0, %s79
    %s94 = sphi 0, %s80
    %s98 = sphi 0, %s98
    %s100 = sphi 0, %s98
    %s101 = sphi 0, %s100
    %s115 = sphi 0, %s101
    %s123 = sphi 0, %s125
    %s126 = sphi 0, %s123
    %s127 = sphi 0, %s126
    %s143 = sphi 0, %s127
  $region4: #{bottleneck_forward.4} parent=0 // loop_header_branch
    %13 = sbr.rel (%p11) target = $region8
  $region5: #{bottleneck_forward.4} parent=0 // loop_body
    %s15 = ssub.s32 %s10, 1
    %s16 = ssub.s32 %s10, 2
    %s23 = sadd.s32 1, %s18
    %p24 = scmp.ge.s32.totalorder %s23, 1
    %s25 = scalar_select %p24, 0, %s23
    %s26 = sadd.s32 1, %s17
    %s27 = scalar_select %p24, %s26, %s17
    %p28 = scmp.ge.s32.totalorder %s27, 2
    %s29 = scalar_select %p28, 0, %s27
    %s30 = ssub.s32 %s17, %s29
    %p31 = scmp.eq.s32.totalorder %s30, 0
    %s33 = sadd.s32 %s32, 1
    %s34 = scalar_select %p31, %s32, %s33
    %p37 = pneg %p31
    %p38 = scmp.eq.s32.totalorder %s10, 1
    %p39 = por %p37, %p38
    %p40 = scmp.ne.s32.totalorder %s32, %s35
    %p41 = scmp.eq.s32.totalorder %s10, 0
    %p42 = por %p40, %p41
    %p43 = scmp.ne.s32.totalorder %s32, %s35
    %p44 = scmp.eq.s32.totalorder %s15, 1
    %p45 = por %p43, %p44
    %p46 = scmp.ne.s32.totalorder %s35, %s36
    %p47 = scmp.eq.s32.totalorder %s15, 0
    %p48 = por %p46, %p47
    %p49 = scmp.ne.s32.totalorder %s35, %s36
    %p50 = scmp.eq.s32.totalorder %s16, 1
    %p51 = por %p49, %p50
    %p53 = scmp.ne.s32.totalorder %s36, %s52
    %p54 = scmp.eq.s32.totalorder %s16, 0
    %p55 = por %p53, %p54
    %s57 = sadd.s32 %s56, 1
    %p60 = scmp.eq.s32.totalorder %s10, 1
    %p61 = scmp.ne.s32.totalorder %s56, %s58
    %p62 = scmp.eq.s32.totalorder %s10, 0
    %p63 = por %p61, %p62
    %p64 = scmp.ne.s32.totalorder %s56, %s58
    %p65 = scmp.eq.s32.totalorder %s15, 1
    %p66 = por %p64, %p65
    %p67 = scmp.ne.s32.totalorder %s58, %s59
    %p68 = scmp.eq.s32.totalorder %s15, 0
    %p69 = por %p67, %p68
    %p70 = scmp.ne.s32.totalorder %s58, %s59
    %p71 = scmp.eq.s32.totalorder %s16, 1
    %p72 = por %p70, %p71
    %p74 = scmp.ne.s32.totalorder %s59, %s73
    %p75 = scmp.eq.s32.totalorder %s16, 0
    %p76 = por %p74, %p75
    %s78 = sadd.s32 %s77, 1
    %p81 = scmp.eq.s32.totalorder %s10, 1
    %p82 = scmp.ne.s32.totalorder %s77, %s79
    %p83 = scmp.eq.s32.totalorder %s10, 0
    %p84 = por %p82, %p83
    %p85 = scmp.ne.s32.totalorder %s77, %s79
    %p86 = scmp.eq.s32.totalorder %s15, 1
    %p87 = por %p85, %p86
    %p88 = scmp.ne.s32.totalorder %s79, %s80
    %p89 = scmp.eq.s32.totalorder %s15, 0
    %p90 = por %p88, %p89
    %p91 = scmp.ne.s32.totalorder %s79, %s80
    %p92 = scmp.eq.s32.totalorder %s16, 1
    %p93 = por %p91, %p92
    %p95 = scmp.ne.s32.totalorder %s80, %s94
    %p96 = scmp.eq.s32.totalorder %s16, 0
    %p97 = por %p95, %p96
    %s99 = sadd.s32 %s98, 1
    %p102 = scmp.eq.s32.totalorder %s10, 1
    %p103 = scmp.ne.s32.totalorder %s98, %s100
    %p104 = scmp.eq.s32.totalorder %s10, 0
    %p105 = por %p103, %p104
    %p106 = scmp.ne.s32.totalorder %s98, %s100
    %p107 = scmp.eq.s32.totalorder %s15, 1
    %p108 = por %p106, %p107
    %p109 = scmp.ne.s32.totalorder %s100, %s101
    %p110 = scmp.eq.s32.totalorder %s15, 0
    %p111 = por %p109, %p110
    %p112 = scmp.ne.s32.totalorder %s100, %s101
    %p113 = scmp.eq.s32.totalorder %s16, 1
    %p114 = por %p112, %p113
    %p116 = scmp.ne.s32.totalorder %s101, %s115
    %p117 = scmp.eq.s32.totalorder %s16, 0
    %p118 = por %p116, %p117
    %s119 = ssub.s32 %s17, %s29
    %s120 = ssub.s32 %s18, %s25
    %s121 = sor.u32 %s119, %s120
    %p122 = scmp.eq.s32.totalorder %s121, 0
    %s124 = sadd.s32 %s123, 1
    %s125 = scalar_select %p122, %s123, %s124
    %p128 = pneg %p122
    %p129 = scmp.eq.s32.totalorder %s10, 1
    %p130 = por %p128, %p129
    %p131 = scmp.ne.s32.totalorder %s123, %s126
    %p132 = scmp.eq.s32.totalorder %s10, 0
    %p133 = por %p131, %p132
    %p134 = scmp.ne.s32.totalorder %s123, %s126
    %p135 = scmp.eq.s32.totalorder %s15, 1
    %p136 = por %p134, %p135
    %p137 = scmp.ne.s32.totalorder %s126, %s127
    %p138 = scmp.eq.s32.totalorder %s15, 0
    %p139 = por %p137, %p138
    %p140 = scmp.ne.s32.totalorder %s126, %s127
    %p141 = scmp.eq.s32.totalorder %s16, 1
    %p142 = por %p140, %p141
    %p144 = scmp.ne.s32.totalorder %s127, %s143
    %p145 = scmp.eq.s32.totalorder %s16, 0
    %p146 = por %p144, %p145
    %p147 = scmp.le.s32.totalorder 1, %s10
    %p148 = scmp.lt.s32.totalorder %s10, 3
    %p149 = pnand %p147, %p148
    %p150 = pneg %p149
    // Predicated region
    $region9: #{bottleneck_forward.4} parent=5 // pred_check
      _
    $region10: #{bottleneck_forward.4} parent=5 // pred_check_branch
      %152 = sbr.rel (%p149) target = $region12
    $region11: #{bottleneck_forward.4} parent=5 // pred_region
      %s153 = ssub.s32 %s10, 1
      // Predicated region
      $region13: #{bottleneck_forward.4} parent=11 // pred_check
        %p154 = pneg %p69
      $region14: #{bottleneck_forward.4} parent=11 // pred_check_branch
        %156 = sbr.rel (%p154) target = $region16
      $region15: #{bottleneck_forward.4} parent=11 // pred_region
        _
      $region16: #{bottleneck_forward.4} parent=11 // pred_fallthru
        _
      // Predicated region
      $region17: #{bottleneck_forward.4} parent=11 // pred_check
        %p157 = pneg %p90
      $region18: #{bottleneck_forward.4} parent=11 // pred_check_branch
        %159 = sbr.rel (%p157) target = $region20
      $region19: #{bottleneck_forward.4} parent=11 // pred_region
        _
      $region20: #{bottleneck_forward.4} parent=11 // pred_fallthru
        _
      // Predicated region
      $region21: #{bottleneck_forward.4} parent=11 // pred_check
        %p160 = pneg %p111
      $region22: #{bottleneck_forward.4} parent=11 // pred_check_branch
        %162 = sbr.rel (%p160) target = $region24
      $region23: #{bottleneck_forward.4} parent=11 // pred_region
        _
      $region24: #{bottleneck_forward.4} parent=11 // pred_fallthru
        _
    $region12: #{bottleneck_forward.4} parent=5 // pred_fallthru
      _
    %p163 = scmp.lt.s32.totalorder %s10, 2
    // Predicated region
    $region25: #{bottleneck_forward.4} parent=5 // pred_check
      %p164 = pneg %p163
    $region26: #{bottleneck_forward.4} parent=5 // pred_check_branch
      %166 = sbr.rel (%p164) target = $region28
    $region27: #{bottleneck_forward.4} parent=5 // pred_region
      // Predicated region
      $region29: #{bottleneck_forward.4} parent=27 // pred_check
        %p167 = pneg %p42
      $region30: #{bottleneck_forward.4} parent=27 // pred_check_branch
        %169 = sbr.rel (%p167) target = $region32
      $region31: #{bottleneck_forward.4} parent=27 // pred_region
        %p170 = scmp.lt.s32.totalorder %s17, 1
        %s171 = scalar_select %p170, %s17, 1
        %s172 = smul.addr %s171, 32
        %s173 = smul.addr %s172, 4
        %s174 = scalar_lea.vmem %s0, %s173
      $region32: #{bottleneck_forward.4} parent=27 // pred_fallthru
        _
    $region28: #{bottleneck_forward.4} parent=5 // pred_fallthru
      _
    %p175 = scmp.le.s32.totalorder 1, %s10
    %p176 = scmp.lt.s32.totalorder %s10, 3
    %p177 = pnand %p175, %p176
    %p178 = pneg %p177
    // Predicated region
    $region33: #{bottleneck_forward.4} parent=5 // pred_check
      _
    $region34: #{bottleneck_forward.4} parent=5 // pred_check_branch
      %180 = sbr.rel (%p177) target = $region36
    $region35: #{bottleneck_forward.4} parent=5 // pred_region
      %s181 = ssub.s32 %s10, 1
      %p182 = scmp.lt.s32.totalorder %s19, 1
      %s183 = scalar_select %p182, %s19, 1
      %s184 = smul.addr %s183, 32
      %s185 = smul.addr %s184, 4
      %s186 = scalar_lea.vmem %s0, %s185
      %p187 = pneg %p48
      %p188 = pneg %p45
      %p189 = pneg %p69
      %p190 = pneg %p66
      %p191 = pneg %p90
      %p192 = pneg %p87
      %p193 = pneg %p111
      %p194 = pneg %p108
      %p195 = pneg %p139
      %p196 = pneg %p136
      %s197 = smul.u32 16, %s20
      %p198 = scmp.lt.s32.totalorder %s19, 1
      %s199 = scalar_select %p198, %s19, 1
      %p200 = scmp.lt.s32.totalorder %s197, 15
      %s201 = scalar_select %p200, %s197, 15
      %s202 = smul.addr %s201, 2
      %s203 = smul.addr %s199, 32
      %s204 = sadd.s32 %s202, %s203
      %s205 = smul.addr %s204, 4
      %s206 = scalar_lea.vmem %s4, %s205
      %p207 = scmp.lt.s32.totalorder %s19, 1
      %s208 = scalar_select %p207, %s19, 1
      %s209 = smul.addr %s208, 32
      %s210 = smul.addr %s209, 4
      %s211 = scalar_lea.vmem %s0, %s210
      %s212 = smul.u32 16, %s20
      %p213 = scmp.lt.s32.totalorder %s19, 1
      %s214 = scalar_select %p213, %s19, 1
      %p215 = scmp.lt.s32.totalorder %s212, 15
      %s216 = scalar_select %p215, %s212, 15
      %s217 = smul.addr %s216, 2
      %s218 = smul.addr %s214, 32
      %s219 = sadd.s32 %s217, %s218
      %s220 = smul.addr %s219, 4
      %s221 = scalar_lea.vmem %s4, %s220
      %s222 = smul.u32 16, %s20
      %p224 = scmp.eq.s32.totalorder %s20, 0
      // Predicated region
      $region37: #{bottleneck_forward.4} parent=35 // pred_check
        %p225 = pneg %p224
      $region38: #{bottleneck_forward.4} parent=35 // pred_check_branch
        %227 = sbr.rel (%p225) target = $region40
      $region39: #{bottleneck_forward.4} parent=35 // pred_region
        %228 = vst [vmem:[#allocation2] sm:$0xf] 0
        %229 = vst [vmem:[#allocation2 + $0x4] sm:$0xf] 0
        %230 = vst [vmem:[#allocation2 + $0x8] sm:$0x1] 0
        %231 = vst [vmem:[#allocation2 + $0xc] sm:$0xf] 0
        %232 = vst [vmem:[#allocation2 + $0x10] sm:$0xf] 0
        %233 = vst [vmem:[#allocation2 + $0x14] sm:$0x1] 0
        %234 = vst [vmem:[#allocation2 + $0x18] sm:$0xf] 0
        %235 = vst [vmem:[#allocation2 + $0x1c] sm:$0xf] 0
        %236 = vst [vmem:[#allocation2 + $0x20] sm:$0x1] 0
        %237 = vst [vmem:[#allocation2 + $0x24] sm:$0xf] 0
        %238 = vst [vmem:[#allocation2 + $0x28] sm:$0xf] 0
        %239 = vst [vmem:[#allocation2 + $0x2c] sm:$0x1] 0
        %240 = vst [vmem:[#allocation2 + $0x30] sm:$0xf] 0
        %241 = vst [vmem:[#allocation2 + $0x34] sm:$0xf] 0
        %242 = vst [vmem:[#allocation2 + $0x38] sm:$0x1] 0
        %243 = vst [vmem:[#allocation2 + $0x3c] sm:$0xf] 0
        %244 = vst [vmem:[#allocation2 + $0x40] sm:$0xf] 0
        %245 = vst [vmem:[#allocation2 + $0x44] sm:$0x1] 0
        %246 = vst [vmem:[#allocation2 + $0x48] sm:$0xf] 0
        %247 = vst [vmem:[#allocation2 + $0x4c] sm:$0xf] 0
        %248 = vst [vmem:[#allocation2 + $0x50] sm:$0x1] 0
        %249 = vst [vmem:[#allocation2 + $0x54] sm:$0xf] 0
        %250 = vst [vmem:[#allocation2 + $0x58] sm:$0xf] 0
        %251 = vst [vmem:[#allocation2 + $0x5c] sm:$0x1] 0
        %252 = vst [vmem:[#allocation2 + $0x60] sm:$0xf] 0
        %253 = vst [vmem:[#allocation2 + $0x64] sm:$0xf] 0
        %254 = vst [vmem:[#allocation2 + $0x68] sm:$0x1] 0
        %255 = vst [vmem:[#allocation2 + $0x6c] sm:$0xf] 0
        %256 = vst [vmem:[#allocation2 + $0x70] sm:$0xf] 0
        %257 = vst [vmem:[#allocation2 + $0x74] sm:$0x1] 0
        %258 = vst [vmem:[#allocation2 + $0x78] sm:$0xf] 0
        %259 = vst [vmem:[#allocation2 + $0x7c] sm:$0xf] 0
        %260 = vst [vmem:[#allocation2 + $0x80] sm:$0x1] 0
        %261 = vst [vmem:[#allocation2 + $0x84] sm:$0xf] 0
        %262 = vst [vmem:[#allocation2 + $0x88] sm:$0xf] 0
        %263 = vst [vmem:[#allocation2 + $0x8c] sm:$0x1] 0
        %264 = vst [vmem:[#allocation2 + $0x90] sm:$0xf] 0
        %265 = vst [vmem:[#allocation2 + $0x94] sm:$0xf] 0
        %266 = vst [vmem:[#allocation2 + $0x98] sm:$0x1] 0
        %267 = vst [vmem:[#allocation2 + $0x9c] sm:$0xf] 0
        %268 = vst [vmem:[#allocation2 + $0xa0] sm:$0xf] 0
        %269 = vst [vmem:[#allocation2 + $0xa4] sm:$0x1] 0
        %270 = vst [vmem:[#allocation2 + $0xa8] sm:$0xf] 0
        %271 = vst [vmem:[#allocation2 + $0xac] sm:$0xf] 0
        %272 = vst [vmem:[#allocation2 + $0xb0] sm:$0x1] 0
        %273 = vst [vmem:[#allocation2 + $0xb4] sm:$0xf] 0
        %274 = vst [vmem:[#allocation2 + $0xb8] sm:$0xf] 0
        %275 = vst [vmem:[#allocation2 + $0xbc] sm:$0x1] 0
        %276 = vst [vmem:[#allocation2 + $0xc0] sm:$0xf] 0
        %277 = vst [vmem:[#allocation2 + $0xc4] sm:$0xf] 0
        %278 = vst [vmem:[#allocation2 + $0xc8] sm:$0x1] 0
        %279 = vst [vmem:[#allocation2 + $0xcc] sm:$0xf] 0
        %280 = vst [vmem:[#allocation2 + $0xd0] sm:$0xf] 0
        %281 = vst [vmem:[#allocation2 + $0xd4] sm:$0x1] 0
        %v282 = vld [vmem:[%s211] sm:$0xf]
        %v283 = vld [vmem:[%s211 + $0x4] sm:$0xf]
        %v284 = vld [vmem:[%s211 + $0x8] sm:$0xf]
        %v285 = vld [vmem:[%s211 + $0xc] sm:$0xf]
        %v286 = vld [vmem:[%s211 + $0x10] sm:$0xf]
        %v287 = vld [vmem:[%s211 + $0x14] sm:$0xf]
        %v288 = vld [vmem:[%s211 + $0x18] sm:$0xf]
        %v289 = vld [vmem:[%s211 + $0x1c] sm:$0xf]
        %v290 = vld [vmem:[%s211 + $0x20] sm:$0xf]
        %v291 = vld [vmem:[%s211 + $0x24] sm:$0xf]
        %v292 = vld [vmem:[%s211 + $0x28] sm:$0xf]
        %v293 = vld [vmem:[%s211 + $0x2c] sm:$0xf]
        %v294 = vld [vmem:[%s211 + $0x30] sm:$0xf]
        %v295 = vld [vmem:[%s211 + $0x34] sm:$0xf]
        %v296 = vld [vmem:[%s211 + $0x38] sm:$0xf]
        %v297 = vld [vmem:[%s211 + $0x3c] sm:$0xf]
        %v298 = vld [vmem:[%s211 + $0x40] sm:$0xf]
        %v299 = vld [vmem:[%s211 + $0x44] sm:$0xf]
        %v300 = vld [vmem:[%s211 + $0x48] sm:$0xf]
        %v301 = vld [vmem:[%s211 + $0x4c] sm:$0xf]
        %v302 = vld [vmem:[%s211 + $0x50] sm:$0xf]
        %v303 = vld [vmem:[%s211 + $0x54] sm:$0xf]
        %v304 = vld [vmem:[%s211 + $0x58] sm:$0xf]
        %v305 = vld [vmem:[%s211 + $0x5c] sm:$0xf]
        %v306 = vld [vmem:[%s211 + $0x60] sm:$0xf]
        %v307 = vld [vmem:[%s211 + $0x64] sm:$0xf]
        %v308 = vld [vmem:[%s211 + $0x68] sm:$0xf]
        %v309 = vld [vmem:[%s211 + $0x6c] sm:$0xf]
        %v310 = vld [vmem:[%s211 + $0x70] sm:$0xf]
        %v311 = vld [vmem:[%s211 + $0x74] sm:$0xf]
        %v312 = vld [vmem:[%s211 + $0x78] sm:$0xf]
        %v313 = vld [vmem:[%s211 + $0x7c] sm:$0xf]
        %vm314 = vsmask.f32 256
        %vm315 = vsmask.f32 4368
        %vm316 = vmor %vm314, %vm315
        %v318 = vshrl.u32 %v282, 16
        %v320 = vrot.slane %v318, 7
        %v321 = vshll.u32 %v282, 16
        %v323 = vor.u32 %v320, %v321
        %v324 = vrot.slane %v320, 4
        %v326 = vshrl.u32 %v283, 16
        %v328 = vrot.slane %v326, 7
        %v329 = vshll.u32 %v283, 16
        %v331 = vor.u32 %v328, %v329
        %v332 = vsel %vm316, %v324, %v331
        %v333 = vrot.slane %v328, 4
        %v335 = vshrl.u32 %v284, 16
        %v337 = vrot.slane %v335, 7
        %v338 = vshll.u32 %v284, 16
        %v340 = vor.u32 %v337, %v338
        %v341 = vrot.slane %v337, 4
        %v343 = vshrl.u32 %v285, 16
        %v345 = vrot.slane %v343, 7
        %v346 = vshll.u32 %v285, 16
        %v348 = vor.u32 %v345, %v346
        %v349 = vsel %vm316, %v341, %v348
        %v350 = vrot.slane %v345, 4
        %v352 = vshrl.u32 %v286, 16
        %v354 = vrot.slane %v352, 7
        %v355 = vshll.u32 %v286, 16
        %v357 = vor.u32 %v354, %v355
        %v358 = vrot.slane %v354, 4
        %v360 = vshrl.u32 %v287, 16
        %v362 = vrot.slane %v360, 7
        %v363 = vshll.u32 %v287, 16
        %v365 = vor.u32 %v362, %v363
        %v366 = vsel %vm316, %v358, %v365
        %v367 = vrot.slane %v362, 4
        %v369 = vshrl.u32 %v288, 16
        %v371 = vrot.slane %v369, 7
        %v372 = vshll.u32 %v288, 16
        %v374 = vor.u32 %v371, %v372
        %v375 = vrot.slane %v371, 4
        %v377 = vshrl.u32 %v289, 16
        %v379 = vrot.slane %v377, 7
        %v380 = vshll.u32 %v289, 16
        %v382 = vor.u32 %v379, %v380
        %v383 = vsel %vm316, %v375, %v382
        %v384 = vrot.slane %v379, 4
        %v386 = vshrl.u32 %v290, 16
        %v388 = vrot.slane %v386, 7
        %v389 = vshll.u32 %v290, 16
        %v391 = vor.u32 %v388, %v389
        %v392 = vrot.slane %v388, 4
        %v394 = vshrl.u32 %v291, 16
        %v396 = vrot.slane %v394, 7
        %v397 = vshll.u32 %v291, 16
        %v399 = vor.u32 %v396, %v397
        %v400 = vsel %vm316, %v392, %v399
        %v401 = vrot.slane %v396, 4
        %v403 = vshrl.u32 %v292, 16
        %v405 = vrot.slane %v403, 7
        %v406 = vshll.u32 %v292, 16
        %v408 = vor.u32 %v405, %v406
        %v409 = vrot.slane %v405, 4
        %v411 = vshrl.u32 %v293, 16
        %v413 = vrot.slane %v411, 7
        %v414 = vshll.u32 %v293, 16
        %v416 = vor.u32 %v413, %v414
        %v417 = vsel %vm316, %v409, %v416
        %v418 = vrot.slane %v413, 4
        %v420 = vshrl.u32 %v294, 16
        %v422 = vrot.slane %v420, 7
        %v423 = vshll.u32 %v294, 16
        %v425 = vor.u32 %v422, %v423
        %v426 = vrot.slane %v422, 4
        %v428 = vshrl.u32 %v295, 16
        %v430 = vrot.slane %v428, 7
        %v431 = vshll.u32 %v295, 16
        %v433 = vor.u32 %v430, %v431
        %v434 = vsel %vm316, %v426, %v433
        %v435 = vrot.slane %v430, 4
        %v437 = vshrl.u32 %v296, 16
        %v439 = vrot.slane %v437, 7
        %v440 = vshll.u32 %v296, 16
        %v442 = vor.u32 %v439, %v440
        %v443 = vrot.slane %v439, 4
        %v445 = vshrl.u32 %v297, 16
        %v447 = vrot.slane %v445, 7
        %v448 = vshll.u32 %v297, 16
        %v450 = vor.u32 %v447, %v448
        %v451 = vsel %vm316, %v443, %v450
        %v452 = vrot.slane %v447, 4
        %v454 = vshrl.u32 %v298, 16
        %v456 = vrot.slane %v454, 7
        %v457 = vshll.u32 %v298, 16
        %v459 = vor.u32 %v456, %v457
        %v460 = vrot.slane %v456, 4
        %v462 = vshrl.u32 %v299, 16
        %v464 = vrot.slane %v462, 7
        %v465 = vshll.u32 %v299, 16
        %v467 = vor.u32 %v464, %v465
        %v468 = vsel %vm316, %v460, %v467
        %v469 = vrot.slane %v464, 4
        %v471 = vshrl.u32 %v300, 16
        %v473 = vrot.slane %v471, 7
        %v474 = vshll.u32 %v300, 16
        %v476 = vor.u32 %v473, %v474
        %v477 = vrot.slane %v473, 4
        %v479 = vshrl.u32 %v301, 16
        %v481 = vrot.slane %v479, 7
        %v482 = vshll.u32 %v301, 16
        %v484 = vor.u32 %v481, %v482
        %v485 = vsel %vm316, %v477, %v484
        %v486 = vrot.slane %v481, 4
        %v488 = vshrl.u32 %v302, 16
        %v490 = vrot.slane %v488, 7
        %v491 = vshll.u32 %v302, 16
        %v493 = vor.u32 %v490, %v491
        %v494 = vrot.slane %v490, 4
        %v496 = vshrl.u32 %v303, 16
        %v498 = vrot.slane %v496, 7
        %v499 = vshll.u32 %v303, 16
        %v501 = vor.u32 %v498, %v499
        %v502 = vsel %vm316, %v494, %v501
        %v503 = vrot.slane %v498, 4
        %v505 = vshrl.u32 %v304, 16
        %v507 = vrot.slane %v505, 7
        %v508 = vshll.u32 %v304, 16
        %v510 = vor.u32 %v507, %v508
        %v511 = vrot.slane %v507, 4
        %v513 = vshrl.u32 %v305, 16
        %v515 = vrot.slane %v513, 7
        %v516 = vshll.u32 %v305, 16
        %v518 = vor.u32 %v515, %v516
        %v519 = vsel %vm316, %v511, %v518
        %v520 = vrot.slane %v515, 4
        %v522 = vshrl.u32 %v306, 16
        %v524 = vrot.slane %v522, 7
        %v525 = vshll.u32 %v306, 16
        %v527 = vor.u32 %v524, %v525
        %v528 = vrot.slane %v524, 4
        %v530 = vshrl.u32 %v307, 16
        %v532 = vrot.slane %v530, 7
        %v533 = vshll.u32 %v307, 16
        %v535 = vor.u32 %v532, %v533
        %v536 = vsel %vm316, %v528, %v535
        %v537 = vrot.slane %v532, 4
        %v539 = vshrl.u32 %v308, 16
        %v541 = vrot.slane %v539, 7
        %v542 = vshll.u32 %v308, 16
        %v544 = vor.u32 %v541, %v542
        %v545 = vrot.slane %v541, 4
        %v547 = vshrl.u32 %v309, 16
        %v549 = vrot.slane %v547, 7
        %v550 = vshll.u32 %v309, 16
        %v552 = vor.u32 %v549, %v550
        %v553 = vsel %vm316, %v545, %v552
        %v554 = vrot.slane %v549, 4
        %v556 = vshrl.u32 %v310, 16
        %v558 = vrot.slane %v556, 7
        %v559 = vshll.u32 %v310, 16
        %v561 = vor.u32 %v558, %v559
        %v562 = vrot.slane %v558, 4
        %v564 = vshrl.u32 %v311, 16
        %v566 = vrot.slane %v564, 7
        %v567 = vshll.u32 %v311, 16
        %v569 = vor.u32 %v566, %v567
        %v570 = vsel %vm316, %v562, %v569
        %v571 = vrot.slane %v566, 4
        %v573 = vshrl.u32 %v312, 16
        %v575 = vrot.slane %v573, 7
        %v576 = vshll.u32 %v312, 16
        %v578 = vor.u32 %v575, %v576
        %v579 = vrot.slane %v575, 4
        %v581 = vshrl.u32 %v313, 16
        %v583 = vrot.slane %v581, 7
        %v584 = vshll.u32 %v313, 16
        %v586 = vor.u32 %v583, %v584
        %v587 = vsel %vm316, %v579, %v586
        %v588 = vrot.slane %v583, 4
        %s637 = scalar_lea.vmem [#allocation2], 12
        %vm638 = vcmask 1043456
        %vm639 = vsmask.f32 7938
        %vm640 = vmand %vm638, %vm639
        %v641 = vld [vmem:[%s637] sm:$0xf]
        %v642 = vsel %vm640, %v323, %v641
        %643 = vst [vmem:[%s637] sm:$0xf] %v642
        %644 = vst [vmem:[%s637 + $0x4] sm:$0xf] %v332
        %vm645 = vcmask 1040384
        %vm646 = vmand %vm645, %vm314
        %v647 = vld [vmem:[%s637 + $0x8] sm:$0x1]
        %v648 = vsel %vm646, %v333, %v647
        %649 = vst [vmem:[%s637 + $0x8] sm:$0x1] %v648
        %v650 = vld [vmem:[%s637 + $0xc] sm:$0xf]
        %v651 = vsel %vm640, %v340, %v650
        %652 = vst [vmem:[%s637 + $0xc] sm:$0xf] %v651
        %653 = vst [vmem:[%s637 + $0x10] sm:$0xf] %v349
        %v654 = vld [vmem:[%s637 + $0x14] sm:$0x1]
        %v655 = vsel %vm646, %v350, %v654
        %656 = vst [vmem:[%s637 + $0x14] sm:$0x1] %v655
        %v657 = vld [vmem:[%s637 + $0x18] sm:$0xf]
        %v658 = vsel %vm640, %v357, %v657
        %659 = vst [vmem:[%s637 + $0x18] sm:$0xf] %v658
        %660 = vst [vmem:[%s637 + $0x1c] sm:$0xf] %v366
        %v661 = vld [vmem:[%s637 + $0x20] sm:$0x1]
        %v662 = vsel %vm646, %v367, %v661
        %663 = vst [vmem:[%s637 + $0x20] sm:$0x1] %v662
        %v664 = vld [vmem:[%s637 + $0x24] sm:$0xf]
        %v665 = vsel %vm640, %v374, %v664
        %666 = vst [vmem:[%s637 + $0x24] sm:$0xf] %v665
        %667 = vst [vmem:[%s637 + $0x28] sm:$0xf] %v383
        %v668 = vld [vmem:[%s637 + $0x2c] sm:$0x1]
        %v669 = vsel %vm646, %v384, %v668
        %670 = vst [vmem:[%s637 + $0x2c] sm:$0x1] %v669
        %v671 = vld [vmem:[%s637 + $0x30] sm:$0xf]
        %v672 = vsel %vm640, %v391, %v671
        %673 = vst [vmem:[%s637 + $0x30] sm:$0xf] %v672
        %674 = vst [vmem:[%s637 + $0x34] sm:$0xf] %v400
        %v675 = vld [vmem:[%s637 + $0x38] sm:$0x1]
        %v676 = vsel %vm646, %v401, %v675
        %677 = vst [vmem:[%s637 + $0x38] sm:$0x1] %v676
        %v678 = vld [vmem:[%s637 + $0x3c] sm:$0xf]
        %v679 = vsel %vm640, %v408, %v678
        %680 = vst [vmem:[%s637 + $0x3c] sm:$0xf] %v679
        %681 = vst [vmem:[%s637 + $0x40] sm:$0xf] %v417
        %v682 = vld [vmem:[%s637 + $0x44] sm:$0x1]
        %v683 = vsel %vm646, %v418, %v682
        %684 = vst [vmem:[%s637 + $0x44] sm:$0x1] %v683
        %v685 = vld [vmem:[%s637 + $0x48] sm:$0xf]
        %v686 = vsel %vm640, %v425, %v685
        %687 = vst [vmem:[%s637 + $0x48] sm:$0xf] %v686
        %688 = vst [vmem:[%s637 + $0x4c] sm:$0xf] %v434
        %v689 = vld [vmem:[%s637 + $0x50] sm:$0x1]
        %v690 = vsel %vm646, %v435, %v689
        %691 = vst [vmem:[%s637 + $0x50] sm:$0x1] %v690
        %v692 = vld [vmem:[%s637 + $0x54] sm:$0xf]
        %v693 = vsel %vm640, %v442, %v692
        %694 = vst [vmem:[%s637 + $0x54] sm:$0xf] %v693
        %695 = vst [vmem:[%s637 + $0x58] sm:$0xf] %v451
        %v696 = vld [vmem:[%s637 + $0x5c] sm:$0x1]
        %v697 = vsel %vm646, %v452, %v696
        %698 = vst [vmem:[%s637 + $0x5c] sm:$0x1] %v697
        %v699 = vld [vmem:[%s637 + $0x60] sm:$0xf]
        %v700 = vsel %vm640, %v459, %v699
        %701 = vst [vmem:[%s637 + $0x60] sm:$0xf] %v700
        %702 = vst [vmem:[%s637 + $0x64] sm:$0xf] %v468
        %v703 = vld [vmem:[%s637 + $0x68] sm:$0x1]
        %v704 = vsel %vm646, %v469, %v703
        %705 = vst [vmem:[%s637 + $0x68] sm:$0x1] %v704
        %v706 = vld [vmem:[%s637 + $0x6c] sm:$0xf]
        %v707 = vsel %vm640, %v476, %v706
        %708 = vst [vmem:[%s637 + $0x6c] sm:$0xf] %v707
        %709 = vst [vmem:[%s637 + $0x70] sm:$0xf] %v485
        %v710 = vld [vmem:[%s637 + $0x74] sm:$0x1]
        %v711 = vsel %vm646, %v486, %v710
        %712 = vst [vmem:[%s637 + $0x74] sm:$0x1] %v711
        %v713 = vld [vmem:[%s637 + $0x78] sm:$0xf]
        %v714 = vsel %vm640, %v493, %v713
        %715 = vst [vmem:[%s637 + $0x78] sm:$0xf] %v714
        %716 = vst [vmem:[%s637 + $0x7c] sm:$0xf] %v502
        %v717 = vld [vmem:[%s637 + $0x80] sm:$0x1]
        %v718 = vsel %vm646, %v503, %v717
        %719 = vst [vmem:[%s637 + $0x80] sm:$0x1] %v718
        %v720 = vld [vmem:[%s637 + $0x84] sm:$0xf]
        %v721 = vsel %vm640, %v510, %v720
        %722 = vst [vmem:[%s637 + $0x84] sm:$0xf] %v721
        %723 = vst [vmem:[%s637 + $0x88] sm:$0xf] %v519
        %v724 = vld [vmem:[%s637 + $0x8c] sm:$0x1]
        %v725 = vsel %vm646, %v520, %v724
        %726 = vst [vmem:[%s637 + $0x8c] sm:$0x1] %v725
        %v727 = vld [vmem:[%s637 + $0x90] sm:$0xf]
        %v728 = vsel %vm640, %v527, %v727
        %729 = vst [vmem:[%s637 + $0x90] sm:$0xf] %v728
        %730 = vst [vmem:[%s637 + $0x94] sm:$0xf] %v536
        %v731 = vld [vmem:[%s637 + $0x98] sm:$0x1]
        %v732 = vsel %vm646, %v537, %v731
        %733 = vst [vmem:[%s637 + $0x98] sm:$0x1] %v732
        %v734 = vld [vmem:[%s637 + $0x9c] sm:$0xf]
        %v735 = vsel %vm640, %v544, %v734
        %736 = vst [vmem:[%s637 + $0x9c] sm:$0xf] %v735
        %737 = vst [vmem:[%s637 + $0xa0] sm:$0xf] %v553
        %v738 = vld [vmem:[%s637 + $0xa4] sm:$0x1]
        %v739 = vsel %vm646, %v554, %v738
        %740 = vst [vmem:[%s637 + $0xa4] sm:$0x1] %v739
        %v741 = vld [vmem:[%s637 + $0xa8] sm:$0xf]
        %v742 = vsel %vm640, %v561, %v741
        %743 = vst [vmem:[%s637 + $0xa8] sm:$0xf] %v742
        %744 = vst [vmem:[%s637 + $0xac] sm:$0xf] %v570
        %v745 = vld [vmem:[%s637 + $0xb0] sm:$0x1]
        %v746 = vsel %vm646, %v571, %v745
        %747 = vst [vmem:[%s637 + $0xb0] sm:$0x1] %v746
        %v748 = vld [vmem:[%s637 + $0xb4] sm:$0xf]
        %v749 = vsel %vm640, %v578, %v748
        %750 = vst [vmem:[%s637 + $0xb4] sm:$0xf] %v749
        %751 = vst [vmem:[%s637 + $0xb8] sm:$0xf] %v587
        %v752 = vld [vmem:[%s637 + $0xbc] sm:$0x1]
        %v753 = vsel %vm646, %v588, %v752
        %754 = vst [vmem:[%s637 + $0xbc] sm:$0x1] %v753
      $region40: #{bottleneck_forward.4} parent=35 // pred_fallthru
        _
      %s755 = smul.u32 %s20, 16
      %s756 = smul.u32 %s755, 3
      %s757 = smul.addr %s756, 4
      %s758 = scalar_lea.vmem [#allocation2], %s757
      %v759 = vld [vmem:[%s758] sm:$0xf]
      %v760 = vld [vmem:[%s758 + $0x4] sm:$0xf]
      %v761 = vld [vmem:[%s758 + $0xc] sm:$0xf]
      %v762 = vld [vmem:[%s758 + $0x10] sm:$0xf]
      %v763 = vld [vmem:[%s758 + $0x18] sm:$0xf]
      %v764 = vld [vmem:[%s758 + $0x1c] sm:$0xf]
      %v765 = vld [vmem:[%s758 + $0x24] sm:$0xf]
      %v766 = vld [vmem:[%s758 + $0x28] sm:$0xf]
      %v767 = vld [vmem:[%s758 + $0x30] sm:$0xf]
      %v768 = vld [vmem:[%s758 + $0x34] sm:$0xf]
      %v769 = vld [vmem:[%s758 + $0x3c] sm:$0xf]
      %v770 = vld [vmem:[%s758 + $0x40] sm:$0xf]
      %v771 = vld [vmem:[%s758 + $0x48] sm:$0xf]
      %v772 = vld [vmem:[%s758 + $0x4c] sm:$0xf]
      %v773 = vld [vmem:[%s758 + $0x54] sm:$0xf]
      %v774 = vld [vmem:[%s758 + $0x58] sm:$0xf]
      %v775 = vld [vmem:[%s758 + $0x60] sm:$0xf]
      %v776 = vld [vmem:[%s758 + $0x64] sm:$0xf]
      %v777 = vld [vmem:[%s758 + $0x6c] sm:$0xf]
      %v778 = vld [vmem:[%s758 + $0x70] sm:$0xf]
      %v779 = vld [vmem:[%s758 + $0x78] sm:$0xf]
      %v780 = vld [vmem:[%s758 + $0x7c] sm:$0xf]
      %v781 = vld [vmem:[%s758 + $0x84] sm:$0xf]
      %v782 = vld [vmem:[%s758 + $0x88] sm:$0xf]
      %v783 = vld [vmem:[%s758 + $0x90] sm:$0xf]
      %v784 = vld [vmem:[%s758 + $0x94] sm:$0xf]
      %v785 = vld [vmem:[%s758 + $0x9c] sm:$0xf]
      %v786 = vld [vmem:[%s758 + $0xa0] sm:$0xf]
      %v787 = vld [vmem:[%s758 + $0xa8] sm:$0xf]
      %v788 = vld [vmem:[%s758 + $0xac] sm:$0xf]
      %v789 = vld [vmem:[%s758 + $0xb4] sm:$0xf]
      %v790 = vld [vmem:[%s758 + $0xb8] sm:$0xf]
      %v791 = vld [vmem:[%s1] sm:$0xf]
      %v792 = vld [vmem:[%s1 + $0x4] sm:$0xf]
      %v793 = vld [vmem:[%s1 + $0x8] sm:$0xf]
      %v794 = vld [vmem:[%s1 + $0xc] sm:$0xf]
      %v795 = vld [vmem:[%s1 + $0x10] sm:$0xf]
      %v796 = vld [vmem:[%s1 + $0x14] sm:$0xf]
      %v797 = vld [vmem:[%s1 + $0x18] sm:$0xf]
      %v798 = vld [vmem:[%s1 + $0x1c] sm:$0xf]
      %v799 = vld [vmem:[%s1 + $0x20] sm:$0xf]
      %v800 = vld [vmem:[%s1 + $0x24] sm:$0xf]
      %v801 = vld [vmem:[%s1 + $0x28] sm:$0xf]
      %v802 = vld [vmem:[%s1 + $0x2c] sm:$0xf]
      %v803 = vld [vmem:[%s1 + $0x30] sm:$0xf]
      %v804 = vld [vmem:[%s1 + $0x34] sm:$0xf]
      %v805 = vld [vmem:[%s1 + $0x38] sm:$0xf]
      %v806 = vld [vmem:[%s1 + $0x3c] sm:$0xf]
      %v807 = vld [vmem:[%s758 + $0x8] sm:$0x1]
      %v808 = vld [vmem:[%s758 + $0x14] sm:$0x1]
      %v809 = vld [vmem:[%s758 + $0x20] sm:$0x1]
      %v810 = vld [vmem:[%s758 + $0x2c] sm:$0x1]
      %v811 = vld [vmem:[%s758 + $0x38] sm:$0x1]
      %v812 = vld [vmem:[%s758 + $0x44] sm:$0x1]
      %v813 = vld [vmem:[%s758 + $0x50] sm:$0x1]
      %v814 = vld [vmem:[%s758 + $0x5c] sm:$0x1]
      %v815 = vld [vmem:[%s758 + $0x68] sm:$0x1]
      %v816 = vld [vmem:[%s758 + $0x74] sm:$0x1]
      %v817 = vld [vmem:[%s758 + $0x80] sm:$0x1]
      %v818 = vld [vmem:[%s758 + $0x8c] sm:$0x1]
      %v819 = vld [vmem:[%s758 + $0x98] sm:$0x1]
      %v820 = vld [vmem:[%s758 + $0xa4] sm:$0x1]
      %v821 = vld [vmem:[%s758 + $0xb0] sm:$0x1]
      %v822 = vld [vmem:[%s758 + $0xbc] sm:$0x1]
      %vm823 = vsmask.f32 3328
      %vm824 = vsmask.f32 7440
      %vm825 = vmor %vm823, %vm824
      %v827 = vshrl.u32 %v759, 16
      %v829 = vrot.slane %v827, 4
      %v830 = vshll.u32 %v759, 16
      %v832 = vrot.slane %v830, 5
      %v833 = vor.u32 %v829, %v832
      %v834 = vrot.slane %v833, 4
      %v836 = vshll.u32 %v760, 16
      %v838 = vrot.slane %v836, 5
      %v839 = vsel %vm825, %v834, %v838
      %v840 = vshrl.u32 %v760, 16
      %v842 = vrot.slane %v840, 4
      %v843 = vor.u32 %v842, %v838
      %v844 = vrot.slane %v843, 4
      %v846 = vshll.u32 %v807, 16
      %v848 = vrot.slane %v846, 5
      %v849 = vsel %vm825, %v844, %v848
      %v851 = vshrl.u32 %v761, 16
      %v853 = vrot.slane %v851, 4
      %v854 = vshll.u32 %v761, 16
      %v856 = vrot.slane %v854, 5
      %v857 = vor.u32 %v853, %v856
      %v858 = vrot.slane %v857, 4
      %v860 = vshll.u32 %v762, 16
      %v862 = vrot.slane %v860, 5
      %v863 = vsel %vm825, %v858, %v862
      %v864 = vshrl.u32 %v762, 16
      %v866 = vrot.slane %v864, 4
      %v867 = vor.u32 %v866, %v862
      %v868 = vrot.slane %v867, 4
      %v870 = vshll.u32 %v808, 16
      %v872 = vrot.slane %v870, 5
      %v873 = vsel %vm825, %v868, %v872
      %v875 = vshrl.u32 %v763, 16
      %v877 = vrot.slane %v875, 4
      %v878 = vshll.u32 %v763, 16
      %v880 = vrot.slane %v878, 5
      %v881 = vor.u32 %v877, %v880
      %v882 = vrot.slane %v881, 4
      %v884 = vshll.u32 %v764, 16
      %v886 = vrot.slane %v884, 5
      %v887 = vsel %vm825, %v882, %v886
      %v888 = vshrl.u32 %v764, 16
      %v890 = vrot.slane %v888, 4
      %v891 = vor.u32 %v890, %v886
      %v892 = vrot.slane %v891, 4
      %v894 = vshll.u32 %v809, 16
      %v896 = vrot.slane %v894, 5
      %v897 = vsel %vm825, %v892, %v896
      %v899 = vshrl.u32 %v765, 16
      %v901 = vrot.slane %v899, 4
      %v902 = vshll.u32 %v765, 16
      %v904 = vrot.slane %v902, 5
      %v905 = vor.u32 %v901, %v904
      %v906 = vrot.slane %v905, 4
      %v908 = vshll.u32 %v766, 16
      %v910 = vrot.slane %v908, 5
      %v911 = vsel %vm825, %v906, %v910
      %v912 = vshrl.u32 %v766, 16
      %v914 = vrot.slane %v912, 4
      %v915 = vor.u32 %v914, %v910
      %v916 = vrot.slane %v915, 4
      %v918 = vshll.u32 %v810, 16
      %v920 = vrot.slane %v918, 5
      %v921 = vsel %vm825, %v916, %v920
      %v923 = vshrl.u32 %v767, 16
      %v925 = vrot.slane %v923, 4
      %v926 = vshll.u32 %v767, 16
      %v928 = vrot.slane %v926, 5
      %v929 = vor.u32 %v925, %v928
      %v930 = vrot.slane %v929, 4
      %v932 = vshll.u32 %v768, 16
      %v934 = vrot.slane %v932, 5
      %v935 = vsel %vm825, %v930, %v934
      %v936 = vshrl.u32 %v768, 16
      %v938 = vrot.slane %v936, 4
      %v939 = vor.u32 %v938, %v934
      %v940 = vrot.slane %v939, 4
      %v942 = vshll.u32 %v811, 16
      %v944 = vrot.slane %v942, 5
      %v945 = vsel %vm825, %v940, %v944
      %v947 = vshrl.u32 %v769, 16
      %v949 = vrot.slane %v947, 4
      %v950 = vshll.u32 %v769, 16
      %v952 = vrot.slane %v950, 5
      %v953 = vor.u32 %v949, %v952
      %v954 = vrot.slane %v953, 4
      %v956 = vshll.u32 %v770, 16
      %v958 = vrot.slane %v956, 5
      %v959 = vsel %vm825, %v954, %v958
      %v960 = vshrl.u32 %v770, 16
      %v962 = vrot.slane %v960, 4
      %v963 = vor.u32 %v962, %v958
      %v964 = vrot.slane %v963, 4
      %v966 = vshll.u32 %v812, 16
      %v968 = vrot.slane %v966, 5
      %v969 = vsel %vm825, %v964, %v968
      %v971 = vshrl.u32 %v771, 16
      %v973 = vrot.slane %v971, 4
      %v974 = vshll.u32 %v771, 16
      %v976 = vrot.slane %v974, 5
      %v977 = vor.u32 %v973, %v976
      %v978 = vrot.slane %v977, 4
      %v980 = vshll.u32 %v772, 16
      %v982 = vrot.slane %v980, 5
      %v983 = vsel %vm825, %v978, %v982
      %v984 = vshrl.u32 %v772, 16
      %v986 = vrot.slane %v984, 4
      %v987 = vor.u32 %v986, %v982
      %v988 = vrot.slane %v987, 4
      %v990 = vshll.u32 %v813, 16
      %v992 = vrot.slane %v990, 5
      %v993 = vsel %vm825, %v988, %v992
      %v995 = vshrl.u32 %v773, 16
      %v997 = vrot.slane %v995, 4
      %v998 = vshll.u32 %v773, 16
      %v1000 = vrot.slane %v998, 5
      %v1001 = vor.u32 %v997, %v1000
      %v1002 = vrot.slane %v1001, 4
      %v1004 = vshll.u32 %v774, 16
      %v1006 = vrot.slane %v1004, 5
      %v1007 = vsel %vm825, %v1002, %v1006
      %v1008 = vshrl.u32 %v774, 16
      %v1010 = vrot.slane %v1008, 4
      %v1011 = vor.u32 %v1010, %v1006
      %v1012 = vrot.slane %v1011, 4
      %v1014 = vshll.u32 %v814, 16
      %v1016 = vrot.slane %v1014, 5
      %v1017 = vsel %vm825, %v1012, %v1016
      %v1019 = vshrl.u32 %v775, 16
      %v1021 = vrot.slane %v1019, 4
      %v1022 = vshll.u32 %v775, 16
      %v1024 = vrot.slane %v1022, 5
      %v1025 = vor.u32 %v1021, %v1024
      %v1026 = vrot.slane %v1025, 4
      %v1028 = vshll.u32 %v776, 16
      %v1030 = vrot.slane %v1028, 5
      %v1031 = vsel %vm825, %v1026, %v1030
      %v1032 = vshrl.u32 %v776, 16
      %v1034 = vrot.slane %v1032, 4
      %v1035 = vor.u32 %v1034, %v1030
      %v1036 = vrot.slane %v1035, 4
      %v1038 = vshll.u32 %v815, 16
      %v1040 = vrot.slane %v1038, 5
      %v1041 = vsel %vm825, %v1036, %v1040
      %v1043 = vshrl.u32 %v777, 16
      %v1045 = vrot.slane %v1043, 4
      %v1046 = vshll.u32 %v777, 16
      %v1048 = vrot.slane %v1046, 5
      %v1049 = vor.u32 %v1045, %v1048
      %v1050 = vrot.slane %v1049, 4
      %v1052 = vshll.u32 %v778, 16
      %v1054 = vrot.slane %v1052, 5
      %v1055 = vsel %vm825, %v1050, %v1054
      %v1056 = vshrl.u32 %v778, 16
      %v1058 = vrot.slane %v1056, 4
      %v1059 = vor.u32 %v1058, %v1054
      %v1060 = vrot.slane %v1059, 4
      %v1062 = vshll.u32 %v816, 16
      %v1064 = vrot.slane %v1062, 5
      %v1065 = vsel %vm825, %v1060, %v1064
      %v1067 = vshrl.u32 %v779, 16
      %v1069 = vrot.slane %v1067, 4
      %v1070 = vshll.u32 %v779, 16
      %v1072 = vrot.slane %v1070, 5
      %v1073 = vor.u32 %v1069, %v1072
      %v1074 = vrot.slane %v1073, 4
      %v1076 = vshll.u32 %v780, 16
      %v1078 = vrot.slane %v1076, 5
      %v1079 = vsel %vm825, %v1074, %v1078
      %v1080 = vshrl.u32 %v780, 16
      %v1082 = vrot.slane %v1080, 4
      %v1083 = vor.u32 %v1082, %v1078
      %v1084 = vrot.slane %v1083, 4
      %v1086 = vshll.u32 %v817, 16
      %v1088 = vrot.slane %v1086, 5
      %v1089 = vsel %vm825, %v1084, %v1088
      %v1091 = vshrl.u32 %v781, 16
      %v1093 = vrot.slane %v1091, 4
      %v1094 = vshll.u32 %v781, 16
      %v1096 = vrot.slane %v1094, 5
      %v1097 = vor.u32 %v1093, %v1096
      %v1098 = vrot.slane %v1097, 4
      %v1100 = vshll.u32 %v782, 16
      %v1102 = vrot.slane %v1100, 5
      %v1103 = vsel %vm825, %v1098, %v1102
      %v1104 = vshrl.u32 %v782, 16
      %v1106 = vrot.slane %v1104, 4
      %v1107 = vor.u32 %v1106, %v1102
      %v1108 = vrot.slane %v1107, 4
      %v1110 = vshll.u32 %v818, 16
      %v1112 = vrot.slane %v1110, 5
      %v1113 = vsel %vm825, %v1108, %v1112
      %v1115 = vshrl.u32 %v783, 16
      %v1117 = vrot.slane %v1115, 4
      %v1118 = vshll.u32 %v783, 16
      %v1120 = vrot.slane %v1118, 5
      %v1121 = vor.u32 %v1117, %v1120
      %v1122 = vrot.slane %v1121, 4
      %v1124 = vshll.u32 %v784, 16
      %v1126 = vrot.slane %v1124, 5
      %v1127 = vsel %vm825, %v1122, %v1126
      %v1128 = vshrl.u32 %v784, 16
      %v1130 = vrot.slane %v1128, 4
      %v1131 = vor.u32 %v1130, %v1126
      %v1132 = vrot.slane %v1131, 4
      %v1134 = vshll.u32 %v819, 16
      %v1136 = vrot.slane %v1134, 5
      %v1137 = vsel %vm825, %v1132, %v1136
      %v1139 = vshrl.u32 %v785, 16
      %v1141 = vrot.slane %v1139, 4
      %v1142 = vshll.u32 %v785, 16
      %v1144 = vrot.slane %v1142, 5
      %v1145 = vor.u32 %v1141, %v1144
      %v1146 = vrot.slane %v1145, 4
      %v1148 = vshll.u32 %v786, 16
      %v1150 = vrot.slane %v1148, 5
      %v1151 = vsel %vm825, %v1146, %v1150
      %v1152 = vshrl.u32 %v786, 16
      %v1154 = vrot.slane %v1152, 4
      %v1155 = vor.u32 %v1154, %v1150
      %v1156 = vrot.slane %v1155, 4
      %v1158 = vshll.u32 %v820, 16
      %v1160 = vrot.slane %v1158, 5
      %v1161 = vsel %vm825, %v1156, %v1160
      %v1163 = vshrl.u32 %v787, 16
      %v1165 = vrot.slane %v1163, 4
      %v1166 = vshll.u32 %v787, 16
      %v1168 = vrot.slane %v1166, 5
      %v1169 = vor.u32 %v1165, %v1168
      %v1170 = vrot.slane %v1169, 4
      %v1172 = vshll.u32 %v788, 16
      %v1174 = vrot.slane %v1172, 5
      %v1175 = vsel %vm825, %v1170, %v1174
      %v1176 = vshrl.u32 %v788, 16
      %v1178 = vrot.slane %v1176, 4
      %v1179 = vor.u32 %v1178, %v1174
      %v1180 = vrot.slane %v1179, 4
      %v1182 = vshll.u32 %v821, 16
      %v1184 = vrot.slane %v1182, 5
      %v1185 = vsel %vm825, %v1180, %v1184
      %v1187 = vshrl.u32 %v789, 16
      %v1189 = vrot.slane %v1187, 4
      %v1190 = vshll.u32 %v789, 16
      %v1192 = vrot.slane %v1190, 5
      %v1193 = vor.u32 %v1189, %v1192
      %v1194 = vrot.slane %v1193, 4
      %v1196 = vshll.u32 %v790, 16
      %v1198 = vrot.slane %v1196, 5
      %v1199 = vsel %vm825, %v1194, %v1198
      %v1200 = vshrl.u32 %v790, 16
      %v1202 = vrot.slane %v1200, 4
      %v1203 = vor.u32 %v1202, %v1198
      %v1204 = vrot.slane %v1203, 4
      %v1206 = vshll.u32 %v822, 16
      %v1208 = vrot.slane %v1206, 5
      %v1209 = vsel %vm825, %v1204, %v1208
      %s1210 = scalar_lea.vmem %s1, 64
      %v1211 = vld [vmem:[%s1210] sm:$0xf]
      %v1212 = vld [vmem:[%s1210 + $0x4] sm:$0xf]
      %v1213 = vld [vmem:[%s1210 + $0x8] sm:$0xf]
      %v1214 = vld [vmem:[%s1210 + $0xc] sm:$0xf]
      %v1215 = vld [vmem:[%s1210 + $0x10] sm:$0xf]
      %v1216 = vld [vmem:[%s1210 + $0x14] sm:$0xf]
      %v1217 = vld [vmem:[%s1210 + $0x18] sm:$0xf]
      %v1218 = vld [vmem:[%s1210 + $0x1c] sm:$0xf]
      %v1219 = vld [vmem:[%s1210 + $0x20] sm:$0xf]
      %v1220 = vld [vmem:[%s1210 + $0x24] sm:$0xf]
      %v1221 = vld [vmem:[%s1210 + $0x28] sm:$0xf]
      %v1222 = vld [vmem:[%s1210 + $0x2c] sm:$0xf]
      %v1223 = vld [vmem:[%s1210 + $0x30] sm:$0xf]
      %v1224 = vld [vmem:[%s1210 + $0x34] sm:$0xf]
      %v1225 = vld [vmem:[%s1210 + $0x38] sm:$0xf]
      %v1226 = vld [vmem:[%s1210 + $0x3c] sm:$0xf]
      %v1227 = vunpack.c.l.b16 %v839
      %v1228 = vunpack.c.l.b16 %v849
      %v1229 = vunpack.c.l.b16 %v863
      %v1230 = vunpack.c.l.b16 %v873
      %v1231 = vunpack.c.l.b16 %v887
      %v1232 = vunpack.c.l.b16 %v897
      %v1233 = vunpack.c.l.b16 %v911
      %v1234 = vunpack.c.l.b16 %v921
      %v1235 = vunpack.c.l.b16 %v935
      %v1236 = vunpack.c.l.b16 %v945
      %v1237 = vunpack.c.l.b16 %v959
      %v1238 = vunpack.c.l.b16 %v969
      %v1239 = vunpack.c.l.b16 %v983
      %v1240 = vunpack.c.l.b16 %v993
      %v1241 = vunpack.c.l.b16 %v1007
      %v1242 = vunpack.c.l.b16 %v1017
      %v1243 = vunpack.c.l.b16 %v1031
      %v1244 = vunpack.c.l.b16 %v1041
      %v1245 = vunpack.c.l.b16 %v1055
      %v1246 = vunpack.c.l.b16 %v1065
      %v1247 = vunpack.c.l.b16 %v1079
      %v1248 = vunpack.c.l.b16 %v1089
      %v1249 = vunpack.c.l.b16 %v1103
      %v1250 = vunpack.c.l.b16 %v1113
      %v1251 = vunpack.c.l.b16 %v1127
      %v1252 = vunpack.c.l.b16 %v1137
      %v1253 = vunpack.c.l.b16 %v1151
      %v1254 = vunpack.c.l.b16 %v1161
      %v1255 = vunpack.c.l.b16 %v1175
      %v1256 = vunpack.c.l.b16 %v1185
      %v1257 = vunpack.c.l.b16 %v1199
      %v1258 = vunpack.c.l.b16 %v1209
      %v1259 = vpack.c.b16 %v1228, %v1227
      %v1260 = vpack.c.b16 %v1230, %v1229
      %v1261 = vpack.c.b16 %v1232, %v1231
      %v1262 = vpack.c.b16 %v1234, %v1233
      %v1263 = vpack.c.b16 %v1236, %v1235
      %v1264 = vpack.c.b16 %v1238, %v1237
      %v1265 = vpack.c.b16 %v1240, %v1239
      %v1266 = vpack.c.b16 %v1242, %v1241
      %v1267 = vpack.c.b16 %v1244, %v1243
      %v1268 = vpack.c.b16 %v1246, %v1245
      %v1269 = vpack.c.b16 %v1248, %v1247
      %v1270 = vpack.c.b16 %v1250, %v1249
      %v1271 = vpack.c.b16 %v1252, %v1251
      %v1272 = vpack.c.b16 %v1254, %v1253
      %v1273 = vpack.c.b16 %v1256, %v1255
      %v1274 = vpack.c.b16 %v1258, %v1257
      %v1307 = vunpack.c.l.b16 %v1211
      %v1308 = vunpack.c.l.b16 %v1212
      %v1309 = vunpack.c.l.b16 %v1213
      %v1310 = vunpack.c.l.b16 %v1214
      %v1311 = vunpack.c.l.b16 %v1215
      %v1312 = vunpack.c.l.b16 %v1216
      %v1313 = vunpack.c.l.b16 %v1217
      %v1314 = vunpack.c.l.b16 %v1218
      %v1315 = vunpack.c.l.b16 %v1219
      %v1316 = vunpack.c.l.b16 %v1220
      %v1317 = vunpack.c.l.b16 %v1221
      %v1318 = vunpack.c.l.b16 %v1222
      %v1319 = vunpack.c.l.b16 %v1223
      %v1320 = vunpack.c.l.b16 %v1224
      %v1321 = vunpack.c.l.b16 %v1225
      %v1322 = vunpack.c.l.b16 %v1226
      %v1323 = vpack.c.b16 %v1308, %v1307
      %v1324 = vpack.c.b16 %v1310, %v1309
      %v1325 = vpack.c.b16 %v1312, %v1311
      %v1326 = vpack.c.b16 %v1314, %v1313
      %v1327 = vpack.c.b16 %v1316, %v1315
      %v1328 = vpack.c.b16 %v1318, %v1317
      %v1329 = vpack.c.b16 %v1320, %v1319
      %v1330 = vpack.c.b16 %v1322, %v1321
      %1339 = vmatprep.subr.bf16.mxu0 0
      %1340 = vmatpush1.bf16.msra.mxu0 %v1330
      %1341 = vmatprep.subr.bf16.mxu0 0
      %1342 = vmatpush1.bf16.msra.mxu0 %v1329
      %1343 = vmatprep.subr.bf16.mxu0 0
      %1344 = vmatpush1.bf16.msra.mxu0 %v1328
      %1345 = vmatprep.subr.bf16.mxu0 0
      %1346 = vmatpush1.bf16.msra.mxu0 %v1327
      %1347 = vmatprep.subr.bf16.mxu0 0
      %1348 = vmatpush1.bf16.msra.mxu0 %v1326
      %1349 = vmatprep.subr.bf16.mxu0 0
      %1350 = vmatpush1.bf16.msra.mxu0 %v1325
      %1351 = vmatprep.subr.bf16.mxu0 0
      %1352 = vmatpush1.bf16.msra.mxu0 %v1324
      %1353 = vmatprep.subr.bf16.mxu0 0
      %1354 = vmatpush1.bf16.msra.mxu0 %v1323
      %1355 = vmatprep.subr.bf16.mxu0 0
      %1356 = vmatpush2.bf16.msra.mxu0 0
      %1357 = vmatprep.subr.bf16.mxu0 0
      %1358 = vmatpush2.bf16.msra.mxu0 0
      %1359 = vmatprep.subr.bf16.mxu0 0
      %1360 = vmatpush2.bf16.msra.mxu0 0
      %1361 = vmatprep.subr.bf16.mxu0 0
      %1362 = vmatpush2.bf16.msra.mxu0 0
      %1363 = vmatprep.subr.bf16.mxu0 0
      %1364 = vmatpush2.bf16.msra.mxu0 0
      %1365 = vmatprep.subr.bf16.mxu0 0
      %1366 = vmatpush2.bf16.msra.mxu0 0
      %1367 = vmatprep.subr.bf16.mxu0 0
      %1368 = vmatpush2.bf16.msra.mxu0 0
      %1369 = vmatprep.subr.bf16.mxu0 0
      %1370 = vmatpush2.bf16.msra.mxu0 0
      %1371 = vmatprep.mubr.bf16.mxu0 0
      %1372 = vmatmul.mubr.bf16.gmra.mxu0 %v1259
      %v1373 = vpop.f32.mrf.mxu0
      %v1374 = vadd.f32 0.0, %v1373
      %v1375 = vpop.f32.mrf.mxu0
      %v1376 = vpop.f32.mrf.mxu0
      %v1377 = vadd.f32 0.0, %v1376
      %v1378 = vpop.f32.mrf.mxu0
      %1379 = vmatprep.mubr.bf16.mxu0 0
      %1380 = vmatmul.mubr.bf16.gmra.mxu0 %v1260
      %v1381 = vpop.f32.mrf.mxu0
      %v1382 = vadd.f32 0.0, %v1381
      %v1383 = vpop.f32.mrf.mxu0
      %v1384 = vpop.f32.mrf.mxu0
      %v1385 = vadd.f32 0.0, %v1384
      %v1386 = vpop.f32.mrf.mxu0
      %1387 = vmatprep.mubr.bf16.mxu0 0
      %1388 = vmatmul.mubr.bf16.gmra.mxu0 %v1261
      %v1389 = vpop.f32.mrf.mxu0
      %v1390 = vadd.f32 0.0, %v1389
      %v1391 = vpop.f32.mrf.mxu0
      %v1392 = vpop.f32.mrf.mxu0
      %v1393 = vadd.f32 0.0, %v1392
      %v1394 = vpop.f32.mrf.mxu0
      %1395 = vmatprep.mubr.bf16.mxu0 0
      %1396 = vmatmul.mubr.bf16.gmra.mxu0 %v1262
      %v1397 = vpop.f32.mrf.mxu0
      %v1398 = vadd.f32 0.0, %v1397
      %v1399 = vpop.f32.mrf.mxu0
      %v1400 = vpop.f32.mrf.mxu0
      %v1401 = vadd.f32 0.0, %v1400
      %v1402 = vpop.f32.mrf.mxu0
      %1403 = vmatprep.mubr.bf16.mxu0 0
      %1404 = vmatmul.mubr.bf16.gmra.mxu0 %v1263
      %v1405 = vpop.f32.mrf.mxu0
      %v1406 = vadd.f32 0.0, %v1405
      %v1407 = vpop.f32.mrf.mxu0
      %v1408 = vpop.f32.mrf.mxu0
      %v1409 = vadd.f32 0.0, %v1408
      %v1410 = vpop.f32.mrf.mxu0
      %1411 = vmatprep.mubr.bf16.mxu0 0
      %1412 = vmatmul.mubr.bf16.gmra.mxu0 %v1264
      %v1413 = vpop.f32.mrf.mxu0
      %v1414 = vadd.f32 0.0, %v1413
      %v1415 = vpop.f32.mrf.mxu0
      %v1416 = vpop.f32.mrf.mxu0
      %v1417 = vadd.f32 0.0, %v1416
      %v1418 = vpop.f32.mrf.mxu0
      %1419 = vmatprep.mubr.bf16.mxu0 0
      %1420 = vmatmul.mubr.bf16.gmra.mxu0 %v1265
      %v1421 = vpop.f32.mrf.mxu0
      %v1422 = vadd.f32 0.0, %v1421
      %v1423 = vpop.f32.mrf.mxu0
      %v1424 = vpop.f32.mrf.mxu0
      %v1425 = vadd.f32 0.0, %v1424
      %v1426 = vpop.f32.mrf.mxu0
      %1427 = vmatprep.mubr.bf16.mxu0 0
      %1428 = vmatmul.mubr.bf16.gmra.mxu0 %v1266
      %v1429 = vpop.f32.mrf.mxu0
      %v1430 = vadd.f32 0.0, %v1429
      %v1431 = vpop.f32.mrf.mxu0
      %v1432 = vpop.f32.mrf.mxu0
      %v1433 = vadd.f32 0.0, %v1432
      %v1434 = vpop.f32.mrf.mxu0
      %1435 = vmatprep.mubr.bf16.mxu0 0
      %1436 = vmatmul.mubr.bf16.gmra.mxu0 %v1267
      %v1437 = vpop.f32.mrf.mxu0
      %v1438 = vadd.f32 0.0, %v1437
      %v1439 = vpop.f32.mrf.mxu0
      %v1440 = vpop.f32.mrf.mxu0
      %v1441 = vadd.f32 0.0, %v1440
      %v1442 = vpop.f32.mrf.mxu0
      %1443 = vmatprep.mubr.bf16.mxu0 0
      %1444 = vmatmul.mubr.bf16.gmra.mxu0 %v1268
      %v1445 = vpop.f32.mrf.mxu0
      %v1446 = vadd.f32 0.0, %v1445
      %v1447 = vpop.f32.mrf.mxu0
      %v1448 = vpop.f32.mrf.mxu0
      %v1449 = vadd.f32 0.0, %v1448
      %v1450 = vpop.f32.mrf.mxu0
      %1451 = vmatprep.mubr.bf16.mxu0 0
      %1452 = vmatmul.mubr.bf16.gmra.mxu0 %v1269
      %v1453 = vpop.f32.mrf.mxu0
      %v1454 = vadd.f32 0.0, %v1453
      %v1455 = vpop.f32.mrf.mxu0
      %v1456 = vpop.f32.mrf.mxu0
      %v1457 = vadd.f32 0.0, %v1456
      %v1458 = vpop.f32.mrf.mxu0
      %1459 = vmatprep.mubr.bf16.mxu0 0
      %1460 = vmatmul.mubr.bf16.gmra.mxu0 %v1270
      %v1461 = vpop.f32.mrf.mxu0
      %v1462 = vadd.f32 0.0, %v1461
      %v1463 = vpop.f32.mrf.mxu0
      %v1464 = vpop.f32.mrf.mxu0
      %v1465 = vadd.f32 0.0, %v1464
      %v1466 = vpop.f32.mrf.mxu0
      %1467 = vmatprep.mubr.bf16.mxu0 0
      %1468 = vmatmul.mubr.bf16.gmra.mxu0 %v1271
      %v1469 = vpop.f32.mrf.mxu0
      %v1470 = vadd.f32 0.0, %v1469
      %v1471 = vpop.f32.mrf.mxu0
      %v1472 = vpop.f32.mrf.mxu0
      %v1473 = vadd.f32 0.0, %v1472
      %v1474 = vpop.f32.mrf.mxu0
      %1475 = vmatprep.mubr.bf16.mxu0 0
      %1476 = vmatmul.mubr.bf16.gmra.mxu0 %v1272
      %v1477 = vpop.f32.mrf.mxu0
      %v1478 = vadd.f32 0.0, %v1477
      %v1479 = vpop.f32.mrf.mxu0
      %v1480 = vpop.f32.mrf.mxu0
      %v1481 = vadd.f32 0.0, %v1480
      %v1482 = vpop.f32.mrf.mxu0
      %1483 = vmatprep.mubr.bf16.mxu0 0
      %1484 = vmatmul.mubr.bf16.gmra.mxu0 %v1273
      %v1485 = vpop.f32.mrf.mxu0
      %v1486 = vadd.f32 0.0, %v1485
      %v1487 = vpop.f32.mrf.mxu0
      %v1488 = vpop.f32.mrf.mxu0
      %v1489 = vadd.f32 0.0, %v1488
      %v1490 = vpop.f32.mrf.mxu0
      %1491 = vmatprep.mubr.bf16.mxu0 0
      %1492 = vmatmul.mubr.bf16.gmra.mxu0 %v1274
      %v1493 = vpop.f32.mrf.mxu0
      %v1494 = vadd.f32 0.0, %v1493
      %v1495 = vpop.f32.mrf.mxu0
      %v1496 = vpop.f32.mrf.mxu0
      %v1497 = vadd.f32 0.0, %v1496
      %v1498 = vpop.f32.mrf.mxu0
      %1499 = vdwg.mxu0
      %v1532 = vunpack.c.l.b16 %v759
      %v1533 = vunpack.c.l.b16 %v760
      %v1534 = vunpack.c.l.b16 %v761
      %v1535 = vunpack.c.l.b16 %v762
      %v1536 = vunpack.c.l.b16 %v763
      %v1537 = vunpack.c.l.b16 %v764
      %v1538 = vunpack.c.l.b16 %v765
      %v1539 = vunpack.c.l.b16 %v766
      %v1540 = vunpack.c.l.b16 %v767
      %v1541 = vunpack.c.l.b16 %v768
      %v1542 = vunpack.c.l.b16 %v769
      %v1543 = vunpack.c.l.b16 %v770
      %v1544 = vunpack.c.l.b16 %v771
      %v1545 = vunpack.c.l.b16 %v772
      %v1546 = vunpack.c.l.b16 %v773
      %v1547 = vunpack.c.l.b16 %v774
      %v1548 = vunpack.c.l.b16 %v775
      %v1549 = vunpack.c.l.b16 %v776
      %v1550 = vunpack.c.l.b16 %v777
      %v1551 = vunpack.c.l.b16 %v778
      %v1552 = vunpack.c.l.b16 %v779
      %v1553 = vunpack.c.l.b16 %v780
      %v1554 = vunpack.c.l.b16 %v781
      %v1555 = vunpack.c.l.b16 %v782
      %v1556 = vunpack.c.l.b16 %v783
      %v1557 = vunpack.c.l.b16 %v784
      %v1558 = vunpack.c.l.b16 %v785
      %v1559 = vunpack.c.l.b16 %v786
      %v1560 = vunpack.c.l.b16 %v787
      %v1561 = vunpack.c.l.b16 %v788
      %v1562 = vunpack.c.l.b16 %v789
      %v1563 = vunpack.c.l.b16 %v790
      %v1564 = vpack.c.b16 %v1533, %v1532
      %v1565 = vpack.c.b16 %v1535, %v1534
      %v1566 = vpack.c.b16 %v1537, %v1536
      %v1567 = vpack.c.b16 %v1539, %v1538
      %v1568 = vpack.c.b16 %v1541, %v1540
      %v1569 = vpack.c.b16 %v1543, %v1542
      %v1570 = vpack.c.b16 %v1545, %v1544
      %v1571 = vpack.c.b16 %v1547, %v1546
      %v1572 = vpack.c.b16 %v1549, %v1548
      %v1573 = vpack.c.b16 %v1551, %v1550
      %v1574 = vpack.c.b16 %v1553, %v1552
      %v1575 = vpack.c.b16 %v1555, %v1554
      %v1576 = vpack.c.b16 %v1557, %v1556
      %v1577 = vpack.c.b16 %v1559, %v1558
      %v1578 = vpack.c.b16 %v1561, %v1560
      %v1579 = vpack.c.b16 %v1563, %v1562
      %v1612 = vunpack.c.l.b16 %v791
      %v1613 = vunpack.c.l.b16 %v792
      %v1614 = vunpack.c.l.b16 %v793
      %v1615 = vunpack.c.l.b16 %v794
      %v1616 = vunpack.c.l.b16 %v795
      %v1617 = vunpack.c.l.b16 %v796
      %v1618 = vunpack.c.l.b16 %v797
      %v1619 = vunpack.c.l.b16 %v798
      %v1620 = vunpack.c.l.b16 %v799
      %v1621 = vunpack.c.l.b16 %v800
      %v1622 = vunpack.c.l.b16 %v801
      %v1623 = vunpack.c.l.b16 %v802
      %v1624 = vunpack.c.l.b16 %v803
      %v1625 = vunpack.c.l.b16 %v804
      %v1626 = vunpack.c.l.b16 %v805
      %v1627 = vunpack.c.l.b16 %v806
      %v1628 = vpack.c.b16 %v1613, %v1612
      %v1629 = vpack.c.b16 %v1615, %v1614
      %v1630 = vpack.c.b16 %v1617, %v1616
      %v1631 = vpack.c.b16 %v1619, %v1618
      %v1632 = vpack.c.b16 %v1621, %v1620
      %v1633 = vpack.c.b16 %v1623, %v1622
      %v1634 = vpack.c.b16 %v1625, %v1624
      %v1635 = vpack.c.b16 %v1627, %v1626
      %1644 = vmatprep.subr.bf16.mxu0 0
      %1645 = vmatpush1.bf16.msra.mxu0 %v1635
      %1646 = vmatprep.subr.bf16.mxu0 0
      %1647 = vmatpush1.bf16.msra.mxu0 %v1634
      %1648 = vmatprep.subr.bf16.mxu0 0
      %1649 = vmatpush1.bf16.msra.mxu0 %v1633
      %1650 = vmatprep.subr.bf16.mxu0 0
      %1651 = vmatpush1.bf16.msra.mxu0 %v1632
      %1652 = vmatprep.subr.bf16.mxu0 0
      %1653 = vmatpush1.bf16.msra.mxu0 %v1631
      %1654 = vmatprep.subr.bf16.mxu0 0
      %1655 = vmatpush1.bf16.msra.mxu0 %v1630
      %1656 = vmatprep.subr.bf16.mxu0 0
      %1657 = vmatpush1.bf16.msra.mxu0 %v1629
      %1658 = vmatprep.subr.bf16.mxu0 0
      %1659 = vmatpush1.bf16.msra.mxu0 %v1628
      %1660 = vmatprep.subr.bf16.mxu0 0
      %1661 = vmatpush2.bf16.msra.mxu0 0
      %1662 = vmatprep.subr.bf16.mxu0 0
      %1663 = vmatpush2.bf16.msra.mxu0 0
      %1664 = vmatprep.subr.bf16.mxu0 0
      %1665 = vmatpush2.bf16.msra.mxu0 0
      %1666 = vmatprep.subr.bf16.mxu0 0
      %1667 = vmatpush2.bf16.msra.mxu0 0
      %1668 = vmatprep.subr.bf16.mxu0 0
      %1669 = vmatpush2.bf16.msra.mxu0 0
      %1670 = vmatprep.subr.bf16.mxu0 0
      %1671 = vmatpush2.bf16.msra.mxu0 0
      %1672 = vmatprep.subr.bf16.mxu0 0
      %1673 = vmatpush2.bf16.msra.mxu0 0
      %1674 = vmatprep.subr.bf16.mxu0 0
      %1675 = vmatpush2.bf16.msra.mxu0 0
      %1676 = vmatprep.mubr.bf16.mxu0 0
      %1677 = vmatmul.mubr.bf16.gmra.mxu0 %v1564
      %v1678 = vpop.f32.mrf.mxu0
      %v1679 = vadd.f32 %v1374, %v1678
      %v1680 = vpop.f32.mrf.mxu0
      %v1681 = vpop.f32.mrf.mxu0
      %v1682 = vadd.f32 %v1377, %v1681
      %v1683 = vpop.f32.mrf.mxu0
      %1684 = vmatprep.mubr.bf16.mxu0 0
      %1685 = vmatmul.mubr.bf16.gmra.mxu0 %v1565
      %v1686 = vpop.f32.mrf.mxu0
      %v1687 = vadd.f32 %v1382, %v1686
      %v1688 = vpop.f32.mrf.mxu0
      %v1689 = vpop.f32.mrf.mxu0
      %v1690 = vadd.f32 %v1385, %v1689
      %v1691 = vpop.f32.mrf.mxu0
      %1692 = vmatprep.mubr.bf16.mxu0 0
      %1693 = vmatmul.mubr.bf16.gmra.mxu0 %v1566
      %v1694 = vpop.f32.mrf.mxu0
      %v1695 = vadd.f32 %v1390, %v1694
      %v1696 = vpop.f32.mrf.mxu0
      %v1697 = vpop.f32.mrf.mxu0
      %v1698 = vadd.f32 %v1393, %v1697
      %v1699 = vpop.f32.mrf.mxu0
      %1700 = vmatprep.mubr.bf16.mxu0 0
      %1701 = vmatmul.mubr.bf16.gmra.mxu0 %v1567
      %v1702 = vpop.f32.mrf.mxu0
      %v1703 = vadd.f32 %v1398, %v1702
      %v1704 = vpop.f32.mrf.mxu0
      %v1705 = vpop.f32.mrf.mxu0
      %v1706 = vadd.f32 %v1401, %v1705
      %v1707 = vpop.f32.mrf.mxu0
      %1708 = vmatprep.mubr.bf16.mxu0 0
      %1709 = vmatmul.mubr.bf16.gmra.mxu0 %v1568
      %v1710 = vpop.f32.mrf.mxu0
      %v1711 = vadd.f32 %v1406, %v1710
      %v1712 = vpop.f32.mrf.mxu0
      %v1713 = vpop.f32.mrf.mxu0
      %v1714 = vadd.f32 %v1409, %v1713
      %v1715 = vpop.f32.mrf.mxu0
      %1716 = vmatprep.mubr.bf16.mxu0 0
      %1717 = vmatmul.mubr.bf16.gmra.mxu0 %v1569
      %v1718 = vpop.f32.mrf.mxu0
      %v1719 = vadd.f32 %v1414, %v1718
      %v1720 = vpop.f32.mrf.mxu0
      %v1721 = vpop.f32.mrf.mxu0
      %v1722 = vadd.f32 %v1417, %v1721
      %v1723 = vpop.f32.mrf.mxu0
      %1724 = vmatprep.mubr.bf16.mxu0 0
      %1725 = vmatmul.mubr.bf16.gmra.mxu0 %v1570
      %v1726 = vpop.f32.mrf.mxu0
      %v1727 = vadd.f32 %v1422, %v1726
      %v1728 = vpop.f32.mrf.mxu0
      %v1729 = vpop.f32.mrf.mxu0
      %v1730 = vadd.f32 %v1425, %v1729
      %v1731 = vpop.f32.mrf.mxu0
      %1732 = vmatprep.mubr.bf16.mxu0 0
      %1733 = vmatmul.mubr.bf16.gmra.mxu0 %v1571
      %v1734 = vpop.f32.mrf.mxu0
      %v1735 = vadd.f32 %v1430, %v1734
      %v1736 = vpop.f32.mrf.mxu0
      %v1737 = vpop.f32.mrf.mxu0
      %v1738 = vadd.f32 %v1433, %v1737
      %v1739 = vpop.f32.mrf.mxu0
      %1740 = vmatprep.mubr.bf16.mxu0 0
      %1741 = vmatmul.mubr.bf16.gmra.mxu0 %v1572
      %v1742 = vpop.f32.mrf.mxu0
      %v1743 = vadd.f32 %v1438, %v1742
      %v1744 = vpop.f32.mrf.mxu0
      %v1745 = vpop.f32.mrf.mxu0
      %v1746 = vadd.f32 %v1441, %v1745
      %v1747 = vpop.f32.mrf.mxu0
      %1748 = vmatprep.mubr.bf16.mxu0 0
      %1749 = vmatmul.mubr.bf16.gmra.mxu0 %v1573
      %v1750 = vpop.f32.mrf.mxu0
      %v1751 = vadd.f32 %v1446, %v1750
      %v1752 = vpop.f32.mrf.mxu0
      %v1753 = vpop.f32.mrf.mxu0
      %v1754 = vadd.f32 %v1449, %v1753
      %v1755 = vpop.f32.mrf.mxu0
      %1756 = vmatprep.mubr.bf16.mxu0 0
      %1757 = vmatmul.mubr.bf16.gmra.mxu0 %v1574
      %v1758 = vpop.f32.mrf.mxu0
      %v1759 = vadd.f32 %v1454, %v1758
      %v1760 = vpop.f32.mrf.mxu0
      %v1761 = vpop.f32.mrf.mxu0
      %v1762 = vadd.f32 %v1457, %v1761
      %v1763 = vpop.f32.mrf.mxu0
      %1764 = vmatprep.mubr.bf16.mxu0 0
      %1765 = vmatmul.mubr.bf16.gmra.mxu0 %v1575
      %v1766 = vpop.f32.mrf.mxu0
      %v1767 = vadd.f32 %v1462, %v1766
      %v1768 = vpop.f32.mrf.mxu0
      %v1769 = vpop.f32.mrf.mxu0
      %v1770 = vadd.f32 %v1465, %v1769
      %v1771 = vpop.f32.mrf.mxu0
      %1772 = vmatprep.mubr.bf16.mxu0 0
      %1773 = vmatmul.mubr.bf16.gmra.mxu0 %v1576
      %v1774 = vpop.f32.mrf.mxu0
      %v1775 = vadd.f32 %v1470, %v1774
      %v1776 = vpop.f32.mrf.mxu0
      %v1777 = vpop.f32.mrf.mxu0
      %v1778 = vadd.f32 %v1473, %v1777
      %v1779 = vpop.f32.mrf.mxu0
      %1780 = vmatprep.mubr.bf16.mxu0 0
      %1781 = vmatmul.mubr.bf16.gmra.mxu0 %v1577
      %v1782 = vpop.f32.mrf.mxu0
      %v1783 = vadd.f32 %v1478, %v1782
      %v1784 = vpop.f32.mrf.mxu0
      %v1785 = vpop.f32.mrf.mxu0
      %v1786 = vadd.f32 %v1481, %v1785
      %v1787 = vpop.f32.mrf.mxu0
      %1788 = vmatprep.mubr.bf16.mxu0 0
      %1789 = vmatmul.mubr.bf16.gmra.mxu0 %v1578
      %v1790 = vpop.f32.mrf.mxu0
      %v1791 = vadd.f32 %v1486, %v1790
      %v1792 = vpop.f32.mrf.mxu0
      %v1793 = vpop.f32.mrf.mxu0
      %v1794 = vadd.f32 %v1489, %v1793
      %v1795 = vpop.f32.mrf.mxu0
      %1796 = vmatprep.mubr.bf16.mxu0 0
      %1797 = vmatmul.mubr.bf16.gmra.mxu0 %v1579
      %v1798 = vpop.f32.mrf.mxu0
      %v1799 = vadd.f32 %v1494, %v1798
      %v1800 = vpop.f32.mrf.mxu0
      %v1801 = vpop.f32.mrf.mxu0
      %v1802 = vadd.f32 %v1497, %v1801
      %v1803 = vpop.f32.mrf.mxu0
      %1804 = vdwg.mxu0
      %v1805 = vld [vmem:[%s758] sm:$0xe]
      %v1806 = vld [vmem:[%s758 + $0xc] sm:$0xe]
      %v1807 = vld [vmem:[%s758 + $0x18] sm:$0xe]
      %v1808 = vld [vmem:[%s758 + $0x24] sm:$0xe]
      %v1809 = vld [vmem:[%s758 + $0x30] sm:$0xe]
      %v1810 = vld [vmem:[%s758 + $0x3c] sm:$0xe]
      %v1811 = vld [vmem:[%s758 + $0x48] sm:$0xe]
      %v1812 = vld [vmem:[%s758 + $0x54] sm:$0xe]
      %v1813 = vld [vmem:[%s758 + $0x60] sm:$0xe]
      %v1814 = vld [vmem:[%s758 + $0x6c] sm:$0xe]
      %v1815 = vld [vmem:[%s758 + $0x78] sm:$0xe]
      %v1816 = vld [vmem:[%s758 + $0x84] sm:$0xe]
      %v1817 = vld [vmem:[%s758 + $0x90] sm:$0xe]
      %v1818 = vld [vmem:[%s758 + $0x9c] sm:$0xe]
      %v1819 = vld [vmem:[%s758 + $0xa8] sm:$0xe]
      %v1820 = vld [vmem:[%s758 + $0xb4] sm:$0xe]
      %vm1853 = vcmask 1042432
      %vm1854 = vcmask 1046532
      %vm1855 = vmor %vm1853, %vm1854
      %v1856 = vrot.slane %v1805, 5
      %v1857 = vrot.slane %v1856, 4
      %v1858 = vrot.slane %v760, 5
      %v1859 = vsel %vm1855, %v1857, %v1858
      %v1860 = vrot.slane %v1858, 4
      %v1861 = vrot.slane %v807, 5
      %v1862 = vsel %vm1855, %v1860, %v1861
      %v1863 = vrot.slane %v1806, 5
      %v1864 = vrot.slane %v1863, 4
      %v1865 = vrot.slane %v762, 5
      %v1866 = vsel %vm1855, %v1864, %v1865
      %v1867 = vrot.slane %v1865, 4
      %v1868 = vrot.slane %v808, 5
      %v1869 = vsel %vm1855, %v1867, %v1868
      %v1870 = vrot.slane %v1807, 5
      %v1871 = vrot.slane %v1870, 4
      %v1872 = vrot.slane %v764, 5
      %v1873 = vsel %vm1855, %v1871, %v1872
      %v1874 = vrot.slane %v1872, 4
      %v1875 = vrot.slane %v809, 5
      %v1876 = vsel %vm1855, %v1874, %v1875
      %v1877 = vrot.slane %v1808, 5
      %v1878 = vrot.slane %v1877, 4
      %v1879 = vrot.slane %v766, 5
      %v1880 = vsel %vm1855, %v1878, %v1879
      %v1881 = vrot.slane %v1879, 4
      %v1882 = vrot.slane %v810, 5
      %v1883 = vsel %vm1855, %v1881, %v1882
      %v1884 = vrot.slane %v1809, 5
      %v1885 = vrot.slane %v1884, 4
      %v1886 = vrot.slane %v768, 5
      %v1887 = vsel %vm1855, %v1885, %v1886
      %v1888 = vrot.slane %v1886, 4
      %v1889 = vrot.slane %v811, 5
      %v1890 = vsel %vm1855, %v1888, %v1889
      %v1891 = vrot.slane %v1810, 5
      %v1892 = vrot.slane %v1891, 4
      %v1893 = vrot.slane %v770, 5
      %v1894 = vsel %vm1855, %v1892, %v1893
      %v1895 = vrot.slane %v1893, 4
      %v1896 = vrot.slane %v812, 5
      %v1897 = vsel %vm1855, %v1895, %v1896
      %v1898 = vrot.slane %v1811, 5
      %v1899 = vrot.slane %v1898, 4
      %v1900 = vrot.slane %v772, 5
      %v1901 = vsel %vm1855, %v1899, %v1900
      %v1902 = vrot.slane %v1900, 4
      %v1903 = vrot.slane %v813, 5
      %v1904 = vsel %vm1855, %v1902, %v1903
      %v1905 = vrot.slane %v1812, 5
      %v1906 = vrot.slane %v1905, 4
      %v1907 = vrot.slane %v774, 5
      %v1908 = vsel %vm1855, %v1906, %v1907
      %v1909 = vrot.slane %v1907, 4
      %v1910 = vrot.slane %v814, 5
      %v1911 = vsel %vm1855, %v1909, %v1910
      %v1912 = vrot.slane %v1813, 5
      %v1913 = vrot.slane %v1912, 4
      %v1914 = vrot.slane %v776, 5
      %v1915 = vsel %vm1855, %v1913, %v1914
      %v1916 = vrot.slane %v1914, 4
      %v1917 = vrot.slane %v815, 5
      %v1918 = vsel %vm1855, %v1916, %v1917
      %v1919 = vrot.slane %v1814, 5
      %v1920 = vrot.slane %v1919, 4
      %v1921 = vrot.slane %v778, 5
      %v1922 = vsel %vm1855, %v1920, %v1921
      %v1923 = vrot.slane %v1921, 4
      %v1924 = vrot.slane %v816, 5
      %v1925 = vsel %vm1855, %v1923, %v1924
      %v1926 = vrot.slane %v1815, 5
      %v1927 = vrot.slane %v1926, 4
      %v1928 = vrot.slane %v780, 5
      %v1929 = vsel %vm1855, %v1927, %v1928
      %v1930 = vrot.slane %v1928, 4
      %v1931 = vrot.slane %v817, 5
      %v1932 = vsel %vm1855, %v1930, %v1931
      %v1933 = vrot.slane %v1816, 5
      %v1934 = vrot.slane %v1933, 4
      %v1935 = vrot.slane %v782, 5
      %v1936 = vsel %vm1855, %v1934, %v1935
      %v1937 = vrot.slane %v1935, 4
      %v1938 = vrot.slane %v818, 5
      %v1939 = vsel %vm1855, %v1937, %v1938
      %v1940 = vrot.slane %v1817, 5
      %v1941 = vrot.slane %v1940, 4
      %v1942 = vrot.slane %v784, 5
      %v1943 = vsel %vm1855, %v1941, %v1942
      %v1944 = vrot.slane %v1942, 4
      %v1945 = vrot.slane %v819, 5
      %v1946 = vsel %vm1855, %v1944, %v1945
      %v1947 = vrot.slane %v1818, 5
      %v1948 = vrot.slane %v1947, 4
      %v1949 = vrot.slane %v786, 5
      %v1950 = vsel %vm1855, %v1948, %v1949
      %v1951 = vrot.slane %v1949, 4
      %v1952 = vrot.slane %v820, 5
      %v1953 = vsel %vm1855, %v1951, %v1952
      %v1954 = vrot.slane %v1819, 5
      %v1955 = vrot.slane %v1954, 4
      %v1956 = vrot.slane %v788, 5
      %v1957 = vsel %vm1855, %v1955, %v1956
      %v1958 = vrot.slane %v1956, 4
      %v1959 = vrot.slane %v821, 5
      %v1960 = vsel %vm1855, %v1958, %v1959
      %v1961 = vrot.slane %v1820, 5
      %v1962 = vrot.slane %v1961, 4
      %v1963 = vrot.slane %v790, 5
      %v1964 = vsel %vm1855, %v1962, %v1963
      %v1965 = vrot.slane %v1963, 4
      %v1966 = vrot.slane %v822, 5
      %v1967 = vsel %vm1855, %v1965, %v1966
      %s1968 = scalar_lea.vmem %s1, 128
      %v1969 = vld [vmem:[%s1968] sm:$0xf]
      %v1970 = vld [vmem:[%s1968 + $0x4] sm:$0xf]
      %v1971 = vld [vmem:[%s1968 + $0x8] sm:$0xf]
      %v1972 = vld [vmem:[%s1968 + $0xc] sm:$0xf]
      %v1973 = vld [vmem:[%s1968 + $0x10] sm:$0xf]
      %v1974 = vld [vmem:[%s1968 + $0x14] sm:$0xf]
      %v1975 = vld [vmem:[%s1968 + $0x18] sm:$0xf]
      %v1976 = vld [vmem:[%s1968 + $0x1c] sm:$0xf]
      %v1977 = vld [vmem:[%s1968 + $0x20] sm:$0xf]
      %v1978 = vld [vmem:[%s1968 + $0x24] sm:$0xf]
      %v1979 = vld [vmem:[%s1968 + $0x28] sm:$0xf]
      %v1980 = vld [vmem:[%s1968 + $0x2c] sm:$0xf]
      %v1981 = vld [vmem:[%s1968 + $0x30] sm:$0xf]
      %v1982 = vld [vmem:[%s1968 + $0x34] sm:$0xf]
      %v1983 = vld [vmem:[%s1968 + $0x38] sm:$0xf]
      %v1984 = vld [vmem:[%s1968 + $0x3c] sm:$0xf]
      %v1985 = vunpack.c.l.b16 %v1859
      %v1986 = vunpack.c.l.b16 %v1862
      %v1987 = vunpack.c.l.b16 %v1866
      %v1988 = vunpack.c.l.b16 %v1869
      %v1989 = vunpack.c.l.b16 %v1873
      %v1990 = vunpack.c.l.b16 %v1876
      %v1991 = vunpack.c.l.b16 %v1880
      %v1992 = vunpack.c.l.b16 %v1883
      %v1993 = vunpack.c.l.b16 %v1887
      %v1994 = vunpack.c.l.b16 %v1890
      %v1995 = vunpack.c.l.b16 %v1894
      %v1996 = vunpack.c.l.b16 %v1897
      %v1997 = vunpack.c.l.b16 %v1901
      %v1998 = vunpack.c.l.b16 %v1904
      %v1999 = vunpack.c.l.b16 %v1908
      %v2000 = vunpack.c.l.b16 %v1911
      %v2001 = vunpack.c.l.b16 %v1915
      %v2002 = vunpack.c.l.b16 %v1918
      %v2003 = vunpack.c.l.b16 %v1922
      %v2004 = vunpack.c.l.b16 %v1925
      %v2005 = vunpack.c.l.b16 %v1929
      %v2006 = vunpack.c.l.b16 %v1932
      %v2007 = vunpack.c.l.b16 %v1936
      %v2008 = vunpack.c.l.b16 %v1939
      %v2009 = vunpack.c.l.b16 %v1943
      %v2010 = vunpack.c.l.b16 %v1946
      %v2011 = vunpack.c.l.b16 %v1950
      %v2012 = vunpack.c.l.b16 %v1953
      %v2013 = vunpack.c.l.b16 %v1957
      %v2014 = vunpack.c.l.b16 %v1960
      %v2015 = vunpack.c.l.b16 %v1964
      %v2016 = vunpack.c.l.b16 %v1967
      %v2017 = vpack.c.b16 %v1986, %v1985
      %v2018 = vpack.c.b16 %v1988, %v1987
      %v2019 = vpack.c.b16 %v1990, %v1989
      %v2020 = vpack.c.b16 %v1992, %v1991
      %v2021 = vpack.c.b16 %v1994, %v1993
      %v2022 = vpack.c.b16 %v1996, %v1995
      %v2023 = vpack.c.b16 %v1998, %v1997
      %v2024 = vpack.c.b16 %v2000, %v1999
      %v2025 = vpack.c.b16 %v2002, %v2001
      %v2026 = vpack.c.b16 %v2004, %v2003
      %v2027 = vpack.c.b16 %v2006, %v2005
      %v2028 = vpack.c.b16 %v2008, %v2007
      %v2029 = vpack.c.b16 %v2010, %v2009
      %v2030 = vpack.c.b16 %v2012, %v2011
      %v2031 = vpack.c.b16 %v2014, %v2013
      %v2032 = vpack.c.b16 %v2016, %v2015
      %v2065 = vunpack.c.l.b16 %v1969
      %v2066 = vunpack.c.l.b16 %v1970
      %v2067 = vunpack.c.l.b16 %v1971
      %v2068 = vunpack.c.l.b16 %v1972
      %v2069 = vunpack.c.l.b16 %v1973
      %v2070 = vunpack.c.l.b16 %v1974
      %v2071 = vunpack.c.l.b16 %v1975
      %v2072 = vunpack.c.l.b16 %v1976
      %v2073 = vunpack.c.l.b16 %v1977
      %v2074 = vunpack.c.l.b16 %v1978
      %v2075 = vunpack.c.l.b16 %v1979
      %v2076 = vunpack.c.l.b16 %v1980
      %v2077 = vunpack.c.l.b16 %v1981
      %v2078 = vunpack.c.l.b16 %v1982
      %v2079 = vunpack.c.l.b16 %v1983
      %v2080 = vunpack.c.l.b16 %v1984
      %v2081 = vpack.c.b16 %v2066, %v2065
      %v2082 = vpack.c.b16 %v2068, %v2067
      %v2083 = vpack.c.b16 %v2070, %v2069
      %v2084 = vpack.c.b16 %v2072, %v2071
      %v2085 = vpack.c.b16 %v2074, %v2073
      %v2086 = vpack.c.b16 %v2076, %v2075
      %v2087 = vpack.c.b16 %v2078, %v2077
      %v2088 = vpack.c.b16 %v2080, %v2079
      %2097 = vmatprep.subr.bf16.mxu0 0
      %2098 = vmatpush1.bf16.msra.mxu0 %v2088
      %2099 = vmatprep.subr.bf16.mxu0 0
      %2100 = vmatpush1.bf16.msra.mxu0 %v2087
      %2101 = vmatprep.subr.bf16.mxu0 0
      %2102 = vmatpush1.bf16.msra.mxu0 %v2086
      %2103 = vmatprep.subr.bf16.mxu0 0
      %2104 = vmatpush1.bf16.msra.mxu0 %v2085
      %2105 = vmatprep.subr.bf16.mxu0 0
      %2106 = vmatpush1.bf16.msra.mxu0 %v2084
      %2107 = vmatprep.subr.bf16.mxu0 0
      %2108 = vmatpush1.bf16.msra.mxu0 %v2083
      %2109 = vmatprep.subr.bf16.mxu0 0
      %2110 = vmatpush1.bf16.msra.mxu0 %v2082
      %2111 = vmatprep.subr.bf16.mxu0 0
      %2112 = vmatpush1.bf16.msra.mxu0 %v2081
      %2113 = vmatprep.subr.bf16.mxu0 0
      %2114 = vmatpush2.bf16.msra.mxu0 0
      %2115 = vmatprep.subr.bf16.mxu0 0
      %2116 = vmatpush2.bf16.msra.mxu0 0
      %2117 = vmatprep.subr.bf16.mxu0 0
      %2118 = vmatpush2.bf16.msra.mxu0 0
      %2119 = vmatprep.subr.bf16.mxu0 0
      %2120 = vmatpush2.bf16.msra.mxu0 0
      %2121 = vmatprep.subr.bf16.mxu0 0
      %2122 = vmatpush2.bf16.msra.mxu0 0
      %2123 = vmatprep.subr.bf16.mxu0 0
      %2124 = vmatpush2.bf16.msra.mxu0 0
      %2125 = vmatprep.subr.bf16.mxu0 0
      %2126 = vmatpush2.bf16.msra.mxu0 0
      %2127 = vmatprep.subr.bf16.mxu0 0
      %2128 = vmatpush2.bf16.msra.mxu0 0
      %2129 = vmatprep.mubr.bf16.mxu0 0
      %2130 = vmatmul.mubr.bf16.gmra.mxu0 %v2017
      %v2131 = vpop.f32.mrf.mxu0
      %v2132 = vadd.f32 0.0, %v2131
      %v2133 = vpop.f32.mrf.mxu0
      %v2134 = vpop.f32.mrf.mxu0
      %v2135 = vadd.f32 0.0, %v2134
      %v2136 = vpop.f32.mrf.mxu0
      %2137 = vmatprep.mubr.bf16.mxu0 0
      %2138 = vmatmul.mubr.bf16.gmra.mxu0 %v2018
      %v2139 = vpop.f32.mrf.mxu0
      %v2140 = vadd.f32 0.0, %v2139
      %v2141 = vpop.f32.mrf.mxu0
      %v2142 = vpop.f32.mrf.mxu0
      %v2143 = vadd.f32 0.0, %v2142
      %v2144 = vpop.f32.mrf.mxu0
      %2145 = vmatprep.mubr.bf16.mxu0 0
      %2146 = vmatmul.mubr.bf16.gmra.mxu0 %v2019
      %v2147 = vpop.f32.mrf.mxu0
      %v2148 = vadd.f32 0.0, %v2147
      %v2149 = vpop.f32.mrf.mxu0
      %v2150 = vpop.f32.mrf.mxu0
      %v2151 = vadd.f32 0.0, %v2150
      %v2152 = vpop.f32.mrf.mxu0
      %2153 = vmatprep.mubr.bf16.mxu0 0
      %2154 = vmatmul.mubr.bf16.gmra.mxu0 %v2020
      %v2155 = vpop.f32.mrf.mxu0
      %v2156 = vadd.f32 0.0, %v2155
      %v2157 = vpop.f32.mrf.mxu0
      %v2158 = vpop.f32.mrf.mxu0
      %v2159 = vadd.f32 0.0, %v2158
      %v2160 = vpop.f32.mrf.mxu0
      %2161 = vmatprep.mubr.bf16.mxu0 0
      %2162 = vmatmul.mubr.bf16.gmra.mxu0 %v2021
      %v2163 = vpop.f32.mrf.mxu0
      %v2164 = vadd.f32 0.0, %v2163
      %v2165 = vpop.f32.mrf.mxu0
      %v2166 = vpop.f32.mrf.mxu0
      %v2167 = vadd.f32 0.0, %v2166
      %v2168 = vpop.f32.mrf.mxu0
      %2169 = vmatprep.mubr.bf16.mxu0 0
      %2170 = vmatmul.mubr.bf16.gmra.mxu0 %v2022
      %v2171 = vpop.f32.mrf.mxu0
      %v2172 = vadd.f32 0.0, %v2171
      %v2173 = vpop.f32.mrf.mxu0
      %v2174 = vpop.f32.mrf.mxu0
      %v2175 = vadd.f32 0.0, %v2174
      %v2176 = vpop.f32.mrf.mxu0
      %2177 = vmatprep.mubr.bf16.mxu0 0
      %2178 = vmatmul.mubr.bf16.gmra.mxu0 %v2023
      %v2179 = vpop.f32.mrf.mxu0
      %v2180 = vadd.f32 0.0, %v2179
      %v2181 = vpop.f32.mrf.mxu0
      %v2182 = vpop.f32.mrf.mxu0
      %v2183 = vadd.f32 0.0, %v2182
      %v2184 = vpop.f32.mrf.mxu0
      %2185 = vmatprep.mubr.bf16.mxu0 0
      %2186 = vmatmul.mubr.bf16.gmra.mxu0 %v2024
      %v2187 = vpop.f32.mrf.mxu0
      %v2188 = vadd.f32 0.0, %v2187
      %v2189 = vpop.f32.mrf.mxu0
      %v2190 = vpop.f32.mrf.mxu0
      %v2191 = vadd.f32 0.0, %v2190
      %v2192 = vpop.f32.mrf.mxu0
      %2193 = vmatprep.mubr.bf16.mxu0 0
      %2194 = vmatmul.mubr.bf16.gmra.mxu0 %v2025
      %v2195 = vpop.f32.mrf.mxu0
      %v2196 = vadd.f32 0.0, %v2195
      %v2197 = vpop.f32.mrf.mxu0
      %v2198 = vpop.f32.mrf.mxu0
      %v2199 = vadd.f32 0.0, %v2198
      %v2200 = vpop.f32.mrf.mxu0
      %2201 = vmatprep.mubr.bf16.mxu0 0
      %2202 = vmatmul.mubr.bf16.gmra.mxu0 %v2026
      %v2203 = vpop.f32.mrf.mxu0
      %v2204 = vadd.f32 0.0, %v2203
      %v2205 = vpop.f32.mrf.mxu0
      %v2206 = vpop.f32.mrf.mxu0
      %v2207 = vadd.f32 0.0, %v2206
      %v2208 = vpop.f32.mrf.mxu0
      %2209 = vmatprep.mubr.bf16.mxu0 0
      %2210 = vmatmul.mubr.bf16.gmra.mxu0 %v2027
      %v2211 = vpop.f32.mrf.mxu0
      %v2212 = vadd.f32 0.0, %v2211
      %v2213 = vpop.f32.mrf.mxu0
      %v2214 = vpop.f32.mrf.mxu0
      %v2215 = vadd.f32 0.0, %v2214
      %v2216 = vpop.f32.mrf.mxu0
      %2217 = vmatprep.mubr.bf16.mxu0 0
      %2218 = vmatmul.mubr.bf16.gmra.mxu0 %v2028
      %v2219 = vpop.f32.mrf.mxu0
      %v2220 = vadd.f32 0.0, %v2219
      %v2221 = vpop.f32.mrf.mxu0
      %v2222 = vpop.f32.mrf.mxu0
      %v2223 = vadd.f32 0.0, %v2222
      %v2224 = vpop.f32.mrf.mxu0
      %2225 = vmatprep.mubr.bf16.mxu0 0
      %2226 = vmatmul.mubr.bf16.gmra.mxu0 %v2029
      %v2227 = vpop.f32.mrf.mxu0
      %v2228 = vadd.f32 0.0, %v2227
      %v2229 = vpop.f32.mrf.mxu0
      %v2230 = vpop.f32.mrf.mxu0
      %v2231 = vadd.f32 0.0, %v2230
      %v2232 = vpop.f32.mrf.mxu0
      %2233 = vmatprep.mubr.bf16.mxu0 0
      %2234 = vmatmul.mubr.bf16.gmra.mxu0 %v2030
      %v2235 = vpop.f32.mrf.mxu0
      %v2236 = vadd.f32 0.0, %v2235
      %v2237 = vpop.f32.mrf.mxu0
      %v2238 = vpop.f32.mrf.mxu0
      %v2239 = vadd.f32 0.0, %v2238
      %v2240 = vpop.f32.mrf.mxu0
      %2241 = vmatprep.mubr.bf16.mxu0 0
      %2242 = vmatmul.mubr.bf16.gmra.mxu0 %v2031
      %v2243 = vpop.f32.mrf.mxu0
      %v2244 = vadd.f32 0.0, %v2243
      %v2245 = vpop.f32.mrf.mxu0
      %v2246 = vpop.f32.mrf.mxu0
      %v2247 = vadd.f32 0.0, %v2246
      %v2248 = vpop.f32.mrf.mxu0
      %2249 = vmatprep.mubr.bf16.mxu0 0
      %2250 = vmatmul.mubr.bf16.gmra.mxu0 %v2032
      %v2251 = vpop.f32.mrf.mxu0
      %v2252 = vadd.f32 0.0, %v2251
      %v2253 = vpop.f32.mrf.mxu0
      %v2254 = vpop.f32.mrf.mxu0
      %v2255 = vadd.f32 0.0, %v2254
      %v2256 = vpop.f32.mrf.mxu0
      %2257 = vdwg.mxu0
      %v2258 = vadd.f32 %v1679, %v2132
      %v2259 = vadd.f32 %v1682, %v2135
      %v2260 = vadd.f32 %v1687, %v2140
      %v2261 = vadd.f32 %v1690, %v2143
      %v2262 = vadd.f32 %v1695, %v2148
      %v2263 = vadd.f32 %v1698, %v2151
      %v2264 = vadd.f32 %v1703, %v2156
      %v2265 = vadd.f32 %v1706, %v2159
      %v2266 = vadd.f32 %v1711, %v2164
      %v2267 = vadd.f32 %v1714, %v2167
      %v2268 = vadd.f32 %v1719, %v2172
      %v2269 = vadd.f32 %v1722, %v2175
      %v2270 = vadd.f32 %v1727, %v2180
      %v2271 = vadd.f32 %v1730, %v2183
      %v2272 = vadd.f32 %v1735, %v2188
      %v2273 = vadd.f32 %v1738, %v2191
      %v2274 = vadd.f32 %v1743, %v2196
      %v2275 = vadd.f32 %v1746, %v2199
      %v2276 = vadd.f32 %v1751, %v2204
      %v2277 = vadd.f32 %v1754, %v2207
      %v2278 = vadd.f32 %v1759, %v2212
      %v2279 = vadd.f32 %v1762, %v2215
      %v2280 = vadd.f32 %v1767, %v2220
      %v2281 = vadd.f32 %v1770, %v2223
      %v2282 = vadd.f32 %v1775, %v2228
      %v2283 = vadd.f32 %v1778, %v2231
      %v2284 = vadd.f32 %v1783, %v2236
      %v2285 = vadd.f32 %v1786, %v2239
      %v2286 = vadd.f32 %v1791, %v2244
      %v2287 = vadd.f32 %v1794, %v2247
      %v2288 = vadd.f32 %v1799, %v2252
      %v2289 = vadd.f32 %v1802, %v2255
      %s2290 = sadd.s32 %s755, 1
      %s2291 = smul.u32 %s2290, 3
      %s2292 = smul.addr %s2291, 4
      %s2293 = scalar_lea.vmem [#allocation2], %s2292
      %v2294 = vld [vmem:[%s2293] sm:$0xf]
      %v2295 = vld [vmem:[%s2293 + $0x4] sm:$0xf]
      %v2296 = vld [vmem:[%s2293 + $0xc] sm:$0xf]
      %v2297 = vld [vmem:[%s2293 + $0x10] sm:$0xf]
      %v2298 = vld [vmem:[%s2293 + $0x18] sm:$0xf]
      %v2299 = vld [vmem:[%s2293 + $0x1c] sm:$0xf]
      %v2300 = vld [vmem:[%s2293 + $0x24] sm:$0xf]
      %v2301 = vld [vmem:[%s2293 + $0x28] sm:$0xf]
      %v2302 = vld [vmem:[%s2293 + $0x30] sm:$0xf]
      %v2303 = vld [vmem:[%s2293 + $0x34] sm:$0xf]
      %v2304 = vld [vmem:[%s2293 + $0x3c] sm:$0xf]
      %v2305 = vld [vmem:[%s2293 + $0x40] sm:$0xf]
      %v2306 = vld [vmem:[%s2293 + $0x48] sm:$0xf]
      %v2307 = vld [vmem:[%s2293 + $0x4c] sm:$0xf]
      %v2308 = vld [vmem:[%s2293 + $0x54] sm:$0xf]
      %v2309 = vld [vmem:[%s2293 + $0x58] sm:$0xf]
      %v2310 = vld [vmem:[%s2293 + $0x60] sm:$0xf]
      %v2311 = vld [vmem:[%s2293 + $0x64] sm:$0xf]
      %v2312 = vld [vmem:[%s2293 + $0x6c] sm:$0xf]
      %v2313 = vld [vmem:[%s2293 + $0x70] sm:$0xf]
      %v2314 = vld [vmem:[%s2293 + $0x78] sm:$0xf]
      %v2315 = vld [vmem:[%s2293 + $0x7c] sm:$0xf]
      %v2316 = vld [vmem:[%s2293 + $0x84] sm:$0xf]
      %v2317 = vld [vmem:[%s2293 + $0x88] sm:$0xf]
      %v2318 = vld [vmem:[%s2293 + $0x90] sm:$0xf]
      %v2319 = vld [vmem:[%s2293 + $0x94] sm:$0xf]
      %v2320 = vld [vmem:[%s2293 + $0x9c] sm:$0xf]
      %v2321 = vld [vmem:[%s2293 + $0xa0] sm:$0xf]
      %v2322 = vld [vmem:[%s2293 + $0xa8] sm:$0xf]
      %v2323 = vld [vmem:[%s2293 + $0xac] sm:$0xf]
      %v2324 = vld [vmem:[%s2293 + $0xb4] sm:$0xf]
      %v2325 = vld [vmem:[%s2293 + $0xb8] sm:$0xf]
      %s2326 = scalar_lea.vmem %s1, 192
      %v2327 = vld [vmem:[%s2326] sm:$0xf]
      %v2328 = vld [vmem:[%s2326 + $0x4] sm:$0xf]
      %v2329 = vld [vmem:[%s2326 + $0x8] sm:$0xf]
      %v2330 = vld [vmem:[%s2326 + $0xc] sm:$0xf]
      %v2331 = vld [vmem:[%s2326 + $0x10] sm:$0xf]
      %v2332 = vld [vmem:[%s2326 + $0x14] sm:$0xf]
      %v2333 = vld [vmem:[%s2326 + $0x18] sm:$0xf]
      %v2334 = vld [vmem:[%s2326 + $0x1c] sm:$0xf]
      %v2335 = vld [vmem:[%s2326 + $0x20] sm:$0xf]
      %v2336 = vld [vmem:[%s2326 + $0x24] sm:$0xf]
      %v2337 = vld [vmem:[%s2326 + $0x28] sm:$0xf]
      %v2338 = vld [vmem:[%s2326 + $0x2c] sm:$0xf]
      %v2339 = vld [vmem:[%s2326 + $0x30] sm:$0xf]
      %v2340 = vld [vmem:[%s2326 + $0x34] sm:$0xf]
      %v2341 = vld [vmem:[%s2326 + $0x38] sm:$0xf]
      %v2342 = vld [vmem:[%s2326 + $0x3c] sm:$0xf]
      %v2375 = vunpack.c.l.b16 %v2294
      %v2376 = vunpack.c.l.b16 %v2295
      %v2377 = vunpack.c.l.b16 %v2296
      %v2378 = vunpack.c.l.b16 %v2297
      %v2379 = vunpack.c.l.b16 %v2298
      %v2380 = vunpack.c.l.b16 %v2299
      %v2381 = vunpack.c.l.b16 %v2300
      %v2382 = vunpack.c.l.b16 %v2301
      %v2383 = vunpack.c.l.b16 %v2302
      %v2384 = vunpack.c.l.b16 %v2303
      %v2385 = vunpack.c.l.b16 %v2304
      %v2386 = vunpack.c.l.b16 %v2305
      %v2387 = vunpack.c.l.b16 %v2306
      %v2388 = vunpack.c.l.b16 %v2307
      %v2389 = vunpack.c.l.b16 %v2308
      %v2390 = vunpack.c.l.b16 %v2309
      %v2391 = vunpack.c.l.b16 %v2310
      %v2392 = vunpack.c.l.b16 %v2311
      %v2393 = vunpack.c.l.b16 %v2312
      %v2394 = vunpack.c.l.b16 %v2313
      %v2395 = vunpack.c.l.b16 %v2314
      %v2396 = vunpack.c.l.b16 %v2315
      %v2397 = vunpack.c.l.b16 %v2316
      %v2398 = vunpack.c.l.b16 %v2317
      %v2399 = vunpack.c.l.b16 %v2318
      %v2400 = vunpack.c.l.b16 %v2319
      %v2401 = vunpack.c.l.b16 %v2320
      %v2402 = vunpack.c.l.b16 %v2321
      %v2403 = vunpack.c.l.b16 %v2322
      %v2404 = vunpack.c.l.b16 %v2323
      %v2405 = vunpack.c.l.b16 %v2324
      %v2406 = vunpack.c.l.b16 %v2325
      %v2407 = vpack.c.b16 %v2376, %v2375
      %v2408 = vpack.c.b16 %v2378, %v2377
      %v2409 = vpack.c.b16 %v2380, %v2379
      %v2410 = vpack.c.b16 %v2382, %v2381
      %v2411 = vpack.c.b16 %v2384, %v2383
      %v2412 = vpack.c.b16 %v2386, %v2385
      %v2413 = vpack.c.b16 %v2388, %v2387
      %v2414 = vpack.c.b16 %v2390, %v2389
      %v2415 = vpack.c.b16 %v2392, %v2391
      %v2416 = vpack.c.b16 %v2394, %v2393
      %v2417 = vpack.c.b16 %v2396, %v2395
      %v2418 = vpack.c.b16 %v2398, %v2397
      %v2419 = vpack.c.b16 %v2400, %v2399
      %v2420 = vpack.c.b16 %v2402, %v2401
      %v2421 = vpack.c.b16 %v2404, %v2403
      %v2422 = vpack.c.b16 %v2406, %v2405
      %v2455 = vunpack.c.l.b16 %v2327
      %v2456 = vunpack.c.l.b16 %v2328
      %v2457 = vunpack.c.l.b16 %v2329
      %v2458 = vunpack.c.l.b16 %v2330
      %v2459 = vunpack.c.l.b16 %v2331
      %v2460 = vunpack.c.l.b16 %v2332
      %v2461 = vunpack.c.l.b16 %v2333
      %v2462 = vunpack.c.l.b16 %v2334
      %v2463 = vunpack.c.l.b16 %v2335
      %v2464 = vunpack.c.l.b16 %v2336
      %v2465 = vunpack.c.l.b16 %v2337
      %v2466 = vunpack.c.l.b16 %v2338
      %v2467 = vunpack.c.l.b16 %v2339
      %v2468 = vunpack.c.l.b16 %v2340
      %v2469 = vunpack.c.l.b16 %v2341
      %v2470 = vunpack.c.l.b16 %v2342
      %v2471 = vpack.c.b16 %v2456, %v2455
      %v2472 = vpack.c.b16 %v2458, %v2457
      %v2473 = vpack.c.b16 %v2460, %v2459
      %v2474 = vpack.c.b16 %v2462, %v2461
      %v2475 = vpack.c.b16 %v2464, %v2463
      %v2476 = vpack.c.b16 %v2466, %v2465
      %v2477 = vpack.c.b16 %v2468, %v2467
      %v2478 = vpack.c.b16 %v2470, %v2469
      %2487 = vmatprep.subr.bf16.mxu0 0
      %2488 = vmatpush1.bf16.msra.mxu0 %v2478
      %2489 = vmatprep.subr.bf16.mxu0 0
      %2490 = vmatpush1.bf16.msra.mxu0 %v2477
      %2491 = vmatprep.subr.bf16.mxu0 0
      %2492 = vmatpush1.bf16.msra.mxu0 %v2476
      %2493 = vmatprep.subr.bf16.mxu0 0
      %2494 = vmatpush1.bf16.msra.mxu0 %v2475
      %2495 = vmatprep.subr.bf16.mxu0 0
      %2496 = vmatpush1.bf16.msra.mxu0 %v2474
      %2497 = vmatprep.subr.bf16.mxu0 0
      %2498 = vmatpush1.bf16.msra.mxu0 %v2473
      %2499 = vmatprep.subr.bf16.mxu0 0
      %2500 = vmatpush1.bf16.msra.mxu0 %v2472
      %2501 = vmatprep.subr.bf16.mxu0 0
      %2502 = vmatpush1.bf16.msra.mxu0 %v2471
      %2503 = vmatprep.subr.bf16.mxu0 0
      %2504 = vmatpush2.bf16.msra.mxu0 0
      %2505 = vmatprep.subr.bf16.mxu0 0
      %2506 = vmatpush2.bf16.msra.mxu0 0
      %2507 = vmatprep.subr.bf16.mxu0 0
      %2508 = vmatpush2.bf16.msra.mxu0 0
      %2509 = vmatprep.subr.bf16.mxu0 0
      %2510 = vmatpush2.bf16.msra.mxu0 0
      %2511 = vmatprep.subr.bf16.mxu0 0
      %2512 = vmatpush2.bf16.msra.mxu0 0
      %2513 = vmatprep.subr.bf16.mxu0 0
      %2514 = vmatpush2.bf16.msra.mxu0 0
      %2515 = vmatprep.subr.bf16.mxu0 0
      %2516 = vmatpush2.bf16.msra.mxu0 0
      %2517 = vmatprep.subr.bf16.mxu0 0
      %2518 = vmatpush2.bf16.msra.mxu0 0
      %2519 = vmatprep.mubr.bf16.mxu0 0
      %2520 = vmatmul.mubr.bf16.gmra.mxu0 %v2407
      %v2521 = vpop.f32.mrf.mxu0
      %v2522 = vadd.f32 0.0, %v2521
      %v2523 = vpop.f32.mrf.mxu0
      %v2524 = vpop.f32.mrf.mxu0
      %v2525 = vadd.f32 0.0, %v2524
      %v2526 = vpop.f32.mrf.mxu0
      %2527 = vmatprep.mubr.bf16.mxu0 0
      %2528 = vmatmul.mubr.bf16.gmra.mxu0 %v2408
      %v2529 = vpop.f32.mrf.mxu0
      %v2530 = vadd.f32 0.0, %v2529
      %v2531 = vpop.f32.mrf.mxu0
      %v2532 = vpop.f32.mrf.mxu0
      %v2533 = vadd.f32 0.0, %v2532
      %v2534 = vpop.f32.mrf.mxu0
      %2535 = vmatprep.mubr.bf16.mxu0 0
      %2536 = vmatmul.mubr.bf16.gmra.mxu0 %v2409
      %v2537 = vpop.f32.mrf.mxu0
      %v2538 = vadd.f32 0.0, %v2537
      %v2539 = vpop.f32.mrf.mxu0
      %v2540 = vpop.f32.mrf.mxu0
      %v2541 = vadd.f32 0.0, %v2540
      %v2542 = vpop.f32.mrf.mxu0
      %2543 = vmatprep.mubr.bf16.mxu0 0
      %2544 = vmatmul.mubr.bf16.gmra.mxu0 %v2410
      %v2545 = vpop.f32.mrf.mxu0
      %v2546 = vadd.f32 0.0, %v2545
      %v2547 = vpop.f32.mrf.mxu0
      %v2548 = vpop.f32.mrf.mxu0
      %v2549 = vadd.f32 0.0, %v2548
      %v2550 = vpop.f32.mrf.mxu0
      %2551 = vmatprep.mubr.bf16.mxu0 0
      %2552 = vmatmul.mubr.bf16.gmra.mxu0 %v2411
      %v2553 = vpop.f32.mrf.mxu0
      %v2554 = vadd.f32 0.0, %v2553
      %v2555 = vpop.f32.mrf.mxu0
      %v2556 = vpop.f32.mrf.mxu0
      %v2557 = vadd.f32 0.0, %v2556
      %v2558 = vpop.f32.mrf.mxu0
      %2559 = vmatprep.mubr.bf16.mxu0 0
      %2560 = vmatmul.mubr.bf16.gmra.mxu0 %v2412
      %v2561 = vpop.f32.mrf.mxu0
      %v2562 = vadd.f32 0.0, %v2561
      %v2563 = vpop.f32.mrf.mxu0
      %v2564 = vpop.f32.mrf.mxu0
      %v2565 = vadd.f32 0.0, %v2564
      %v2566 = vpop.f32.mrf.mxu0
      %2567 = vmatprep.mubr.bf16.mxu0 0
      %2568 = vmatmul.mubr.bf16.gmra.mxu0 %v2413
      %v2569 = vpop.f32.mrf.mxu0
      %v2570 = vadd.f32 0.0, %v2569
      %v2571 = vpop.f32.mrf.mxu0
      %v2572 = vpop.f32.mrf.mxu0
      %v2573 = vadd.f32 0.0, %v2572
      %v2574 = vpop.f32.mrf.mxu0
      %2575 = vmatprep.mubr.bf16.mxu0 0
      %2576 = vmatmul.mubr.bf16.gmra.mxu0 %v2414
      %v2577 = vpop.f32.mrf.mxu0
      %v2578 = vadd.f32 0.0, %v2577
      %v2579 = vpop.f32.mrf.mxu0
      %v2580 = vpop.f32.mrf.mxu0
      %v2581 = vadd.f32 0.0, %v2580
      %v2582 = vpop.f32.mrf.mxu0
      %2583 = vmatprep.mubr.bf16.mxu0 0
      %2584 = vmatmul.mubr.bf16.gmra.mxu0 %v2415
      %v2585 = vpop.f32.mrf.mxu0
      %v2586 = vadd.f32 0.0, %v2585
      %v2587 = vpop.f32.mrf.mxu0
      %v2588 = vpop.f32.mrf.mxu0
      %v2589 = vadd.f32 0.0, %v2588
      %v2590 = vpop.f32.mrf.mxu0
      %2591 = vmatprep.mubr.bf16.mxu0 0
      %2592 = vmatmul.mubr.bf16.gmra.mxu0 %v2416
      %v2593 = vpop.f32.mrf.mxu0
      %v2594 = vadd.f32 0.0, %v2593
      %v2595 = vpop.f32.mrf.mxu0
      %v2596 = vpop.f32.mrf.mxu0
      %v2597 = vadd.f32 0.0, %v2596
      %v2598 = vpop.f32.mrf.mxu0
      %2599 = vmatprep.mubr.bf16.mxu0 0
      %2600 = vmatmul.mubr.bf16.gmra.mxu0 %v2417
      %v2601 = vpop.f32.mrf.mxu0
      %v2602 = vadd.f32 0.0, %v2601
      %v2603 = vpop.f32.mrf.mxu0
      %v2604 = vpop.f32.mrf.mxu0
      %v2605 = vadd.f32 0.0, %v2604
      %v2606 = vpop.f32.mrf.mxu0
      %2607 = vmatprep.mubr.bf16.mxu0 0
      %2608 = vmatmul.mubr.bf16.gmra.mxu0 %v2418
      %v2609 = vpop.f32.mrf.mxu0
      %v2610 = vadd.f32 0.0, %v2609
      %v2611 = vpop.f32.mrf.mxu0
      %v2612 = vpop.f32.mrf.mxu0
      %v2613 = vadd.f32 0.0, %v2612
      %v2614 = vpop.f32.mrf.mxu0
      %2615 = vmatprep.mubr.bf16.mxu0 0
      %2616 = vmatmul.mubr.bf16.gmra.mxu0 %v2419
      %v2617 = vpop.f32.mrf.mxu0
      %v2618 = vadd.f32 0.0, %v2617
      %v2619 = vpop.f32.mrf.mxu0
      %v2620 = vpop.f32.mrf.mxu0
      %v2621 = vadd.f32 0.0, %v2620
      %v2622 = vpop.f32.mrf.mxu0
      %2623 = vmatprep.mubr.bf16.mxu0 0
      %2624 = vmatmul.mubr.bf16.gmra.mxu0 %v2420
      %v2625 = vpop.f32.mrf.mxu0
      %v2626 = vadd.f32 0.0, %v2625
      %v2627 = vpop.f32.mrf.mxu0
      %v2628 = vpop.f32.mrf.mxu0
      %v2629 = vadd.f32 0.0, %v2628
      %v2630 = vpop.f32.mrf.mxu0
      %2631 = vmatprep.mubr.bf16.mxu0 0
      %2632 = vmatmul.mubr.bf16.gmra.mxu0 %v2421
      %v2633 = vpop.f32.mrf.mxu0
      %v2634 = vadd.f32 0.0, %v2633
      %v2635 = vpop.f32.mrf.mxu0
      %v2636 = vpop.f32.mrf.mxu0
      %v2637 = vadd.f32 0.0, %v2636
      %v2638 = vpop.f32.mrf.mxu0
      %2639 = vmatprep.mubr.bf16.mxu0 0
      %2640 = vmatmul.mubr.bf16.gmra.mxu0 %v2422
      %v2641 = vpop.f32.mrf.mxu0
      %v2642 = vadd.f32 0.0, %v2641
      %v2643 = vpop.f32.mrf.mxu0
      %v2644 = vpop.f32.mrf.mxu0
      %v2645 = vadd.f32 0.0, %v2644
      %v2646 = vpop.f32.mrf.mxu0
      %2647 = vdwg.mxu0
      %v2648 = vadd.f32 %v2258, %v2522
      %v2649 = vadd.f32 %v2259, %v2525
      %v2650 = vadd.f32 %v2260, %v2530
      %v2651 = vadd.f32 %v2261, %v2533
      %v2652 = vadd.f32 %v2262, %v2538
      %v2653 = vadd.f32 %v2263, %v2541
      %v2654 = vadd.f32 %v2264, %v2546
      %v2655 = vadd.f32 %v2265, %v2549
      %v2656 = vadd.f32 %v2266, %v2554
      %v2657 = vadd.f32 %v2267, %v2557
      %v2658 = vadd.f32 %v2268, %v2562
      %v2659 = vadd.f32 %v2269, %v2565
      %v2660 = vadd.f32 %v2270, %v2570
      %v2661 = vadd.f32 %v2271, %v2573
      %v2662 = vadd.f32 %v2272, %v2578
      %v2663 = vadd.f32 %v2273, %v2581
      %v2664 = vadd.f32 %v2274, %v2586
      %v2665 = vadd.f32 %v2275, %v2589
      %v2666 = vadd.f32 %v2276, %v2594
      %v2667 = vadd.f32 %v2277, %v2597
      %v2668 = vadd.f32 %v2278, %v2602
      %v2669 = vadd.f32 %v2279, %v2605
      %v2670 = vadd.f32 %v2280, %v2610
      %v2671 = vadd.f32 %v2281, %v2613
      %v2672 = vadd.f32 %v2282, %v2618
      %v2673 = vadd.f32 %v2283, %v2621
      %v2674 = vadd.f32 %v2284, %v2626
      %v2675 = vadd.f32 %v2285, %v2629
      %v2676 = vadd.f32 %v2286, %v2634
      %v2677 = vadd.f32 %v2287, %v2637
      %v2678 = vadd.f32 %v2288, %v2642
      %v2679 = vadd.f32 %v2289, %v2645
      %v2680 = vld [vmem:[%s2293] sm:$0xf]
      %v2681 = vld [vmem:[%s2293 + $0x4] sm:$0xf]
      %v2682 = vld [vmem:[%s2293 + $0x8] sm:$0x1]
      %v2683 = vld [vmem:[%s2293 + $0xc] sm:$0xf]
      %v2684 = vld [vmem:[%s2293 + $0x10] sm:$0xf]
      %v2685 = vld [vmem:[%s2293 + $0x14] sm:$0x1]
      %v2686 = vld [vmem:[%s2293 + $0x18] sm:$0xf]
      %v2687 = vld [vmem:[%s2293 + $0x1c] sm:$0xf]
      %v2688 = vld [vmem:[%s2293 + $0x20] sm:$0x1]
      %v2689 = vld [vmem:[%s2293 + $0x24] sm:$0xf]
      %v2690 = vld [vmem:[%s2293 + $0x28] sm:$0xf]
      %v2691 = vld [vmem:[%s2293 + $0x2c] sm:$0x1]
      %v2692 = vld [vmem:[%s2293 + $0x30] sm:$0xf]
      %v2693 = vld [vmem:[%s2293 + $0x34] sm:$0xf]
      %v2694 = vld [vmem:[%s2293 + $0x38] sm:$0x1]
      %v2695 = vld [vmem:[%s2293 + $0x3c] sm:$0xf]
      %v2696 = vld [vmem:[%s2293 + $0x40] sm:$0xf]
      %v2697 = vld [vmem:[%s2293 + $0x44] sm:$0x1]
      %v2698 = vld [vmem:[%s2293 + $0x48] sm:$0xf]
      %v2699 = vld [vmem:[%s2293 + $0x4c] sm:$0xf]
      %v2700 = vld [vmem:[%s2293 + $0x50] sm:$0x1]
      %v2701 = vld [vmem:[%s2293 + $0x54] sm:$0xf]
      %v2702 = vld [vmem:[%s2293 + $0x58] sm:$0xf]
      %v2703 = vld [vmem:[%s2293 + $0x5c] sm:$0x1]
      %v2704 = vld [vmem:[%s2293 + $0x60] sm:$0xf]
      %v2705 = vld [vmem:[%s2293 + $0x64] sm:$0xf]
      %v2706 = vld [vmem:[%s2293 + $0x68] sm:$0x1]
      %v2707 = vld [vmem:[%s2293 + $0x6c] sm:$0xf]
      %v2708 = vld [vmem:[%s2293 + $0x70] sm:$0xf]
      %v2709 = vld [vmem:[%s2293 + $0x74] sm:$0x1]
      %v2710 = vld [vmem:[%s2293 + $0x78] sm:$0xf]
      %v2711 = vld [vmem:[%s2293 + $0x7c] sm:$0xf]
      %v2712 = vld [vmem:[%s2293 + $0x80] sm:$0x1]
      %v2713 = vld [vmem:[%s2293 + $0x84] sm:$0xf]
      %v2714 = vld [vmem:[%s2293 + $0x88] sm:$0xf]
      %v2715 = vld [vmem:[%s2293 + $0x8c] sm:$0x1]
      %v2716 = vld [vmem:[%s2293 + $0x90] sm:$0xf]
      %v2717 = vld [vmem:[%s2293 + $0x94] sm:$0xf]
      %v2718 = vld [vmem:[%s2293 + $0x98] sm:$0x1]
      %v2719 = vld [vmem:[%s2293 + $0x9c] sm:$0xf]
      %v2720 = vld [vmem:[%s2293 + $0xa0] sm:$0xf]
      %v2721 = vld [vmem:[%s2293 + $0xa4] sm:$0x1]
      %v2722 = vld [vmem:[%s2293 + $0xa8] sm:$0xf]
      %v2723 = vld [vmem:[%s2293 + $0xac] sm:$0xf]
      %v2724 = vld [vmem:[%s2293 + $0xb0] sm:$0x1]
      %v2725 = vld [vmem:[%s2293 + $0xb4] sm:$0xf]
      %v2726 = vld [vmem:[%s2293 + $0xb8] sm:$0xf]
      %v2727 = vld [vmem:[%s2293 + $0xbc] sm:$0x1]
      %v2729 = vshrl.u32 %v2680, 16
      %v2731 = vrot.slane %v2729, 4
      %v2732 = vshll.u32 %v2680, 16
      %v2734 = vrot.slane %v2732, 5
      %v2735 = vor.u32 %v2731, %v2734
      %v2736 = vrot.slane %v2735, 4
      %v2738 = vshll.u32 %v2681, 16
      %v2740 = vrot.slane %v2738, 5
      %v2741 = vsel %vm825, %v2736, %v2740
      %v2742 = vshrl.u32 %v2681, 16
      %v2744 = vrot.slane %v2742, 4
      %v2745 = vor.u32 %v2744, %v2740
      %v2746 = vrot.slane %v2745, 4
      %v2748 = vshll.u32 %v2682, 16
      %v2750 = vrot.slane %v2748, 5
      %v2751 = vsel %vm825, %v2746, %v2750
      %v2753 = vshrl.u32 %v2683, 16
      %v2755 = vrot.slane %v2753, 4
      %v2756 = vshll.u32 %v2683, 16
      %v2758 = vrot.slane %v2756, 5
      %v2759 = vor.u32 %v2755, %v2758
      %v2760 = vrot.slane %v2759, 4
      %v2762 = vshll.u32 %v2684, 16
      %v2764 = vrot.slane %v2762, 5
      %v2765 = vsel %vm825, %v2760, %v2764
      %v2766 = vshrl.u32 %v2684, 16
      %v2768 = vrot.slane %v2766, 4
      %v2769 = vor.u32 %v2768, %v2764
      %v2770 = vrot.slane %v2769, 4
      %v2772 = vshll.u32 %v2685, 16
      %v2774 = vrot.slane %v2772, 5
      %v2775 = vsel %vm825, %v2770, %v2774
      %v2777 = vshrl.u32 %v2686, 16
      %v2779 = vrot.slane %v2777, 4
      %v2780 = vshll.u32 %v2686, 16
      %v2782 = vrot.slane %v2780, 5
      %v2783 = vor.u32 %v2779, %v2782
      %v2784 = vrot.slane %v2783, 4
      %v2786 = vshll.u32 %v2687, 16
      %v2788 = vrot.slane %v2786, 5
      %v2789 = vsel %vm825, %v2784, %v2788
      %v2790 = vshrl.u32 %v2687, 16
      %v2792 = vrot.slane %v2790, 4
      %v2793 = vor.u32 %v2792, %v2788
      %v2794 = vrot.slane %v2793, 4
      %v2796 = vshll.u32 %v2688, 16
      %v2798 = vrot.slane %v2796, 5
      %v2799 = vsel %vm825, %v2794, %v2798
      %v2801 = vshrl.u32 %v2689, 16
      %v2803 = vrot.slane %v2801, 4
      %v2804 = vshll.u32 %v2689, 16
      %v2806 = vrot.slane %v2804, 5
      %v2807 = vor.u32 %v2803, %v2806
      %v2808 = vrot.slane %v2807, 4
      %v2810 = vshll.u32 %v2690, 16
      %v2812 = vrot.slane %v2810, 5
      %v2813 = vsel %vm825, %v2808, %v2812
      %v2814 = vshrl.u32 %v2690, 16
      %v2816 = vrot.slane %v2814, 4
      %v2817 = vor.u32 %v2816, %v2812
      %v2818 = vrot.slane %v2817, 4
      %v2820 = vshll.u32 %v2691, 16
      %v2822 = vrot.slane %v2820, 5
      %v2823 = vsel %vm825, %v2818, %v2822
      %v2825 = vshrl.u32 %v2692, 16
      %v2827 = vrot.slane %v2825, 4
      %v2828 = vshll.u32 %v2692, 16
      %v2830 = vrot.slane %v2828, 5
      %v2831 = vor.u32 %v2827, %v2830
      %v2832 = vrot.slane %v2831, 4
      %v2834 = vshll.u32 %v2693, 16
      %v2836 = vrot.slane %v2834, 5
      %v2837 = vsel %vm825, %v2832, %v2836
      %v2838 = vshrl.u32 %v2693, 16
      %v2840 = vrot.slane %v2838, 4
      %v2841 = vor.u32 %v2840, %v2836
      %v2842 = vrot.slane %v2841, 4
      %v2844 = vshll.u32 %v2694, 16
      %v2846 = vrot.slane %v2844, 5
      %v2847 = vsel %vm825, %v2842, %v2846
      %v2849 = vshrl.u32 %v2695, 16
      %v2851 = vrot.slane %v2849, 4
      %v2852 = vshll.u32 %v2695, 16
      %v2854 = vrot.slane %v2852, 5
      %v2855 = vor.u32 %v2851, %v2854
      %v2856 = vrot.slane %v2855, 4
      %v2858 = vshll.u32 %v2696, 16
      %v2860 = vrot.slane %v2858, 5
      %v2861 = vsel %vm825, %v2856, %v2860
      %v2862 = vshrl.u32 %v2696, 16
      %v2864 = vrot.slane %v2862, 4
      %v2865 = vor.u32 %v2864, %v2860
      %v2866 = vrot.slane %v2865, 4
      %v2868 = vshll.u32 %v2697, 16
      %v2870 = vrot.slane %v2868, 5
      %v2871 = vsel %vm825, %v2866, %v2870
      %v2873 = vshrl.u32 %v2698, 16
      %v2875 = vrot.slane %v2873, 4
      %v2876 = vshll.u32 %v2698, 16
      %v2878 = vrot.slane %v2876, 5
      %v2879 = vor.u32 %v2875, %v2878
      %v2880 = vrot.slane %v2879, 4
      %v2882 = vshll.u32 %v2699, 16
      %v2884 = vrot.slane %v2882, 5
      %v2885 = vsel %vm825, %v2880, %v2884
      %v2886 = vshrl.u32 %v2699, 16
      %v2888 = vrot.slane %v2886, 4
      %v2889 = vor.u32 %v2888, %v2884
      %v2890 = vrot.slane %v2889, 4
      %v2892 = vshll.u32 %v2700, 16
      %v2894 = vrot.slane %v2892, 5
      %v2895 = vsel %vm825, %v2890, %v2894
      %v2897 = vshrl.u32 %v2701, 16
      %v2899 = vrot.slane %v2897, 4
      %v2900 = vshll.u32 %v2701, 16
      %v2902 = vrot.slane %v2900, 5
      %v2903 = vor.u32 %v2899, %v2902
      %v2904 = vrot.slane %v2903, 4
      %v2906 = vshll.u32 %v2702, 16
      %v2908 = vrot.slane %v2906, 5
      %v2909 = vsel %vm825, %v2904, %v2908
      %v2910 = vshrl.u32 %v2702, 16
      %v2912 = vrot.slane %v2910, 4
      %v2913 = vor.u32 %v2912, %v2908
      %v2914 = vrot.slane %v2913, 4
      %v2916 = vshll.u32 %v2703, 16
      %v2918 = vrot.slane %v2916, 5
      %v2919 = vsel %vm825, %v2914, %v2918
      %v2921 = vshrl.u32 %v2704, 16
      %v2923 = vrot.slane %v2921, 4
      %v2924 = vshll.u32 %v2704, 16
      %v2926 = vrot.slane %v2924, 5
      %v2927 = vor.u32 %v2923, %v2926
      %v2928 = vrot.slane %v2927, 4
      %v2930 = vshll.u32 %v2705, 16
      %v2932 = vrot.slane %v2930, 5
      %v2933 = vsel %vm825, %v2928, %v2932
      %v2934 = vshrl.u32 %v2705, 16
      %v2936 = vrot.slane %v2934, 4
      %v2937 = vor.u32 %v2936, %v2932
      %v2938 = vrot.slane %v2937, 4
      %v2940 = vshll.u32 %v2706, 16
      %v2942 = vrot.slane %v2940, 5
      %v2943 = vsel %vm825, %v2938, %v2942
      %v2945 = vshrl.u32 %v2707, 16
      %v2947 = vrot.slane %v2945, 4
      %v2948 = vshll.u32 %v2707, 16
      %v2950 = vrot.slane %v2948, 5
      %v2951 = vor.u32 %v2947, %v2950
      %v2952 = vrot.slane %v2951, 4
      %v2954 = vshll.u32 %v2708, 16
      %v2956 = vrot.slane %v2954, 5
      %v2957 = vsel %vm825, %v2952, %v2956
      %v2958 = vshrl.u32 %v2708, 16
      %v2960 = vrot.slane %v2958, 4
      %v2961 = vor.u32 %v2960, %v2956
      %v2962 = vrot.slane %v2961, 4
      %v2964 = vshll.u32 %v2709, 16
      %v2966 = vrot.slane %v2964, 5
      %v2967 = vsel %vm825, %v2962, %v2966
      %v2969 = vshrl.u32 %v2710, 16
      %v2971 = vrot.slane %v2969, 4
      %v2972 = vshll.u32 %v2710, 16
      %v2974 = vrot.slane %v2972, 5
      %v2975 = vor.u32 %v2971, %v2974
      %v2976 = vrot.slane %v2975, 4
      %v2978 = vshll.u32 %v2711, 16
      %v2980 = vrot.slane %v2978, 5
      %v2981 = vsel %vm825, %v2976, %v2980
      %v2982 = vshrl.u32 %v2711, 16
      %v2984 = vrot.slane %v2982, 4
      %v2985 = vor.u32 %v2984, %v2980
      %v2986 = vrot.slane %v2985, 4
      %v2988 = vshll.u32 %v2712, 16
      %v2990 = vrot.slane %v2988, 5
      %v2991 = vsel %vm825, %v2986, %v2990
      %v2993 = vshrl.u32 %v2713, 16
      %v2995 = vrot.slane %v2993, 4
      %v2996 = vshll.u32 %v2713, 16
      %v2998 = vrot.slane %v2996, 5
      %v2999 = vor.u32 %v2995, %v2998
      %v3000 = vrot.slane %v2999, 4
      %v3002 = vshll.u32 %v2714, 16
      %v3004 = vrot.slane %v3002, 5
      %v3005 = vsel %vm825, %v3000, %v3004
      %v3006 = vshrl.u32 %v2714, 16
      %v3008 = vrot.slane %v3006, 4
      %v3009 = vor.u32 %v3008, %v3004
      %v3010 = vrot.slane %v3009, 4
      %v3012 = vshll.u32 %v2715, 16
      %v3014 = vrot.slane %v3012, 5
      %v3015 = vsel %vm825, %v3010, %v3014
      %v3017 = vshrl.u32 %v2716, 16
      %v3019 = vrot.slane %v3017, 4
      %v3020 = vshll.u32 %v2716, 16
      %v3022 = vrot.slane %v3020, 5
      %v3023 = vor.u32 %v3019, %v3022
      %v3024 = vrot.slane %v3023, 4
      %v3026 = vshll.u32 %v2717, 16
      %v3028 = vrot.slane %v3026, 5
      %v3029 = vsel %vm825, %v3024, %v3028
      %v3030 = vshrl.u32 %v2717, 16
      %v3032 = vrot.slane %v3030, 4
      %v3033 = vor.u32 %v3032, %v3028
      %v3034 = vrot.slane %v3033, 4
      %v3036 = vshll.u32 %v2718, 16
      %v3038 = vrot.slane %v3036, 5
      %v3039 = vsel %vm825, %v3034, %v3038
      %v3041 = vshrl.u32 %v2719, 16
      %v3043 = vrot.slane %v3041, 4
      %v3044 = vshll.u32 %v2719, 16
      %v3046 = vrot.slane %v3044, 5
      %v3047 = vor.u32 %v3043, %v3046
      %v3048 = vrot.slane %v3047, 4
      %v3050 = vshll.u32 %v2720, 16
      %v3052 = vrot.slane %v3050, 5
      %v3053 = vsel %vm825, %v3048, %v3052
      %v3054 = vshrl.u32 %v2720, 16
      %v3056 = vrot.slane %v3054, 4
      %v3057 = vor.u32 %v3056, %v3052
      %v3058 = vrot.slane %v3057, 4
      %v3060 = vshll.u32 %v2721, 16
      %v3062 = vrot.slane %v3060, 5
      %v3063 = vsel %vm825, %v3058, %v3062
      %v3065 = vshrl.u32 %v2722, 16
      %v3067 = vrot.slane %v3065, 4
      %v3068 = vshll.u32 %v2722, 16
      %v3070 = vrot.slane %v3068, 5
      %v3071 = vor.u32 %v3067, %v3070
      %v3072 = vrot.slane %v3071, 4
      %v3074 = vshll.u32 %v2723, 16
      %v3076 = vrot.slane %v3074, 5
      %v3077 = vsel %vm825, %v3072, %v3076
      %v3078 = vshrl.u32 %v2723, 16
      %v3080 = vrot.slane %v3078, 4
      %v3081 = vor.u32 %v3080, %v3076
      %v3082 = vrot.slane %v3081, 4
      %v3084 = vshll.u32 %v2724, 16
      %v3086 = vrot.slane %v3084, 5
      %v3087 = vsel %vm825, %v3082, %v3086
      %v3089 = vshrl.u32 %v2725, 16
      %v3091 = vrot.slane %v3089, 4
      %v3092 = vshll.u32 %v2725, 16
      %v3094 = vrot.slane %v3092, 5
      %v3095 = vor.u32 %v3091, %v3094
      %v3096 = vrot.slane %v3095, 4
      %v3098 = vshll.u32 %v2726, 16
      %v3100 = vrot.slane %v3098, 5
      %v3101 = vsel %vm825, %v3096, %v3100
      %v3102 = vshrl.u32 %v2726, 16
      %v3104 = vrot.slane %v3102, 4
      %v3105 = vor.u32 %v3104, %v3100
      %v3106 = vrot.slane %v3105, 4
      %v3108 = vshll.u32 %v2727, 16
      %v3110 = vrot.slane %v3108, 5
      %v3111 = vsel %vm825, %v3106, %v3110
      %s3112 = scalar_lea.vmem %s1, 256
      %v3113 = vld [vmem:[%s3112] sm:$0xf]
      %v3114 = vld [vmem:[%s3112 + $0x4] sm:$0xf]
      %v3115 = vld [vmem:[%s3112 + $0x8] sm:$0xf]
      %v3116 = vld [vmem:[%s3112 + $0xc] sm:$0xf]
      %v3117 = vld [vmem:[%s3112 + $0x10] sm:$0xf]
      %v3118 = vld [vmem:[%s3112 + $0x14] sm:$0xf]
      %v3119 = vld [vmem:[%s3112 + $0x18] sm:$0xf]
      %v3120 = vld [vmem:[%s3112 + $0x1c] sm:$0xf]
      %v3121 = vld [vmem:[%s3112 + $0x20] sm:$0xf]
      %v3122 = vld [vmem:[%s3112 + $0x24] sm:$0xf]
      %v3123 = vld [vmem:[%s3112 + $0x28] sm:$0xf]
      %v3124 = vld [vmem:[%s3112 + $0x2c] sm:$0xf]
      %v3125 = vld [vmem:[%s3112 + $0x30] sm:$0xf]
      %v3126 = vld [vmem:[%s3112 + $0x34] sm:$0xf]
      %v3127 = vld [vmem:[%s3112 + $0x38] sm:$0xf]
      %v3128 = vld [vmem:[%s3112 + $0x3c] sm:$0xf]
      %v3129 = vunpack.c.l.b16 %v2741
      %v3130 = vunpack.c.l.b16 %v2751
      %v3131 = vunpack.c.l.b16 %v2765
      %v3132 = vunpack.c.l.b16 %v2775
      %v3133 = vunpack.c.l.b16 %v2789
      %v3134 = vunpack.c.l.b16 %v2799
      %v3135 = vunpack.c.l.b16 %v2813
      %v3136 = vunpack.c.l.b16 %v2823
      %v3137 = vunpack.c.l.b16 %v2837
      %v3138 = vunpack.c.l.b16 %v2847
      %v3139 = vunpack.c.l.b16 %v2861
      %v3140 = vunpack.c.l.b16 %v2871
      %v3141 = vunpack.c.l.b16 %v2885
      %v3142 = vunpack.c.l.b16 %v2895
      %v3143 = vunpack.c.l.b16 %v2909
      %v3144 = vunpack.c.l.b16 %v2919
      %v3145 = vunpack.c.l.b16 %v2933
      %v3146 = vunpack.c.l.b16 %v2943
      %v3147 = vunpack.c.l.b16 %v2957
      %v3148 = vunpack.c.l.b16 %v2967
      %v3149 = vunpack.c.l.b16 %v2981
      %v3150 = vunpack.c.l.b16 %v2991
      %v3151 = vunpack.c.l.b16 %v3005
      %v3152 = vunpack.c.l.b16 %v3015
      %v3153 = vunpack.c.l.b16 %v3029
      %v3154 = vunpack.c.l.b16 %v3039
      %v3155 = vunpack.c.l.b16 %v3053
      %v3156 = vunpack.c.l.b16 %v3063
      %v3157 = vunpack.c.l.b16 %v3077
      %v3158 = vunpack.c.l.b16 %v3087
      %v3159 = vunpack.c.l.b16 %v3101
      %v3160 = vunpack.c.l.b16 %v3111
      %v3161 = vpack.c.b16 %v3130, %v3129
      %v3162 = vpack.c.b16 %v3132, %v3131
      %v3163 = vpack.c.b16 %v3134, %v3133
      %v3164 = vpack.c.b16 %v3136, %v3135
      %v3165 = vpack.c.b16 %v3138, %v3137
      %v3166 = vpack.c.b16 %v3140, %v3139
      %v3167 = vpack.c.b16 %v3142, %v3141
      %v3168 = vpack.c.b16 %v3144, %v3143
      %v3169 = vpack.c.b16 %v3146, %v3145
      %v3170 = vpack.c.b16 %v3148, %v3147
      %v3171 = vpack.c.b16 %v3150, %v3149
      %v3172 = vpack.c.b16 %v3152, %v3151
      %v3173 = vpack.c.b16 %v3154, %v3153
      %v3174 = vpack.c.b16 %v3156, %v3155
      %v3175 = vpack.c.b16 %v3158, %v3157
      %v3176 = vpack.c.b16 %v3160, %v3159
      %v3209 = vunpack.c.l.b16 %v3113
      %v3210 = vunpack.c.l.b16 %v3114
      %v3211 = vunpack.c.l.b16 %v3115
      %v3212 = vunpack.c.l.b16 %v3116
      %v3213 = vunpack.c.l.b16 %v3117
      %v3214 = vunpack.c.l.b16 %v3118
      %v3215 = vunpack.c.l.b16 %v3119
      %v3216 = vunpack.c.l.b16 %v3120
      %v3217 = vunpack.c.l.b16 %v3121
      %v3218 = vunpack.c.l.b16 %v3122
      %v3219 = vunpack.c.l.b16 %v3123
      %v3220 = vunpack.c.l.b16 %v3124
      %v3221 = vunpack.c.l.b16 %v3125
      %v3222 = vunpack.c.l.b16 %v3126
      %v3223 = vunpack.c.l.b16 %v3127
      %v3224 = vunpack.c.l.b16 %v3128
      %v3225 = vpack.c.b16 %v3210, %v3209
      %v3226 = vpack.c.b16 %v3212, %v3211
      %v3227 = vpack.c.b16 %v3214, %v3213
      %v3228 = vpack.c.b16 %v3216, %v3215
      %v3229 = vpack.c.b16 %v3218, %v3217
      %v3230 = vpack.c.b16 %v3220, %v3219
      %v3231 = vpack.c.b16 %v3222, %v3221
      %v3232 = vpack.c.b16 %v3224, %v3223
      %3241 = vmatprep.subr.bf16.mxu0 0
      %3242 = vmatpush1.bf16.msra.mxu0 %v3232
      %3243 = vmatprep.subr.bf16.mxu0 0
      %3244 = vmatpush1.bf16.msra.mxu0 %v3231
      %3245 = vmatprep.subr.bf16.mxu0 0
      %3246 = vmatpush1.bf16.msra.mxu0 %v3230
      %3247 = vmatprep.subr.bf16.mxu0 0
      %3248 = vmatpush1.bf16.msra.mxu0 %v3229
      %3249 = vmatprep.subr.bf16.mxu0 0
      %3250 = vmatpush1.bf16.msra.mxu0 %v3228
      %3251 = vmatprep.subr.bf16.mxu0 0
      %3252 = vmatpush1.bf16.msra.mxu0 %v3227
      %3253 = vmatprep.subr.bf16.mxu0 0
      %3254 = vmatpush1.bf16.msra.mxu0 %v3226
      %3255 = vmatprep.subr.bf16.mxu0 0
      %3256 = vmatpush1.bf16.msra.mxu0 %v3225
      %3257 = vmatprep.subr.bf16.mxu0 0
      %3258 = vmatpush2.bf16.msra.mxu0 0
      %3259 = vmatprep.subr.bf16.mxu0 0
      %3260 = vmatpush2.bf16.msra.mxu0 0
      %3261 = vmatprep.subr.bf16.mxu0 0
      %3262 = vmatpush2.bf16.msra.mxu0 0
      %3263 = vmatprep.subr.bf16.mxu0 0
      %3264 = vmatpush2.bf16.msra.mxu0 0
      %3265 = vmatprep.subr.bf16.mxu0 0
      %3266 = vmatpush2.bf16.msra.mxu0 0
      %3267 = vmatprep.subr.bf16.mxu0 0
      %3268 = vmatpush2.bf16.msra.mxu0 0
      %3269 = vmatprep.subr.bf16.mxu0 0
      %3270 = vmatpush2.bf16.msra.mxu0 0
      %3271 = vmatprep.subr.bf16.mxu0 0
      %3272 = vmatpush2.bf16.msra.mxu0 0
      %3273 = vmatprep.mubr.bf16.mxu0 0
      %3274 = vmatmul.mubr.bf16.gmra.mxu0 %v3161
      %v3275 = vpop.f32.mrf.mxu0
      %v3276 = vadd.f32 0.0, %v3275
      %v3277 = vpop.f32.mrf.mxu0
      %v3278 = vpop.f32.mrf.mxu0
      %v3279 = vadd.f32 0.0, %v3278
      %v3280 = vpop.f32.mrf.mxu0
      %3281 = vmatprep.mubr.bf16.mxu0 0
      %3282 = vmatmul.mubr.bf16.gmra.mxu0 %v3162
      %v3283 = vpop.f32.mrf.mxu0
      %v3284 = vadd.f32 0.0, %v3283
      %v3285 = vpop.f32.mrf.mxu0
      %v3286 = vpop.f32.mrf.mxu0
      %v3287 = vadd.f32 0.0, %v3286
      %v3288 = vpop.f32.mrf.mxu0
      %3289 = vmatprep.mubr.bf16.mxu0 0
      %3290 = vmatmul.mubr.bf16.gmra.mxu0 %v3163
      %v3291 = vpop.f32.mrf.mxu0
      %v3292 = vadd.f32 0.0, %v3291
      %v3293 = vpop.f32.mrf.mxu0
      %v3294 = vpop.f32.mrf.mxu0
      %v3295 = vadd.f32 0.0, %v3294
      %v3296 = vpop.f32.mrf.mxu0
      %3297 = vmatprep.mubr.bf16.mxu0 0
      %3298 = vmatmul.mubr.bf16.gmra.mxu0 %v3164
      %v3299 = vpop.f32.mrf.mxu0
      %v3300 = vadd.f32 0.0, %v3299
      %v3301 = vpop.f32.mrf.mxu0
      %v3302 = vpop.f32.mrf.mxu0
      %v3303 = vadd.f32 0.0, %v3302
      %v3304 = vpop.f32.mrf.mxu0
      %3305 = vmatprep.mubr.bf16.mxu0 0
      %3306 = vmatmul.mubr.bf16.gmra.mxu0 %v3165
      %v3307 = vpop.f32.mrf.mxu0
      %v3308 = vadd.f32 0.0, %v3307
      %v3309 = vpop.f32.mrf.mxu0
      %v3310 = vpop.f32.mrf.mxu0
      %v3311 = vadd.f32 0.0, %v3310
      %v3312 = vpop.f32.mrf.mxu0
      %3313 = vmatprep.mubr.bf16.mxu0 0
      %3314 = vmatmul.mubr.bf16.gmra.mxu0 %v3166
      %v3315 = vpop.f32.mrf.mxu0
      %v3316 = vadd.f32 0.0, %v3315
      %v3317 = vpop.f32.mrf.mxu0
      %v3318 = vpop.f32.mrf.mxu0
      %v3319 = vadd.f32 0.0, %v3318
      %v3320 = vpop.f32.mrf.mxu0
      %3321 = vmatprep.mubr.bf16.mxu0 0
      %3322 = vmatmul.mubr.bf16.gmra.mxu0 %v3167
      %v3323 = vpop.f32.mrf.mxu0
      %v3324 = vadd.f32 0.0, %v3323
      %v3325 = vpop.f32.mrf.mxu0
      %v3326 = vpop.f32.mrf.mxu0
      %v3327 = vadd.f32 0.0, %v3326
      %v3328 = vpop.f32.mrf.mxu0
      %3329 = vmatprep.mubr.bf16.mxu0 0
      %3330 = vmatmul.mubr.bf16.gmra.mxu0 %v3168
      %v3331 = vpop.f32.mrf.mxu0
      %v3332 = vadd.f32 0.0, %v3331
      %v3333 = vpop.f32.mrf.mxu0
      %v3334 = vpop.f32.mrf.mxu0
      %v3335 = vadd.f32 0.0, %v3334
      %v3336 = vpop.f32.mrf.mxu0
      %3337 = vmatprep.mubr.bf16.mxu0 0
      %3338 = vmatmul.mubr.bf16.gmra.mxu0 %v3169
      %v3339 = vpop.f32.mrf.mxu0
      %v3340 = vadd.f32 0.0, %v3339
      %v3341 = vpop.f32.mrf.mxu0
      %v3342 = vpop.f32.mrf.mxu0
      %v3343 = vadd.f32 0.0, %v3342
      %v3344 = vpop.f32.mrf.mxu0
      %3345 = vmatprep.mubr.bf16.mxu0 0
      %3346 = vmatmul.mubr.bf16.gmra.mxu0 %v3170
      %v3347 = vpop.f32.mrf.mxu0
      %v3348 = vadd.f32 0.0, %v3347
      %v3349 = vpop.f32.mrf.mxu0
      %v3350 = vpop.f32.mrf.mxu0
      %v3351 = vadd.f32 0.0, %v3350
      %v3352 = vpop.f32.mrf.mxu0
      %3353 = vmatprep.mubr.bf16.mxu0 0
      %3354 = vmatmul.mubr.bf16.gmra.mxu0 %v3171
      %v3355 = vpop.f32.mrf.mxu0
      %v3356 = vadd.f32 0.0, %v3355
      %v3357 = vpop.f32.mrf.mxu0
      %v3358 = vpop.f32.mrf.mxu0
      %v3359 = vadd.f32 0.0, %v3358
      %v3360 = vpop.f32.mrf.mxu0
      %3361 = vmatprep.mubr.bf16.mxu0 0
      %3362 = vmatmul.mubr.bf16.gmra.mxu0 %v3172
      %v3363 = vpop.f32.mrf.mxu0
      %v3364 = vadd.f32 0.0, %v3363
      %v3365 = vpop.f32.mrf.mxu0
      %v3366 = vpop.f32.mrf.mxu0
      %v3367 = vadd.f32 0.0, %v3366
      %v3368 = vpop.f32.mrf.mxu0
      %3369 = vmatprep.mubr.bf16.mxu0 0
      %3370 = vmatmul.mubr.bf16.gmra.mxu0 %v3173
      %v3371 = vpop.f32.mrf.mxu0
      %v3372 = vadd.f32 0.0, %v3371
      %v3373 = vpop.f32.mrf.mxu0
      %v3374 = vpop.f32.mrf.mxu0
      %v3375 = vadd.f32 0.0, %v3374
      %v3376 = vpop.f32.mrf.mxu0
      %3377 = vmatprep.mubr.bf16.mxu0 0
      %3378 = vmatmul.mubr.bf16.gmra.mxu0 %v3174
      %v3379 = vpop.f32.mrf.mxu0
      %v3380 = vadd.f32 0.0, %v3379
      %v3381 = vpop.f32.mrf.mxu0
      %v3382 = vpop.f32.mrf.mxu0
      %v3383 = vadd.f32 0.0, %v3382
      %v3384 = vpop.f32.mrf.mxu0
      %3385 = vmatprep.mubr.bf16.mxu0 0
      %3386 = vmatmul.mubr.bf16.gmra.mxu0 %v3175
      %v3387 = vpop.f32.mrf.mxu0
      %v3388 = vadd.f32 0.0, %v3387
      %v3389 = vpop.f32.mrf.mxu0
      %v3390 = vpop.f32.mrf.mxu0
      %v3391 = vadd.f32 0.0, %v3390
      %v3392 = vpop.f32.mrf.mxu0
      %3393 = vmatprep.mubr.bf16.mxu0 0
      %3394 = vmatmul.mubr.bf16.gmra.mxu0 %v3176
      %v3395 = vpop.f32.mrf.mxu0
      %v3396 = vadd.f32 0.0, %v3395
      %v3397 = vpop.f32.mrf.mxu0
      %v3398 = vpop.f32.mrf.mxu0
      %v3399 = vadd.f32 0.0, %v3398
      %v3400 = vpop.f32.mrf.mxu0
      %3401 = vdwg.mxu0
      %v3402 = vadd.f32 %v2648, %v3276
      %v3403 = vadd.f32 %v2649, %v3279
      %v3404 = vadd.f32 %v2650, %v3284
      %v3405 = vadd.f32 %v2651, %v3287
      %v3406 = vadd.f32 %v2652, %v3292
      %v3407 = vadd.f32 %v2653, %v3295
      %v3408 = vadd.f32 %v2654, %v3300
      %v3409 = vadd.f32 %v2655, %v3303
      %v3410 = vadd.f32 %v2656, %v3308
      %v3411 = vadd.f32 %v2657, %v3311
      %v3412 = vadd.f32 %v2658, %v3316
      %v3413 = vadd.f32 %v2659, %v3319
      %v3414 = vadd.f32 %v2660, %v3324
      %v3415 = vadd.f32 %v2661, %v3327
      %v3416 = vadd.f32 %v2662, %v3332
      %v3417 = vadd.f32 %v2663, %v3335
      %v3418 = vadd.f32 %v2664, %v3340
      %v3419 = vadd.f32 %v2665, %v3343
      %v3420 = vadd.f32 %v2666, %v3348
      %v3421 = vadd.f32 %v2667, %v3351
      %v3422 = vadd.f32 %v2668, %v3356
      %v3423 = vadd.f32 %v2669, %v3359
      %v3424 = vadd.f32 %v2670, %v3364
      %v3425 = vadd.f32 %v2671, %v3367
      %v3426 = vadd.f32 %v2672, %v3372
      %v3427 = vadd.f32 %v2673, %v3375
      %v3428 = vadd.f32 %v2674, %v3380
      %v3429 = vadd.f32 %v2675, %v3383
      %v3430 = vadd.f32 %v2676, %v3388
      %v3431 = vadd.f32 %v2677, %v3391
      %v3432 = vadd.f32 %v2678, %v3396
      %v3433 = vadd.f32 %v2679, %v3399
      %v3434 = vld [vmem:[%s2293] sm:$0xe]
      %v3435 = vld [vmem:[%s2293 + $0xc] sm:$0xe]
      %v3436 = vld [vmem:[%s2293 + $0x18] sm:$0xe]
      %v3437 = vld [vmem:[%s2293 + $0x24] sm:$0xe]
      %v3438 = vld [vmem:[%s2293 + $0x30] sm:$0xe]
      %v3439 = vld [vmem:[%s2293 + $0x3c] sm:$0xe]
      %v3440 = vld [vmem:[%s2293 + $0x48] sm:$0xe]
      %v3441 = vld [vmem:[%s2293 + $0x54] sm:$0xe]
      %v3442 = vld [vmem:[%s2293 + $0x60] sm:$0xe]
      %v3443 = vld [vmem:[%s2293 + $0x6c] sm:$0xe]
      %v3444 = vld [vmem:[%s2293 + $0x78] sm:$0xe]
      %v3445 = vld [vmem:[%s2293 + $0x84] sm:$0xe]
      %v3446 = vld [vmem:[%s2293 + $0x90] sm:$0xe]
      %v3447 = vld [vmem:[%s2293 + $0x9c] sm:$0xe]
      %v3448 = vld [vmem:[%s2293 + $0xa8] sm:$0xe]
      %v3449 = vld [vmem:[%s2293 + $0xb4] sm:$0xe]
      %v3498 = vrot.slane %v3434, 5
      %v3499 = vrot.slane %v3498, 4
      %v3500 = vrot.slane %v2681, 5
      %v3501 = vsel %vm1855, %v3499, %v3500
      %v3502 = vrot.slane %v3500, 4
      %v3503 = vrot.slane %v2682, 5
      %v3504 = vsel %vm1855, %v3502, %v3503
      %v3505 = vrot.slane %v3435, 5
      %v3506 = vrot.slane %v3505, 4
      %v3507 = vrot.slane %v2684, 5
      %v3508 = vsel %vm1855, %v3506, %v3507
      %v3509 = vrot.slane %v3507, 4
      %v3510 = vrot.slane %v2685, 5
      %v3511 = vsel %vm1855, %v3509, %v3510
      %v3512 = vrot.slane %v3436, 5
      %v3513 = vrot.slane %v3512, 4
      %v3514 = vrot.slane %v2687, 5
      %v3515 = vsel %vm1855, %v3513, %v3514
      %v3516 = vrot.slane %v3514, 4
      %v3517 = vrot.slane %v2688, 5
      %v3518 = vsel %vm1855, %v3516, %v3517
      %v3519 = vrot.slane %v3437, 5
      %v3520 = vrot.slane %v3519, 4
      %v3521 = vrot.slane %v2690, 5
      %v3522 = vsel %vm1855, %v3520, %v3521
      %v3523 = vrot.slane %v3521, 4
      %v3524 = vrot.slane %v2691, 5
      %v3525 = vsel %vm1855, %v3523, %v3524
      %v3526 = vrot.slane %v3438, 5
      %v3527 = vrot.slane %v3526, 4
      %v3528 = vrot.slane %v2693, 5
      %v3529 = vsel %vm1855, %v3527, %v3528
      %v3530 = vrot.slane %v3528, 4
      %v3531 = vrot.slane %v2694, 5
      %v3532 = vsel %vm1855, %v3530, %v3531
      %v3533 = vrot.slane %v3439, 5
      %v3534 = vrot.slane %v3533, 4
      %v3535 = vrot.slane %v2696, 5
      %v3536 = vsel %vm1855, %v3534, %v3535
      %v3537 = vrot.slane %v3535, 4
      %v3538 = vrot.slane %v2697, 5
      %v3539 = vsel %vm1855, %v3537, %v3538
      %v3540 = vrot.slane %v3440, 5
      %v3541 = vrot.slane %v3540, 4
      %v3542 = vrot.slane %v2699, 5
      %v3543 = vsel %vm1855, %v3541, %v3542
      %v3544 = vrot.slane %v3542, 4
      %v3545 = vrot.slane %v2700, 5
      %v3546 = vsel %vm1855, %v3544, %v3545
      %v3547 = vrot.slane %v3441, 5
      %v3548 = vrot.slane %v3547, 4
      %v3549 = vrot.slane %v2702, 5
      %v3550 = vsel %vm1855, %v3548, %v3549
      %v3551 = vrot.slane %v3549, 4
      %v3552 = vrot.slane %v2703, 5
      %v3553 = vsel %vm1855, %v3551, %v3552
      %v3554 = vrot.slane %v3442, 5
      %v3555 = vrot.slane %v3554, 4
      %v3556 = vrot.slane %v2705, 5
      %v3557 = vsel %vm1855, %v3555, %v3556
      %v3558 = vrot.slane %v3556, 4
      %v3559 = vrot.slane %v2706, 5
      %v3560 = vsel %vm1855, %v3558, %v3559
      %v3561 = vrot.slane %v3443, 5
      %v3562 = vrot.slane %v3561, 4
      %v3563 = vrot.slane %v2708, 5
      %v3564 = vsel %vm1855, %v3562, %v3563
      %v3565 = vrot.slane %v3563, 4
      %v3566 = vrot.slane %v2709, 5
      %v3567 = vsel %vm1855, %v3565, %v3566
      %v3568 = vrot.slane %v3444, 5
      %v3569 = vrot.slane %v3568, 4
      %v3570 = vrot.slane %v2711, 5
      %v3571 = vsel %vm1855, %v3569, %v3570
      %v3572 = vrot.slane %v3570, 4
      %v3573 = vrot.slane %v2712, 5
      %v3574 = vsel %vm1855, %v3572, %v3573
      %v3575 = vrot.slane %v3445, 5
      %v3576 = vrot.slane %v3575, 4
      %v3577 = vrot.slane %v2714, 5
      %v3578 = vsel %vm1855, %v3576, %v3577
      %v3579 = vrot.slane %v3577, 4
      %v3580 = vrot.slane %v2715, 5
      %v3581 = vsel %vm1855, %v3579, %v3580
      %v3582 = vrot.slane %v3446, 5
      %v3583 = vrot.slane %v3582, 4
      %v3584 = vrot.slane %v2717, 5
      %v3585 = vsel %vm1855, %v3583, %v3584
      %v3586 = vrot.slane %v3584, 4
      %v3587 = vrot.slane %v2718, 5
      %v3588 = vsel %vm1855, %v3586, %v3587
      %v3589 = vrot.slane %v3447, 5
      %v3590 = vrot.slane %v3589, 4
      %v3591 = vrot.slane %v2720, 5
      %v3592 = vsel %vm1855, %v3590, %v3591
      %v3593 = vrot.slane %v3591, 4
      %v3594 = vrot.slane %v2721, 5
      %v3595 = vsel %vm1855, %v3593, %v3594
      %v3596 = vrot.slane %v3448, 5
      %v3597 = vrot.slane %v3596, 4
      %v3598 = vrot.slane %v2723, 5
      %v3599 = vsel %vm1855, %v3597, %v3598
      %v3600 = vrot.slane %v3598, 4
      %v3601 = vrot.slane %v2724, 5
      %v3602 = vsel %vm1855, %v3600, %v3601
      %v3603 = vrot.slane %v3449, 5
      %v3604 = vrot.slane %v3603, 4
      %v3605 = vrot.slane %v2726, 5
      %v3606 = vsel %vm1855, %v3604, %v3605
      %v3607 = vrot.slane %v3605, 4
      %v3608 = vrot.slane %v2727, 5
      %v3609 = vsel %vm1855, %v3607, %v3608
      %s3610 = scalar_lea.vmem %s1, 320
      %v3611 = vld [vmem:[%s3610] sm:$0xf]
      %v3612 = vld [vmem:[%s3610 + $0x4] sm:$0xf]
      %v3613 = vld [vmem:[%s3610 + $0x8] sm:$0xf]
      %v3614 = vld [vmem:[%s3610 + $0xc] sm:$0xf]
      %v3615 = vld [vmem:[%s3610 + $0x10] sm:$0xf]
      %v3616 = vld [vmem:[%s3610 + $0x14] sm:$0xf]
      %v3617 = vld [vmem:[%s3610 + $0x18] sm:$0xf]
      %v3618 = vld [vmem:[%s3610 + $0x1c] sm:$0xf]
      %v3619 = vld [vmem:[%s3610 + $0x20] sm:$0xf]
      %v3620 = vld [vmem:[%s3610 + $0x24] sm:$0xf]
      %v3621 = vld [vmem:[%s3610 + $0x28] sm:$0xf]
      %v3622 = vld [vmem:[%s3610 + $0x2c] sm:$0xf]
      %v3623 = vld [vmem:[%s3610 + $0x30] sm:$0xf]
      %v3624 = vld [vmem:[%s3610 + $0x34] sm:$0xf]
      %v3625 = vld [vmem:[%s3610 + $0x38] sm:$0xf]
      %v3626 = vld [vmem:[%s3610 + $0x3c] sm:$0xf]
      %v3627 = vunpack.c.l.b16 %v3501
      %v3628 = vunpack.c.l.b16 %v3504
      %v3629 = vunpack.c.l.b16 %v3508
      %v3630 = vunpack.c.l.b16 %v3511
      %v3631 = vunpack.c.l.b16 %v3515
      %v3632 = vunpack.c.l.b16 %v3518
      %v3633 = vunpack.c.l.b16 %v3522
      %v3634 = vunpack.c.l.b16 %v3525
      %v3635 = vunpack.c.l.b16 %v3529
      %v3636 = vunpack.c.l.b16 %v3532
      %v3637 = vunpack.c.l.b16 %v3536
      %v3638 = vunpack.c.l.b16 %v3539
      %v3639 = vunpack.c.l.b16 %v3543
      %v3640 = vunpack.c.l.b16 %v3546
      %v3641 = vunpack.c.l.b16 %v3550
      %v3642 = vunpack.c.l.b16 %v3553
      %v3643 = vunpack.c.l.b16 %v3557
      %v3644 = vunpack.c.l.b16 %v3560
      %v3645 = vunpack.c.l.b16 %v3564
      %v3646 = vunpack.c.l.b16 %v3567
      %v3647 = vunpack.c.l.b16 %v3571
      %v3648 = vunpack.c.l.b16 %v3574
      %v3649 = vunpack.c.l.b16 %v3578
      %v3650 = vunpack.c.l.b16 %v3581
      %v3651 = vunpack.c.l.b16 %v3585
      %v3652 = vunpack.c.l.b16 %v3588
      %v3653 = vunpack.c.l.b16 %v3592
      %v3654 = vunpack.c.l.b16 %v3595
      %v3655 = vunpack.c.l.b16 %v3599
      %v3656 = vunpack.c.l.b16 %v3602
      %v3657 = vunpack.c.l.b16 %v3606
      %v3658 = vunpack.c.l.b16 %v3609
      %v3659 = vpack.c.b16 %v3628, %v3627
      %v3660 = vpack.c.b16 %v3630, %v3629
      %v3661 = vpack.c.b16 %v3632, %v3631
      %v3662 = vpack.c.b16 %v3634, %v3633
      %v3663 = vpack.c.b16 %v3636, %v3635
      %v3664 = vpack.c.b16 %v3638, %v3637
      %v3665 = vpack.c.b16 %v3640, %v3639
      %v3666 = vpack.c.b16 %v3642, %v3641
      %v3667 = vpack.c.b16 %v3644, %v3643
      %v3668 = vpack.c.b16 %v3646, %v3645
      %v3669 = vpack.c.b16 %v3648, %v3647
      %v3670 = vpack.c.b16 %v3650, %v3649
      %v3671 = vpack.c.b16 %v3652, %v3651
      %v3672 = vpack.c.b16 %v3654, %v3653
      %v3673 = vpack.c.b16 %v3656, %v3655
      %v3674 = vpack.c.b16 %v3658, %v3657
      %v3707 = vunpack.c.l.b16 %v3611
      %v3708 = vunpack.c.l.b16 %v3612
      %v3709 = vunpack.c.l.b16 %v3613
      %v3710 = vunpack.c.l.b16 %v3614
      %v3711 = vunpack.c.l.b16 %v3615
      %v3712 = vunpack.c.l.b16 %v3616
      %v3713 = vunpack.c.l.b16 %v3617
      %v3714 = vunpack.c.l.b16 %v3618
      %v3715 = vunpack.c.l.b16 %v3619
      %v3716 = vunpack.c.l.b16 %v3620
      %v3717 = vunpack.c.l.b16 %v3621
      %v3718 = vunpack.c.l.b16 %v3622
      %v3719 = vunpack.c.l.b16 %v3623
      %v3720 = vunpack.c.l.b16 %v3624
      %v3721 = vunpack.c.l.b16 %v3625
      %v3722 = vunpack.c.l.b16 %v3626
      %v3723 = vpack.c.b16 %v3708, %v3707
      %v3724 = vpack.c.b16 %v3710, %v3709
      %v3725 = vpack.c.b16 %v3712, %v3711
      %v3726 = vpack.c.b16 %v3714, %v3713
      %v3727 = vpack.c.b16 %v3716, %v3715
      %v3728 = vpack.c.b16 %v3718, %v3717
      %v3729 = vpack.c.b16 %v3720, %v3719
      %v3730 = vpack.c.b16 %v3722, %v3721
      %3739 = vmatprep.subr.bf16.mxu0 0
      %3740 = vmatpush1.bf16.msra.mxu0 %v3730
      %3741 = vmatprep.subr.bf16.mxu0 0
      %3742 = vmatpush1.bf16.msra.mxu0 %v3729
      %3743 = vmatprep.subr.bf16.mxu0 0
      %3744 = vmatpush1.bf16.msra.mxu0 %v3728
      %3745 = vmatprep.subr.bf16.mxu0 0
      %3746 = vmatpush1.bf16.msra.mxu0 %v3727
      %3747 = vmatprep.subr.bf16.mxu0 0
      %3748 = vmatpush1.bf16.msra.mxu0 %v3726
      %3749 = vmatprep.subr.bf16.mxu0 0
      %3750 = vmatpush1.bf16.msra.mxu0 %v3725
      %3751 = vmatprep.subr.bf16.mxu0 0
      %3752 = vmatpush1.bf16.msra.mxu0 %v3724
      %3753 = vmatprep.subr.bf16.mxu0 0
      %3754 = vmatpush1.bf16.msra.mxu0 %v3723
      %3755 = vmatprep.subr.bf16.mxu0 0
      %3756 = vmatpush2.bf16.msra.mxu0 0
      %3757 = vmatprep.subr.bf16.mxu0 0
      %3758 = vmatpush2.bf16.msra.mxu0 0
      %3759 = vmatprep.subr.bf16.mxu0 0
      %3760 = vmatpush2.bf16.msra.mxu0 0
      %3761 = vmatprep.subr.bf16.mxu0 0
      %3762 = vmatpush2.bf16.msra.mxu0 0
      %3763 = vmatprep.subr.bf16.mxu0 0
      %3764 = vmatpush2.bf16.msra.mxu0 0
      %3765 = vmatprep.subr.bf16.mxu0 0
      %3766 = vmatpush2.bf16.msra.mxu0 0
      %3767 = vmatprep.subr.bf16.mxu0 0
      %3768 = vmatpush2.bf16.msra.mxu0 0
      %3769 = vmatprep.subr.bf16.mxu0 0
      %3770 = vmatpush2.bf16.msra.mxu0 0
      %3771 = vmatprep.mubr.bf16.mxu0 0
      %3772 = vmatmul.mubr.bf16.gmra.mxu0 %v3659
      %v3773 = vpop.f32.mrf.mxu0
      %v3774 = vadd.f32 0.0, %v3773
      %v3775 = vpop.f32.mrf.mxu0
      %v3776 = vpop.f32.mrf.mxu0
      %v3777 = vadd.f32 0.0, %v3776
      %v3778 = vpop.f32.mrf.mxu0
      %3779 = vmatprep.mubr.bf16.mxu0 0
      %3780 = vmatmul.mubr.bf16.gmra.mxu0 %v3660
      %v3781 = vpop.f32.mrf.mxu0
      %v3782 = vadd.f32 0.0, %v3781
      %v3783 = vpop.f32.mrf.mxu0
      %v3784 = vpop.f32.mrf.mxu0
      %v3785 = vadd.f32 0.0, %v3784
      %v3786 = vpop.f32.mrf.mxu0
      %3787 = vmatprep.mubr.bf16.mxu0 0
      %3788 = vmatmul.mubr.bf16.gmra.mxu0 %v3661
      %v3789 = vpop.f32.mrf.mxu0
      %v3790 = vadd.f32 0.0, %v3789
      %v3791 = vpop.f32.mrf.mxu0
      %v3792 = vpop.f32.mrf.mxu0
      %v3793 = vadd.f32 0.0, %v3792
      %v3794 = vpop.f32.mrf.mxu0
      %3795 = vmatprep.mubr.bf16.mxu0 0
      %3796 = vmatmul.mubr.bf16.gmra.mxu0 %v3662
      %v3797 = vpop.f32.mrf.mxu0
      %v3798 = vadd.f32 0.0, %v3797
      %v3799 = vpop.f32.mrf.mxu0
      %v3800 = vpop.f32.mrf.mxu0
      %v3801 = vadd.f32 0.0, %v3800
      %v3802 = vpop.f32.mrf.mxu0
      %3803 = vmatprep.mubr.bf16.mxu0 0
      %3804 = vmatmul.mubr.bf16.gmra.mxu0 %v3663
      %v3805 = vpop.f32.mrf.mxu0
      %v3806 = vadd.f32 0.0, %v3805
      %v3807 = vpop.f32.mrf.mxu0
      %v3808 = vpop.f32.mrf.mxu0
      %v3809 = vadd.f32 0.0, %v3808
      %v3810 = vpop.f32.mrf.mxu0
      %3811 = vmatprep.mubr.bf16.mxu0 0
      %3812 = vmatmul.mubr.bf16.gmra.mxu0 %v3664
      %v3813 = vpop.f32.mrf.mxu0
      %v3814 = vadd.f32 0.0, %v3813
      %v3815 = vpop.f32.mrf.mxu0
      %v3816 = vpop.f32.mrf.mxu0
      %v3817 = vadd.f32 0.0, %v3816
      %v3818 = vpop.f32.mrf.mxu0
      %3819 = vmatprep.mubr.bf16.mxu0 0
      %3820 = vmatmul.mubr.bf16.gmra.mxu0 %v3665
      %v3821 = vpop.f32.mrf.mxu0
      %v3822 = vadd.f32 0.0, %v3821
      %v3823 = vpop.f32.mrf.mxu0
      %v3824 = vpop.f32.mrf.mxu0
      %v3825 = vadd.f32 0.0, %v3824
      %v3826 = vpop.f32.mrf.mxu0
      %3827 = vmatprep.mubr.bf16.mxu0 0
      %3828 = vmatmul.mubr.bf16.gmra.mxu0 %v3666
      %v3829 = vpop.f32.mrf.mxu0
      %v3830 = vadd.f32 0.0, %v3829
      %v3831 = vpop.f32.mrf.mxu0
      %v3832 = vpop.f32.mrf.mxu0
      %v3833 = vadd.f32 0.0, %v3832
      %v3834 = vpop.f32.mrf.mxu0
      %3835 = vmatprep.mubr.bf16.mxu0 0
      %3836 = vmatmul.mubr.bf16.gmra.mxu0 %v3667
      %v3837 = vpop.f32.mrf.mxu0
      %v3838 = vadd.f32 0.0, %v3837
      %v3839 = vpop.f32.mrf.mxu0
      %v3840 = vpop.f32.mrf.mxu0
      %v3841 = vadd.f32 0.0, %v3840
      %v3842 = vpop.f32.mrf.mxu0
      %3843 = vmatprep.mubr.bf16.mxu0 0
      %3844 = vmatmul.mubr.bf16.gmra.mxu0 %v3668
      %v3845 = vpop.f32.mrf.mxu0
      %v3846 = vadd.f32 0.0, %v3845
      %v3847 = vpop.f32.mrf.mxu0
      %v3848 = vpop.f32.mrf.mxu0
      %v3849 = vadd.f32 0.0, %v3848
      %v3850 = vpop.f32.mrf.mxu0
      %3851 = vmatprep.mubr.bf16.mxu0 0
      %3852 = vmatmul.mubr.bf16.gmra.mxu0 %v3669
      %v3853 = vpop.f32.mrf.mxu0
      %v3854 = vadd.f32 0.0, %v3853
      %v3855 = vpop.f32.mrf.mxu0
      %v3856 = vpop.f32.mrf.mxu0
      %v3857 = vadd.f32 0.0, %v3856
      %v3858 = vpop.f32.mrf.mxu0
      %3859 = vmatprep.mubr.bf16.mxu0 0
      %3860 = vmatmul.mubr.bf16.gmra.mxu0 %v3670
      %v3861 = vpop.f32.mrf.mxu0
      %v3862 = vadd.f32 0.0, %v3861
      %v3863 = vpop.f32.mrf.mxu0
      %v3864 = vpop.f32.mrf.mxu0
      %v3865 = vadd.f32 0.0, %v3864
      %v3866 = vpop.f32.mrf.mxu0
      %3867 = vmatprep.mubr.bf16.mxu0 0
      %3868 = vmatmul.mubr.bf16.gmra.mxu0 %v3671
      %v3869 = vpop.f32.mrf.mxu0
      %v3870 = vadd.f32 0.0, %v3869
      %v3871 = vpop.f32.mrf.mxu0
      %v3872 = vpop.f32.mrf.mxu0
      %v3873 = vadd.f32 0.0, %v3872
      %v3874 = vpop.f32.mrf.mxu0
      %3875 = vmatprep.mubr.bf16.mxu0 0
      %3876 = vmatmul.mubr.bf16.gmra.mxu0 %v3672
      %v3877 = vpop.f32.mrf.mxu0
      %v3878 = vadd.f32 0.0, %v3877
      %v3879 = vpop.f32.mrf.mxu0
      %v3880 = vpop.f32.mrf.mxu0
      %v3881 = vadd.f32 0.0, %v3880
      %v3882 = vpop.f32.mrf.mxu0
      %3883 = vmatprep.mubr.bf16.mxu0 0
      %3884 = vmatmul.mubr.bf16.gmra.mxu0 %v3673
      %v3885 = vpop.f32.mrf.mxu0
      %v3886 = vadd.f32 0.0, %v3885
      %v3887 = vpop.f32.mrf.mxu0
      %v3888 = vpop.f32.mrf.mxu0
      %v3889 = vadd.f32 0.0, %v3888
      %v3890 = vpop.f32.mrf.mxu0
      %3891 = vmatprep.mubr.bf16.mxu0 0
      %3892 = vmatmul.mubr.bf16.gmra.mxu0 %v3674
      %v3893 = vpop.f32.mrf.mxu0
      %v3894 = vadd.f32 0.0, %v3893
      %v3895 = vpop.f32.mrf.mxu0
      %v3896 = vpop.f32.mrf.mxu0
      %v3897 = vadd.f32 0.0, %v3896
      %v3898 = vpop.f32.mrf.mxu0
      %3899 = vdwg.mxu0
      %v3900 = vadd.f32 %v3402, %v3774
      %v3901 = vadd.f32 %v3403, %v3777
      %v3902 = vadd.f32 %v3404, %v3782
      %v3903 = vadd.f32 %v3405, %v3785
      %v3904 = vadd.f32 %v3406, %v3790
      %v3905 = vadd.f32 %v3407, %v3793
      %v3906 = vadd.f32 %v3408, %v3798
      %v3907 = vadd.f32 %v3409, %v3801
      %v3908 = vadd.f32 %v3410, %v3806
      %v3909 = vadd.f32 %v3411, %v3809
      %v3910 = vadd.f32 %v3412, %v3814
      %v3911 = vadd.f32 %v3413, %v3817
      %v3912 = vadd.f32 %v3414, %v3822
      %v3913 = vadd.f32 %v3415, %v3825
      %v3914 = vadd.f32 %v3416, %v3830
      %v3915 = vadd.f32 %v3417, %v3833
      %v3916 = vadd.f32 %v3418, %v3838
      %v3917 = vadd.f32 %v3419, %v3841
      %v3918 = vadd.f32 %v3420, %v3846
      %v3919 = vadd.f32 %v3421, %v3849
      %v3920 = vadd.f32 %v3422, %v3854
      %v3921 = vadd.f32 %v3423, %v3857
      %v3922 = vadd.f32 %v3424, %v3862
      %v3923 = vadd.f32 %v3425, %v3865
      %v3924 = vadd.f32 %v3426, %v3870
      %v3925 = vadd.f32 %v3427, %v3873
      %v3926 = vadd.f32 %v3428, %v3878
      %v3927 = vadd.f32 %v3429, %v3881
      %v3928 = vadd.f32 %v3430, %v3886
      %v3929 = vadd.f32 %v3431, %v3889
      %v3930 = vadd.f32 %v3432, %v3894
      %v3931 = vadd.f32 %v3433, %v3897
      %s3932 = sadd.s32 %s755, 2
      %s3933 = smul.u32 %s3932, 3
      %s3934 = smul.addr %s3933, 4
      %s3935 = scalar_lea.vmem [#allocation2], %s3934
      %v3936 = vld [vmem:[%s3935] sm:$0xf]
      %v3937 = vld [vmem:[%s3935 + $0x4] sm:$0xf]
      %v3938 = vld [vmem:[%s3935 + $0xc] sm:$0xf]
      %v3939 = vld [vmem:[%s3935 + $0x10] sm:$0xf]
      %v3940 = vld [vmem:[%s3935 + $0x18] sm:$0xf]
      %v3941 = vld [vmem:[%s3935 + $0x1c] sm:$0xf]
      %v3942 = vld [vmem:[%s3935 + $0x24] sm:$0xf]
      %v3943 = vld [vmem:[%s3935 + $0x28] sm:$0xf]
      %v3944 = vld [vmem:[%s3935 + $0x30] sm:$0xf]
      %v3945 = vld [vmem:[%s3935 + $0x34] sm:$0xf]
      %v3946 = vld [vmem:[%s3935 + $0x3c] sm:$0xf]
      %v3947 = vld [vmem:[%s3935 + $0x40] sm:$0xf]
      %v3948 = vld [vmem:[%s3935 + $0x48] sm:$0xf]
      %v3949 = vld [vmem:[%s3935 + $0x4c] sm:$0xf]
      %v3950 = vld [vmem:[%s3935 + $0x54] sm:$0xf]
      %v3951 = vld [vmem:[%s3935 + $0x58] sm:$0xf]
      %v3952 = vld [vmem:[%s3935 + $0x60] sm:$0xf]
      %v3953 = vld [vmem:[%s3935 + $0x64] sm:$0xf]
      %v3954 = vld [vmem:[%s3935 + $0x6c] sm:$0xf]
      %v3955 = vld [vmem:[%s3935 + $0x70] sm:$0xf]
      %v3956 = vld [vmem:[%s3935 + $0x78] sm:$0xf]
      %v3957 = vld [vmem:[%s3935 + $0x7c] sm:$0xf]
      %v3958 = vld [vmem:[%s3935 + $0x84] sm:$0xf]
      %v3959 = vld [vmem:[%s3935 + $0x88] sm:$0xf]
      %v3960 = vld [vmem:[%s3935 + $0x90] sm:$0xf]
      %v3961 = vld [vmem:[%s3935 + $0x94] sm:$0xf]
      %v3962 = vld [vmem:[%s3935 + $0x9c] sm:$0xf]
      %v3963 = vld [vmem:[%s3935 + $0xa0] sm:$0xf]
      %v3964 = vld [vmem:[%s3935 + $0xa8] sm:$0xf]
      %v3965 = vld [vmem:[%s3935 + $0xac] sm:$0xf]
      %v3966 = vld [vmem:[%s3935 + $0xb4] sm:$0xf]
      %v3967 = vld [vmem:[%s3935 + $0xb8] sm:$0xf]
      %s3968 = scalar_lea.vmem %s1, 384
      %v3969 = vld [vmem:[%s3968] sm:$0xf]
      %v3970 = vld [vmem:[%s3968 + $0x4] sm:$0xf]
      %v3971 = vld [vmem:[%s3968 + $0x8] sm:$0xf]
      %v3972 = vld [vmem:[%s3968 + $0xc] sm:$0xf]
      %v3973 = vld [vmem:[%s3968 + $0x10] sm:$0xf]
      %v3974 = vld [vmem:[%s3968 + $0x14] sm:$0xf]
      %v3975 = vld [vmem:[%s3968 + $0x18] sm:$0xf]
      %v3976 = vld [vmem:[%s3968 + $0x1c] sm:$0xf]
      %v3977 = vld [vmem:[%s3968 + $0x20] sm:$0xf]
      %v3978 = vld [vmem:[%s3968 + $0x24] sm:$0xf]
      %v3979 = vld [vmem:[%s3968 + $0x28] sm:$0xf]
      %v3980 = vld [vmem:[%s3968 + $0x2c] sm:$0xf]
      %v3981 = vld [vmem:[%s3968 + $0x30] sm:$0xf]
      %v3982 = vld [vmem:[%s3968 + $0x34] sm:$0xf]
      %v3983 = vld [vmem:[%s3968 + $0x38] sm:$0xf]
      %v3984 = vld [vmem:[%s3968 + $0x3c] sm:$0xf]
      %v4017 = vunpack.c.l.b16 %v3936
      %v4018 = vunpack.c.l.b16 %v3937
      %v4019 = vunpack.c.l.b16 %v3938
      %v4020 = vunpack.c.l.b16 %v3939
      %v4021 = vunpack.c.l.b16 %v3940
      %v4022 = vunpack.c.l.b16 %v3941
      %v4023 = vunpack.c.l.b16 %v3942
      %v4024 = vunpack.c.l.b16 %v3943
      %v4025 = vunpack.c.l.b16 %v3944
      %v4026 = vunpack.c.l.b16 %v3945
      %v4027 = vunpack.c.l.b16 %v3946
      %v4028 = vunpack.c.l.b16 %v3947
      %v4029 = vunpack.c.l.b16 %v3948
      %v4030 = vunpack.c.l.b16 %v3949
      %v4031 = vunpack.c.l.b16 %v3950
      %v4032 = vunpack.c.l.b16 %v3951
      %v4033 = vunpack.c.l.b16 %v3952
      %v4034 = vunpack.c.l.b16 %v3953
      %v4035 = vunpack.c.l.b16 %v3954
      %v4036 = vunpack.c.l.b16 %v3955
      %v4037 = vunpack.c.l.b16 %v3956
      %v4038 = vunpack.c.l.b16 %v3957
      %v4039 = vunpack.c.l.b16 %v3958
      %v4040 = vunpack.c.l.b16 %v3959
      %v4041 = vunpack.c.l.b16 %v3960
      %v4042 = vunpack.c.l.b16 %v3961
      %v4043 = vunpack.c.l.b16 %v3962
      %v4044 = vunpack.c.l.b16 %v3963
      %v4045 = vunpack.c.l.b16 %v3964
      %v4046 = vunpack.c.l.b16 %v3965
      %v4047 = vunpack.c.l.b16 %v3966
      %v4048 = vunpack.c.l.b16 %v3967
      %v4049 = vpack.c.b16 %v4018, %v4017
      %v4050 = vpack.c.b16 %v4020, %v4019
      %v4051 = vpack.c.b16 %v4022, %v4021
      %v4052 = vpack.c.b16 %v4024, %v4023
      %v4053 = vpack.c.b16 %v4026, %v4025
      %v4054 = vpack.c.b16 %v4028, %v4027
      %v4055 = vpack.c.b16 %v4030, %v4029
      %v4056 = vpack.c.b16 %v4032, %v4031
      %v4057 = vpack.c.b16 %v4034, %v4033
      %v4058 = vpack.c.b16 %v4036, %v4035
      %v4059 = vpack.c.b16 %v4038, %v4037
      %v4060 = vpack.c.b16 %v4040, %v4039
      %v4061 = vpack.c.b16 %v4042, %v4041
      %v4062 = vpack.c.b16 %v4044, %v4043
      %v4063 = vpack.c.b16 %v4046, %v4045
      %v4064 = vpack.c.b16 %v4048, %v4047
      %v4097 = vunpack.c.l.b16 %v3969
      %v4098 = vunpack.c.l.b16 %v3970
      %v4099 = vunpack.c.l.b16 %v3971
      %v4100 = vunpack.c.l.b16 %v3972
      %v4101 = vunpack.c.l.b16 %v3973
      %v4102 = vunpack.c.l.b16 %v3974
      %v4103 = vunpack.c.l.b16 %v3975
      %v4104 = vunpack.c.l.b16 %v3976
      %v4105 = vunpack.c.l.b16 %v3977
      %v4106 = vunpack.c.l.b16 %v3978
      %v4107 = vunpack.c.l.b16 %v3979
      %v4108 = vunpack.c.l.b16 %v3980
      %v4109 = vunpack.c.l.b16 %v3981
      %v4110 = vunpack.c.l.b16 %v3982
      %v4111 = vunpack.c.l.b16 %v3983
      %v4112 = vunpack.c.l.b16 %v3984
      %v4113 = vpack.c.b16 %v4098, %v4097
      %v4114 = vpack.c.b16 %v4100, %v4099
      %v4115 = vpack.c.b16 %v4102, %v4101
      %v4116 = vpack.c.b16 %v4104, %v4103
      %v4117 = vpack.c.b16 %v4106, %v4105
      %v4118 = vpack.c.b16 %v4108, %v4107
      %v4119 = vpack.c.b16 %v4110, %v4109
      %v4120 = vpack.c.b16 %v4112, %v4111
      %4129 = vmatprep.subr.bf16.mxu0 0
      %4130 = vmatpush1.bf16.msra.mxu0 %v4120
      %4131 = vmatprep.subr.bf16.mxu0 0
      %4132 = vmatpush1.bf16.msra.mxu0 %v4119
      %4133 = vmatprep.subr.bf16.mxu0 0
      %4134 = vmatpush1.bf16.msra.mxu0 %v4118
      %4135 = vmatprep.subr.bf16.mxu0 0
      %4136 = vmatpush1.bf16.msra.mxu0 %v4117
      %4137 = vmatprep.subr.bf16.mxu0 0
      %4138 = vmatpush1.bf16.msra.mxu0 %v4116
      %4139 = vmatprep.subr.bf16.mxu0 0
      %4140 = vmatpush1.bf16.msra.mxu0 %v4115
      %4141 = vmatprep.subr.bf16.mxu0 0
      %4142 = vmatpush1.bf16.msra.mxu0 %v4114
      %4143 = vmatprep.subr.bf16.mxu0 0
      %4144 = vmatpush1.bf16.msra.mxu0 %v4113
      %4145 = vmatprep.subr.bf16.mxu0 0
      %4146 = vmatpush2.bf16.msra.mxu0 0
      %4147 = vmatprep.subr.bf16.mxu0 0
      %4148 = vmatpush2.bf16.msra.mxu0 0
      %4149 = vmatprep.subr.bf16.mxu0 0
      %4150 = vmatpush2.bf16.msra.mxu0 0
      %4151 = vmatprep.subr.bf16.mxu0 0
      %4152 = vmatpush2.bf16.msra.mxu0 0
      %4153 = vmatprep.subr.bf16.mxu0 0
      %4154 = vmatpush2.bf16.msra.mxu0 0
      %4155 = vmatprep.subr.bf16.mxu0 0
      %4156 = vmatpush2.bf16.msra.mxu0 0
      %4157 = vmatprep.subr.bf16.mxu0 0
      %4158 = vmatpush2.bf16.msra.mxu0 0
      %4159 = vmatprep.subr.bf16.mxu0 0
      %4160 = vmatpush2.bf16.msra.mxu0 0
      %4161 = vmatprep.mubr.bf16.mxu0 0
      %4162 = vmatmul.mubr.bf16.gmra.mxu0 %v4049
      %v4163 = vpop.f32.mrf.mxu0
      %v4164 = vadd.f32 0.0, %v4163
      %v4165 = vpop.f32.mrf.mxu0
      %v4166 = vpop.f32.mrf.mxu0
      %v4167 = vadd.f32 0.0, %v4166
      %v4168 = vpop.f32.mrf.mxu0
      %4169 = vmatprep.mubr.bf16.mxu0 0
      %4170 = vmatmul.mubr.bf16.gmra.mxu0 %v4050
      %v4171 = vpop.f32.mrf.mxu0
      %v4172 = vadd.f32 0.0, %v4171
      %v4173 = vpop.f32.mrf.mxu0
      %v4174 = vpop.f32.mrf.mxu0
      %v4175 = vadd.f32 0.0, %v4174
      %v4176 = vpop.f32.mrf.mxu0
      %4177 = vmatprep.mubr.bf16.mxu0 0
      %4178 = vmatmul.mubr.bf16.gmra.mxu0 %v4051
      %v4179 = vpop.f32.mrf.mxu0
      %v4180 = vadd.f32 0.0, %v4179
      %v4181 = vpop.f32.mrf.mxu0
      %v4182 = vpop.f32.mrf.mxu0
      %v4183 = vadd.f32 0.0, %v4182
      %v4184 = vpop.f32.mrf.mxu0
      %4185 = vmatprep.mubr.bf16.mxu0 0
      %4186 = vmatmul.mubr.bf16.gmra.mxu0 %v4052
      %v4187 = vpop.f32.mrf.mxu0
      %v4188 = vadd.f32 0.0, %v4187
      %v4189 = vpop.f32.mrf.mxu0
      %v4190 = vpop.f32.mrf.mxu0
      %v4191 = vadd.f32 0.0, %v4190
      %v4192 = vpop.f32.mrf.mxu0
      %4193 = vmatprep.mubr.bf16.mxu0 0
      %4194 = vmatmul.mubr.bf16.gmra.mxu0 %v4053
      %v4195 = vpop.f32.mrf.mxu0
      %v4196 = vadd.f32 0.0, %v4195
      %v4197 = vpop.f32.mrf.mxu0
      %v4198 = vpop.f32.mrf.mxu0
      %v4199 = vadd.f32 0.0, %v4198
      %v4200 = vpop.f32.mrf.mxu0
      %4201 = vmatprep.mubr.bf16.mxu0 0
      %4202 = vmatmul.mubr.bf16.gmra.mxu0 %v4054
      %v4203 = vpop.f32.mrf.mxu0
      %v4204 = vadd.f32 0.0, %v4203
      %v4205 = vpop.f32.mrf.mxu0
      %v4206 = vpop.f32.mrf.mxu0
      %v4207 = vadd.f32 0.0, %v4206
      %v4208 = vpop.f32.mrf.mxu0
      %4209 = vmatprep.mubr.bf16.mxu0 0
      %4210 = vmatmul.mubr.bf16.gmra.mxu0 %v4055
      %v4211 = vpop.f32.mrf.mxu0
      %v4212 = vadd.f32 0.0, %v4211
      %v4213 = vpop.f32.mrf.mxu0
      %v4214 = vpop.f32.mrf.mxu0
      %v4215 = vadd.f32 0.0, %v4214
      %v4216 = vpop.f32.mrf.mxu0
      %4217 = vmatprep.mubr.bf16.mxu0 0
      %4218 = vmatmul.mubr.bf16.gmra.mxu0 %v4056
      %v4219 = vpop.f32.mrf.mxu0
      %v4220 = vadd.f32 0.0, %v4219
      %v4221 = vpop.f32.mrf.mxu0
      %v4222 = vpop.f32.mrf.mxu0
      %v4223 = vadd.f32 0.0, %v4222
      %v4224 = vpop.f32.mrf.mxu0
      %4225 = vmatprep.mubr.bf16.mxu0 0
      %4226 = vmatmul.mubr.bf16.gmra.mxu0 %v4057
      %v4227 = vpop.f32.mrf.mxu0
      %v4228 = vadd.f32 0.0, %v4227
      %v4229 = vpop.f32.mrf.mxu0
      %v4230 = vpop.f32.mrf.mxu0
      %v4231 = vadd.f32 0.0, %v4230
      %v4232 = vpop.f32.mrf.mxu0
      %4233 = vmatprep.mubr.bf16.mxu0 0
      %4234 = vmatmul.mubr.bf16.gmra.mxu0 %v4058
      %v4235 = vpop.f32.mrf.mxu0
      %v4236 = vadd.f32 0.0, %v4235
      %v4237 = vpop.f32.mrf.mxu0
      %v4238 = vpop.f32.mrf.mxu0
      %v4239 = vadd.f32 0.0, %v4238
      %v4240 = vpop.f32.mrf.mxu0
      %4241 = vmatprep.mubr.bf16.mxu0 0
      %4242 = vmatmul.mubr.bf16.gmra.mxu0 %v4059
      %v4243 = vpop.f32.mrf.mxu0
      %v4244 = vadd.f32 0.0, %v4243
      %v4245 = vpop.f32.mrf.mxu0
      %v4246 = vpop.f32.mrf.mxu0
      %v4247 = vadd.f32 0.0, %v4246
      %v4248 = vpop.f32.mrf.mxu0
      %4249 = vmatprep.mubr.bf16.mxu0 0
      %4250 = vmatmul.mubr.bf16.gmra.mxu0 %v4060
      %v4251 = vpop.f32.mrf.mxu0
      %v4252 = vadd.f32 0.0, %v4251
      %v4253 = vpop.f32.mrf.mxu0
      %v4254 = vpop.f32.mrf.mxu0
      %v4255 = vadd.f32 0.0, %v4254
      %v4256 = vpop.f32.mrf.mxu0
      %4257 = vmatprep.mubr.bf16.mxu0 0
      %4258 = vmatmul.mubr.bf16.gmra.mxu0 %v4061
      %v4259 = vpop.f32.mrf.mxu0
      %v4260 = vadd.f32 0.0, %v4259
      %v4261 = vpop.f32.mrf.mxu0
      %v4262 = vpop.f32.mrf.mxu0
      %v4263 = vadd.f32 0.0, %v4262
      %v4264 = vpop.f32.mrf.mxu0
      %4265 = vmatprep.mubr.bf16.mxu0 0
      %4266 = vmatmul.mubr.bf16.gmra.mxu0 %v4062
      %v4267 = vpop.f32.mrf.mxu0
      %v4268 = vadd.f32 0.0, %v4267
      %v4269 = vpop.f32.mrf.mxu0
      %v4270 = vpop.f32.mrf.mxu0
      %v4271 = vadd.f32 0.0, %v4270
      %v4272 = vpop.f32.mrf.mxu0
      %4273 = vmatprep.mubr.bf16.mxu0 0
      %4274 = vmatmul.mubr.bf16.gmra.mxu0 %v4063
      %v4275 = vpop.f32.mrf.mxu0
      %v4276 = vadd.f32 0.0, %v4275
      %v4277 = vpop.f32.mrf.mxu0
      %v4278 = vpop.f32.mrf.mxu0
      %v4279 = vadd.f32 0.0, %v4278
      %v4280 = vpop.f32.mrf.mxu0
      %4281 = vmatprep.mubr.bf16.mxu0 0
      %4282 = vmatmul.mubr.bf16.gmra.mxu0 %v4064
      %v4283 = vpop.f32.mrf.mxu0
      %v4284 = vadd.f32 0.0, %v4283
      %v4285 = vpop.f32.mrf.mxu0
      %v4286 = vpop.f32.mrf.mxu0
      %v4287 = vadd.f32 0.0, %v4286
      %v4288 = vpop.f32.mrf.mxu0
      %4289 = vdwg.mxu0
      %v4290 = vadd.f32 %v3900, %v4164
      %v4291 = vadd.f32 %v3901, %v4167
      %v4292 = vadd.f32 %v3902, %v4172
      %v4293 = vadd.f32 %v3903, %v4175
      %v4294 = vadd.f32 %v3904, %v4180
      %v4295 = vadd.f32 %v3905, %v4183
      %v4296 = vadd.f32 %v3906, %v4188
      %v4297 = vadd.f32 %v3907, %v4191
      %v4298 = vadd.f32 %v3908, %v4196
      %v4299 = vadd.f32 %v3909, %v4199
      %v4300 = vadd.f32 %v3910, %v4204
      %v4301 = vadd.f32 %v3911, %v4207
      %v4302 = vadd.f32 %v3912, %v4212
      %v4303 = vadd.f32 %v3913, %v4215
      %v4304 = vadd.f32 %v3914, %v4220
      %v4305 = vadd.f32 %v3915, %v4223
      %v4306 = vadd.f32 %v3916, %v4228
      %v4307 = vadd.f32 %v3917, %v4231
      %v4308 = vadd.f32 %v3918, %v4236
      %v4309 = vadd.f32 %v3919, %v4239
      %v4310 = vadd.f32 %v3920, %v4244
      %v4311 = vadd.f32 %v3921, %v4247
      %v4312 = vadd.f32 %v3922, %v4252
      %v4313 = vadd.f32 %v3923, %v4255
      %v4314 = vadd.f32 %v3924, %v4260
      %v4315 = vadd.f32 %v3925, %v4263
      %v4316 = vadd.f32 %v3926, %v4268
      %v4317 = vadd.f32 %v3927, %v4271
      %v4318 = vadd.f32 %v3928, %v4276
      %v4319 = vadd.f32 %v3929, %v4279
      %v4320 = vadd.f32 %v3930, %v4284
      %v4321 = vadd.f32 %v3931, %v4287
      %v4322 = vld [vmem:[%s3935] sm:$0xf]
      %v4323 = vld [vmem:[%s3935 + $0x4] sm:$0xf]
      %v4324 = vld [vmem:[%s3935 + $0x8] sm:$0x1]
      %v4325 = vld [vmem:[%s3935 + $0xc] sm:$0xf]
      %v4326 = vld [vmem:[%s3935 + $0x10] sm:$0xf]
      %v4327 = vld [vmem:[%s3935 + $0x14] sm:$0x1]
      %v4328 = vld [vmem:[%s3935 + $0x18] sm:$0xf]
      %v4329 = vld [vmem:[%s3935 + $0x1c] sm:$0xf]
      %v4330 = vld [vmem:[%s3935 + $0x20] sm:$0x1]
      %v4331 = vld [vmem:[%s3935 + $0x24] sm:$0xf]
      %v4332 = vld [vmem:[%s3935 + $0x28] sm:$0xf]
      %v4333 = vld [vmem:[%s3935 + $0x2c] sm:$0x1]
      %v4334 = vld [vmem:[%s3935 + $0x30] sm:$0xf]
      %v4335 = vld [vmem:[%s3935 + $0x34] sm:$0xf]
      %v4336 = vld [vmem:[%s3935 + $0x38] sm:$0x1]
      %v4337 = vld [vmem:[%s3935 + $0x3c] sm:$0xf]
      %v4338 = vld [vmem:[%s3935 + $0x40] sm:$0xf]
      %v4339 = vld [vmem:[%s3935 + $0x44] sm:$0x1]
      %v4340 = vld [vmem:[%s3935 + $0x48] sm:$0xf]
      %v4341 = vld [vmem:[%s3935 + $0x4c] sm:$0xf]
      %v4342 = vld [vmem:[%s3935 + $0x50] sm:$0x1]
      %v4343 = vld [vmem:[%s3935 + $0x54] sm:$0xf]
      %v4344 = vld [vmem:[%s3935 + $0x58] sm:$0xf]
      %v4345 = vld [vmem:[%s3935 + $0x5c] sm:$0x1]
      %v4346 = vld [vmem:[%s3935 + $0x60] sm:$0xf]
      %v4347 = vld [vmem:[%s3935 + $0x64] sm:$0xf]
      %v4348 = vld [vmem:[%s3935 + $0x68] sm:$0x1]
      %v4349 = vld [vmem:[%s3935 + $0x6c] sm:$0xf]
      %v4350 = vld [vmem:[%s3935 + $0x70] sm:$0xf]
      %v4351 = vld [vmem:[%s3935 + $0x74] sm:$0x1]
      %v4352 = vld [vmem:[%s3935 + $0x78] sm:$0xf]
      %v4353 = vld [vmem:[%s3935 + $0x7c] sm:$0xf]
      %v4354 = vld [vmem:[%s3935 + $0x80] sm:$0x1]
      %v4355 = vld [vmem:[%s3935 + $0x84] sm:$0xf]
      %v4356 = vld [vmem:[%s3935 + $0x88] sm:$0xf]
      %v4357 = vld [vmem:[%s3935 + $0x8c] sm:$0x1]
      %v4358 = vld [vmem:[%s3935 + $0x90] sm:$0xf]
      %v4359 = vld [vmem:[%s3935 + $0x94] sm:$0xf]
      %v4360 = vld [vmem:[%s3935 + $0x98] sm:$0x1]
      %v4361 = vld [vmem:[%s3935 + $0x9c] sm:$0xf]
      %v4362 = vld [vmem:[%s3935 + $0xa0] sm:$0xf]
      %v4363 = vld [vmem:[%s3935 + $0xa4] sm:$0x1]
      %v4364 = vld [vmem:[%s3935 + $0xa8] sm:$0xf]
      %v4365 = vld [vmem:[%s3935 + $0xac] sm:$0xf]
      %v4366 = vld [vmem:[%s3935 + $0xb0] sm:$0x1]
      %v4367 = vld [vmem:[%s3935 + $0xb4] sm:$0xf]
      %v4368 = vld [vmem:[%s3935 + $0xb8] sm:$0xf]
      %v4369 = vld [vmem:[%s3935 + $0xbc] sm:$0x1]
      %v4371 = vshrl.u32 %v4322, 16
      %v4373 = vrot.slane %v4371, 4
      %v4374 = vshll.u32 %v4322, 16
      %v4376 = vrot.slane %v4374, 5
      %v4377 = vor.u32 %v4373, %v4376
      %v4378 = vrot.slane %v4377, 4
      %v4380 = vshll.u32 %v4323, 16
      %v4382 = vrot.slane %v4380, 5
      %v4383 = vsel %vm825, %v4378, %v4382
      %v4384 = vshrl.u32 %v4323, 16
      %v4386 = vrot.slane %v4384, 4
      %v4387 = vor.u32 %v4386, %v4382
      %v4388 = vrot.slane %v4387, 4
      %v4390 = vshll.u32 %v4324, 16
      %v4392 = vrot.slane %v4390, 5
      %v4393 = vsel %vm825, %v4388, %v4392
      %v4395 = vshrl.u32 %v4325, 16
      %v4397 = vrot.slane %v4395, 4
      %v4398 = vshll.u32 %v4325, 16
      %v4400 = vrot.slane %v4398, 5
      %v4401 = vor.u32 %v4397, %v4400
      %v4402 = vrot.slane %v4401, 4
      %v4404 = vshll.u32 %v4326, 16
      %v4406 = vrot.slane %v4404, 5
      %v4407 = vsel %vm825, %v4402, %v4406
      %v4408 = vshrl.u32 %v4326, 16
      %v4410 = vrot.slane %v4408, 4
      %v4411 = vor.u32 %v4410, %v4406
      %v4412 = vrot.slane %v4411, 4
      %v4414 = vshll.u32 %v4327, 16
      %v4416 = vrot.slane %v4414, 5
      %v4417 = vsel %vm825, %v4412, %v4416
      %v4419 = vshrl.u32 %v4328, 16
      %v4421 = vrot.slane %v4419, 4
      %v4422 = vshll.u32 %v4328, 16
      %v4424 = vrot.slane %v4422, 5
      %v4425 = vor.u32 %v4421, %v4424
      %v4426 = vrot.slane %v4425, 4
      %v4428 = vshll.u32 %v4329, 16
      %v4430 = vrot.slane %v4428, 5
      %v4431 = vsel %vm825, %v4426, %v4430
      %v4432 = vshrl.u32 %v4329, 16
      %v4434 = vrot.slane %v4432, 4
      %v4435 = vor.u32 %v4434, %v4430
      %v4436 = vrot.slane %v4435, 4
      %v4438 = vshll.u32 %v4330, 16
      %v4440 = vrot.slane %v4438, 5
      %v4441 = vsel %vm825, %v4436, %v4440
      %v4443 = vshrl.u32 %v4331, 16
      %v4445 = vrot.slane %v4443, 4
      %v4446 = vshll.u32 %v4331, 16
      %v4448 = vrot.slane %v4446, 5
      %v4449 = vor.u32 %v4445, %v4448
      %v4450 = vrot.slane %v4449, 4
      %v4452 = vshll.u32 %v4332, 16
      %v4454 = vrot.slane %v4452, 5
      %v4455 = vsel %vm825, %v4450, %v4454
      %v4456 = vshrl.u32 %v4332, 16
      %v4458 = vrot.slane %v4456, 4
      %v4459 = vor.u32 %v4458, %v4454
      %v4460 = vrot.slane %v4459, 4
      %v4462 = vshll.u32 %v4333, 16
      %v4464 = vrot.slane %v4462, 5
      %v4465 = vsel %vm825, %v4460, %v4464
      %v4467 = vshrl.u32 %v4334, 16
      %v4469 = vrot.slane %v4467, 4
      %v4470 = vshll.u32 %v4334, 16
      %v4472 = vrot.slane %v4470, 5
      %v4473 = vor.u32 %v4469, %v4472
      %v4474 = vrot.slane %v4473, 4
      %v4476 = vshll.u32 %v4335, 16
      %v4478 = vrot.slane %v4476, 5
      %v4479 = vsel %vm825, %v4474, %v4478
      %v4480 = vshrl.u32 %v4335, 16
      %v4482 = vrot.slane %v4480, 4
      %v4483 = vor.u32 %v4482, %v4478
      %v4484 = vrot.slane %v4483, 4
      %v4486 = vshll.u32 %v4336, 16
      %v4488 = vrot.slane %v4486, 5
      %v4489 = vsel %vm825, %v4484, %v4488
      %v4491 = vshrl.u32 %v4337, 16
      %v4493 = vrot.slane %v4491, 4
      %v4494 = vshll.u32 %v4337, 16
      %v4496 = vrot.slane %v4494, 5
      %v4497 = vor.u32 %v4493, %v4496
      %v4498 = vrot.slane %v4497, 4
      %v4500 = vshll.u32 %v4338, 16
      %v4502 = vrot.slane %v4500, 5
      %v4503 = vsel %vm825, %v4498, %v4502
      %v4504 = vshrl.u32 %v4338, 16
      %v4506 = vrot.slane %v4504, 4
      %v4507 = vor.u32 %v4506, %v4502
      %v4508 = vrot.slane %v4507, 4
      %v4510 = vshll.u32 %v4339, 16
      %v4512 = vrot.slane %v4510, 5
      %v4513 = vsel %vm825, %v4508, %v4512
      %v4515 = vshrl.u32 %v4340, 16
      %v4517 = vrot.slane %v4515, 4
      %v4518 = vshll.u32 %v4340, 16
      %v4520 = vrot.slane %v4518, 5
      %v4521 = vor.u32 %v4517, %v4520
      %v4522 = vrot.slane %v4521, 4
      %v4524 = vshll.u32 %v4341, 16
      %v4526 = vrot.slane %v4524, 5
      %v4527 = vsel %vm825, %v4522, %v4526
      %v4528 = vshrl.u32 %v4341, 16
      %v4530 = vrot.slane %v4528, 4
      %v4531 = vor.u32 %v4530, %v4526
      %v4532 = vrot.slane %v4531, 4
      %v4534 = vshll.u32 %v4342, 16
      %v4536 = vrot.slane %v4534, 5
      %v4537 = vsel %vm825, %v4532, %v4536
      %v4539 = vshrl.u32 %v4343, 16
      %v4541 = vrot.slane %v4539, 4
      %v4542 = vshll.u32 %v4343, 16
      %v4544 = vrot.slane %v4542, 5
      %v4545 = vor.u32 %v4541, %v4544
      %v4546 = vrot.slane %v4545, 4
      %v4548 = vshll.u32 %v4344, 16
      %v4550 = vrot.slane %v4548, 5
      %v4551 = vsel %vm825, %v4546, %v4550
      %v4552 = vshrl.u32 %v4344, 16
      %v4554 = vrot.slane %v4552, 4
      %v4555 = vor.u32 %v4554, %v4550
      %v4556 = vrot.slane %v4555, 4
      %v4558 = vshll.u32 %v4345, 16
      %v4560 = vrot.slane %v4558, 5
      %v4561 = vsel %vm825, %v4556, %v4560
      %v4563 = vshrl.u32 %v4346, 16
      %v4565 = vrot.slane %v4563, 4
      %v4566 = vshll.u32 %v4346, 16
      %v4568 = vrot.slane %v4566, 5
      %v4569 = vor.u32 %v4565, %v4568
      %v4570 = vrot.slane %v4569, 4
      %v4572 = vshll.u32 %v4347, 16
      %v4574 = vrot.slane %v4572, 5
      %v4575 = vsel %vm825, %v4570, %v4574
      %v4576 = vshrl.u32 %v4347, 16
      %v4578 = vrot.slane %v4576, 4
      %v4579 = vor.u32 %v4578, %v4574
      %v4580 = vrot.slane %v4579, 4
      %v4582 = vshll.u32 %v4348, 16
      %v4584 = vrot.slane %v4582, 5
      %v4585 = vsel %vm825, %v4580, %v4584
      %v4587 = vshrl.u32 %v4349, 16
      %v4589 = vrot.slane %v4587, 4
      %v4590 = vshll.u32 %v4349, 16
      %v4592 = vrot.slane %v4590, 5
      %v4593 = vor.u32 %v4589, %v4592
      %v4594 = vrot.slane %v4593, 4
      %v4596 = vshll.u32 %v4350, 16
      %v4598 = vrot.slane %v4596, 5
      %v4599 = vsel %vm825, %v4594, %v4598
      %v4600 = vshrl.u32 %v4350, 16
      %v4602 = vrot.slane %v4600, 4
      %v4603 = vor.u32 %v4602, %v4598
      %v4604 = vrot.slane %v4603, 4
      %v4606 = vshll.u32 %v4351, 16
      %v4608 = vrot.slane %v4606, 5
      %v4609 = vsel %vm825, %v4604, %v4608
      %v4611 = vshrl.u32 %v4352, 16
      %v4613 = vrot.slane %v4611, 4
      %v4614 = vshll.u32 %v4352, 16
      %v4616 = vrot.slane %v4614, 5
      %v4617 = vor.u32 %v4613, %v4616
      %v4618 = vrot.slane %v4617, 4
      %v4620 = vshll.u32 %v4353, 16
      %v4622 = vrot.slane %v4620, 5
      %v4623 = vsel %vm825, %v4618, %v4622
      %v4624 = vshrl.u32 %v4353, 16
      %v4626 = vrot.slane %v4624, 4
      %v4627 = vor.u32 %v4626, %v4622
      %v4628 = vrot.slane %v4627, 4
      %v4630 = vshll.u32 %v4354, 16
      %v4632 = vrot.slane %v4630, 5
      %v4633 = vsel %vm825, %v4628, %v4632
      %v4635 = vshrl.u32 %v4355, 16
      %v4637 = vrot.slane %v4635, 4
      %v4638 = vshll.u32 %v4355, 16
      %v4640 = vrot.slane %v4638, 5
      %v4641 = vor.u32 %v4637, %v4640
      %v4642 = vrot.slane %v4641, 4
      %v4644 = vshll.u32 %v4356, 16
      %v4646 = vrot.slane %v4644, 5
      %v4647 = vsel %vm825, %v4642, %v4646
      %v4648 = vshrl.u32 %v4356, 16
      %v4650 = vrot.slane %v4648, 4
      %v4651 = vor.u32 %v4650, %v4646
      %v4652 = vrot.slane %v4651, 4
      %v4654 = vshll.u32 %v4357, 16
      %v4656 = vrot.slane %v4654, 5
      %v4657 = vsel %vm825, %v4652, %v4656
      %v4659 = vshrl.u32 %v4358, 16
      %v4661 = vrot.slane %v4659, 4
      %v4662 = vshll.u32 %v4358, 16
      %v4664 = vrot.slane %v4662, 5
      %v4665 = vor.u32 %v4661, %v4664
      %v4666 = vrot.slane %v4665, 4
      %v4668 = vshll.u32 %v4359, 16
      %v4670 = vrot.slane %v4668, 5
      %v4671 = vsel %vm825, %v4666, %v4670
      %v4672 = vshrl.u32 %v4359, 16
      %v4674 = vrot.slane %v4672, 4
      %v4675 = vor.u32 %v4674, %v4670
      %v4676 = vrot.slane %v4675, 4
      %v4678 = vshll.u32 %v4360, 16
      %v4680 = vrot.slane %v4678, 5
      %v4681 = vsel %vm825, %v4676, %v4680
      %v4683 = vshrl.u32 %v4361, 16
      %v4685 = vrot.slane %v4683, 4
      %v4686 = vshll.u32 %v4361, 16
      %v4688 = vrot.slane %v4686, 5
      %v4689 = vor.u32 %v4685, %v4688
      %v4690 = vrot.slane %v4689, 4
      %v4692 = vshll.u32 %v4362, 16
      %v4694 = vrot.slane %v4692, 5
      %v4695 = vsel %vm825, %v4690, %v4694
      %v4696 = vshrl.u32 %v4362, 16
      %v4698 = vrot.slane %v4696, 4
      %v4699 = vor.u32 %v4698, %v4694
      %v4700 = vrot.slane %v4699, 4
      %v4702 = vshll.u32 %v4363, 16
      %v4704 = vrot.slane %v4702, 5
      %v4705 = vsel %vm825, %v4700, %v4704
      %v4707 = vshrl.u32 %v4364, 16
      %v4709 = vrot.slane %v4707, 4
      %v4710 = vshll.u32 %v4364, 16
      %v4712 = vrot.slane %v4710, 5
      %v4713 = vor.u32 %v4709, %v4712
      %v4714 = vrot.slane %v4713, 4
      %v4716 = vshll.u32 %v4365, 16
      %v4718 = vrot.slane %v4716, 5
      %v4719 = vsel %vm825, %v4714, %v4718
      %v4720 = vshrl.u32 %v4365, 16
      %v4722 = vrot.slane %v4720, 4
      %v4723 = vor.u32 %v4722, %v4718
      %v4724 = vrot.slane %v4723, 4
      %v4726 = vshll.u32 %v4366, 16
      %v4728 = vrot.slane %v4726, 5
      %v4729 = vsel %vm825, %v4724, %v4728
      %v4731 = vshrl.u32 %v4367, 16
      %v4733 = vrot.slane %v4731, 4
      %v4734 = vshll.u32 %v4367, 16
      %v4736 = vrot.slane %v4734, 5
      %v4737 = vor.u32 %v4733, %v4736
      %v4738 = vrot.slane %v4737, 4
      %v4740 = vshll.u32 %v4368, 16
      %v4742 = vrot.slane %v4740, 5
      %v4743 = vsel %vm825, %v4738, %v4742
      %v4744 = vshrl.u32 %v4368, 16
      %v4746 = vrot.slane %v4744, 4
      %v4747 = vor.u32 %v4746, %v4742
      %v4748 = vrot.slane %v4747, 4
      %v4750 = vshll.u32 %v4369, 16
      %v4752 = vrot.slane %v4750, 5
      %v4753 = vsel %vm825, %v4748, %v4752
      %s4754 = scalar_lea.vmem %s1, 448
      %v4755 = vld [vmem:[%s4754] sm:$0xf]
      %v4756 = vld [vmem:[%s4754 + $0x4] sm:$0xf]
      %v4757 = vld [vmem:[%s4754 + $0x8] sm:$0xf]
      %v4758 = vld [vmem:[%s4754 + $0xc] sm:$0xf]
      %v4759 = vld [vmem:[%s4754 + $0x10] sm:$0xf]
      %v4760 = vld [vmem:[%s4754 + $0x14] sm:$0xf]
      %v4761 = vld [vmem:[%s4754 + $0x18] sm:$0xf]
      %v4762 = vld [vmem:[%s4754 + $0x1c] sm:$0xf]
      %v4763 = vld [vmem:[%s4754 + $0x20] sm:$0xf]
      %v4764 = vld [vmem:[%s4754 + $0x24] sm:$0xf]
      %v4765 = vld [vmem:[%s4754 + $0x28] sm:$0xf]
      %v4766 = vld [vmem:[%s4754 + $0x2c] sm:$0xf]
      %v4767 = vld [vmem:[%s4754 + $0x30] sm:$0xf]
      %v4768 = vld [vmem:[%s4754 + $0x34] sm:$0xf]
      %v4769 = vld [vmem:[%s4754 + $0x38] sm:$0xf]
      %v4770 = vld [vmem:[%s4754 + $0x3c] sm:$0xf]
      %v4771 = vunpack.c.l.b16 %v4383
      %v4772 = vunpack.c.l.b16 %v4393
      %v4773 = vunpack.c.l.b16 %v4407
      %v4774 = vunpack.c.l.b16 %v4417
      %v4775 = vunpack.c.l.b16 %v4431
      %v4776 = vunpack.c.l.b16 %v4441
      %v4777 = vunpack.c.l.b16 %v4455
      %v4778 = vunpack.c.l.b16 %v4465
      %v4779 = vunpack.c.l.b16 %v4479
      %v4780 = vunpack.c.l.b16 %v4489
      %v4781 = vunpack.c.l.b16 %v4503
      %v4782 = vunpack.c.l.b16 %v4513
      %v4783 = vunpack.c.l.b16 %v4527
      %v4784 = vunpack.c.l.b16 %v4537
      %v4785 = vunpack.c.l.b16 %v4551
      %v4786 = vunpack.c.l.b16 %v4561
      %v4787 = vunpack.c.l.b16 %v4575
      %v4788 = vunpack.c.l.b16 %v4585
      %v4789 = vunpack.c.l.b16 %v4599
      %v4790 = vunpack.c.l.b16 %v4609
      %v4791 = vunpack.c.l.b16 %v4623
      %v4792 = vunpack.c.l.b16 %v4633
      %v4793 = vunpack.c.l.b16 %v4647
      %v4794 = vunpack.c.l.b16 %v4657
      %v4795 = vunpack.c.l.b16 %v4671
      %v4796 = vunpack.c.l.b16 %v4681
      %v4797 = vunpack.c.l.b16 %v4695
      %v4798 = vunpack.c.l.b16 %v4705
      %v4799 = vunpack.c.l.b16 %v4719
      %v4800 = vunpack.c.l.b16 %v4729
      %v4801 = vunpack.c.l.b16 %v4743
      %v4802 = vunpack.c.l.b16 %v4753
      %v4803 = vpack.c.b16 %v4772, %v4771
      %v4804 = vpack.c.b16 %v4774, %v4773
      %v4805 = vpack.c.b16 %v4776, %v4775
      %v4806 = vpack.c.b16 %v4778, %v4777
      %v4807 = vpack.c.b16 %v4780, %v4779
      %v4808 = vpack.c.b16 %v4782, %v4781
      %v4809 = vpack.c.b16 %v4784, %v4783
      %v4810 = vpack.c.b16 %v4786, %v4785
      %v4811 = vpack.c.b16 %v4788, %v4787
      %v4812 = vpack.c.b16 %v4790, %v4789
      %v4813 = vpack.c.b16 %v4792, %v4791
      %v4814 = vpack.c.b16 %v4794, %v4793
      %v4815 = vpack.c.b16 %v4796, %v4795
      %v4816 = vpack.c.b16 %v4798, %v4797
      %v4817 = vpack.c.b16 %v4800, %v4799
      %v4818 = vpack.c.b16 %v4802, %v4801
      %v4851 = vunpack.c.l.b16 %v4755
      %v4852 = vunpack.c.l.b16 %v4756
      %v4853 = vunpack.c.l.b16 %v4757
      %v4854 = vunpack.c.l.b16 %v4758
      %v4855 = vunpack.c.l.b16 %v4759
      %v4856 = vunpack.c.l.b16 %v4760
      %v4857 = vunpack.c.l.b16 %v4761
      %v4858 = vunpack.c.l.b16 %v4762
      %v4859 = vunpack.c.l.b16 %v4763
      %v4860 = vunpack.c.l.b16 %v4764
      %v4861 = vunpack.c.l.b16 %v4765
      %v4862 = vunpack.c.l.b16 %v4766
      %v4863 = vunpack.c.l.b16 %v4767
      %v4864 = vunpack.c.l.b16 %v4768
      %v4865 = vunpack.c.l.b16 %v4769
      %v4866 = vunpack.c.l.b16 %v4770
      %v4867 = vpack.c.b16 %v4852, %v4851
      %v4868 = vpack.c.b16 %v4854, %v4853
      %v4869 = vpack.c.b16 %v4856, %v4855
      %v4870 = vpack.c.b16 %v4858, %v4857
      %v4871 = vpack.c.b16 %v4860, %v4859
      %v4872 = vpack.c.b16 %v4862, %v4861
      %v4873 = vpack.c.b16 %v4864, %v4863
      %v4874 = vpack.c.b16 %v4866, %v4865
      %4883 = vmatprep.subr.bf16.mxu0 0
      %4884 = vmatpush1.bf16.msra.mxu0 %v4874
      %4885 = vmatprep.subr.bf16.mxu0 0
      %4886 = vmatpush1.bf16.msra.mxu0 %v4873
      %4887 = vmatprep.subr.bf16.mxu0 0
      %4888 = vmatpush1.bf16.msra.mxu0 %v4872
      %4889 = vmatprep.subr.bf16.mxu0 0
      %4890 = vmatpush1.bf16.msra.mxu0 %v4871
      %4891 = vmatprep.subr.bf16.mxu0 0
      %4892 = vmatpush1.bf16.msra.mxu0 %v4870
      %4893 = vmatprep.subr.bf16.mxu0 0
      %4894 = vmatpush1.bf16.msra.mxu0 %v4869
      %4895 = vmatprep.subr.bf16.mxu0 0
      %4896 = vmatpush1.bf16.msra.mxu0 %v4868
      %4897 = vmatprep.subr.bf16.mxu0 0
      %4898 = vmatpush1.bf16.msra.mxu0 %v4867
      %4899 = vmatprep.subr.bf16.mxu0 0
      %4900 = vmatpush2.bf16.msra.mxu0 0
      %4901 = vmatprep.subr.bf16.mxu0 0
      %4902 = vmatpush2.bf16.msra.mxu0 0
      %4903 = vmatprep.subr.bf16.mxu0 0
      %4904 = vmatpush2.bf16.msra.mxu0 0
      %4905 = vmatprep.subr.bf16.mxu0 0
      %4906 = vmatpush2.bf16.msra.mxu0 0
      %4907 = vmatprep.subr.bf16.mxu0 0
      %4908 = vmatpush2.bf16.msra.mxu0 0
      %4909 = vmatprep.subr.bf16.mxu0 0
      %4910 = vmatpush2.bf16.msra.mxu0 0
      %4911 = vmatprep.subr.bf16.mxu0 0
      %4912 = vmatpush2.bf16.msra.mxu0 0
      %4913 = vmatprep.subr.bf16.mxu0 0
      %4914 = vmatpush2.bf16.msra.mxu0 0
      %4915 = vmatprep.mubr.bf16.mxu0 0
      %4916 = vmatmul.mubr.bf16.gmra.mxu0 %v4803
      %v4917 = vpop.f32.mrf.mxu0
      %v4918 = vadd.f32 0.0, %v4917
      %v4919 = vpop.f32.mrf.mxu0
      %v4920 = vpop.f32.mrf.mxu0
      %v4921 = vadd.f32 0.0, %v4920
      %v4922 = vpop.f32.mrf.mxu0
      %4923 = vmatprep.mubr.bf16.mxu0 0
      %4924 = vmatmul.mubr.bf16.gmra.mxu0 %v4804
      %v4925 = vpop.f32.mrf.mxu0
      %v4926 = vadd.f32 0.0, %v4925
      %v4927 = vpop.f32.mrf.mxu0
      %v4928 = vpop.f32.mrf.mxu0
      %v4929 = vadd.f32 0.0, %v4928
      %v4930 = vpop.f32.mrf.mxu0
      %4931 = vmatprep.mubr.bf16.mxu0 0
      %4932 = vmatmul.mubr.bf16.gmra.mxu0 %v4805
      %v4933 = vpop.f32.mrf.mxu0
      %v4934 = vadd.f32 0.0, %v4933
      %v4935 = vpop.f32.mrf.mxu0
      %v4936 = vpop.f32.mrf.mxu0
      %v4937 = vadd.f32 0.0, %v4936
      %v4938 = vpop.f32.mrf.mxu0
      %4939 = vmatprep.mubr.bf16.mxu0 0
      %4940 = vmatmul.mubr.bf16.gmra.mxu0 %v4806
      %v4941 = vpop.f32.mrf.mxu0
      %v4942 = vadd.f32 0.0, %v4941
      %v4943 = vpop.f32.mrf.mxu0
      %v4944 = vpop.f32.mrf.mxu0
      %v4945 = vadd.f32 0.0, %v4944
      %v4946 = vpop.f32.mrf.mxu0
      %4947 = vmatprep.mubr.bf16.mxu0 0
      %4948 = vmatmul.mubr.bf16.gmra.mxu0 %v4807
      %v4949 = vpop.f32.mrf.mxu0
      %v4950 = vadd.f32 0.0, %v4949
      %v4951 = vpop.f32.mrf.mxu0
      %v4952 = vpop.f32.mrf.mxu0
      %v4953 = vadd.f32 0.0, %v4952
      %v4954 = vpop.f32.mrf.mxu0
      %4955 = vmatprep.mubr.bf16.mxu0 0
      %4956 = vmatmul.mubr.bf16.gmra.mxu0 %v4808
      %v4957 = vpop.f32.mrf.mxu0
      %v4958 = vadd.f32 0.0, %v4957
      %v4959 = vpop.f32.mrf.mxu0
      %v4960 = vpop.f32.mrf.mxu0
      %v4961 = vadd.f32 0.0, %v4960
      %v4962 = vpop.f32.mrf.mxu0
      %4963 = vmatprep.mubr.bf16.mxu0 0
      %4964 = vmatmul.mubr.bf16.gmra.mxu0 %v4809
      %v4965 = vpop.f32.mrf.mxu0
      %v4966 = vadd.f32 0.0, %v4965
      %v4967 = vpop.f32.mrf.mxu0
      %v4968 = vpop.f32.mrf.mxu0
      %v4969 = vadd.f32 0.0, %v4968
      %v4970 = vpop.f32.mrf.mxu0
      %4971 = vmatprep.mubr.bf16.mxu0 0
      %4972 = vmatmul.mubr.bf16.gmra.mxu0 %v4810
      %v4973 = vpop.f32.mrf.mxu0
      %v4974 = vadd.f32 0.0, %v4973
      %v4975 = vpop.f32.mrf.mxu0
      %v4976 = vpop.f32.mrf.mxu0
      %v4977 = vadd.f32 0.0, %v4976
      %v4978 = vpop.f32.mrf.mxu0
      %4979 = vmatprep.mubr.bf16.mxu0 0
      %4980 = vmatmul.mubr.bf16.gmra.mxu0 %v4811
      %v4981 = vpop.f32.mrf.mxu0
      %v4982 = vadd.f32 0.0, %v4981
      %v4983 = vpop.f32.mrf.mxu0
      %v4984 = vpop.f32.mrf.mxu0
      %v4985 = vadd.f32 0.0, %v4984
      %v4986 = vpop.f32.mrf.mxu0
      %4987 = vmatprep.mubr.bf16.mxu0 0
      %4988 = vmatmul.mubr.bf16.gmra.mxu0 %v4812
      %v4989 = vpop.f32.mrf.mxu0
      %v4990 = vadd.f32 0.0, %v4989
      %v4991 = vpop.f32.mrf.mxu0
      %v4992 = vpop.f32.mrf.mxu0
      %v4993 = vadd.f32 0.0, %v4992
      %v4994 = vpop.f32.mrf.mxu0
      %4995 = vmatprep.mubr.bf16.mxu0 0
      %4996 = vmatmul.mubr.bf16.gmra.mxu0 %v4813
      %v4997 = vpop.f32.mrf.mxu0
      %v4998 = vadd.f32 0.0, %v4997
      %v4999 = vpop.f32.mrf.mxu0
      %v5000 = vpop.f32.mrf.mxu0
      %v5001 = vadd.f32 0.0, %v5000
      %v5002 = vpop.f32.mrf.mxu0
      %5003 = vmatprep.mubr.bf16.mxu0 0
      %5004 = vmatmul.mubr.bf16.gmra.mxu0 %v4814
      %v5005 = vpop.f32.mrf.mxu0
      %v5006 = vadd.f32 0.0, %v5005
      %v5007 = vpop.f32.mrf.mxu0
      %v5008 = vpop.f32.mrf.mxu0
      %v5009 = vadd.f32 0.0, %v5008
      %v5010 = vpop.f32.mrf.mxu0
      %5011 = vmatprep.mubr.bf16.mxu0 0
      %5012 = vmatmul.mubr.bf16.gmra.mxu0 %v4815
      %v5013 = vpop.f32.mrf.mxu0
      %v5014 = vadd.f32 0.0, %v5013
      %v5015 = vpop.f32.mrf.mxu0
      %v5016 = vpop.f32.mrf.mxu0
      %v5017 = vadd.f32 0.0, %v5016
      %v5018 = vpop.f32.mrf.mxu0
      %5019 = vmatprep.mubr.bf16.mxu0 0
      %5020 = vmatmul.mubr.bf16.gmra.mxu0 %v4816
      %v5021 = vpop.f32.mrf.mxu0
      %v5022 = vadd.f32 0.0, %v5021
      %v5023 = vpop.f32.mrf.mxu0
      %v5024 = vpop.f32.mrf.mxu0
      %v5025 = vadd.f32 0.0, %v5024
      %v5026 = vpop.f32.mrf.mxu0
      %5027 = vmatprep.mubr.bf16.mxu0 0
      %5028 = vmatmul.mubr.bf16.gmra.mxu0 %v4817
      %v5029 = vpop.f32.mrf.mxu0
      %v5030 = vadd.f32 0.0, %v5029
      %v5031 = vpop.f32.mrf.mxu0
      %v5032 = vpop.f32.mrf.mxu0
      %v5033 = vadd.f32 0.0, %v5032
      %v5034 = vpop.f32.mrf.mxu0
      %5035 = vmatprep.mubr.bf16.mxu0 0
      %5036 = vmatmul.mubr.bf16.gmra.mxu0 %v4818
      %v5037 = vpop.f32.mrf.mxu0
      %v5038 = vadd.f32 0.0, %v5037
      %v5039 = vpop.f32.mrf.mxu0
      %v5040 = vpop.f32.mrf.mxu0
      %v5041 = vadd.f32 0.0, %v5040
      %v5042 = vpop.f32.mrf.mxu0
      %5043 = vdwg.mxu0
      %v5044 = vadd.f32 %v4290, %v4918
      %v5045 = vadd.f32 %v4291, %v4921
      %v5046 = vadd.f32 %v4292, %v4926
      %v5047 = vadd.f32 %v4293, %v4929
      %v5048 = vadd.f32 %v4294, %v4934
      %v5049 = vadd.f32 %v4295, %v4937
      %v5050 = vadd.f32 %v4296, %v4942
      %v5051 = vadd.f32 %v4297, %v4945
      %v5052 = vadd.f32 %v4298, %v4950
      %v5053 = vadd.f32 %v4299, %v4953
      %v5054 = vadd.f32 %v4300, %v4958
      %v5055 = vadd.f32 %v4301, %v4961
      %v5056 = vadd.f32 %v4302, %v4966
      %v5057 = vadd.f32 %v4303, %v4969
      %v5058 = vadd.f32 %v4304, %v4974
      %v5059 = vadd.f32 %v4305, %v4977
      %v5060 = vadd.f32 %v4306, %v4982
      %v5061 = vadd.f32 %v4307, %v4985
      %v5062 = vadd.f32 %v4308, %v4990
      %v5063 = vadd.f32 %v4309, %v4993
      %v5064 = vadd.f32 %v4310, %v4998
      %v5065 = vadd.f32 %v4311, %v5001
      %v5066 = vadd.f32 %v4312, %v5006
      %v5067 = vadd.f32 %v4313, %v5009
      %v5068 = vadd.f32 %v4314, %v5014
      %v5069 = vadd.f32 %v4315, %v5017
      %v5070 = vadd.f32 %v4316, %v5022
      %v5071 = vadd.f32 %v4317, %v5025
      %v5072 = vadd.f32 %v4318, %v5030
      %v5073 = vadd.f32 %v4319, %v5033
      %v5074 = vadd.f32 %v4320, %v5038
      %v5075 = vadd.f32 %v4321, %v5041
      %v5076 = vld [vmem:[%s3935] sm:$0xe]
      %v5077 = vld [vmem:[%s3935 + $0xc] sm:$0xe]
      %v5078 = vld [vmem:[%s3935 + $0x18] sm:$0xe]
      %v5079 = vld [vmem:[%s3935 + $0x24] sm:$0xe]
      %v5080 = vld [vmem:[%s3935 + $0x30] sm:$0xe]
      %v5081 = vld [vmem:[%s3935 + $0x3c] sm:$0xe]
      %v5082 = vld [vmem:[%s3935 + $0x48] sm:$0xe]
      %v5083 = vld [vmem:[%s3935 + $0x54] sm:$0xe]
      %v5084 = vld [vmem:[%s3935 + $0x60] sm:$0xe]
      %v5085 = vld [vmem:[%s3935 + $0x6c] sm:$0xe]
      %v5086 = vld [vmem:[%s3935 + $0x78] sm:$0xe]
      %v5087 = vld [vmem:[%s3935 + $0x84] sm:$0xe]
      %v5088 = vld [vmem:[%s3935 + $0x90] sm:$0xe]
      %v5089 = vld [vmem:[%s3935 + $0x9c] sm:$0xe]
      %v5090 = vld [vmem:[%s3935 + $0xa8] sm:$0xe]
      %v5091 = vld [vmem:[%s3935 + $0xb4] sm:$0xe]
      %v5140 = vrot.slane %v5076, 5
      %v5141 = vrot.slane %v5140, 4
      %v5142 = vrot.slane %v4323, 5
      %v5143 = vsel %vm1855, %v5141, %v5142
      %v5144 = vrot.slane %v5142, 4
      %v5145 = vrot.slane %v4324, 5
      %v5146 = vsel %vm1855, %v5144, %v5145
      %v5147 = vrot.slane %v5077, 5
      %v5148 = vrot.slane %v5147, 4
      %v5149 = vrot.slane %v4326, 5
      %v5150 = vsel %vm1855, %v5148, %v5149
      %v5151 = vrot.slane %v5149, 4
      %v5152 = vrot.slane %v4327, 5
      %v5153 = vsel %vm1855, %v5151, %v5152
      %v5154 = vrot.slane %v5078, 5
      %v5155 = vrot.slane %v5154, 4
      %v5156 = vrot.slane %v4329, 5
      %v5157 = vsel %vm1855, %v5155, %v5156
      %v5158 = vrot.slane %v5156, 4
      %v5159 = vrot.slane %v4330, 5
      %v5160 = vsel %vm1855, %v5158, %v5159
      %v5161 = vrot.slane %v5079, 5
      %v5162 = vrot.slane %v5161, 4
      %v5163 = vrot.slane %v4332, 5
      %v5164 = vsel %vm1855, %v5162, %v5163
      %v5165 = vrot.slane %v5163, 4
      %v5166 = vrot.slane %v4333, 5
      %v5167 = vsel %vm1855, %v5165, %v5166
      %v5168 = vrot.slane %v5080, 5
      %v5169 = vrot.slane %v5168, 4
      %v5170 = vrot.slane %v4335, 5
      %v5171 = vsel %vm1855, %v5169, %v5170
      %v5172 = vrot.slane %v5170, 4
      %v5173 = vrot.slane %v4336, 5
      %v5174 = vsel %vm1855, %v5172, %v5173
      %v5175 = vrot.slane %v5081, 5
      %v5176 = vrot.slane %v5175, 4
      %v5177 = vrot.slane %v4338, 5
      %v5178 = vsel %vm1855, %v5176, %v5177
      %v5179 = vrot.slane %v5177, 4
      %v5180 = vrot.slane %v4339, 5
      %v5181 = vsel %vm1855, %v5179, %v5180
      %v5182 = vrot.slane %v5082, 5
      %v5183 = vrot.slane %v5182, 4
      %v5184 = vrot.slane %v4341, 5
      %v5185 = vsel %vm1855, %v5183, %v5184
      %v5186 = vrot.slane %v5184, 4
      %v5187 = vrot.slane %v4342, 5
      %v5188 = vsel %vm1855, %v5186, %v5187
      %v5189 = vrot.slane %v5083, 5
      %v5190 = vrot.slane %v5189, 4
      %v5191 = vrot.slane %v4344, 5
      %v5192 = vsel %vm1855, %v5190, %v5191
      %v5193 = vrot.slane %v5191, 4
      %v5194 = vrot.slane %v4345, 5
      %v5195 = vsel %vm1855, %v5193, %v5194
      %v5196 = vrot.slane %v5084, 5
      %v5197 = vrot.slane %v5196, 4
      %v5198 = vrot.slane %v4347, 5
      %v5199 = vsel %vm1855, %v5197, %v5198
      %v5200 = vrot.slane %v5198, 4
      %v5201 = vrot.slane %v4348, 5
      %v5202 = vsel %vm1855, %v5200, %v5201
      %v5203 = vrot.slane %v5085, 5
      %v5204 = vrot.slane %v5203, 4
      %v5205 = vrot.slane %v4350, 5
      %v5206 = vsel %vm1855, %v5204, %v5205
      %v5207 = vrot.slane %v5205, 4
      %v5208 = vrot.slane %v4351, 5
      %v5209 = vsel %vm1855, %v5207, %v5208
      %v5210 = vrot.slane %v5086, 5
      %v5211 = vrot.slane %v5210, 4
      %v5212 = vrot.slane %v4353, 5
      %v5213 = vsel %vm1855, %v5211, %v5212
      %v5214 = vrot.slane %v5212, 4
      %v5215 = vrot.slane %v4354, 5
      %v5216 = vsel %vm1855, %v5214, %v5215
      %v5217 = vrot.slane %v5087, 5
      %v5218 = vrot.slane %v5217, 4
      %v5219 = vrot.slane %v4356, 5
      %v5220 = vsel %vm1855, %v5218, %v5219
      %v5221 = vrot.slane %v5219, 4
      %v5222 = vrot.slane %v4357, 5
      %v5223 = vsel %vm1855, %v5221, %v5222
      %v5224 = vrot.slane %v5088, 5
      %v5225 = vrot.slane %v5224, 4
      %v5226 = vrot.slane %v4359, 5
      %v5227 = vsel %vm1855, %v5225, %v5226
      %v5228 = vrot.slane %v5226, 4
      %v5229 = vrot.slane %v4360, 5
      %v5230 = vsel %vm1855, %v5228, %v5229
      %v5231 = vrot.slane %v5089, 5
      %v5232 = vrot.slane %v5231, 4
      %v5233 = vrot.slane %v4362, 5
      %v5234 = vsel %vm1855, %v5232, %v5233
      %v5235 = vrot.slane %v5233, 4
      %v5236 = vrot.slane %v4363, 5
      %v5237 = vsel %vm1855, %v5235, %v5236
      %v5238 = vrot.slane %v5090, 5
      %v5239 = vrot.slane %v5238, 4
      %v5240 = vrot.slane %v4365, 5
      %v5241 = vsel %vm1855, %v5239, %v5240
      %v5242 = vrot.slane %v5240, 4
      %v5243 = vrot.slane %v4366, 5
      %v5244 = vsel %vm1855, %v5242, %v5243
      %v5245 = vrot.slane %v5091, 5
      %v5246 = vrot.slane %v5245, 4
      %v5247 = vrot.slane %v4368, 5
      %v5248 = vsel %vm1855, %v5246, %v5247
      %v5249 = vrot.slane %v5247, 4
      %v5250 = vrot.slane %v4369, 5
      %v5251 = vsel %vm1855, %v5249, %v5250
      %s5252 = scalar_lea.vmem %s1, 512
      %v5253 = vld [vmem:[%s5252] sm:$0xf]
      %v5254 = vld [vmem:[%s5252 + $0x4] sm:$0xf]
      %v5255 = vld [vmem:[%s5252 + $0x8] sm:$0xf]
      %v5256 = vld [vmem:[%s5252 + $0xc] sm:$0xf]
      %v5257 = vld [vmem:[%s5252 + $0x10] sm:$0xf]
      %v5258 = vld [vmem:[%s5252 + $0x14] sm:$0xf]
      %v5259 = vld [vmem:[%s5252 + $0x18] sm:$0xf]
      %v5260 = vld [vmem:[%s5252 + $0x1c] sm:$0xf]
      %v5261 = vld [vmem:[%s5252 + $0x20] sm:$0xf]
      %v5262 = vld [vmem:[%s5252 + $0x24] sm:$0xf]
      %v5263 = vld [vmem:[%s5252 + $0x28] sm:$0xf]
      %v5264 = vld [vmem:[%s5252 + $0x2c] sm:$0xf]
      %v5265 = vld [vmem:[%s5252 + $0x30] sm:$0xf]
      %v5266 = vld [vmem:[%s5252 + $0x34] sm:$0xf]
      %v5267 = vld [vmem:[%s5252 + $0x38] sm:$0xf]
      %v5268 = vld [vmem:[%s5252 + $0x3c] sm:$0xf]
      %v5269 = vunpack.c.l.b16 %v5143
      %v5270 = vunpack.c.l.b16 %v5146
      %v5271 = vunpack.c.l.b16 %v5150
      %v5272 = vunpack.c.l.b16 %v5153
      %v5273 = vunpack.c.l.b16 %v5157
      %v5274 = vunpack.c.l.b16 %v5160
      %v5275 = vunpack.c.l.b16 %v5164
      %v5276 = vunpack.c.l.b16 %v5167
      %v5277 = vunpack.c.l.b16 %v5171
      %v5278 = vunpack.c.l.b16 %v5174
      %v5279 = vunpack.c.l.b16 %v5178
      %v5280 = vunpack.c.l.b16 %v5181
      %v5281 = vunpack.c.l.b16 %v5185
      %v5282 = vunpack.c.l.b16 %v5188
      %v5283 = vunpack.c.l.b16 %v5192
      %v5284 = vunpack.c.l.b16 %v5195
      %v5285 = vunpack.c.l.b16 %v5199
      %v5286 = vunpack.c.l.b16 %v5202
      %v5287 = vunpack.c.l.b16 %v5206
      %v5288 = vunpack.c.l.b16 %v5209
      %v5289 = vunpack.c.l.b16 %v5213
      %v5290 = vunpack.c.l.b16 %v5216
      %v5291 = vunpack.c.l.b16 %v5220
      %v5292 = vunpack.c.l.b16 %v5223
      %v5293 = vunpack.c.l.b16 %v5227
      %v5294 = vunpack.c.l.b16 %v5230
      %v5295 = vunpack.c.l.b16 %v5234
      %v5296 = vunpack.c.l.b16 %v5237
      %v5297 = vunpack.c.l.b16 %v5241
      %v5298 = vunpack.c.l.b16 %v5244
      %v5299 = vunpack.c.l.b16 %v5248
      %v5300 = vunpack.c.l.b16 %v5251
      %v5301 = vpack.c.b16 %v5270, %v5269
      %v5302 = vpack.c.b16 %v5272, %v5271
      %v5303 = vpack.c.b16 %v5274, %v5273
      %v5304 = vpack.c.b16 %v5276, %v5275
      %v5305 = vpack.c.b16 %v5278, %v5277
      %v5306 = vpack.c.b16 %v5280, %v5279
      %v5307 = vpack.c.b16 %v5282, %v5281
      %v5308 = vpack.c.b16 %v5284, %v5283
      %v5309 = vpack.c.b16 %v5286, %v5285
      %v5310 = vpack.c.b16 %v5288, %v5287
      %v5311 = vpack.c.b16 %v5290, %v5289
      %v5312 = vpack.c.b16 %v5292, %v5291
      %v5313 = vpack.c.b16 %v5294, %v5293
      %v5314 = vpack.c.b16 %v5296, %v5295
      %v5315 = vpack.c.b16 %v5298, %v5297
      %v5316 = vpack.c.b16 %v5300, %v5299
      %v5349 = vunpack.c.l.b16 %v5253
      %v5350 = vunpack.c.l.b16 %v5254
      %v5351 = vunpack.c.l.b16 %v5255
      %v5352 = vunpack.c.l.b16 %v5256
      %v5353 = vunpack.c.l.b16 %v5257
      %v5354 = vunpack.c.l.b16 %v5258
      %v5355 = vunpack.c.l.b16 %v5259
      %v5356 = vunpack.c.l.b16 %v5260
      %v5357 = vunpack.c.l.b16 %v5261
      %v5358 = vunpack.c.l.b16 %v5262
      %v5359 = vunpack.c.l.b16 %v5263
      %v5360 = vunpack.c.l.b16 %v5264
      %v5361 = vunpack.c.l.b16 %v5265
      %v5362 = vunpack.c.l.b16 %v5266
      %v5363 = vunpack.c.l.b16 %v5267
      %v5364 = vunpack.c.l.b16 %v5268
      %v5365 = vpack.c.b16 %v5350, %v5349
      %v5366 = vpack.c.b16 %v5352, %v5351
      %v5367 = vpack.c.b16 %v5354, %v5353
      %v5368 = vpack.c.b16 %v5356, %v5355
      %v5369 = vpack.c.b16 %v5358, %v5357
      %v5370 = vpack.c.b16 %v5360, %v5359
      %v5371 = vpack.c.b16 %v5362, %v5361
      %v5372 = vpack.c.b16 %v5364, %v5363
      %5381 = vmatprep.subr.bf16.mxu0 0
      %5382 = vmatpush1.bf16.msra.mxu0 %v5372
      %5383 = vmatprep.subr.bf16.mxu0 0
      %5384 = vmatpush1.bf16.msra.mxu0 %v5371
      %5385 = vmatprep.subr.bf16.mxu0 0
      %5386 = vmatpush1.bf16.msra.mxu0 %v5370
      %5387 = vmatprep.subr.bf16.mxu0 0
      %5388 = vmatpush1.bf16.msra.mxu0 %v5369
      %5389 = vmatprep.subr.bf16.mxu0 0
      %5390 = vmatpush1.bf16.msra.mxu0 %v5368
      %5391 = vmatprep.subr.bf16.mxu0 0
      %5392 = vmatpush1.bf16.msra.mxu0 %v5367
      %5393 = vmatprep.subr.bf16.mxu0 0
      %5394 = vmatpush1.bf16.msra.mxu0 %v5366
      %5395 = vmatprep.subr.bf16.mxu0 0
      %5396 = vmatpush1.bf16.msra.mxu0 %v5365
      %5397 = vmatprep.subr.bf16.mxu0 0
      %5398 = vmatpush2.bf16.msra.mxu0 0
      %5399 = vmatprep.subr.bf16.mxu0 0
      %5400 = vmatpush2.bf16.msra.mxu0 0
      %5401 = vmatprep.subr.bf16.mxu0 0
      %5402 = vmatpush2.bf16.msra.mxu0 0
      %5403 = vmatprep.subr.bf16.mxu0 0
      %5404 = vmatpush2.bf16.msra.mxu0 0
      %5405 = vmatprep.subr.bf16.mxu0 0
      %5406 = vmatpush2.bf16.msra.mxu0 0
      %5407 = vmatprep.subr.bf16.mxu0 0
      %5408 = vmatpush2.bf16.msra.mxu0 0
      %5409 = vmatprep.subr.bf16.mxu0 0
      %5410 = vmatpush2.bf16.msra.mxu0 0
      %5411 = vmatprep.subr.bf16.mxu0 0
      %5412 = vmatpush2.bf16.msra.mxu0 0
      %5413 = vmatprep.mubr.bf16.mxu0 0
      %5414 = vmatmul.mubr.bf16.gmra.mxu0 %v5301
      %v5415 = vpop.f32.mrf.mxu0
      %v5416 = vadd.f32 0.0, %v5415
      %v5417 = vpop.f32.mrf.mxu0
      %v5418 = vpop.f32.mrf.mxu0
      %v5419 = vadd.f32 0.0, %v5418
      %v5420 = vpop.f32.mrf.mxu0
      %5421 = vmatprep.mubr.bf16.mxu0 0
      %5422 = vmatmul.mubr.bf16.gmra.mxu0 %v5302
      %v5423 = vpop.f32.mrf.mxu0
      %v5424 = vadd.f32 0.0, %v5423
      %v5425 = vpop.f32.mrf.mxu0
      %v5426 = vpop.f32.mrf.mxu0
      %v5427 = vadd.f32 0.0, %v5426
      %v5428 = vpop.f32.mrf.mxu0
      %5429 = vmatprep.mubr.bf16.mxu0 0
      %5430 = vmatmul.mubr.bf16.gmra.mxu0 %v5303
      %v5431 = vpop.f32.mrf.mxu0
      %v5432 = vadd.f32 0.0, %v5431
      %v5433 = vpop.f32.mrf.mxu0
      %v5434 = vpop.f32.mrf.mxu0
      %v5435 = vadd.f32 0.0, %v5434
      %v5436 = vpop.f32.mrf.mxu0
      %5437 = vmatprep.mubr.bf16.mxu0 0
      %5438 = vmatmul.mubr.bf16.gmra.mxu0 %v5304
      %v5439 = vpop.f32.mrf.mxu0
      %v5440 = vadd.f32 0.0, %v5439
      %v5441 = vpop.f32.mrf.mxu0
      %v5442 = vpop.f32.mrf.mxu0
      %v5443 = vadd.f32 0.0, %v5442
      %v5444 = vpop.f32.mrf.mxu0
      %5445 = vmatprep.mubr.bf16.mxu0 0
      %5446 = vmatmul.mubr.bf16.gmra.mxu0 %v5305
      %v5447 = vpop.f32.mrf.mxu0
      %v5448 = vadd.f32 0.0, %v5447
      %v5449 = vpop.f32.mrf.mxu0
      %v5450 = vpop.f32.mrf.mxu0
      %v5451 = vadd.f32 0.0, %v5450
      %v5452 = vpop.f32.mrf.mxu0
      %5453 = vmatprep.mubr.bf16.mxu0 0
      %5454 = vmatmul.mubr.bf16.gmra.mxu0 %v5306
      %v5455 = vpop.f32.mrf.mxu0
      %v5456 = vadd.f32 0.0, %v5455
      %v5457 = vpop.f32.mrf.mxu0
      %v5458 = vpop.f32.mrf.mxu0
      %v5459 = vadd.f32 0.0, %v5458
      %v5460 = vpop.f32.mrf.mxu0
      %5461 = vmatprep.mubr.bf16.mxu0 0
      %5462 = vmatmul.mubr.bf16.gmra.mxu0 %v5307
      %v5463 = vpop.f32.mrf.mxu0
      %v5464 = vadd.f32 0.0, %v5463
      %v5465 = vpop.f32.mrf.mxu0
      %v5466 = vpop.f32.mrf.mxu0
      %v5467 = vadd.f32 0.0, %v5466
      %v5468 = vpop.f32.mrf.mxu0
      %5469 = vmatprep.mubr.bf16.mxu0 0
      %5470 = vmatmul.mubr.bf16.gmra.mxu0 %v5308
      %v5471 = vpop.f32.mrf.mxu0
      %v5472 = vadd.f32 0.0, %v5471
      %v5473 = vpop.f32.mrf.mxu0
      %v5474 = vpop.f32.mrf.mxu0
      %v5475 = vadd.f32 0.0, %v5474
      %v5476 = vpop.f32.mrf.mxu0
      %5477 = vmatprep.mubr.bf16.mxu0 0
      %5478 = vmatmul.mubr.bf16.gmra.mxu0 %v5309
      %v5479 = vpop.f32.mrf.mxu0
      %v5480 = vadd.f32 0.0, %v5479
      %v5481 = vpop.f32.mrf.mxu0
      %v5482 = vpop.f32.mrf.mxu0
      %v5483 = vadd.f32 0.0, %v5482
      %v5484 = vpop.f32.mrf.mxu0
      %5485 = vmatprep.mubr.bf16.mxu0 0
      %5486 = vmatmul.mubr.bf16.gmra.mxu0 %v5310
      %v5487 = vpop.f32.mrf.mxu0
      %v5488 = vadd.f32 0.0, %v5487
      %v5489 = vpop.f32.mrf.mxu0
      %v5490 = vpop.f32.mrf.mxu0
      %v5491 = vadd.f32 0.0, %v5490
      %v5492 = vpop.f32.mrf.mxu0
      %5493 = vmatprep.mubr.bf16.mxu0 0
      %5494 = vmatmul.mubr.bf16.gmra.mxu0 %v5311
      %v5495 = vpop.f32.mrf.mxu0
      %v5496 = vadd.f32 0.0, %v5495
      %v5497 = vpop.f32.mrf.mxu0
      %v5498 = vpop.f32.mrf.mxu0
      %v5499 = vadd.f32 0.0, %v5498
      %v5500 = vpop.f32.mrf.mxu0
      %5501 = vmatprep.mubr.bf16.mxu0 0
      %5502 = vmatmul.mubr.bf16.gmra.mxu0 %v5312
      %v5503 = vpop.f32.mrf.mxu0
      %v5504 = vadd.f32 0.0, %v5503
      %v5505 = vpop.f32.mrf.mxu0
      %v5506 = vpop.f32.mrf.mxu0
      %v5507 = vadd.f32 0.0, %v5506
      %v5508 = vpop.f32.mrf.mxu0
      %5509 = vmatprep.mubr.bf16.mxu0 0
      %5510 = vmatmul.mubr.bf16.gmra.mxu0 %v5313
      %v5511 = vpop.f32.mrf.mxu0
      %v5512 = vadd.f32 0.0, %v5511
      %v5513 = vpop.f32.mrf.mxu0
      %v5514 = vpop.f32.mrf.mxu0
      %v5515 = vadd.f32 0.0, %v5514
      %v5516 = vpop.f32.mrf.mxu0
      %5517 = vmatprep.mubr.bf16.mxu0 0
      %5518 = vmatmul.mubr.bf16.gmra.mxu0 %v5314
      %v5519 = vpop.f32.mrf.mxu0
      %v5520 = vadd.f32 0.0, %v5519
      %v5521 = vpop.f32.mrf.mxu0
      %v5522 = vpop.f32.mrf.mxu0
      %v5523 = vadd.f32 0.0, %v5522
      %v5524 = vpop.f32.mrf.mxu0
      %5525 = vmatprep.mubr.bf16.mxu0 0
      %5526 = vmatmul.mubr.bf16.gmra.mxu0 %v5315
      %v5527 = vpop.f32.mrf.mxu0
      %v5528 = vadd.f32 0.0, %v5527
      %v5529 = vpop.f32.mrf.mxu0
      %v5530 = vpop.f32.mrf.mxu0
      %v5531 = vadd.f32 0.0, %v5530
      %v5532 = vpop.f32.mrf.mxu0
      %5533 = vmatprep.mubr.bf16.mxu0 0
      %5534 = vmatmul.mubr.bf16.gmra.mxu0 %v5316
      %v5535 = vpop.f32.mrf.mxu0
      %v5536 = vadd.f32 0.0, %v5535
      %v5537 = vpop.f32.mrf.mxu0
      %v5538 = vpop.f32.mrf.mxu0
      %v5539 = vadd.f32 0.0, %v5538
      %v5540 = vpop.f32.mrf.mxu0
      %5541 = vdwg.mxu0
      %v5542 = vadd.f32 %v5044, %v5416
      %v5543 = vadd.f32 %v5045, %v5419
      %v5544 = vadd.f32 %v5046, %v5424
      %v5545 = vadd.f32 %v5047, %v5427
      %v5546 = vadd.f32 %v5048, %v5432
      %v5547 = vadd.f32 %v5049, %v5435
      %v5548 = vadd.f32 %v5050, %v5440
      %v5549 = vadd.f32 %v5051, %v5443
      %v5550 = vadd.f32 %v5052, %v5448
      %v5551 = vadd.f32 %v5053, %v5451
      %v5552 = vadd.f32 %v5054, %v5456
      %v5553 = vadd.f32 %v5055, %v5459
      %v5554 = vadd.f32 %v5056, %v5464
      %v5555 = vadd.f32 %v5057, %v5467
      %v5556 = vadd.f32 %v5058, %v5472
      %v5557 = vadd.f32 %v5059, %v5475
      %v5558 = vadd.f32 %v5060, %v5480
      %v5559 = vadd.f32 %v5061, %v5483
      %v5560 = vadd.f32 %v5062, %v5488
      %v5561 = vadd.f32 %v5063, %v5491
      %v5562 = vadd.f32 %v5064, %v5496
      %v5563 = vadd.f32 %v5065, %v5499
      %v5564 = vadd.f32 %v5066, %v5504
      %v5565 = vadd.f32 %v5067, %v5507
      %v5566 = vadd.f32 %v5068, %v5512
      %v5567 = vadd.f32 %v5069, %v5515
      %v5568 = vadd.f32 %v5070, %v5520
      %v5569 = vadd.f32 %v5071, %v5523
      %v5570 = vadd.f32 %v5072, %v5528
      %v5571 = vadd.f32 %v5073, %v5531
      %v5572 = vadd.f32 %v5074, %v5536
      %v5573 = vadd.f32 %v5075, %v5539
      %v5574 = vld [vmem:[%s2] sm:$0x1]
      %v5576 = vlaneseq
      %v5577 = vshrl.u32 %v5576, 7
      %v5578 = vsub.s32 0, %v5577
      %v5579 = vrot.slane %v5574, %v5578
      %v5581 = vmul.f32 %v5542, %v5579
      %v5582 = vmul.f32 %v5543, %v5579
      %v5583 = vmul.f32 %v5544, %v5579
      %v5584 = vmul.f32 %v5545, %v5579
      %v5585 = vmul.f32 %v5546, %v5579
      %v5586 = vmul.f32 %v5547, %v5579
      %v5587 = vmul.f32 %v5548, %v5579
      %v5588 = vmul.f32 %v5549, %v5579
      %v5589 = vmul.f32 %v5550, %v5579
      %v5590 = vmul.f32 %v5551, %v5579
      %v5591 = vmul.f32 %v5552, %v5579
      %v5592 = vmul.f32 %v5553, %v5579
      %v5593 = vmul.f32 %v5554, %v5579
      %v5594 = vmul.f32 %v5555, %v5579
      %v5595 = vmul.f32 %v5556, %v5579
      %v5596 = vmul.f32 %v5557, %v5579
      %v5597 = vmul.f32 %v5558, %v5579
      %v5598 = vmul.f32 %v5559, %v5579
      %v5599 = vmul.f32 %v5560, %v5579
      %v5600 = vmul.f32 %v5561, %v5579
      %v5601 = vmul.f32 %v5562, %v5579
      %v5602 = vmul.f32 %v5563, %v5579
      %v5603 = vmul.f32 %v5564, %v5579
      %v5604 = vmul.f32 %v5565, %v5579
      %v5605 = vmul.f32 %v5566, %v5579
      %v5606 = vmul.f32 %v5567, %v5579
      %v5607 = vmul.f32 %v5568, %v5579
      %v5608 = vmul.f32 %v5569, %v5579
      %v5609 = vmul.f32 %v5570, %v5579
      %v5610 = vmul.f32 %v5571, %v5579
      %v5611 = vmul.f32 %v5572, %v5579
      %v5612 = vmul.f32 %v5573, %v5579
      %v5613 = vld [vmem:[%s3] sm:$0x1]
      %v5615 = vlaneseq
      %v5616 = vshrl.u32 %v5615, 7
      %v5617 = vsub.s32 0, %v5616
      %v5618 = vrot.slane %v5613, %v5617
      %v5620 = vadd.f32 %v5581, %v5618
      %v5621 = vadd.f32 %v5582, %v5618
      %v5622 = vadd.f32 %v5583, %v5618
      %v5623 = vadd.f32 %v5584, %v5618
      %v5624 = vadd.f32 %v5585, %v5618
      %v5625 = vadd.f32 %v5586, %v5618
      %v5626 = vadd.f32 %v5587, %v5618
      %v5627 = vadd.f32 %v5588, %v5618
      %v5628 = vadd.f32 %v5589, %v5618
      %v5629 = vadd.f32 %v5590, %v5618
      %v5630 = vadd.f32 %v5591, %v5618
      %v5631 = vadd.f32 %v5592, %v5618
      %v5632 = vadd.f32 %v5593, %v5618
      %v5633 = vadd.f32 %v5594, %v5618
      %v5634 = vadd.f32 %v5595, %v5618
      %v5635 = vadd.f32 %v5596, %v5618
      %v5636 = vadd.f32 %v5597, %v5618
      %v5637 = vadd.f32 %v5598, %v5618
      %v5638 = vadd.f32 %v5599, %v5618
      %v5639 = vadd.f32 %v5600, %v5618
      %v5640 = vadd.f32 %v5601, %v5618
      %v5641 = vadd.f32 %v5602, %v5618
      %v5642 = vadd.f32 %v5603, %v5618
      %v5643 = vadd.f32 %v5604, %v5618
      %v5644 = vadd.f32 %v5605, %v5618
      %v5645 = vadd.f32 %v5606, %v5618
      %v5646 = vadd.f32 %v5607, %v5618
      %v5647 = vadd.f32 %v5608, %v5618
      %v5648 = vadd.f32 %v5609, %v5618
      %v5649 = vadd.f32 %v5610, %v5618
      %v5650 = vadd.f32 %v5611, %v5618
      %v5651 = vadd.f32 %v5612, %v5618
      %v5652 = vmax.f32 %v5620, 0.0
      %v5653 = vmax.f32 %v5621, 0.0
      %v5654 = vmax.f32 %v5622, 0.0
      %v5655 = vmax.f32 %v5623, 0.0
      %v5656 = vmax.f32 %v5624, 0.0
      %v5657 = vmax.f32 %v5625, 0.0
      %v5658 = vmax.f32 %v5626, 0.0
      %v5659 = vmax.f32 %v5627, 0.0
      %v5660 = vmax.f32 %v5628, 0.0
      %v5661 = vmax.f32 %v5629, 0.0
      %v5662 = vmax.f32 %v5630, 0.0
      %v5663 = vmax.f32 %v5631, 0.0
      %v5664 = vmax.f32 %v5632, 0.0
      %v5665 = vmax.f32 %v5633, 0.0
      %v5666 = vmax.f32 %v5634, 0.0
      %v5667 = vmax.f32 %v5635, 0.0
      %v5668 = vmax.f32 %v5636, 0.0
      %v5669 = vmax.f32 %v5637, 0.0
      %v5670 = vmax.f32 %v5638, 0.0
      %v5671 = vmax.f32 %v5639, 0.0
      %v5672 = vmax.f32 %v5640, 0.0
      %v5673 = vmax.f32 %v5641, 0.0
      %v5674 = vmax.f32 %v5642, 0.0
      %v5675 = vmax.f32 %v5643, 0.0
      %v5676 = vmax.f32 %v5644, 0.0
      %v5677 = vmax.f32 %v5645, 0.0
      %v5678 = vmax.f32 %v5646, 0.0
      %v5679 = vmax.f32 %v5647, 0.0
      %v5680 = vmax.f32 %v5648, 0.0
      %v5681 = vmax.f32 %v5649, 0.0
      %v5682 = vmax.f32 %v5650, 0.0
      %v5683 = vmax.f32 %v5651, 0.0
      %v5684 = vpack.c.bf16 %v5653, %v5652
      %v5685 = vpack.c.bf16 %v5655, %v5654
      %v5686 = vpack.c.bf16 %v5657, %v5656
      %v5687 = vpack.c.bf16 %v5659, %v5658
      %v5688 = vpack.c.bf16 %v5661, %v5660
      %v5689 = vpack.c.bf16 %v5663, %v5662
      %v5690 = vpack.c.bf16 %v5665, %v5664
      %v5691 = vpack.c.bf16 %v5667, %v5666
      %v5692 = vpack.c.bf16 %v5669, %v5668
      %v5693 = vpack.c.bf16 %v5671, %v5670
      %v5694 = vpack.c.bf16 %v5673, %v5672
      %v5695 = vpack.c.bf16 %v5675, %v5674
      %v5696 = vpack.c.bf16 %v5677, %v5676
      %v5697 = vpack.c.bf16 %v5679, %v5678
      %v5698 = vpack.c.bf16 %v5681, %v5680
      %v5699 = vpack.c.bf16 %v5683, %v5682
      %v5716 = vunpack.c.l.b16 %v5684
      %v5717 = vunpack.c.h.b16 %v5684
      %v5718 = vunpack.c.l.b16 %v5685
      %v5719 = vunpack.c.h.b16 %v5685
      %v5720 = vunpack.c.l.b16 %v5686
      %v5721 = vunpack.c.h.b16 %v5686
      %v5722 = vunpack.c.l.b16 %v5687
      %v5723 = vunpack.c.h.b16 %v5687
      %v5724 = vunpack.c.l.b16 %v5688
      %v5725 = vunpack.c.h.b16 %v5688
      %v5726 = vunpack.c.l.b16 %v5689
      %v5727 = vunpack.c.h.b16 %v5689
      %v5728 = vunpack.c.l.b16 %v5690
      %v5729 = vunpack.c.h.b16 %v5690
      %v5730 = vunpack.c.l.b16 %v5691
      %v5731 = vunpack.c.h.b16 %v5691
      %v5732 = vunpack.c.l.b16 %v5692
      %v5733 = vunpack.c.h.b16 %v5692
      %v5734 = vunpack.c.l.b16 %v5693
      %v5735 = vunpack.c.h.b16 %v5693
      %v5736 = vunpack.c.l.b16 %v5694
      %v5737 = vunpack.c.h.b16 %v5694
      %v5738 = vunpack.c.l.b16 %v5695
      %v5739 = vunpack.c.h.b16 %v5695
      %v5740 = vunpack.c.l.b16 %v5696
      %v5741 = vunpack.c.h.b16 %v5696
      %v5742 = vunpack.c.l.b16 %v5697
      %v5743 = vunpack.c.h.b16 %v5697
      %v5744 = vunpack.c.l.b16 %v5698
      %v5745 = vunpack.c.h.b16 %v5698
      %v5746 = vunpack.c.l.b16 %v5699
      %v5747 = vunpack.c.h.b16 %v5699
      %v5748 = vpack.c.b16 %v5716, %v5716
      %v5749 = vpack.c.b16 %v5717, %v5717
      %v5750 = vpack.c.b16 %v5718, %v5718
      %v5751 = vpack.c.b16 %v5719, %v5719
      %v5752 = vpack.c.b16 %v5720, %v5720
      %v5753 = vpack.c.b16 %v5721, %v5721
      %v5754 = vpack.c.b16 %v5722, %v5722
      %v5755 = vpack.c.b16 %v5723, %v5723
      %v5756 = vpack.c.b16 %v5724, %v5724
      %v5757 = vpack.c.b16 %v5725, %v5725
      %v5758 = vpack.c.b16 %v5726, %v5726
      %v5759 = vpack.c.b16 %v5727, %v5727
      %v5760 = vpack.c.b16 %v5728, %v5728
      %v5761 = vpack.c.b16 %v5729, %v5729
      %v5762 = vpack.c.b16 %v5730, %v5730
      %v5763 = vpack.c.b16 %v5731, %v5731
      %v5764 = vpack.c.b16 %v5732, %v5732
      %v5765 = vpack.c.b16 %v5733, %v5733
      %v5766 = vpack.c.b16 %v5734, %v5734
      %v5767 = vpack.c.b16 %v5735, %v5735
      %v5768 = vpack.c.b16 %v5736, %v5736
      %v5769 = vpack.c.b16 %v5737, %v5737
      %v5770 = vpack.c.b16 %v5738, %v5738
      %v5771 = vpack.c.b16 %v5739, %v5739
      %v5772 = vpack.c.b16 %v5740, %v5740
      %v5773 = vpack.c.b16 %v5741, %v5741
      %v5774 = vpack.c.b16 %v5742, %v5742
      %v5775 = vpack.c.b16 %v5743, %v5743
      %v5776 = vpack.c.b16 %v5744, %v5744
      %v5777 = vpack.c.b16 %v5745, %v5745
      %v5778 = vpack.c.b16 %v5746, %v5746
      %v5779 = vpack.c.b16 %v5747, %v5747
      %5812 = vst [vmem:[%s221] sm:$0xf] %v5748
      %5813 = vst [vmem:[%s221 + $0x4] sm:$0xf] %v5749
      %5814 = vst [vmem:[%s221 + $0x8] sm:$0xf] %v5750
      %5815 = vst [vmem:[%s221 + $0xc] sm:$0xf] %v5751
      %5816 = vst [vmem:[%s221 + $0x10] sm:$0xf] %v5752
      %5817 = vst [vmem:[%s221 + $0x14] sm:$0xf] %v5753
      %5818 = vst [vmem:[%s221 + $0x18] sm:$0xf] %v5754
      %5819 = vst [vmem:[%s221 + $0x1c] sm:$0xf] %v5755
      %5820 = vst [vmem:[%s221 + $0x20] sm:$0xf] %v5756
      %5821 = vst [vmem:[%s221 + $0x24] sm:$0xf] %v5757
      %5822 = vst [vmem:[%s221 + $0x28] sm:$0xf] %v5758
      %5823 = vst [vmem:[%s221 + $0x2c] sm:$0xf] %v5759
      %5824 = vst [vmem:[%s221 + $0x30] sm:$0xf] %v5760
      %5825 = vst [vmem:[%s221 + $0x34] sm:$0xf] %v5761
      %5826 = vst [vmem:[%s221 + $0x38] sm:$0xf] %v5762
      %5827 = vst [vmem:[%s221 + $0x3c] sm:$0xf] %v5763
      %5828 = vst [vmem:[%s221 + $0x40] sm:$0xf] %v5764
      %5829 = vst [vmem:[%s221 + $0x44] sm:$0xf] %v5765
      %5830 = vst [vmem:[%s221 + $0x48] sm:$0xf] %v5766
      %5831 = vst [vmem:[%s221 + $0x4c] sm:$0xf] %v5767
      %5832 = vst [vmem:[%s221 + $0x50] sm:$0xf] %v5768
      %5833 = vst [vmem:[%s221 + $0x54] sm:$0xf] %v5769
      %5834 = vst [vmem:[%s221 + $0x58] sm:$0xf] %v5770
      %5835 = vst [vmem:[%s221 + $0x5c] sm:$0xf] %v5771
      %5836 = vst [vmem:[%s221 + $0x60] sm:$0xf] %v5772
      %5837 = vst [vmem:[%s221 + $0x64] sm:$0xf] %v5773
      %5838 = vst [vmem:[%s221 + $0x68] sm:$0xf] %v5774
      %5839 = vst [vmem:[%s221 + $0x6c] sm:$0xf] %v5775
      %5840 = vst [vmem:[%s221 + $0x70] sm:$0xf] %v5776
      %5841 = vst [vmem:[%s221 + $0x74] sm:$0xf] %v5777
      %5842 = vst [vmem:[%s221 + $0x78] sm:$0xf] %v5778
      %5843 = vst [vmem:[%s221 + $0x7c] sm:$0xf] %v5779
      %s5844 = smul.u32 16, %s20
      %p5845 = scmp.lt.s32.totalorder %s19, 1
      %s5846 = scalar_select %p5845, %s19, 1
      %p5847 = scmp.lt.s32.totalorder %s5844, 15
      %s5848 = scalar_select %p5847, %s5844, 15
      %s5849 = smul.addr %s5848, 2
      %s5850 = smul.addr %s5846, 32
      %s5851 = sadd.s32 %s5849, %s5850
      %s5852 = smul.addr %s5851, 4
      %s5853 = scalar_lea.vmem %s4, %s5852
      // Predicated region
      $region41: #{bottleneck_forward.4} parent=35 // pred_check
        %p5854 = pneg %p136
      $region42: #{bottleneck_forward.4} parent=35 // pred_check_branch
        %5856 = sbr.rel (%p5854) target = $region44
      $region43: #{bottleneck_forward.4} parent=35 // pred_region
        %s5857 = smul.u32 16, %s20
      $region44: #{bottleneck_forward.4} parent=35 // pred_fallthru
        _
    $region36: #{bottleneck_forward.4} parent=5 // pred_fallthru
      _
    %p5858 = scmp.le.s32.totalorder 2, %s10
    // Predicated region
    $region45: #{bottleneck_forward.4} parent=5 // pred_check
      %p5859 = pneg %p5858
    $region46: #{bottleneck_forward.4} parent=5 // pred_check_branch
      %5861 = sbr.rel (%p5859) target = $region48
    $region47: #{bottleneck_forward.4} parent=5 // pred_region
      %s5862 = ssub.s32 %s10, 2
      // Predicated region
      $region49: #{bottleneck_forward.4} parent=47 // pred_check
        %p5863 = pneg %p142
      $region50: #{bottleneck_forward.4} parent=47 // pred_check_branch
        %5865 = sbr.rel (%p5863) target = $region52
      $region51: #{bottleneck_forward.4} parent=47 // pred_region
        %s5866 = smul.u32 16, %s22
        %p5867 = scmp.lt.s32.totalorder %s21, 1
        %s5868 = scalar_select %p5867, %s21, 1
        %p5869 = scmp.lt.s32.totalorder %s5866, 15
        %s5870 = scalar_select %p5869, %s5866, 15
        %s5871 = smul.addr %s5870, 2
        %s5872 = smul.addr %s5868, 32
        %s5873 = sadd.s32 %s5871, %s5872
        %s5874 = smul.addr %s5873, 4
        %s5875 = scalar_lea.vmem %s4, %s5874
      $region52: #{bottleneck_forward.4} parent=47 // pred_fallthru
        _
    $region48: #{bottleneck_forward.4} parent=5 // pred_fallthru
      _
  $region6: #{bottleneck_forward.4} parent=0 // loop_footer
    %s14 = sadd.s32 1, %s10
  $region7: #{bottleneck_forward.4} parent=0 // loop_footer_branch
    %9 = sbr.rel target = $region3
  $region8: #{bottleneck_forward.4} parent=0 // loop_exit
    _

</llo_original>
